<compile_context>
chip_gen: v5e
topology: v5e:2x2
jax: 0.10.0
libtpu: 0.0.40
codegen_flags: <defaults>
</compile_context>

<pallas_src>
import functools

import jax
import jax.numpy as jnp
from jax.experimental import pallas as pl
from jax.experimental.pallas import tpu as pltpu

BN_EPS = 1e-5


def _round_up(x, m):
    return (x + m - 1) // m * m


# ----------------------------- fused conv matmul Pallas kernel -----------------------------

def _fused_conv_kernel(relu, has_res, *refs):
    """out = [ReLU]( (A @ B) * scale + bias [+ residual] )

    A: [tm, Kp] bf16, B: [Kp, Cout] bf16, scale/bias: [1, Cout] f32,
    residual (optional): [tm, Cout] f32, out: [tm, Cout] f32.
    Single K step -> no accumulator scratch; BN/residual/ReLU fused into the store.
    """
    if has_res:
        a_ref, b_ref, s_ref, c_ref, r_ref, o_ref = refs
    else:
        a_ref, b_ref, s_ref, c_ref, o_ref = refs
    acc = jnp.dot(a_ref[...], b_ref[...], preferred_element_type=jnp.float32)
    y = acc * s_ref[...] + c_ref[...]
    if has_res:
        y = y + r_ref[...]
    if relu:
        y = jnp.maximum(y, 0.0)
    o_ref[...] = y


def fused_matmul_bn(a, b, scale, bias, *, relu, res=None):
    """a: [M, Kp] bf16, b: [Kp, Cout] bf16 -> [M, Cout] f32 with fused BN(+res)(+ReLU) epilogue."""
    M, Kp = a.shape
    Kp2, Nc = b.shape
    assert Kp == Kp2
    # Fill the 256-row MXU where M allows; all M values in this model are multiples of 128.
    tm = 256 if M % 256 == 0 else (128 if M % 128 == 0 else M)

    s2 = scale.astype(jnp.float32).reshape(1, Nc)
    c2 = bias.astype(jnp.float32).reshape(1, Nc)

    in_specs = [
        pl.BlockSpec((tm, Kp), lambda i: (i, 0)),      # A tile (full K)
        pl.BlockSpec((Kp, Nc), lambda i: (0, 0)),      # B resident across the grid
        pl.BlockSpec((1, Nc), lambda i: (0, 0)),       # BN scale
        pl.BlockSpec((1, Nc), lambda i: (0, 0)),       # BN bias
    ]
    args = [a, b, s2, c2]
    if res is not None:
        in_specs.append(pl.BlockSpec((tm, Nc), lambda i: (i, 0)))
        args.append(res.astype(jnp.float32))

    return pl.pallas_call(
        functools.partial(_fused_conv_kernel, relu, res is not None),
        out_shape=jax.ShapeDtypeStruct((M, Nc), jnp.float32),
        grid_spec=pltpu.PrefetchScalarGridSpec(
            num_scalar_prefetch=0,
            grid=(M // tm,),
            in_specs=in_specs,
            out_specs=pl.BlockSpec((tm, Nc), lambda i: (i, 0)),
        ),
        compiler_params=pltpu.CompilerParams(
            dimension_semantics=("parallel",)),
    )(*args)


# ----------------------------- conv (im2col) + fused BN/ReLU/residual -----------------------------

def _fold_bn(bn):
    gamma, beta, mean, var = bn
    scale = gamma / jnp.sqrt(var + BN_EPS)
    bias = beta - mean * scale
    return scale, bias


def conv_bn_act(x, w, bn, *, stride, pad, relu, residual=None):
    """x: [N, D, H, W, Cin] (NDHWC) f32; w: [Cout, Cin, kd, kh, kw] (PyTorch layout), no bias.

    Conv = im2col on the MXU (bf16 operands, f32 accumulation). Eval-mode BN scale/bias,
    optional residual add and ReLU are fused into the matmul epilogue.
    """
    Cout, Cin, kd, kh, kw = w.shape
    sd, sh, sw = stride
    pd, ph, pw = pad

    xp = jnp.pad(x, ((0, 0), (pd, pd), (ph, ph), (pw, pw), (0, 0))).astype(jnp.bfloat16)
    N, Dp, Hp, Wp, _ = xp.shape
    Do = (Dp - kd) // sd + 1
    Ho = (Hp - kh) // sh + 1
    Wo = (Wp - kw) // sw + 1
    M = N * Do * Ho * Wo
    K = kd * kh * kw * Cin

    if kd == kh == kw == 1:
        # 1x1x1 conv (downsample path): no im2col, just the strided spatial subsample.
        Kp = K
        A = xp[:, :sd * Do:sd, :sh * Ho:sh, :sw * Wo:sw, :].reshape(M, K)
    else:
        # K padded to a multiple of 128 by appending a zero chunk inside the (unavoidable) concat,
        # so no extra pad copy of A is ever made.
        Kp = _round_up(K, 128)
        taps = [xp[:, dz:dz + sd * Do:sd, dy:dy + sh * Ho:sh, dx:dx + sw * Wo:sw, :]
                for dz in range(kd) for dy in range(kh) for dx in range(kw)]
        if Kp > K:
            taps.append(jnp.zeros((N, Do, Ho, Wo, Kp - K), jnp.bfloat16))
        A = jnp.concatenate(taps, axis=-1).reshape(M, Kp)

    B = jnp.transpose(w, (2, 3, 4, 1, 0)).reshape(K, Cout)
    if Kp > K:
        B = jnp.pad(B, ((0, Kp - K), (0, 0)))
    B = B.astype(jnp.bfloat16)

    scale, bias = _fold_bn(bn)
    res2d = None if residual is None else residual.reshape(M, Cout)
    out2d = fused_matmul_bn(A, B, scale, bias, relu=relu, res=res2d)
    return out2d.reshape(N, Do, Ho, Wo, Cout)


# ----------------------------- non-Pallas glue (per perf review) -----------------------------

def max_pool3d(x, ksize=3, stride=2, pad=1):
    """MaxPool3d(kernel=3, stride=2, padding=1), NDHWC. Tree of maxima over the 27 taps:
    XLA fuses the strided slices + max into one pass (no 27x stacked HBM tensor)."""
    neg = jnp.finfo(jnp.float32).min
    xp = jnp.pad(x, ((0, 0), (pad, pad), (pad, pad), (pad, pad), (0, 0)),
                 constant_values=neg)
    N, Dp, Hp, Wp, C = xp.shape
    Do = (Dp - ksize) // stride + 1
    Ho = (Hp - ksize) // stride + 1
    Wo = (Wp - ksize) // stride + 1
    out = None
    for dz in range(ksize):
        for dy in range(ksize):
            for dx in range(ksize):
                tap = xp[:, dz:dz + stride * Do:stride,
                         dy:dy + stride * Ho:stride,
                         dx:dx + stride * Wo:stride, :]
                out = tap if out is None else jnp.maximum(out, tap)
    return out


def basic_block(x, blk, stride):
    if 'ds_conv' in blk:
        res = conv_bn_act(x, blk['ds_conv'], blk['ds_bn'],
                          stride=(stride,) * 3, pad=(0, 0, 0), relu=False)
    else:
        res = x
    out = conv_bn_act(x, blk['conv1'], blk['bn1'],
                      stride=(stride,) * 3, pad=(1, 1, 1), relu=True)
    # conv2 -> bn2 -> (+ residual) -> ReLU, all fused into the second conv's epilogue.
    out = conv_bn_act(out, blk['conv2'], blk['bn2'],
                      stride=(1, 1, 1), pad=(1, 1, 1), relu=True, residual=res)
    return out


def ggo_forward(x_ncdhw, params):
    # PyTorch NCDHW -> NDHWC (channels last: per-channel BN broadcasts along the lane axis)
    x = jnp.transpose(x_ncdhw, (0, 2, 3, 4, 1)).astype(jnp.float32)
    # stem: conv1 + BN + ReLU fused, then maxpool
    x = conv_bn_act(x, params['conv1'], params['bn1'],
                    stride=(1, 2, 2), pad=(3, 3, 3), relu=True)
    x = max_pool3d(x)
    # layer1 (32 -> 32)
    for blk in params['layer1']:
        x = basic_block(x, blk, stride=1)
    # layer2 (32 -> 64, first block stride 2 + 1x1x1 downsample)
    x = basic_block(x, params['layer2'][0], stride=2)
    x = basic_block(x, params['layer2'][1], stride=1)
    # AdaptiveAvgPool3d((1,1,1)) + flatten + fc: tiny tail, kept in plain jnp (pad/launch overhead
    # of a Pallas call would exceed the work by orders of magnitude).
    N, D, H, W, C = x.shape
    pooled = jnp.mean(x.reshape(N, D * H * W, C), axis=1)          # [N, 64]
    out = pooled @ params['fc_w'].T + params['fc_b'][None, :]      # Linear(64, num_classes)
    return out


# ----------------------------- deterministic parameter init -----------------------------

def init_params(key, num_classes=2):
    state = {'key': key}

    def nxt():
        state['key'], sub = jax.random.split(state['key'])
        return sub

    def conv_w(cout, cin, k):
        return jax.random.normal(nxt(), (cout, cin, k, k, k), jnp.float32) * 0.05

    def bn_p(c):
        gamma = jax.random.uniform(nxt(), (c,), jnp.float32, 0.5, 1.5)
        beta = jax.random.normal(nxt(), (c,), jnp.float32) * 0.1
        mean = jax.random.normal(nxt(), (c,), jnp.float32) * 0.1
        var = jax.random.uniform(nxt(), (c,), jnp.float32, 0.5, 1.5)
        return (gamma, beta, mean, var)

    def block(cin, cout, downsample):
        b = {'conv1': conv_w(cout, cin, 3), 'bn1': bn_p(cout),
             'conv2': conv_w(cout, cout, 3), 'bn2': bn_p(cout)}
        if downsample:
            b['ds_conv'] = conv_w(cout, cin, 1)
            b['ds_bn'] = bn_p(cout)
        return b

    params = {
        'conv1': conv_w(32, 1, 7),                 # Conv3d(1, 32, 7, stride=(1,2,2), pad=3)
        'bn1': bn_p(32),
        'layer1': [block(32, 32, False), block(32, 32, False)],
        'layer2': [block(32, 64, True), block(64, 64, False)],
        'fc_w': jax.random.normal(nxt(), (num_classes, 64), jnp.float32) * 0.05,
        'fc_b': jax.random.normal(nxt(), (num_classes,), jnp.float32) * 0.05,
    }
    return params


# ----------------------------- main -----------------------------

if __name__ == "__main__":
    key = jax.random.PRNGKey(0)
    k_param, k_input = jax.random.split(key)
    params = init_params(k_param, num_classes=2)

    # input: [N, C, D, H, W] = [2, 1, 16, 32, 32]  (PyTorch NCDHW convention)
    x = jax.random.normal(k_input, (2, 1, 16, 32, 32), jnp.float32)

    fwd = jax.jit(ggo_forward)
    out = fwd(x, params)
    out = jax.block_until_ready(out)

    assert out.shape == (2, 2), out.shape
    assert bool(jnp.all(jnp.isfinite(out)))
    print("KERNEL_OK")
</pallas_src>

<mosaic_0001>
module attributes {stable_mosaic.version = 11 : i64} {
  func.func @_fused_conv_kernel(%arg0: i32, %arg1: memref<256x384xbf16, #tpu.memory_space<vmem>>, %arg2: memref<384x32xbf16, #tpu.memory_space<vmem>>, %arg3: memref<1x32xf32, #tpu.memory_space<vmem>>, %arg4: memref<1x32xf32, #tpu.memory_space<vmem>>, %arg5: memref<256x32xf32, #tpu.memory_space<vmem>>) attributes {dimension_semantics = [#tpu.dimension_semantics<parallel>], iteration_bounds = array<i64: 32>, scalar_prefetch = 0 : i64, scratch_operands = 0 : i64, tpu.core_type = #tpu.core_type<tc>, window_params = [{transform_indices = @transform_0, window_bounds = array<i64: 256, 384>}, {pipeline_mode = #tpu.pipeline_mode<synchronous>, transform_indices = @transform_1, window_bounds = array<i64: 384, 32>}, {pipeline_mode = #tpu.pipeline_mode<synchronous>, transform_indices = @transform_2, window_bounds = array<i64: 1, 32>}, {pipeline_mode = #tpu.pipeline_mode<synchronous>, transform_indices = @transform_3, window_bounds = array<i64: 1, 32>}, {transform_indices = @transform_4, window_bounds = array<i64: 256, 32>}]} {
    %c0 = arith.constant 0 : index
    %c0_0 = arith.constant 0 : index
    %0 = vector.load %arg1[%c0, %c0_0] : memref<256x384xbf16, #tpu.memory_space<vmem>>, vector<256x384xbf16>
    %c0_1 = arith.constant 0 : index
    %c0_2 = arith.constant 0 : index
    %1 = vector.load %arg2[%c0_1, %c0_2] : memref<384x32xbf16, #tpu.memory_space<vmem>>, vector<384x32xbf16>
    %cst = arith.constant dense<0.000000e+00> : vector<256x32xf32>
    %2 = tpu.matmul %0, %1, %cst {dimension_numbers = #tpu.dot_dimension_numbers<[1], [0], [0], [1], [0, 0, 1, 1], [], []>} : vector<256x384xbf16>, vector<384x32xbf16>, vector<256x32xf32> -> vector<256x32xf32>
    %c0_3 = arith.constant 0 : index
    %c0_4 = arith.constant 0 : index
    %3 = vector.load %arg3[%c0_3, %c0_4] : memref<1x32xf32, #tpu.memory_space<vmem>>, vector<1x32xf32>
    %4 = vector.broadcast %3 : vector<1x32xf32> to vector<256x32xf32>
    %5 = arith.mulf %2, %4 : vector<256x32xf32>
    %c0_5 = arith.constant 0 : index
    %c0_6 = arith.constant 0 : index
    %6 = vector.load %arg4[%c0_5, %c0_6] : memref<1x32xf32, #tpu.memory_space<vmem>>, vector<1x32xf32>
    %7 = vector.broadcast %6 : vector<1x32xf32> to vector<256x32xf32>
    %8 = arith.addf %5, %7 : vector<256x32xf32>
    %cst_7 = arith.constant 0.000000e+00 : f32
    %9 = vector.broadcast %cst_7 : f32 to vector<256x32xf32>
    %10 = arith.maximumf %8, %9 : vector<256x32xf32>
    %c0_8 = arith.constant 0 : index
    %c0_9 = arith.constant 0 : index
    %11 = vector.load %arg5[%c0_8, %c0_9] : memref<256x32xf32, #tpu.memory_space<vmem>>, vector<256x32xf32>
    tpu.vector_store %arg5[%c0_8, %c0_9], %10 {strides = array<i32>} : memref<256x32xf32, #tpu.memory_space<vmem>>, vector<256x32xf32>,
    return
  }
  func.func @transform_0(%arg0: i32) -> (i32, i32) {
    %c0_i32 = arith.constant 0 : i32
    %c0_i32_0 = arith.constant 0 : i32
    return %arg0, %c0_i32 : i32, i32
  }
  func.func @transform_1(%arg0: i32) -> (i32, i32) {
    %c0_i32 = arith.constant 0 : i32
    %c0_i32_0 = arith.constant 0 : i32
    %c0_i32_1 = arith.constant 0 : i32
    return %c0_i32, %c0_i32_0 : i32, i32
  }
  func.func @transform_2(%arg0: i32) -> (i32, i32) {
    %c0_i32 = arith.constant 0 : i32
    %c0_i32_0 = arith.constant 0 : i32
    %c0_i32_1 = arith.constant 0 : i32
    return %c0_i32, %c0_i32_0 : i32, i32
  }
  func.func @transform_3(%arg0: i32) -> (i32, i32) {
    %c0_i32 = arith.constant 0 : i32
    %c0_i32_0 = arith.constant 0 : i32
    %c0_i32_1 = arith.constant 0 : i32
    return %c0_i32, %c0_i32_0 : i32, i32
  }
  func.func @transform_4(%arg0: i32) -> (i32, i32) {
    %c0_i32 = arith.constant 0 : i32
    %c0_i32_0 = arith.constant 0 : i32
    return %arg0, %c0_i32 : i32, i32
  }
}

module attributes {stable_mosaic.version = 11 : i64} {
  func.func @_fused_conv_kernel(%arg0: i32, %arg1: memref<256x896xbf16, #tpu.memory_space<vmem>>, %arg2: memref<896x32xbf16, #tpu.memory_space<vmem>>, %arg3: memref<1x32xf32, #tpu.memory_space<vmem>>, %arg4: memref<1x32xf32, #tpu.memory_space<vmem>>, %arg5: memref<256x32xf32, #tpu.memory_space<vmem>>) attributes {dimension_semantics = [#tpu.dimension_semantics<parallel>], iteration_bounds = array<i64: 4>, scalar_prefetch = 0 : i64, scratch_operands = 0 : i64, tpu.core_type = #tpu.core_type<tc>, window_params = [{transform_indices = @transform_0, window_bounds = array<i64: 256, 896>}, {pipeline_mode = #tpu.pipeline_mode<synchronous>, transform_indices = @transform_1, window_bounds = array<i64: 896, 32>}, {pipeline_mode = #tpu.pipeline_mode<synchronous>, transform_indices = @transform_2, window_bounds = array<i64: 1, 32>}, {pipeline_mode = #tpu.pipeline_mode<synchronous>, transform_indices = @transform_3, window_bounds = array<i64: 1, 32>}, {transform_indices = @transform_4, window_bounds = array<i64: 256, 32>}]} {
    %c0 = arith.constant 0 : index
    %c0_0 = arith.constant 0 : index
    %0 = vector.load %arg1[%c0, %c0_0] : memref<256x896xbf16, #tpu.memory_space<vmem>>, vector<256x896xbf16>
    %c0_1 = arith.constant 0 : index
    %c0_2 = arith.constant 0 : index
    %1 = vector.load %arg2[%c0_1, %c0_2] : memref<896x32xbf16, #tpu.memory_space<vmem>>, vector<896x32xbf16>
    %cst = arith.constant dense<0.000000e+00> : vector<256x32xf32>
    %2 = tpu.matmul %0, %1, %cst {dimension_numbers = #tpu.dot_dimension_numbers<[1], [0], [0], [1], [0, 0, 1, 1], [], []>} : vector<256x896xbf16>, vector<896x32xbf16>, vector<256x32xf32> -> vector<256x32xf32>
    %c0_3 = arith.constant 0 : index
    %c0_4 = arith.constant 0 : index
    %3 = vector.load %arg3[%c0_3, %c0_4] : memref<1x32xf32, #tpu.memory_space<vmem>>, vector<1x32xf32>
    %4 = vector.broadcast %3 : vector<1x32xf32> to vector<256x32xf32>
    %5 = arith.mulf %2, %4 : vector<256x32xf32>
    %c0_5 = arith.constant 0 : index
    %c0_6 = arith.constant 0 : index
    %6 = vector.load %arg4[%c0_5, %c0_6] : memref<1x32xf32, #tpu.memory_space<vmem>>, vector<1x32xf32>
    %7 = vector.broadcast %6 : vector<1x32xf32> to vector<256x32xf32>
    %8 = arith.addf %5, %7 : vector<256x32xf32>
    %cst_7 = arith.constant 0.000000e+00 : f32
    %9 = vector.broadcast %cst_7 : f32 to vector<256x32xf32>
    %10 = arith.maximumf %8, %9 : vector<256x32xf32>
    %c0_8 = arith.constant 0 : index
    %c0_9 = arith.constant 0 : index
    %11 = vector.load %arg5[%c0_8, %c0_9] : memref<256x32xf32, #tpu.memory_space<vmem>>, vector<256x32xf32>
    tpu.vector_store %arg5[%c0_8, %c0_9], %10 {strides = array<i32>} : memref<256x32xf32, #tpu.memory_space<vmem>>, vector<256x32xf32>,
    return
  }
  func.func @transform_0(%arg0: i32) -> (i32, i32) {
    %c0_i32 = arith.constant 0 : i32
    %c0_i32_0 = arith.constant 0 : i32
    return %arg0, %c0_i32 : i32, i32
  }
  func.func @transform_1(%arg0: i32) -> (i32, i32) {
    %c0_i32 = arith.constant 0 : i32
    %c0_i32_0 = arith.constant 0 : i32
    %c0_i32_1 = arith.constant 0 : i32
    return %c0_i32, %c0_i32_0 : i32, i32
  }
  func.func @transform_2(%arg0: i32) -> (i32, i32) {
    %c0_i32 = arith.constant 0 : i32
    %c0_i32_0 = arith.constant 0 : i32
    %c0_i32_1 = arith.constant 0 : i32
    return %c0_i32, %c0_i32_0 : i32, i32
  }
  func.func @transform_3(%arg0: i32) -> (i32, i32) {
    %c0_i32 = arith.constant 0 : i32
    %c0_i32_0 = arith.constant 0 : i32
    %c0_i32_1 = arith.constant 0 : i32
    return %c0_i32, %c0_i32_0 : i32, i32
  }
  func.func @transform_4(%arg0: i32) -> (i32, i32) {
    %c0_i32 = arith.constant 0 : i32
    %c0_i32_0 = arith.constant 0 : i32
    return %arg0, %c0_i32 : i32, i32
  }
}

module attributes {stable_mosaic.version = 11 : i64} {
  func.func @_fused_conv_kernel(%arg0: i32, %arg1: memref<256x896xbf16, #tpu.memory_space<vmem>>, %arg2: memref<896x32xbf16, #tpu.memory_space<vmem>>, %arg3: memref<1x32xf32, #tpu.memory_space<vmem>>, %arg4: memref<1x32xf32, #tpu.memory_space<vmem>>, %arg5: memref<256x32xf32, #tpu.memory_space<vmem>>, %arg6: memref<256x32xf32, #tpu.memory_space<vmem>>) attributes {dimension_semantics = [#tpu.dimension_semantics<parallel>], iteration_bounds = array<i64: 4>, scalar_prefetch = 0 : i64, scratch_operands = 0 : i64, tpu.core_type = #tpu.core_type<tc>, window_params = [{transform_indices = @transform_0, window_bounds = array<i64: 256, 896>}, {pipeline_mode = #tpu.pipeline_mode<synchronous>, transform_indices = @transform_1, window_bounds = array<i64: 896, 32>}, {pipeline_mode = #tpu.pipeline_mode<synchronous>, transform_indices = @transform_2, window_bounds = array<i64: 1, 32>}, {pipeline_mode = #tpu.pipeline_mode<synchronous>, transform_indices = @transform_3, window_bounds = array<i64: 1, 32>}, {transform_indices = @transform_4, window_bounds = array<i64: 256, 32>}, {transform_indices = @transform_5, window_bounds = array<i64: 256, 32>}]} {
    %c0 = arith.constant 0 : index
    %c0_0 = arith.constant 0 : index
    %0 = vector.load %arg1[%c0, %c0_0] : memref<256x896xbf16, #tpu.memory_space<vmem>>, vector<256x896xbf16>
    %c0_1 = arith.constant 0 : index
    %c0_2 = arith.constant 0 : index
    %1 = vector.load %arg2[%c0_1, %c0_2] : memref<896x32xbf16, #tpu.memory_space<vmem>>, vector<896x32xbf16>
    %cst = arith.constant dense<0.000000e+00> : vector<256x32xf32>
    %2 = tpu.matmul %0, %1, %cst {dimension_numbers = #tpu.dot_dimension_numbers<[1], [0], [0], [1], [0, 0, 1, 1], [], []>} : vector<256x896xbf16>, vector<896x32xbf16>, vector<256x32xf32> -> vector<256x32xf32>
    %c0_3 = arith.constant 0 : index
    %c0_4 = arith.constant 0 : index
    %3 = vector.load %arg3[%c0_3, %c0_4] : memref<1x32xf32, #tpu.memory_space<vmem>>, vector<1x32xf32>
    %4 = vector.broadcast %3 : vector<1x32xf32> to vector<256x32xf32>
    %5 = arith.mulf %2, %4 : vector<256x32xf32>
    %c0_5 = arith.constant 0 : index
    %c0_6 = arith.constant 0 : index
    %6 = vector.load %arg4[%c0_5, %c0_6] : memref<1x32xf32, #tpu.memory_space<vmem>>, vector<1x32xf32>
    %7 = vector.broadcast %6 : vector<1x32xf32> to vector<256x32xf32>
    %8 = arith.addf %5, %7 : vector<256x32xf32>
    %c0_7 = arith.constant 0 : index
    %c0_8 = arith.constant 0 : index
    %9 = vector.load %arg5[%c0_7, %c0_8] : memref<256x32xf32, #tpu.memory_space<vmem>>, vector<256x32xf32>
    %10 = arith.addf %8, %9 : vector<256x32xf32>
    %cst_9 = arith.constant 0.000000e+00 : f32
    %11 = vector.broadcast %cst_9 : f32 to vector<256x32xf32>
    %12 = arith.maximumf %10, %11 : vector<256x32xf32>
    %c0_10 = arith.constant 0 : index
    %c0_11 = arith.constant 0 : index
    %13 = vector.load %arg6[%c0_10, %c0_11] : memref<256x32xf32, #tpu.memory_space<vmem>>, vector<256x32xf32>
    tpu.vector_store %arg6[%c0_10, %c0_11], %12 {strides = array<i32>} : memref<256x32xf32, #tpu.memory_space<vmem>>, vector<256x32xf32>,
    return
  }
  func.func @transform_0(%arg0: i32) -> (i32, i32) {
    %c0_i32 = arith.constant 0 : i32
    %c0_i32_0 = arith.constant 0 : i32
    return %arg0, %c0_i32 : i32, i32
  }
  func.func @transform_1(%arg0: i32) -> (i32, i32) {
    %c0_i32 = arith.constant 0 : i32
    %c0_i32_0 = arith.constant 0 : i32
    %c0_i32_1 = arith.constant 0 : i32
    return %c0_i32, %c0_i32_0 : i32, i32
  }
  func.func @transform_2(%arg0: i32) -> (i32, i32) {
    %c0_i32 = arith.constant 0 : i32
    %c0_i32_0 = arith.constant 0 : i32
    %c0_i32_1 = arith.constant 0 : i32
    return %c0_i32, %c0_i32_0 : i32, i32
  }
  func.func @transform_3(%arg0: i32) -> (i32, i32) {
    %c0_i32 = arith.constant 0 : i32
    %c0_i32_0 = arith.constant 0 : i32
    %c0_i32_1 = arith.constant 0 : i32
    return %c0_i32, %c0_i32_0 : i32, i32
  }
  func.func @transform_4(%arg0: i32) -> (i32, i32) {
    %c0_i32 = arith.constant 0 : i32
    %c0_i32_0 = arith.constant 0 : i32
    return %arg0, %c0_i32 : i32, i32
  }
  func.func @transform_5(%arg0: i32) -> (i32, i32) {
    %c0_i32 = arith.constant 0 : i32
    %c0_i32_0 = arith.constant 0 : i32
    return %arg0, %c0_i32 : i32, i32
  }
}

module attributes {stable_mosaic.version = 11 : i64} {
  func.func @_fused_conv_kernel(%arg0: i32, %arg1: memref<128x896xbf16, #tpu.memory_space<vmem>>, %arg2: memref<896x64xbf16, #tpu.memory_space<vmem>>, %arg3: memref<1x64xf32, #tpu.memory_space<vmem>>, %arg4: memref<1x64xf32, #tpu.memory_space<vmem>>, %arg5: memref<128x64xf32, #tpu.memory_space<vmem>>) attributes {dimension_semantics = [#tpu.dimension_semantics<parallel>], iteration_bounds = array<i64: 1>, scalar_prefetch = 0 : i64, scratch_operands = 0 : i64, tpu.core_type = #tpu.core_type<tc>, window_params = [{transform_indices = @transform_0, window_bounds = array<i64: 128, 896>}, {pipeline_mode = #tpu.pipeline_mode<synchronous>, transform_indices = @transform_1, window_bounds = array<i64: 896, 64>}, {pipeline_mode = #tpu.pipeline_mode<synchronous>, transform_indices = @transform_2, window_bounds = array<i64: 1, 64>}, {pipeline_mode = #tpu.pipeline_mode<synchronous>, transform_indices = @transform_3, window_bounds = array<i64: 1, 64>}, {transform_indices = @transform_4, window_bounds = array<i64: 128, 64>}]} {
    %c0 = arith.constant 0 : index
    %c0_0 = arith.constant 0 : index
    %0 = vector.load %arg1[%c0, %c0_0] : memref<128x896xbf16, #tpu.memory_space<vmem>>, vector<128x896xbf16>
    %c0_1 = arith.constant 0 : index
    %c0_2 = arith.constant 0 : index
    %1 = vector.load %arg2[%c0_1, %c0_2] : memref<896x64xbf16, #tpu.memory_space<vmem>>, vector<896x64xbf16>
    %cst = arith.constant dense<0.000000e+00> : vector<128x64xf32>
    %2 = tpu.matmul %0, %1, %cst {dimension_numbers = #tpu.dot_dimension_numbers<[1], [0], [0], [1], [0, 0, 1, 1], [], []>} : vector<128x896xbf16>, vector<896x64xbf16>, vector<128x64xf32> -> vector<128x64xf32>
    %c0_3 = arith.constant 0 : index
    %c0_4 = arith.constant 0 : index
    %3 = vector.load %arg3[%c0_3, %c0_4] : memref<1x64xf32, #tpu.memory_space<vmem>>, vector<1x64xf32>
    %4 = vector.broadcast %3 : vector<1x64xf32> to vector<128x64xf32>
    %5 = arith.mulf %2, %4 : vector<128x64xf32>
    %c0_5 = arith.constant 0 : index
    %c0_6 = arith.constant 0 : index
    %6 = vector.load %arg4[%c0_5, %c0_6] : memref<1x64xf32, #tpu.memory_space<vmem>>, vector<1x64xf32>
    %7 = vector.broadcast %6 : vector<1x64xf32> to vector<128x64xf32>
    %8 = arith.addf %5, %7 : vector<128x64xf32>
    %cst_7 = arith.constant 0.000000e+00 : f32
    %9 = vector.broadcast %cst_7 : f32 to vector<128x64xf32>
    %10 = arith.maximumf %8, %9 : vector<128x64xf32>
    %c0_8 = arith.constant 0 : index
    %c0_9 = arith.constant 0 : index
    %11 = vector.load %arg5[%c0_8, %c0_9] : memref<128x64xf32, #tpu.memory_space<vmem>>, vector<128x64xf32>
    tpu.vector_store %arg5[%c0_8, %c0_9], %10 {strides = array<i32>} : memref<128x64xf32, #tpu.memory_space<vmem>>, vector<128x64xf32>,
    return
  }
  func.func @transform_0(%arg0: i32) -> (i32, i32) {
    %c0_i32 = arith.constant 0 : i32
    %c0_i32_0 = arith.constant 0 : i32
    return %arg0, %c0_i32 : i32, i32
  }
  func.func @transform_1(%arg0: i32) -> (i32, i32) {
    %c0_i32 = arith.constant 0 : i32
    %c0_i32_0 = arith.constant 0 : i32
    %c0_i32_1 = arith.constant 0 : i32
    return %c0_i32, %c0_i32_0 : i32, i32
  }
  func.func @transform_2(%arg0: i32) -> (i32, i32) {
    %c0_i32 = arith.constant 0 : i32
    %c0_i32_0 = arith.constant 0 : i32
    %c0_i32_1 = arith.constant 0 : i32
    return %c0_i32, %c0_i32_0 : i32, i32
  }
  func.func @transform_3(%arg0: i32) -> (i32, i32) {
    %c0_i32 = arith.constant 0 : i32
    %c0_i32_0 = arith.constant 0 : i32
    %c0_i32_1 = arith.constant 0 : i32
    return %c0_i32, %c0_i32_0 : i32, i32
  }
  func.func @transform_4(%arg0: i32) -> (i32, i32) {
    %c0_i32 = arith.constant 0 : i32
    %c0_i32_0 = arith.constant 0 : i32
    return %arg0, %c0_i32 : i32, i32
  }
}

module attributes {stable_mosaic.version = 11 : i64} {
  func.func @_fused_conv_kernel(%arg0: i32, %arg1: memref<128x32xbf16, #tpu.memory_space<vmem>>, %arg2: memref<32x64xbf16, #tpu.memory_space<vmem>>, %arg3: memref<1x64xf32, #tpu.memory_space<vmem>>, %arg4: memref<1x64xf32, #tpu.memory_space<vmem>>, %arg5: memref<128x64xf32, #tpu.memory_space<vmem>>) attributes {dimension_semantics = [#tpu.dimension_semantics<parallel>], iteration_bounds = array<i64: 1>, scalar_prefetch = 0 : i64, scratch_operands = 0 : i64, tpu.core_type = #tpu.core_type<tc>, window_params = [{transform_indices = @transform_0, window_bounds = array<i64: 128, 32>}, {pipeline_mode = #tpu.pipeline_mode<synchronous>, transform_indices = @transform_1, window_bounds = array<i64: 32, 64>}, {pipeline_mode = #tpu.pipeline_mode<synchronous>, transform_indices = @transform_2, window_bounds = array<i64: 1, 64>}, {pipeline_mode = #tpu.pipeline_mode<synchronous>, transform_indices = @transform_3, window_bounds = array<i64: 1, 64>}, {transform_indices = @transform_4, window_bounds = array<i64: 128, 64>}]} {
    %c0 = arith.constant 0 : index
    %c0_0 = arith.constant 0 : index
    %0 = vector.load %arg1[%c0, %c0_0] : memref<128x32xbf16, #tpu.memory_space<vmem>>, vector<128x32xbf16>
    %c0_1 = arith.constant 0 : index
    %c0_2 = arith.constant 0 : index
    %1 = vector.load %arg2[%c0_1, %c0_2] : memref<32x64xbf16, #tpu.memory_space<vmem>>, vector<32x64xbf16>
    %cst = arith.constant dense<0.000000e+00> : vector<128x64xf32>
    %2 = tpu.matmul %0, %1, %cst {dimension_numbers = #tpu.dot_dimension_numbers<[1], [0], [0], [1], [0, 0, 1, 1], [], []>} : vector<128x32xbf16>, vector<32x64xbf16>, vector<128x64xf32> -> vector<128x64xf32>
    %c0_3 = arith.constant 0 : index
    %c0_4 = arith.constant 0 : index
    %3 = vector.load %arg3[%c0_3, %c0_4] : memref<1x64xf32, #tpu.memory_space<vmem>>, vector<1x64xf32>
    %4 = vector.broadcast %3 : vector<1x64xf32> to vector<128x64xf32>
    %5 = arith.mulf %2, %4 : vector<128x64xf32>
    %c0_5 = arith.constant 0 : index
    %c0_6 = arith.constant 0 : index
    %6 = vector.load %arg4[%c0_5, %c0_6] : memref<1x64xf32, #tpu.memory_space<vmem>>, vector<1x64xf32>
    %7 = vector.broadcast %6 : vector<1x64xf32> to vector<128x64xf32>
    %8 = arith.addf %5, %7 : vector<128x64xf32>
    %c0_7 = arith.constant 0 : index
    %c0_8 = arith.constant 0 : index
    %9 = vector.load %arg5[%c0_7, %c0_8] : memref<128x64xf32, #tpu.memory_space<vmem>>, vector<128x64xf32>
    tpu.vector_store %arg5[%c0_7, %c0_8], %8 {strides = array<i32>} : memref<128x64xf32, #tpu.memory_space<vmem>>, vector<128x64xf32>,
    return
  }
  func.func @transform_0(%arg0: i32) -> (i32, i32) {
    %c0_i32 = arith.constant 0 : i32
    %c0_i32_0 = arith.constant 0 : i32
    return %arg0, %c0_i32 : i32, i32
  }
  func.func @transform_1(%arg0: i32) -> (i32, i32) {
    %c0_i32 = arith.constant 0 : i32
    %c0_i32_0 = arith.constant 0 : i32
    %c0_i32_1 = arith.constant 0 : i32
    return %c0_i32, %c0_i32_0 : i32, i32
  }
  func.func @transform_2(%arg0: i32) -> (i32, i32) {
    %c0_i32 = arith.constant 0 : i32
    %c0_i32_0 = arith.constant 0 : i32
    %c0_i32_1 = arith.constant 0 : i32
    return %c0_i32, %c0_i32_0 : i32, i32
  }
  func.func @transform_3(%arg0: i32) -> (i32, i32) {
    %c0_i32 = arith.constant 0 : i32
    %c0_i32_0 = arith.constant 0 : i32
    %c0_i32_1 = arith.constant 0 : i32
    return %c0_i32, %c0_i32_0 : i32, i32
  }
  func.func @transform_4(%arg0: i32) -> (i32, i32) {
    %c0_i32 = arith.constant 0 : i32
    %c0_i32_0 = arith.constant 0 : i32
    return %arg0, %c0_i32 : i32, i32
  }
}

module attributes {stable_mosaic.version = 11 : i64} {
  func.func @_fused_conv_kernel(%arg0: i32, %arg1: memref<128x1792xbf16, #tpu.memory_space<vmem>>, %arg2: memref<1792x64xbf16, #tpu.memory_space<vmem>>, %arg3: memref<1x64xf32, #tpu.memory_space<vmem>>, %arg4: memref<1x64xf32, #tpu.memory_space<vmem>>, %arg5: memref<128x64xf32, #tpu.memory_space<vmem>>, %arg6: memref<128x64xf32, #tpu.memory_space<vmem>>) attributes {dimension_semantics = [#tpu.dimension_semantics<parallel>], iteration_bounds = array<i64: 1>, scalar_prefetch = 0 : i64, scratch_operands = 0 : i64, tpu.core_type = #tpu.core_type<tc>, window_params = [{transform_indices = @transform_0, window_bounds = array<i64: 128, 1792>}, {pipeline_mode = #tpu.pipeline_mode<synchronous>, transform_indices = @transform_1, window_bounds = array<i64: 1792, 64>}, {pipeline_mode = #tpu.pipeline_mode<synchronous>, transform_indices = @transform_2, window_bounds = array<i64: 1, 64>}, {pipeline_mode = #tpu.pipeline_mode<synchronous>, transform_indices = @transform_3, window_bounds = array<i64: 1, 64>}, {transform_indices = @transform_4, window_bounds = array<i64: 128, 64>}, {transform_indices = @transform_5, window_bounds = array<i64: 128, 64>}]} {
    %c0 = arith.constant 0 : index
    %c0_0 = arith.constant 0 : index
    %0 = vector.load %arg1[%c0, %c0_0] : memref<128x1792xbf16, #tpu.memory_space<vmem>>, vector<128x1792xbf16>
    %c0_1 = arith.constant 0 : index
    %c0_2 = arith.constant 0 : index
    %1 = vector.load %arg2[%c0_1, %c0_2] : memref<1792x64xbf16, #tpu.memory_space<vmem>>, vector<1792x64xbf16>
    %cst = arith.constant dense<0.000000e+00> : vector<128x64xf32>
    %2 = tpu.matmul %0, %1, %cst {dimension_numbers = #tpu.dot_dimension_numbers<[1], [0], [0], [1], [0, 0, 1, 1], [], []>} : vector<128x1792xbf16>, vector<1792x64xbf16>, vector<128x64xf32> -> vector<128x64xf32>
    %c0_3 = arith.constant 0 : index
    %c0_4 = arith.constant 0 : index
    %3 = vector.load %arg3[%c0_3, %c0_4] : memref<1x64xf32, #tpu.memory_space<vmem>>, vector<1x64xf32>
    %4 = vector.broadcast %3 : vector<1x64xf32> to vector<128x64xf32>
    %5 = arith.mulf %2, %4 : vector<128x64xf32>
    %c0_5 = arith.constant 0 : index
    %c0_6 = arith.constant 0 : index
    %6 = vector.load %arg4[%c0_5, %c0_6] : memref<1x64xf32, #tpu.memory_space<vmem>>, vector<1x64xf32>
    %7 = vector.broadcast %6 : vector<1x64xf32> to vector<128x64xf32>
    %8 = arith.addf %5, %7 : vector<128x64xf32>
    %c0_7 = arith.constant 0 : index
    %c0_8 = arith.constant 0 : index
    %9 = vector.load %arg5[%c0_7, %c0_8] : memref<128x64xf32, #tpu.memory_space<vmem>>, vector<128x64xf32>
    %10 = arith.addf %8, %9 : vector<128x64xf32>
    %cst_9 = arith.constant 0.000000e+00 : f32
    %11 = vector.broadcast %cst_9 : f32 to vector<128x64xf32>
    %12 = arith.maximumf %10, %11 : vector<128x64xf32>
    %c0_10 = arith.constant 0 : index
    %c0_11 = arith.constant 0 : index
    %13 = vector.load %arg6[%c0_10, %c0_11] : memref<128x64xf32, #tpu.memory_space<vmem>>, vector<128x64xf32>
    tpu.vector_store %arg6[%c0_10, %c0_11], %12 {strides = array<i32>} : memref<128x64xf32, #tpu.memory_space<vmem>>, vector<128x64xf32>,
    return
  }
  func.func @transform_0(%arg0: i32) -> (i32, i32) {
    %c0_i32 = arith.constant 0 : i32
    %c0_i32_0 = arith.constant 0 : i32
    return %arg0, %c0_i32 : i32, i32
  }
  func.func @transform_1(%arg0: i32) -> (i32, i32) {
    %c0_i32 = arith.constant 0 : i32
    %c0_i32_0 = arith.constant 0 : i32
    %c0_i32_1 = arith.constant 0 : i32
    return %c0_i32, %c0_i32_0 : i32, i32
  }
  func.func @transform_2(%arg0: i32) -> (i32, i32) {
    %c0_i32 = arith.constant 0 : i32
    %c0_i32_0 = arith.constant 0 : i32
    %c0_i32_1 = arith.constant 0 : i32
    return %c0_i32, %c0_i32_0 : i32, i32
  }
  func.func @transform_3(%arg0: i32) -> (i32, i32) {
    %c0_i32 = arith.constant 0 : i32
    %c0_i32_0 = arith.constant 0 : i32
    %c0_i32_1 = arith.constant 0 : i32
    return %c0_i32, %c0_i32_0 : i32, i32
  }
  func.func @transform_4(%arg0: i32) -> (i32, i32) {
    %c0_i32 = arith.constant 0 : i32
    %c0_i32_0 = arith.constant 0 : i32
    return %arg0, %c0_i32 : i32, i32
  }
  func.func @transform_5(%arg0: i32) -> (i32, i32) {
    %c0_i32 = arith.constant 0 : i32
    %c0_i32_0 = arith.constant 0 : i32
    return %arg0, %c0_i32 : i32, i32
  }
}

module attributes {stable_mosaic.version = 11 : i64} {
  func.func @_fused_conv_kernel(%arg0: i32, %arg1: memref<128x1792xbf16, #tpu.memory_space<vmem>>, %arg2: memref<1792x64xbf16, #tpu.memory_space<vmem>>, %arg3: memref<1x64xf32, #tpu.memory_space<vmem>>, %arg4: memref<1x64xf32, #tpu.memory_space<vmem>>, %arg5: memref<128x64xf32, #tpu.memory_space<vmem>>) attributes {dimension_semantics = [#tpu.dimension_semantics<parallel>], iteration_bounds = array<i64: 1>, scalar_prefetch = 0 : i64, scratch_operands = 0 : i64, tpu.core_type = #tpu.core_type<tc>, window_params = [{transform_indices = @transform_0, window_bounds = array<i64: 128, 1792>}, {pipeline_mode = #tpu.pipeline_mode<synchronous>, transform_indices = @transform_1, window_bounds = array<i64: 1792, 64>}, {pipeline_mode = #tpu.pipeline_mode<synchronous>, transform_indices = @transform_2, window_bounds = array<i64: 1, 64>}, {pipeline_mode = #tpu.pipeline_mode<synchronous>, transform_indices = @transform_3, window_bounds = array<i64: 1, 64>}, {transform_indices = @transform_4, window_bounds = array<i64: 128, 64>}]} {
    %c0 = arith.constant 0 : index
    %c0_0 = arith.constant 0 : index
    %0 = vector.load %arg1[%c0, %c0_0] : memref<128x1792xbf16, #tpu.memory_space<vmem>>, vector<128x1792xbf16>
    %c0_1 = arith.constant 0 : index
    %c0_2 = arith.constant 0 : index
    %1 = vector.load %arg2[%c0_1, %c0_2] : memref<1792x64xbf16, #tpu.memory_space<vmem>>, vector<1792x64xbf16>
    %cst = arith.constant dense<0.000000e+00> : vector<128x64xf32>
    %2 = tpu.matmul %0, %1, %cst {dimension_numbers = #tpu.dot_dimension_numbers<[1], [0], [0], [1], [0, 0, 1, 1], [], []>} : vector<128x1792xbf16>, vector<1792x64xbf16>, vector<128x64xf32> -> vector<128x64xf32>
    %c0_3 = arith.constant 0 : index
    %c0_4 = arith.constant 0 : index
    %3 = vector.load %arg3[%c0_3, %c0_4] : memref<1x64xf32, #tpu.memory_space<vmem>>, vector<1x64xf32>
    %4 = vector.broadcast %3 : vector<1x64xf32> to vector<128x64xf32>
    %5 = arith.mulf %2, %4 : vector<128x64xf32>
    %c0_5 = arith.constant 0 : index
    %c0_6 = arith.constant 0 : index
    %6 = vector.load %arg4[%c0_5, %c0_6] : memref<1x64xf32, #tpu.memory_space<vmem>>, vector<1x64xf32>
    %7 = vector.broadcast %6 : vector<1x64xf32> to vector<128x64xf32>
    %8 = arith.addf %5, %7 : vector<128x64xf32>
    %cst_7 = arith.constant 0.000000e+00 : f32
    %9 = vector.broadcast %cst_7 : f32 to vector<128x64xf32>
    %10 = arith.maximumf %8, %9 : vector<128x64xf32>
    %c0_8 = arith.constant 0 : index
    %c0_9 = arith.constant 0 : index
    %11 = vector.load %arg5[%c0_8, %c0_9] : memref<128x64xf32, #tpu.memory_space<vmem>>, vector<128x64xf32>
    tpu.vector_store %arg5[%c0_8, %c0_9], %10 {strides = array<i32>} : memref<128x64xf32, #tpu.memory_space<vmem>>, vector<128x64xf32>,
    return
  }
  func.func @transform_0(%arg0: i32) -> (i32, i32) {
    %c0_i32 = arith.constant 0 : i32
    %c0_i32_0 = arith.constant 0 : i32
    return %arg0, %c0_i32 : i32, i32
  }
  func.func @transform_1(%arg0: i32) -> (i32, i32) {
    %c0_i32 = arith.constant 0 : i32
    %c0_i32_0 = arith.constant 0 : i32
    %c0_i32_1 = arith.constant 0 : i32
    return %c0_i32, %c0_i32_0 : i32, i32
  }
  func.func @transform_2(%arg0: i32) -> (i32, i32) {
    %c0_i32 = arith.constant 0 : i32
    %c0_i32_0 = arith.constant 0 : i32
    %c0_i32_1 = arith.constant 0 : i32
    return %c0_i32, %c0_i32_0 : i32, i32
  }
  func.func @transform_3(%arg0: i32) -> (i32, i32) {
    %c0_i32 = arith.constant 0 : i32
    %c0_i32_0 = arith.constant 0 : i32
    %c0_i32_1 = arith.constant 0 : i32
    return %c0_i32, %c0_i32_0 : i32, i32
  }
  func.func @transform_4(%arg0: i32) -> (i32, i32) {
    %c0_i32 = arith.constant 0 : i32
    %c0_i32_0 = arith.constant 0 : i32
    return %arg0, %c0_i32 : i32, i32
  }
}

</mosaic_0001>

<llo_original>
// kernel: ggo_forward.10
$region0: #{ggo_forward.10}
  #allocation0 [shape = 'u32[]', space=smem, size = 0x4, offset = 0x4, fixed_abs, tag = 'smem constant byte address 0x4 - core index']
  #allocation1 [shape = 'u32[72,128]{1,0:T(1,128)}', space=vmem, size = 0x9000, scoped, tag = 'internal scratch']
  %s0 = inlined_call_operand.vmem [shape: bf16[8192,384], index: 0, kind: input, shape index: {}]
  %s1 = inlined_call_operand.vmem [shape: bf16[384,32], index: 1, kind: input, shape index: {}]
  %s2 = inlined_call_operand.vmem [shape: f32[1,32], index: 2, kind: input, shape index: {}]
  %s3 = inlined_call_operand.vmem [shape: f32[1,32], index: 3, kind: input, shape index: {}]
  %s4 = inlined_call_operand.vmem [shape: f32[8192,32], index: 4, kind: output, shape index: {}]
  %s5 = sld [smem:[#allocation0]]
  $region49: #{ggo_forward.10} parent=0
    _
  %s7 = ssub.s32 1, %s5
  %s8 = scalar_select 0, %s7, %s5
  loop: start=0, step=1, limit=34
  $region2: #{ggo_forward.10} parent=0 // loop_pre_header
    _
  $region3: #{ggo_forward.10} parent=0 // loop_header
    %s10 = sphi 0, %s14
    %p11 = scmp.ge.s32.totalorder %s10, 34
    %s20 = sphi 0, %s22
    %s23 = sphi 0, %s20
    %s24 = sphi 0, %s23
    %s40 = sphi 0, %s24
    %s44 = sphi 0, %s44
    %s46 = sphi 0, %s44
    %s47 = sphi 0, %s46
    %s61 = sphi 0, %s47
    %s65 = sphi 0, %s65
    %s67 = sphi 0, %s65
    %s68 = sphi 0, %s67
    %s82 = sphi 0, %s68
    %s86 = sphi 0, %s86
    %s88 = sphi 0, %s86
    %s89 = sphi 0, %s88
    %s103 = sphi 0, %s89
    %s109 = sphi 0, %s111
    %s112 = sphi 0, %s109
    %s113 = sphi 0, %s112
    %s129 = sphi 0, %s113
  $region4: #{ggo_forward.10} parent=0 // loop_header_branch
    %13 = sbr.rel (%p11) target = $region8
  $region5: #{ggo_forward.10} parent=0 // loop_body
    %s15 = ssub.s32 %s10, 1
    %s16 = ssub.s32 %s10, 2
    %s17 = sadd.s32 %s10, 1
    %s18 = ssub.s32 %s10, %s17
    %p19 = scmp.eq.s32.totalorder %s18, 0
    %s21 = sadd.s32 %s20, 1
    %s22 = scalar_select %p19, %s20, %s21
    %p25 = pneg %p19
    %p26 = scmp.eq.s32.totalorder %s10, 31
    %p27 = por %p25, %p26
    %p28 = scmp.ne.s32.totalorder %s20, %s23
    %p29 = scmp.eq.s32.totalorder %s10, 0
    %p30 = por %p28, %p29
    %p31 = scmp.ne.s32.totalorder %s20, %s23
    %p32 = scmp.eq.s32.totalorder %s15, 31
    %p33 = por %p31, %p32
    %p34 = scmp.ne.s32.totalorder %s23, %s24
    %p35 = scmp.eq.s32.totalorder %s15, 0
    %p36 = por %p34, %p35
    %p37 = scmp.ne.s32.totalorder %s23, %s24
    %p38 = scmp.eq.s32.totalorder %s16, 31
    %p39 = por %p37, %p38
    %p41 = scmp.ne.s32.totalorder %s24, %s40
    %p42 = scmp.eq.s32.totalorder %s16, 0
    %p43 = por %p41, %p42
    %s45 = sadd.s32 %s44, 1
    %p48 = scmp.eq.s32.totalorder %s10, 31
    %p49 = scmp.ne.s32.totalorder %s44, %s46
    %p50 = scmp.eq.s32.totalorder %s10, 0
    %p51 = por %p49, %p50
    %p52 = scmp.ne.s32.totalorder %s44, %s46
    %p53 = scmp.eq.s32.totalorder %s15, 31
    %p54 = por %p52, %p53
    %p55 = scmp.ne.s32.totalorder %s46, %s47
    %p56 = scmp.eq.s32.totalorder %s15, 0
    %p57 = por %p55, %p56
    %p58 = scmp.ne.s32.totalorder %s46, %s47
    %p59 = scmp.eq.s32.totalorder %s16, 31
    %p60 = por %p58, %p59
    %p62 = scmp.ne.s32.totalorder %s47, %s61
    %p63 = scmp.eq.s32.totalorder %s16, 0
    %p64 = por %p62, %p63
    %s66 = sadd.s32 %s65, 1
    %p69 = scmp.eq.s32.totalorder %s10, 31
    %p70 = scmp.ne.s32.totalorder %s65, %s67
    %p71 = scmp.eq.s32.totalorder %s10, 0
    %p72 = por %p70, %p71
    %p73 = scmp.ne.s32.totalorder %s65, %s67
    %p74 = scmp.eq.s32.totalorder %s15, 31
    %p75 = por %p73, %p74
    %p76 = scmp.ne.s32.totalorder %s67, %s68
    %p77 = scmp.eq.s32.totalorder %s15, 0
    %p78 = por %p76, %p77
    %p79 = scmp.ne.s32.totalorder %s67, %s68
    %p80 = scmp.eq.s32.totalorder %s16, 31
    %p81 = por %p79, %p80
    %p83 = scmp.ne.s32.totalorder %s68, %s82
    %p84 = scmp.eq.s32.totalorder %s16, 0
    %p85 = por %p83, %p84
    %s87 = sadd.s32 %s86, 1
    %p90 = scmp.eq.s32.totalorder %s10, 31
    %p91 = scmp.ne.s32.totalorder %s86, %s88
    %p92 = scmp.eq.s32.totalorder %s10, 0
    %p93 = por %p91, %p92
    %p94 = scmp.ne.s32.totalorder %s86, %s88
    %p95 = scmp.eq.s32.totalorder %s15, 31
    %p96 = por %p94, %p95
    %p97 = scmp.ne.s32.totalorder %s88, %s89
    %p98 = scmp.eq.s32.totalorder %s15, 0
    %p99 = por %p97, %p98
    %p100 = scmp.ne.s32.totalorder %s88, %s89
    %p101 = scmp.eq.s32.totalorder %s16, 31
    %p102 = por %p100, %p101
    %p104 = scmp.ne.s32.totalorder %s89, %s103
    %p105 = scmp.eq.s32.totalorder %s16, 0
    %p106 = por %p104, %p105
    %s107 = ssub.s32 %s10, %s17
    %p108 = scmp.eq.s32.totalorder %s107, 0
    %s110 = sadd.s32 %s109, 1
    %s111 = scalar_select %p108, %s109, %s110
    %p114 = pneg %p108
    %p115 = scmp.eq.s32.totalorder %s10, 31
    %p116 = por %p114, %p115
    %p117 = scmp.ne.s32.totalorder %s109, %s112
    %p118 = scmp.eq.s32.totalorder %s10, 0
    %p119 = por %p117, %p118
    %p120 = scmp.ne.s32.totalorder %s109, %s112
    %p121 = scmp.eq.s32.totalorder %s15, 31
    %p122 = por %p120, %p121
    %p123 = scmp.ne.s32.totalorder %s112, %s113
    %p124 = scmp.eq.s32.totalorder %s15, 0
    %p125 = por %p123, %p124
    %p126 = scmp.ne.s32.totalorder %s112, %s113
    %p127 = scmp.eq.s32.totalorder %s16, 31
    %p128 = por %p126, %p127
    %p130 = scmp.ne.s32.totalorder %s113, %s129
    %p131 = scmp.eq.s32.totalorder %s16, 0
    %p132 = por %p130, %p131
    %p133 = scmp.le.s32.totalorder 1, %s10
    %p134 = scmp.lt.s32.totalorder %s10, 33
    %p135 = pnand %p133, %p134
    %p136 = pneg %p135
    // Predicated region
    $region9: #{ggo_forward.10} parent=5 // pred_check
      _
    $region10: #{ggo_forward.10} parent=5 // pred_check_branch
      %138 = sbr.rel (%p135) target = $region12
    $region11: #{ggo_forward.10} parent=5 // pred_region
      %s139 = ssub.s32 %s10, 1
      // Predicated region
      $region13: #{ggo_forward.10} parent=11 // pred_check
        %p140 = pneg %p57
      $region14: #{ggo_forward.10} parent=11 // pred_check_branch
        %142 = sbr.rel (%p140) target = $region16
      $region15: #{ggo_forward.10} parent=11 // pred_region
        _
      $region16: #{ggo_forward.10} parent=11 // pred_fallthru
        _
      // Predicated region
      $region17: #{ggo_forward.10} parent=11 // pred_check
        %p143 = pneg %p78
      $region18: #{ggo_forward.10} parent=11 // pred_check_branch
        %145 = sbr.rel (%p143) target = $region20
      $region19: #{ggo_forward.10} parent=11 // pred_region
        _
      $region20: #{ggo_forward.10} parent=11 // pred_fallthru
        _
      // Predicated region
      $region21: #{ggo_forward.10} parent=11 // pred_check
        %p146 = pneg %p99
      $region22: #{ggo_forward.10} parent=11 // pred_check_branch
        %148 = sbr.rel (%p146) target = $region24
      $region23: #{ggo_forward.10} parent=11 // pred_region
        _
      $region24: #{ggo_forward.10} parent=11 // pred_fallthru
        _
    $region12: #{ggo_forward.10} parent=5 // pred_fallthru
      _
    %p149 = scmp.lt.s32.totalorder %s10, 32
    // Predicated region
    $region25: #{ggo_forward.10} parent=5 // pred_check
      %p150 = pneg %p149
    $region26: #{ggo_forward.10} parent=5 // pred_check_branch
      %152 = sbr.rel (%p150) target = $region28
    $region27: #{ggo_forward.10} parent=5 // pred_region
      // Predicated region
      $region29: #{ggo_forward.10} parent=27 // pred_check
        %p153 = pneg %p30
      $region30: #{ggo_forward.10} parent=27 // pred_check_branch
        %155 = sbr.rel (%p153) target = $region32
      $region31: #{ggo_forward.10} parent=27 // pred_region
        %s156 = smul.u32 32, %s10
        %p157 = scmp.lt.s32.totalorder %s156, 1023
        %s158 = scalar_select %p157, %s156, 1023
        %s159 = smul.addr %s158, 3
        %s160 = smul.addr %s159, 4
        %s161 = scalar_lea.vmem %s0, %s160
        %s162 = smul.u32 32, %s10
      $region32: #{ggo_forward.10} parent=27 // pred_fallthru
        _
    $region28: #{ggo_forward.10} parent=5 // pred_fallthru
      _
    %p163 = scmp.le.s32.totalorder 1, %s10
    %p164 = scmp.lt.s32.totalorder %s10, 33
    %p165 = pnand %p163, %p164
    %p166 = pneg %p165
    // Predicated region
    $region33: #{ggo_forward.10} parent=5 // pred_check
      _
    $region34: #{ggo_forward.10} parent=5 // pred_check_branch
      %168 = sbr.rel (%p165) target = $region36
    $region35: #{ggo_forward.10} parent=5 // pred_region
      %s169 = ssub.s32 %s10, 1
      %s170 = smul.u32 32, %s15
      %p171 = scmp.lt.s32.totalorder %s170, 1023
      %s172 = scalar_select %p171, %s170, 1023
      %s173 = smul.addr %s172, 3
      %s174 = smul.addr %s173, 4
      %s175 = scalar_lea.vmem %s0, %s174
      %p176 = pneg %p36
      %p177 = pneg %p33
      %p178 = pneg %p57
      %p179 = pneg %p54
      %p180 = pneg %p78
      %p181 = pneg %p75
      %p182 = pneg %p99
      %p183 = pneg %p96
      %p184 = pneg %p125
      %p185 = pneg %p122
      %s186 = smul.u32 32, %s15
      %p187 = scmp.lt.s32.totalorder %s186, 1023
      %s188 = scalar_select %p187, %s186, 1023
      %s189 = smul.addr %s188, 8
      %s190 = scalar_lea.vmem %s4, %s189
      %s191 = smul.u32 32, %s15
      %p192 = scmp.lt.s32.totalorder %s191, 1023
      %s193 = scalar_select %p192, %s191, 1023
      %s194 = smul.addr %s193, 3
      %s195 = smul.addr %s194, 4
      %s196 = scalar_lea.vmem %s0, %s195
      %s197 = smul.u32 32, %s15
      %s198 = smul.u32 32, %s15
      %p199 = scmp.lt.s32.totalorder %s198, 1023
      %s200 = scalar_select %p199, %s198, 1023
      %s201 = smul.addr %s200, 8
      %s202 = scalar_lea.vmem %s4, %s201
      %s203 = smul.u32 32, %s15
      %v204 = vld [vmem:[%s196] sm:$0xff]
      %v205 = vld [vmem:[%s196 + $0x8] sm:$0xf]
      %v206 = vld [vmem:[%s196 + $0xc] sm:$0xff]
      %v207 = vld [vmem:[%s196 + $0x14] sm:$0xf]
      %v208 = vld [vmem:[%s196 + $0x18] sm:$0xff]
      %v209 = vld [vmem:[%s196 + $0x20] sm:$0xf]
      %v210 = vld [vmem:[%s196 + $0x24] sm:$0xff]
      %v211 = vld [vmem:[%s196 + $0x2c] sm:$0xf]
      %v212 = vld [vmem:[%s196 + $0x30] sm:$0xff]
      %v213 = vld [vmem:[%s196 + $0x38] sm:$0xf]
      %v214 = vld [vmem:[%s196 + $0x3c] sm:$0xff]
      %v215 = vld [vmem:[%s196 + $0x44] sm:$0xf]
      %v216 = vld [vmem:[%s196 + $0x48] sm:$0xff]
      %v217 = vld [vmem:[%s196 + $0x50] sm:$0xf]
      %v218 = vld [vmem:[%s196 + $0x54] sm:$0xff]
      %v219 = vld [vmem:[%s196 + $0x5c] sm:$0xf]
      %v220 = vld [vmem:[%s196 + $0x60] sm:$0xff]
      %v221 = vld [vmem:[%s196 + $0x68] sm:$0xf]
      %v222 = vld [vmem:[%s196 + $0x6c] sm:$0xff]
      %v223 = vld [vmem:[%s196 + $0x74] sm:$0xf]
      %v224 = vld [vmem:[%s196 + $0x78] sm:$0xff]
      %v225 = vld [vmem:[%s196 + $0x80] sm:$0xf]
      %v226 = vld [vmem:[%s196 + $0x84] sm:$0xff]
      %v227 = vld [vmem:[%s196 + $0x8c] sm:$0xf]
      %v228 = vld [vmem:[%s196 + $0x90] sm:$0xff]
      %v229 = vld [vmem:[%s196 + $0x98] sm:$0xf]
      %v230 = vld [vmem:[%s196 + $0x9c] sm:$0xff]
      %v231 = vld [vmem:[%s196 + $0xa4] sm:$0xf]
      %v232 = vld [vmem:[%s196 + $0xa8] sm:$0xff]
      %v233 = vld [vmem:[%s196 + $0xb0] sm:$0xf]
      %v234 = vld [vmem:[%s196 + $0xb4] sm:$0xff]
      %v235 = vld [vmem:[%s196 + $0xbc] sm:$0xf]
      %v236 = vld [vmem:[%s196 + $0xc0] sm:$0xff]
      %v237 = vld [vmem:[%s196 + $0xc8] sm:$0xf]
      %v238 = vld [vmem:[%s196 + $0xcc] sm:$0xff]
      %v239 = vld [vmem:[%s196 + $0xd4] sm:$0xf]
      %v240 = vld [vmem:[%s196 + $0xd8] sm:$0xff]
      %v241 = vld [vmem:[%s196 + $0xe0] sm:$0xf]
      %v242 = vld [vmem:[%s196 + $0xe4] sm:$0xff]
      %v243 = vld [vmem:[%s196 + $0xec] sm:$0xf]
      %v244 = vld [vmem:[%s196 + $0xf0] sm:$0xff]
      %v245 = vld [vmem:[%s196 + $0xf8] sm:$0xf]
      %v246 = vld [vmem:[%s196 + $0xfc] sm:$0xff]
      %v247 = vld [vmem:[%s196 + $0x104] sm:$0xf]
      %v248 = vld [vmem:[%s196 + $0x108] sm:$0xff]
      %v249 = vld [vmem:[%s196 + $0x110] sm:$0xf]
      %v250 = vld [vmem:[%s196 + $0x114] sm:$0xff]
      %v251 = vld [vmem:[%s196 + $0x11c] sm:$0xf]
      %v252 = vld [vmem:[%s196 + $0x120] sm:$0xff]
      %v253 = vld [vmem:[%s196 + $0x128] sm:$0xf]
      %v254 = vld [vmem:[%s196 + $0x12c] sm:$0xff]
      %v255 = vld [vmem:[%s196 + $0x134] sm:$0xf]
      %v256 = vld [vmem:[%s196 + $0x138] sm:$0xff]
      %v257 = vld [vmem:[%s196 + $0x140] sm:$0xf]
      %v258 = vld [vmem:[%s196 + $0x144] sm:$0xff]
      %v259 = vld [vmem:[%s196 + $0x14c] sm:$0xf]
      %v260 = vld [vmem:[%s196 + $0x150] sm:$0xff]
      %v261 = vld [vmem:[%s196 + $0x158] sm:$0xf]
      %v262 = vld [vmem:[%s196 + $0x15c] sm:$0xff]
      %v263 = vld [vmem:[%s196 + $0x164] sm:$0xf]
      %v264 = vld [vmem:[%s196 + $0x168] sm:$0xff]
      %v265 = vld [vmem:[%s196 + $0x170] sm:$0xf]
      %v266 = vld [vmem:[%s196 + $0x174] sm:$0xff]
      %v267 = vld [vmem:[%s196 + $0x17c] sm:$0xf]
      %v268 = vld [vmem:[%s1] sm:$0xf]
      %v269 = vld [vmem:[%s1 + $0x4] sm:$0xf]
      %v270 = vld [vmem:[%s1 + $0x8] sm:$0xf]
      %v271 = vld [vmem:[%s1 + $0xc] sm:$0xf]
      %v272 = vld [vmem:[%s1 + $0x10] sm:$0xf]
      %v273 = vld [vmem:[%s1 + $0x14] sm:$0xf]
      %v274 = vld [vmem:[%s1 + $0x18] sm:$0xf]
      %v275 = vld [vmem:[%s1 + $0x1c] sm:$0xf]
      %v276 = vld [vmem:[%s1 + $0x20] sm:$0xf]
      %v277 = vld [vmem:[%s1 + $0x24] sm:$0xf]
      %v278 = vld [vmem:[%s1 + $0x28] sm:$0xf]
      %v279 = vld [vmem:[%s1 + $0x2c] sm:$0xf]
      %v280 = vld [vmem:[%s1 + $0x30] sm:$0xf]
      %v281 = vld [vmem:[%s1 + $0x34] sm:$0xf]
      %v282 = vld [vmem:[%s1 + $0x38] sm:$0xf]
      %v283 = vld [vmem:[%s1 + $0x3c] sm:$0xf]
      %v284 = vld [vmem:[%s1 + $0x40] sm:$0xf]
      %v285 = vld [vmem:[%s1 + $0x44] sm:$0xf]
      %v286 = vld [vmem:[%s1 + $0x48] sm:$0xf]
      %v287 = vld [vmem:[%s1 + $0x4c] sm:$0xf]
      %v288 = vld [vmem:[%s1 + $0x50] sm:$0xf]
      %v289 = vld [vmem:[%s1 + $0x54] sm:$0xf]
      %v290 = vld [vmem:[%s1 + $0x58] sm:$0xf]
      %v291 = vld [vmem:[%s1 + $0x5c] sm:$0xf]
      %v292 = vld [vmem:[%s1 + $0x60] sm:$0xf]
      %v293 = vld [vmem:[%s1 + $0x64] sm:$0xf]
      %v294 = vld [vmem:[%s1 + $0x68] sm:$0xf]
      %v295 = vld [vmem:[%s1 + $0x6c] sm:$0xf]
      %v296 = vld [vmem:[%s1 + $0x70] sm:$0xf]
      %v297 = vld [vmem:[%s1 + $0x74] sm:$0xf]
      %v298 = vld [vmem:[%s1 + $0x78] sm:$0xf]
      %v299 = vld [vmem:[%s1 + $0x7c] sm:$0xf]
      %v300 = vld [vmem:[%s1 + $0x80] sm:$0xf]
      %v301 = vld [vmem:[%s1 + $0x84] sm:$0xf]
      %v302 = vld [vmem:[%s1 + $0x88] sm:$0xf]
      %v303 = vld [vmem:[%s1 + $0x8c] sm:$0xf]
      %v304 = vld [vmem:[%s1 + $0x90] sm:$0xf]
      %v305 = vld [vmem:[%s1 + $0x94] sm:$0xf]
      %v306 = vld [vmem:[%s1 + $0x98] sm:$0xf]
      %v307 = vld [vmem:[%s1 + $0x9c] sm:$0xf]
      %v308 = vld [vmem:[%s1 + $0xa0] sm:$0xf]
      %v309 = vld [vmem:[%s1 + $0xa4] sm:$0xf]
      %v310 = vld [vmem:[%s1 + $0xa8] sm:$0xf]
      %v311 = vld [vmem:[%s1 + $0xac] sm:$0xf]
      %v312 = vld [vmem:[%s1 + $0xb0] sm:$0xf]
      %v313 = vld [vmem:[%s1 + $0xb4] sm:$0xf]
      %v314 = vld [vmem:[%s1 + $0xb8] sm:$0xf]
      %v315 = vld [vmem:[%s1 + $0xbc] sm:$0xf]
      %v380 = vunpack.c.l.b16 %v204
      %v381 = vunpack.c.h.b16 %v204
      %v382 = vunpack.c.l.b16 %v205
      %v383 = vunpack.c.l.b16 %v206
      %v384 = vunpack.c.h.b16 %v206
      %v385 = vunpack.c.l.b16 %v207
      %v386 = vunpack.c.l.b16 %v208
      %v387 = vunpack.c.h.b16 %v208
      %v388 = vunpack.c.l.b16 %v209
      %v389 = vunpack.c.l.b16 %v210
      %v390 = vunpack.c.h.b16 %v210
      %v391 = vunpack.c.l.b16 %v211
      %v392 = vunpack.c.l.b16 %v212
      %v393 = vunpack.c.h.b16 %v212
      %v394 = vunpack.c.l.b16 %v213
      %v395 = vunpack.c.l.b16 %v214
      %v396 = vunpack.c.h.b16 %v214
      %v397 = vunpack.c.l.b16 %v215
      %v398 = vunpack.c.l.b16 %v216
      %v399 = vunpack.c.h.b16 %v216
      %v400 = vunpack.c.l.b16 %v217
      %v401 = vunpack.c.l.b16 %v218
      %v402 = vunpack.c.h.b16 %v218
      %v403 = vunpack.c.l.b16 %v219
      %v404 = vunpack.c.l.b16 %v220
      %v405 = vunpack.c.h.b16 %v220
      %v406 = vunpack.c.l.b16 %v221
      %v407 = vunpack.c.l.b16 %v222
      %v408 = vunpack.c.h.b16 %v222
      %v409 = vunpack.c.l.b16 %v223
      %v410 = vunpack.c.l.b16 %v224
      %v411 = vunpack.c.h.b16 %v224
      %v412 = vunpack.c.l.b16 %v225
      %v413 = vunpack.c.l.b16 %v226
      %v414 = vunpack.c.h.b16 %v226
      %v415 = vunpack.c.l.b16 %v227
      %v416 = vunpack.c.l.b16 %v228
      %v417 = vunpack.c.h.b16 %v228
      %v418 = vunpack.c.l.b16 %v229
      %v419 = vunpack.c.l.b16 %v230
      %v420 = vunpack.c.h.b16 %v230
      %v421 = vunpack.c.l.b16 %v231
      %v422 = vunpack.c.l.b16 %v232
      %v423 = vunpack.c.h.b16 %v232
      %v424 = vunpack.c.l.b16 %v233
      %v425 = vunpack.c.l.b16 %v234
      %v426 = vunpack.c.h.b16 %v234
      %v427 = vunpack.c.l.b16 %v235
      %v428 = vunpack.c.l.b16 %v236
      %v429 = vunpack.c.h.b16 %v236
      %v430 = vunpack.c.l.b16 %v237
      %v431 = vunpack.c.l.b16 %v238
      %v432 = vunpack.c.h.b16 %v238
      %v433 = vunpack.c.l.b16 %v239
      %v434 = vunpack.c.l.b16 %v240
      %v435 = vunpack.c.h.b16 %v240
      %v436 = vunpack.c.l.b16 %v241
      %v437 = vunpack.c.l.b16 %v242
      %v438 = vunpack.c.h.b16 %v242
      %v439 = vunpack.c.l.b16 %v243
      %v440 = vunpack.c.l.b16 %v244
      %v441 = vunpack.c.h.b16 %v244
      %v442 = vunpack.c.l.b16 %v245
      %v443 = vunpack.c.l.b16 %v246
      %v444 = vunpack.c.h.b16 %v246
      %v445 = vunpack.c.l.b16 %v247
      %v446 = vunpack.c.l.b16 %v248
      %v447 = vunpack.c.h.b16 %v248
      %v448 = vunpack.c.l.b16 %v249
      %v449 = vunpack.c.l.b16 %v250
      %v450 = vunpack.c.h.b16 %v250
      %v451 = vunpack.c.l.b16 %v251
      %v452 = vunpack.c.l.b16 %v252
      %v453 = vunpack.c.h.b16 %v252
      %v454 = vunpack.c.l.b16 %v253
      %v455 = vunpack.c.l.b16 %v254
      %v456 = vunpack.c.h.b16 %v254
      %v457 = vunpack.c.l.b16 %v255
      %v458 = vunpack.c.l.b16 %v256
      %v459 = vunpack.c.h.b16 %v256
      %v460 = vunpack.c.l.b16 %v257
      %v461 = vunpack.c.l.b16 %v258
      %v462 = vunpack.c.h.b16 %v258
      %v463 = vunpack.c.l.b16 %v259
      %v464 = vunpack.c.l.b16 %v260
      %v465 = vunpack.c.h.b16 %v260
      %v466 = vunpack.c.l.b16 %v261
      %v467 = vunpack.c.l.b16 %v262
      %v468 = vunpack.c.h.b16 %v262
      %v469 = vunpack.c.l.b16 %v263
      %v470 = vunpack.c.l.b16 %v264
      %v471 = vunpack.c.h.b16 %v264
      %v472 = vunpack.c.l.b16 %v265
      %v473 = vunpack.c.l.b16 %v266
      %v474 = vunpack.c.h.b16 %v266
      %v475 = vunpack.c.l.b16 %v267
      %v476 = vpack.c.b16 %v383, %v380
      %v477 = vpack.c.b16 %v384, %v381
      %v478 = vpack.c.b16 %v385, %v382
      %v479 = vpack.c.b16 %v389, %v386
      %v480 = vpack.c.b16 %v390, %v387
      %v481 = vpack.c.b16 %v391, %v388
      %v482 = vpack.c.b16 %v395, %v392
      %v483 = vpack.c.b16 %v396, %v393
      %v484 = vpack.c.b16 %v397, %v394
      %v485 = vpack.c.b16 %v401, %v398
      %v486 = vpack.c.b16 %v402, %v399
      %v487 = vpack.c.b16 %v403, %v400
      %v488 = vpack.c.b16 %v407, %v404
      %v489 = vpack.c.b16 %v408, %v405
      %v490 = vpack.c.b16 %v409, %v406
      %v491 = vpack.c.b16 %v413, %v410
      %v492 = vpack.c.b16 %v414, %v411
      %v493 = vpack.c.b16 %v415, %v412
      %v494 = vpack.c.b16 %v419, %v416
      %v495 = vpack.c.b16 %v420, %v417
      %v496 = vpack.c.b16 %v421, %v418
      %v497 = vpack.c.b16 %v425, %v422
      %v498 = vpack.c.b16 %v426, %v423
      %v499 = vpack.c.b16 %v427, %v424
      %v500 = vpack.c.b16 %v431, %v428
      %v501 = vpack.c.b16 %v432, %v429
      %v502 = vpack.c.b16 %v433, %v430
      %v503 = vpack.c.b16 %v437, %v434
      %v504 = vpack.c.b16 %v438, %v435
      %v505 = vpack.c.b16 %v439, %v436
      %v506 = vpack.c.b16 %v443, %v440
      %v507 = vpack.c.b16 %v444, %v441
      %v508 = vpack.c.b16 %v445, %v442
      %v509 = vpack.c.b16 %v449, %v446
      %v510 = vpack.c.b16 %v450, %v447
      %v511 = vpack.c.b16 %v451, %v448
      %v512 = vpack.c.b16 %v455, %v452
      %v513 = vpack.c.b16 %v456, %v453
      %v514 = vpack.c.b16 %v457, %v454
      %v515 = vpack.c.b16 %v461, %v458
      %v516 = vpack.c.b16 %v462, %v459
      %v517 = vpack.c.b16 %v463, %v460
      %v518 = vpack.c.b16 %v467, %v464
      %v519 = vpack.c.b16 %v468, %v465
      %v520 = vpack.c.b16 %v469, %v466
      %v521 = vpack.c.b16 %v473, %v470
      %v522 = vpack.c.b16 %v474, %v471
      %v523 = vpack.c.b16 %v475, %v472
      %v620 = vunpack.c.l.b16 %v268
      %v621 = vunpack.c.l.b16 %v269
      %v622 = vunpack.c.l.b16 %v270
      %v623 = vunpack.c.l.b16 %v271
      %v624 = vunpack.c.l.b16 %v272
      %v625 = vunpack.c.l.b16 %v273
      %v626 = vunpack.c.l.b16 %v274
      %v627 = vunpack.c.l.b16 %v275
      %v628 = vunpack.c.l.b16 %v276
      %v629 = vunpack.c.l.b16 %v277
      %v630 = vunpack.c.l.b16 %v278
      %v631 = vunpack.c.l.b16 %v279
      %v632 = vunpack.c.l.b16 %v280
      %v633 = vunpack.c.l.b16 %v281
      %v634 = vunpack.c.l.b16 %v282
      %v635 = vunpack.c.l.b16 %v283
      %v636 = vunpack.c.l.b16 %v284
      %v637 = vunpack.c.l.b16 %v285
      %v638 = vunpack.c.l.b16 %v286
      %v639 = vunpack.c.l.b16 %v287
      %v640 = vunpack.c.l.b16 %v288
      %v641 = vunpack.c.l.b16 %v289
      %v642 = vunpack.c.l.b16 %v290
      %v643 = vunpack.c.l.b16 %v291
      %v644 = vunpack.c.l.b16 %v292
      %v645 = vunpack.c.l.b16 %v293
      %v646 = vunpack.c.l.b16 %v294
      %v647 = vunpack.c.l.b16 %v295
      %v648 = vunpack.c.l.b16 %v296
      %v649 = vunpack.c.l.b16 %v297
      %v650 = vunpack.c.l.b16 %v298
      %v651 = vunpack.c.l.b16 %v299
      %v652 = vunpack.c.l.b16 %v300
      %v653 = vunpack.c.l.b16 %v301
      %v654 = vunpack.c.l.b16 %v302
      %v655 = vunpack.c.l.b16 %v303
      %v656 = vunpack.c.l.b16 %v304
      %v657 = vunpack.c.l.b16 %v305
      %v658 = vunpack.c.l.b16 %v306
      %v659 = vunpack.c.l.b16 %v307
      %v660 = vunpack.c.l.b16 %v308
      %v661 = vunpack.c.l.b16 %v309
      %v662 = vunpack.c.l.b16 %v310
      %v663 = vunpack.c.l.b16 %v311
      %v664 = vunpack.c.l.b16 %v312
      %v665 = vunpack.c.l.b16 %v313
      %v666 = vunpack.c.l.b16 %v314
      %v667 = vunpack.c.l.b16 %v315
      %v668 = vpack.c.b16 %v621, %v620
      %v669 = vpack.c.b16 %v623, %v622
      %v670 = vpack.c.b16 %v625, %v624
      %v671 = vpack.c.b16 %v627, %v626
      %v672 = vpack.c.b16 %v629, %v628
      %v673 = vpack.c.b16 %v631, %v630
      %v674 = vpack.c.b16 %v633, %v632
      %v675 = vpack.c.b16 %v635, %v634
      %v676 = vpack.c.b16 %v637, %v636
      %v677 = vpack.c.b16 %v639, %v638
      %v678 = vpack.c.b16 %v641, %v640
      %v679 = vpack.c.b16 %v643, %v642
      %v680 = vpack.c.b16 %v645, %v644
      %v681 = vpack.c.b16 %v647, %v646
      %v682 = vpack.c.b16 %v649, %v648
      %v683 = vpack.c.b16 %v651, %v650
      %v684 = vpack.c.b16 %v653, %v652
      %v685 = vpack.c.b16 %v655, %v654
      %v686 = vpack.c.b16 %v657, %v656
      %v687 = vpack.c.b16 %v659, %v658
      %v688 = vpack.c.b16 %v661, %v660
      %v689 = vpack.c.b16 %v663, %v662
      %v690 = vpack.c.b16 %v665, %v664
      %v691 = vpack.c.b16 %v667, %v666
      %716 = vmatpush.bf16.msra.mxu0 %v675
      %717 = vmatpush.bf16.msra.mxu0 %v674
      %718 = vmatpush.bf16.msra.mxu0 %v673
      %719 = vmatpush.bf16.msra.mxu0 %v672
      %720 = vmatpush.bf16.msra.mxu0 %v671
      %721 = vmatpush.bf16.msra.mxu0 %v670
      %722 = vmatpush.bf16.msra.mxu0 %v669
      %723 = vmatpush.bf16.msra.mxu0 %v668
      %724 = vmatmul.bf16.gmra.mxu0 %v476
      %v725 = vpop.f32.mrf.mxu0
      %v726 = vadd.f32 0.0, %v725
      %v727 = vpop.f32.mrf.mxu0
      %v728 = vadd.f32 0.0, %v727
      %729 = vmatmul.bf16.gmra.mxu0 %v479
      %v730 = vpop.f32.mrf.mxu0
      %v731 = vadd.f32 0.0, %v730
      %v732 = vpop.f32.mrf.mxu0
      %v733 = vadd.f32 0.0, %v732
      %734 = vmatmul.bf16.gmra.mxu0 %v482
      %v735 = vpop.f32.mrf.mxu0
      %v736 = vadd.f32 0.0, %v735
      %v737 = vpop.f32.mrf.mxu0
      %v738 = vadd.f32 0.0, %v737
      %739 = vmatmul.bf16.gmra.mxu0 %v485
      %v740 = vpop.f32.mrf.mxu0
      %v741 = vadd.f32 0.0, %v740
      %v742 = vpop.f32.mrf.mxu0
      %v743 = vadd.f32 0.0, %v742
      %744 = vmatmul.bf16.gmra.mxu0 %v488
      %v745 = vpop.f32.mrf.mxu0
      %v746 = vadd.f32 0.0, %v745
      %v747 = vpop.f32.mrf.mxu0
      %v748 = vadd.f32 0.0, %v747
      %749 = vmatmul.bf16.gmra.mxu0 %v491
      %v750 = vpop.f32.mrf.mxu0
      %v751 = vadd.f32 0.0, %v750
      %v752 = vpop.f32.mrf.mxu0
      %v753 = vadd.f32 0.0, %v752
      %754 = vmatmul.bf16.gmra.mxu0 %v494
      %v755 = vpop.f32.mrf.mxu0
      %v756 = vadd.f32 0.0, %v755
      %v757 = vpop.f32.mrf.mxu0
      %v758 = vadd.f32 0.0, %v757
      %759 = vmatmul.bf16.gmra.mxu0 %v497
      %v760 = vpop.f32.mrf.mxu0
      %v761 = vadd.f32 0.0, %v760
      %v762 = vpop.f32.mrf.mxu0
      %v763 = vadd.f32 0.0, %v762
      %764 = vmatmul.bf16.gmra.mxu0 %v500
      %v765 = vpop.f32.mrf.mxu0
      %v766 = vadd.f32 0.0, %v765
      %v767 = vpop.f32.mrf.mxu0
      %v768 = vadd.f32 0.0, %v767
      %769 = vmatmul.bf16.gmra.mxu0 %v503
      %v770 = vpop.f32.mrf.mxu0
      %v771 = vadd.f32 0.0, %v770
      %v772 = vpop.f32.mrf.mxu0
      %v773 = vadd.f32 0.0, %v772
      %774 = vmatmul.bf16.gmra.mxu0 %v506
      %v775 = vpop.f32.mrf.mxu0
      %v776 = vadd.f32 0.0, %v775
      %v777 = vpop.f32.mrf.mxu0
      %v778 = vadd.f32 0.0, %v777
      %779 = vmatmul.bf16.gmra.mxu0 %v509
      %v780 = vpop.f32.mrf.mxu0
      %v781 = vadd.f32 0.0, %v780
      %v782 = vpop.f32.mrf.mxu0
      %v783 = vadd.f32 0.0, %v782
      %784 = vmatmul.bf16.gmra.mxu0 %v512
      %v785 = vpop.f32.mrf.mxu0
      %v786 = vadd.f32 0.0, %v785
      %v787 = vpop.f32.mrf.mxu0
      %v788 = vadd.f32 0.0, %v787
      %789 = vmatmul.bf16.gmra.mxu0 %v515
      %v790 = vpop.f32.mrf.mxu0
      %v791 = vadd.f32 0.0, %v790
      %v792 = vpop.f32.mrf.mxu0
      %v793 = vadd.f32 0.0, %v792
      %794 = vmatmul.bf16.gmra.mxu0 %v518
      %v795 = vpop.f32.mrf.mxu0
      %v796 = vadd.f32 0.0, %v795
      %v797 = vpop.f32.mrf.mxu0
      %v798 = vadd.f32 0.0, %v797
      %799 = vmatmul.bf16.gmra.mxu0 %v521
      %v800 = vpop.f32.mrf.mxu0
      %v801 = vadd.f32 0.0, %v800
      %v802 = vpop.f32.mrf.mxu0
      %v803 = vadd.f32 0.0, %v802
      %804 = vdwg.mxu0
      %805 = vmatpush.bf16.msra.mxu0 %v683
      %806 = vmatpush.bf16.msra.mxu0 %v682
      %807 = vmatpush.bf16.msra.mxu0 %v681
      %808 = vmatpush.bf16.msra.mxu0 %v680
      %809 = vmatpush.bf16.msra.mxu0 %v679
      %810 = vmatpush.bf16.msra.mxu0 %v678
      %811 = vmatpush.bf16.msra.mxu0 %v677
      %812 = vmatpush.bf16.msra.mxu0 %v676
      %813 = vmatmul.bf16.gmra.mxu0 %v477
      %v814 = vpop.f32.mrf.mxu0
      %v815 = vadd.f32 %v726, %v814
      %v816 = vpop.f32.mrf.mxu0
      %v817 = vadd.f32 %v728, %v816
      %818 = vmatmul.bf16.gmra.mxu0 %v480
      %v819 = vpop.f32.mrf.mxu0
      %v820 = vadd.f32 %v731, %v819
      %v821 = vpop.f32.mrf.mxu0
      %v822 = vadd.f32 %v733, %v821
      %823 = vmatmul.bf16.gmra.mxu0 %v483
      %v824 = vpop.f32.mrf.mxu0
      %v825 = vadd.f32 %v736, %v824
      %v826 = vpop.f32.mrf.mxu0
      %v827 = vadd.f32 %v738, %v826
      %828 = vmatmul.bf16.gmra.mxu0 %v486
      %v829 = vpop.f32.mrf.mxu0
      %v830 = vadd.f32 %v741, %v829
      %v831 = vpop.f32.mrf.mxu0
      %v832 = vadd.f32 %v743, %v831
      %833 = vmatmul.bf16.gmra.mxu0 %v489
      %v834 = vpop.f32.mrf.mxu0
      %v835 = vadd.f32 %v746, %v834
      %v836 = vpop.f32.mrf.mxu0
      %v837 = vadd.f32 %v748, %v836
      %838 = vmatmul.bf16.gmra.mxu0 %v492
      %v839 = vpop.f32.mrf.mxu0
      %v840 = vadd.f32 %v751, %v839
      %v841 = vpop.f32.mrf.mxu0
      %v842 = vadd.f32 %v753, %v841
      %843 = vmatmul.bf16.gmra.mxu0 %v495
      %v844 = vpop.f32.mrf.mxu0
      %v845 = vadd.f32 %v756, %v844
      %v846 = vpop.f32.mrf.mxu0
      %v847 = vadd.f32 %v758, %v846
      %848 = vmatmul.bf16.gmra.mxu0 %v498
      %v849 = vpop.f32.mrf.mxu0
      %v850 = vadd.f32 %v761, %v849
      %v851 = vpop.f32.mrf.mxu0
      %v852 = vadd.f32 %v763, %v851
      %853 = vmatmul.bf16.gmra.mxu0 %v501
      %v854 = vpop.f32.mrf.mxu0
      %v855 = vadd.f32 %v766, %v854
      %v856 = vpop.f32.mrf.mxu0
      %v857 = vadd.f32 %v768, %v856
      %858 = vmatmul.bf16.gmra.mxu0 %v504
      %v859 = vpop.f32.mrf.mxu0
      %v860 = vadd.f32 %v771, %v859
      %v861 = vpop.f32.mrf.mxu0
      %v862 = vadd.f32 %v773, %v861
      %863 = vmatmul.bf16.gmra.mxu0 %v507
      %v864 = vpop.f32.mrf.mxu0
      %v865 = vadd.f32 %v776, %v864
      %v866 = vpop.f32.mrf.mxu0
      %v867 = vadd.f32 %v778, %v866
      %868 = vmatmul.bf16.gmra.mxu0 %v510
      %v869 = vpop.f32.mrf.mxu0
      %v870 = vadd.f32 %v781, %v869
      %v871 = vpop.f32.mrf.mxu0
      %v872 = vadd.f32 %v783, %v871
      %873 = vmatmul.bf16.gmra.mxu0 %v513
      %v874 = vpop.f32.mrf.mxu0
      %v875 = vadd.f32 %v786, %v874
      %v876 = vpop.f32.mrf.mxu0
      %v877 = vadd.f32 %v788, %v876
      %878 = vmatmul.bf16.gmra.mxu0 %v516
      %v879 = vpop.f32.mrf.mxu0
      %v880 = vadd.f32 %v791, %v879
      %v881 = vpop.f32.mrf.mxu0
      %v882 = vadd.f32 %v793, %v881
      %883 = vmatmul.bf16.gmra.mxu0 %v519
      %v884 = vpop.f32.mrf.mxu0
      %v885 = vadd.f32 %v796, %v884
      %v886 = vpop.f32.mrf.mxu0
      %v887 = vadd.f32 %v798, %v886
      %888 = vmatmul.bf16.gmra.mxu0 %v522
      %v889 = vpop.f32.mrf.mxu0
      %v890 = vadd.f32 %v801, %v889
      %v891 = vpop.f32.mrf.mxu0
      %v892 = vadd.f32 %v803, %v891
      %893 = vdwg.mxu0
      %894 = vmatpush.bf16.msra.mxu0 %v691
      %895 = vmatpush.bf16.msra.mxu0 %v690
      %896 = vmatpush.bf16.msra.mxu0 %v689
      %897 = vmatpush.bf16.msra.mxu0 %v688
      %898 = vmatpush.bf16.msra.mxu0 %v687
      %899 = vmatpush.bf16.msra.mxu0 %v686
      %900 = vmatpush.bf16.msra.mxu0 %v685
      %901 = vmatpush.bf16.msra.mxu0 %v684
      %902 = vmatmul.bf16.gmra.mxu0 %v478
      %v903 = vpop.f32.mrf.mxu0
      %v904 = vadd.f32 %v815, %v903
      %v905 = vpop.f32.mrf.mxu0
      %v906 = vadd.f32 %v817, %v905
      %907 = vmatmul.bf16.gmra.mxu0 %v481
      %v908 = vpop.f32.mrf.mxu0
      %v909 = vadd.f32 %v820, %v908
      %v910 = vpop.f32.mrf.mxu0
      %v911 = vadd.f32 %v822, %v910
      %912 = vmatmul.bf16.gmra.mxu0 %v484
      %v913 = vpop.f32.mrf.mxu0
      %v914 = vadd.f32 %v825, %v913
      %v915 = vpop.f32.mrf.mxu0
      %v916 = vadd.f32 %v827, %v915
      %917 = vmatmul.bf16.gmra.mxu0 %v487
      %v918 = vpop.f32.mrf.mxu0
      %v919 = vadd.f32 %v830, %v918
      %v920 = vpop.f32.mrf.mxu0
      %v921 = vadd.f32 %v832, %v920
      %922 = vmatmul.bf16.gmra.mxu0 %v490
      %v923 = vpop.f32.mrf.mxu0
      %v924 = vadd.f32 %v835, %v923
      %v925 = vpop.f32.mrf.mxu0
      %v926 = vadd.f32 %v837, %v925
      %927 = vmatmul.bf16.gmra.mxu0 %v493
      %v928 = vpop.f32.mrf.mxu0
      %v929 = vadd.f32 %v840, %v928
      %v930 = vpop.f32.mrf.mxu0
      %v931 = vadd.f32 %v842, %v930
      %932 = vmatmul.bf16.gmra.mxu0 %v496
      %v933 = vpop.f32.mrf.mxu0
      %v934 = vadd.f32 %v845, %v933
      %v935 = vpop.f32.mrf.mxu0
      %v936 = vadd.f32 %v847, %v935
      %937 = vmatmul.bf16.gmra.mxu0 %v499
      %v938 = vpop.f32.mrf.mxu0
      %v939 = vadd.f32 %v850, %v938
      %v940 = vpop.f32.mrf.mxu0
      %v941 = vadd.f32 %v852, %v940
      %942 = vmatmul.bf16.gmra.mxu0 %v502
      %v943 = vpop.f32.mrf.mxu0
      %v944 = vadd.f32 %v855, %v943
      %v945 = vpop.f32.mrf.mxu0
      %v946 = vadd.f32 %v857, %v945
      %947 = vmatmul.bf16.gmra.mxu0 %v505
      %v948 = vpop.f32.mrf.mxu0
      %v949 = vadd.f32 %v860, %v948
      %v950 = vpop.f32.mrf.mxu0
      %v951 = vadd.f32 %v862, %v950
      %952 = vmatmul.bf16.gmra.mxu0 %v508
      %v953 = vpop.f32.mrf.mxu0
      %v954 = vadd.f32 %v865, %v953
      %v955 = vpop.f32.mrf.mxu0
      %v956 = vadd.f32 %v867, %v955
      %957 = vmatmul.bf16.gmra.mxu0 %v511
      %v958 = vpop.f32.mrf.mxu0
      %v959 = vadd.f32 %v870, %v958
      %v960 = vpop.f32.mrf.mxu0
      %v961 = vadd.f32 %v872, %v960
      %962 = vmatmul.bf16.gmra.mxu0 %v514
      %v963 = vpop.f32.mrf.mxu0
      %v964 = vadd.f32 %v875, %v963
      %v965 = vpop.f32.mrf.mxu0
      %v966 = vadd.f32 %v877, %v965
      %967 = vmatmul.bf16.gmra.mxu0 %v517
      %v968 = vpop.f32.mrf.mxu0
      %v969 = vadd.f32 %v880, %v968
      %v970 = vpop.f32.mrf.mxu0
      %v971 = vadd.f32 %v882, %v970
      %972 = vmatmul.bf16.gmra.mxu0 %v520
      %v973 = vpop.f32.mrf.mxu0
      %v974 = vadd.f32 %v885, %v973
      %v975 = vpop.f32.mrf.mxu0
      %v976 = vadd.f32 %v887, %v975
      %977 = vmatmul.bf16.gmra.mxu0 %v523
      %v978 = vpop.f32.mrf.mxu0
      %v979 = vadd.f32 %v890, %v978
      %v980 = vpop.f32.mrf.mxu0
      %v981 = vadd.f32 %v892, %v980
      %982 = vdwg.mxu0
      %v983 = vld [vmem:[%s2] sm:$0x1]
      %v985 = vperm.slane %v983, 0
      %v987 = vmul.f32 %v904, %v985
      %v988 = vmul.f32 %v906, %v985
      %v989 = vmul.f32 %v909, %v985
      %v990 = vmul.f32 %v911, %v985
      %v991 = vmul.f32 %v914, %v985
      %v992 = vmul.f32 %v916, %v985
      %v993 = vmul.f32 %v919, %v985
      %v994 = vmul.f32 %v921, %v985
      %v995 = vmul.f32 %v924, %v985
      %v996 = vmul.f32 %v926, %v985
      %v997 = vmul.f32 %v929, %v985
      %v998 = vmul.f32 %v931, %v985
      %v999 = vmul.f32 %v934, %v985
      %v1000 = vmul.f32 %v936, %v985
      %v1001 = vmul.f32 %v939, %v985
      %v1002 = vmul.f32 %v941, %v985
      %v1003 = vmul.f32 %v944, %v985
      %v1004 = vmul.f32 %v946, %v985
      %v1005 = vmul.f32 %v949, %v985
      %v1006 = vmul.f32 %v951, %v985
      %v1007 = vmul.f32 %v954, %v985
      %v1008 = vmul.f32 %v956, %v985
      %v1009 = vmul.f32 %v959, %v985
      %v1010 = vmul.f32 %v961, %v985
      %v1011 = vmul.f32 %v964, %v985
      %v1012 = vmul.f32 %v966, %v985
      %v1013 = vmul.f32 %v969, %v985
      %v1014 = vmul.f32 %v971, %v985
      %v1015 = vmul.f32 %v974, %v985
      %v1016 = vmul.f32 %v976, %v985
      %v1017 = vmul.f32 %v979, %v985
      %v1018 = vmul.f32 %v981, %v985
      %v1019 = vld [vmem:[%s3] sm:$0x1]
      %v1021 = vperm.slane %v1019, 0
      %v1023 = vadd.f32 %v987, %v1021
      %v1024 = vadd.f32 %v988, %v1021
      %v1025 = vadd.f32 %v989, %v1021
      %v1026 = vadd.f32 %v990, %v1021
      %v1027 = vadd.f32 %v991, %v1021
      %v1028 = vadd.f32 %v992, %v1021
      %v1029 = vadd.f32 %v993, %v1021
      %v1030 = vadd.f32 %v994, %v1021
      %v1031 = vadd.f32 %v995, %v1021
      %v1032 = vadd.f32 %v996, %v1021
      %v1033 = vadd.f32 %v997, %v1021
      %v1034 = vadd.f32 %v998, %v1021
      %v1035 = vadd.f32 %v999, %v1021
      %v1036 = vadd.f32 %v1000, %v1021
      %v1037 = vadd.f32 %v1001, %v1021
      %v1038 = vadd.f32 %v1002, %v1021
      %v1039 = vadd.f32 %v1003, %v1021
      %v1040 = vadd.f32 %v1004, %v1021
      %v1041 = vadd.f32 %v1005, %v1021
      %v1042 = vadd.f32 %v1006, %v1021
      %v1043 = vadd.f32 %v1007, %v1021
      %v1044 = vadd.f32 %v1008, %v1021
      %v1045 = vadd.f32 %v1009, %v1021
      %v1046 = vadd.f32 %v1010, %v1021
      %v1047 = vadd.f32 %v1011, %v1021
      %v1048 = vadd.f32 %v1012, %v1021
      %v1049 = vadd.f32 %v1013, %v1021
      %v1050 = vadd.f32 %v1014, %v1021
      %v1051 = vadd.f32 %v1015, %v1021
      %v1052 = vadd.f32 %v1016, %v1021
      %v1053 = vadd.f32 %v1017, %v1021
      %v1054 = vadd.f32 %v1018, %v1021
      %v1055 = vmax.f32 %v1023, 0.0
      %v1056 = vmax.f32 %v1024, 0.0
      %v1057 = vmax.f32 %v1025, 0.0
      %v1058 = vmax.f32 %v1026, 0.0
      %v1059 = vmax.f32 %v1027, 0.0
      %v1060 = vmax.f32 %v1028, 0.0
      %v1061 = vmax.f32 %v1029, 0.0
      %v1062 = vmax.f32 %v1030, 0.0
      %v1063 = vmax.f32 %v1031, 0.0
      %v1064 = vmax.f32 %v1032, 0.0
      %v1065 = vmax.f32 %v1033, 0.0
      %v1066 = vmax.f32 %v1034, 0.0
      %v1067 = vmax.f32 %v1035, 0.0
      %v1068 = vmax.f32 %v1036, 0.0
      %v1069 = vmax.f32 %v1037, 0.0
      %v1070 = vmax.f32 %v1038, 0.0
      %v1071 = vmax.f32 %v1039, 0.0
      %v1072 = vmax.f32 %v1040, 0.0
      %v1073 = vmax.f32 %v1041, 0.0
      %v1074 = vmax.f32 %v1042, 0.0
      %v1075 = vmax.f32 %v1043, 0.0
      %v1076 = vmax.f32 %v1044, 0.0
      %v1077 = vmax.f32 %v1045, 0.0
      %v1078 = vmax.f32 %v1046, 0.0
      %v1079 = vmax.f32 %v1047, 0.0
      %v1080 = vmax.f32 %v1048, 0.0
      %v1081 = vmax.f32 %v1049, 0.0
      %v1082 = vmax.f32 %v1050, 0.0
      %v1083 = vmax.f32 %v1051, 0.0
      %v1084 = vmax.f32 %v1052, 0.0
      %v1085 = vmax.f32 %v1053, 0.0
      %v1086 = vmax.f32 %v1054, 0.0
      %vm1087 = vcmask 261120
      %1088 = vst.msk [vmem:[%s202] sm:$0xff] %vm1087, %v1055
      %1089 = vst.msk [vmem:[%s202 + $0x8] sm:$0xff] %vm1087, %v1056
      %1090 = vst.msk [vmem:[%s202 + $0x10] sm:$0xff] %vm1087, %v1057
      %1091 = vst.msk [vmem:[%s202 + $0x18] sm:$0xff] %vm1087, %v1058
      %1092 = vst.msk [vmem:[%s202 + $0x20] sm:$0xff] %vm1087, %v1059
      %1093 = vst.msk [vmem:[%s202 + $0x28] sm:$0xff] %vm1087, %v1060
      %1094 = vst.msk [vmem:[%s202 + $0x30] sm:$0xff] %vm1087, %v1061
      %1095 = vst.msk [vmem:[%s202 + $0x38] sm:$0xff] %vm1087, %v1062
      %1096 = vst.msk [vmem:[%s202 + $0x40] sm:$0xff] %vm1087, %v1063
      %1097 = vst.msk [vmem:[%s202 + $0x48] sm:$0xff] %vm1087, %v1064
      %1098 = vst.msk [vmem:[%s202 + $0x50] sm:$0xff] %vm1087, %v1065
      %1099 = vst.msk [vmem:[%s202 + $0x58] sm:$0xff] %vm1087, %v1066
      %1100 = vst.msk [vmem:[%s202 + $0x60] sm:$0xff] %vm1087, %v1067
      %1101 = vst.msk [vmem:[%s202 + $0x68] sm:$0xff] %vm1087, %v1068
      %1102 = vst.msk [vmem:[%s202 + $0x70] sm:$0xff] %vm1087, %v1069
      %1103 = vst.msk [vmem:[%s202 + $0x78] sm:$0xff] %vm1087, %v1070
      %1104 = vst.msk [vmem:[%s202 + $0x80] sm:$0xff] %vm1087, %v1071
      %1105 = vst.msk [vmem:[%s202 + $0x88] sm:$0xff] %vm1087, %v1072
      %1106 = vst.msk [vmem:[%s202 + $0x90] sm:$0xff] %vm1087, %v1073
      %1107 = vst.msk [vmem:[%s202 + $0x98] sm:$0xff] %vm1087, %v1074
      %1108 = vst.msk [vmem:[%s202 + $0xa0] sm:$0xff] %vm1087, %v1075
      %1109 = vst.msk [vmem:[%s202 + $0xa8] sm:$0xff] %vm1087, %v1076
      %1110 = vst.msk [vmem:[%s202 + $0xb0] sm:$0xff] %vm1087, %v1077
      %1111 = vst.msk [vmem:[%s202 + $0xb8] sm:$0xff] %vm1087, %v1078
      %1112 = vst.msk [vmem:[%s202 + $0xc0] sm:$0xff] %vm1087, %v1079
      %1113 = vst.msk [vmem:[%s202 + $0xc8] sm:$0xff] %vm1087, %v1080
      %1114 = vst.msk [vmem:[%s202 + $0xd0] sm:$0xff] %vm1087, %v1081
      %1115 = vst.msk [vmem:[%s202 + $0xd8] sm:$0xff] %vm1087, %v1082
      %1116 = vst.msk [vmem:[%s202 + $0xe0] sm:$0xff] %vm1087, %v1083
      %1117 = vst.msk [vmem:[%s202 + $0xe8] sm:$0xff] %vm1087, %v1084
      %1118 = vst.msk [vmem:[%s202 + $0xf0] sm:$0xff] %vm1087, %v1085
      %1119 = vst.msk [vmem:[%s202 + $0xf8] sm:$0xff] %vm1087, %v1086
      %s1120 = smul.u32 32, %s15
      %p1121 = scmp.lt.s32.totalorder %s1120, 1023
      %s1122 = scalar_select %p1121, %s1120, 1023
      %s1123 = smul.addr %s1122, 8
      %s1124 = scalar_lea.vmem %s4, %s1123
      // Predicated region
      $region37: #{ggo_forward.10} parent=35 // pred_check
        %p1125 = pneg %p122
      $region38: #{ggo_forward.10} parent=35 // pred_check_branch
        %1127 = sbr.rel (%p1125) target = $region40
      $region39: #{ggo_forward.10} parent=35 // pred_region
        %s1128 = smul.u32 32, %s15
      $region40: #{ggo_forward.10} parent=35 // pred_fallthru
        _
    $region36: #{ggo_forward.10} parent=5 // pred_fallthru
      _
    %p1129 = scmp.le.s32.totalorder 2, %s10
    // Predicated region
    $region41: #{ggo_forward.10} parent=5 // pred_check
      %p1130 = pneg %p1129
    $region42: #{ggo_forward.10} parent=5 // pred_check_branch
      %1132 = sbr.rel (%p1130) target = $region44
    $region43: #{ggo_forward.10} parent=5 // pred_region
      %s1133 = ssub.s32 %s10, 2
      // Predicated region
      $region45: #{ggo_forward.10} parent=43 // pred_check
        %p1134 = pneg %p128
      $region46: #{ggo_forward.10} parent=43 // pred_check_branch
        %1136 = sbr.rel (%p1134) target = $region48
      $region47: #{ggo_forward.10} parent=43 // pred_region
        %s1137 = smul.u32 32, %s16
        %p1138 = scmp.lt.s32.totalorder %s1137, 1023
        %s1139 = scalar_select %p1138, %s1137, 1023
        %s1140 = smul.addr %s1139, 8
        %s1141 = scalar_lea.vmem %s4, %s1140
      $region48: #{ggo_forward.10} parent=43 // pred_fallthru
        _
    $region44: #{ggo_forward.10} parent=5 // pred_fallthru
      _
  $region6: #{ggo_forward.10} parent=0 // loop_footer
    %s14 = sadd.s32 1, %s10
  $region7: #{ggo_forward.10} parent=0 // loop_footer_branch
    %9 = sbr.rel target = $region3
  $region8: #{ggo_forward.10} parent=0 // loop_exit
    _

// kernel: ggo_forward.12
$region0: #{ggo_forward.12}
  #allocation0 [shape = 'u32[]', space=smem, size = 0x4, offset = 0x4, fixed_abs, tag = 'smem constant byte address 0x4 - core index']
  #allocation1 [shape = 'u32[72,128]{1,0:T(1,128)}', space=vmem, size = 0x9000, scoped, tag = 'internal scratch']
  %s0 = inlined_call_operand.vmem [shape: bf16[1024,896], index: 0, kind: input, shape index: {}]
  %s1 = inlined_call_operand.vmem [shape: bf16[896,32], index: 1, kind: input, shape index: {}]
  %s2 = inlined_call_operand.vmem [shape: f32[1,32], index: 2, kind: input, shape index: {}]
  %s3 = inlined_call_operand.vmem [shape: f32[1,32], index: 3, kind: input, shape index: {}]
  %s4 = inlined_call_operand.vmem [shape: f32[1024,32], index: 4, kind: input, shape index: {}]
  %s5 = inlined_call_operand.vmem [shape: f32[1024,32], index: 5, kind: output, shape index: {}]
  %s6 = sld [smem:[#allocation0]]
  $region53: #{ggo_forward.12} parent=0
    _
  %s8 = ssub.s32 1, %s6
  %s9 = scalar_select 0, %s8, %s6
  loop: start=0, step=1, limit=6
  $region2: #{ggo_forward.12} parent=0 // loop_pre_header
    _
  $region3: #{ggo_forward.12} parent=0 // loop_header
    %s11 = sphi 0, %s15
    %p12 = scmp.ge.s32.totalorder %s11, 6
    %s21 = sphi 0, %s23
    %s24 = sphi 0, %s21
    %s25 = sphi 0, %s24
    %s41 = sphi 0, %s25
    %s45 = sphi 0, %s45
    %s47 = sphi 0, %s45
    %s48 = sphi 0, %s47
    %s62 = sphi 0, %s48
    %s66 = sphi 0, %s66
    %s68 = sphi 0, %s66
    %s69 = sphi 0, %s68
    %s83 = sphi 0, %s69
    %s87 = sphi 0, %s87
    %s89 = sphi 0, %s87
    %s90 = sphi 0, %s89
    %s104 = sphi 0, %s90
    %s110 = sphi 0, %s112
    %s113 = sphi 0, %s110
    %s114 = sphi 0, %s113
    %s130 = sphi 0, %s114
    %s136 = sphi 0, %s138
    %s139 = sphi 0, %s136
    %s140 = sphi 0, %s139
    %s156 = sphi 0, %s140
  $region4: #{ggo_forward.12} parent=0 // loop_header_branch
    %14 = sbr.rel (%p12) target = $region8
  $region5: #{ggo_forward.12} parent=0 // loop_body
    %s16 = ssub.s32 %s11, 1
    %s17 = ssub.s32 %s11, 2
    %s18 = sadd.s32 %s11, 1
    %s19 = ssub.s32 %s11, %s18
    %p20 = scmp.eq.s32.totalorder %s19, 0
    %s22 = sadd.s32 %s21, 1
    %s23 = scalar_select %p20, %s21, %s22
    %p26 = pneg %p20
    %p27 = scmp.eq.s32.totalorder %s11, 3
    %p28 = por %p26, %p27
    %p29 = scmp.ne.s32.totalorder %s21, %s24
    %p30 = scmp.eq.s32.totalorder %s11, 0
    %p31 = por %p29, %p30
    %p32 = scmp.ne.s32.totalorder %s21, %s24
    %p33 = scmp.eq.s32.totalorder %s16, 3
    %p34 = por %p32, %p33
    %p35 = scmp.ne.s32.totalorder %s24, %s25
    %p36 = scmp.eq.s32.totalorder %s16, 0
    %p37 = por %p35, %p36
    %p38 = scmp.ne.s32.totalorder %s24, %s25
    %p39 = scmp.eq.s32.totalorder %s17, 3
    %p40 = por %p38, %p39
    %p42 = scmp.ne.s32.totalorder %s25, %s41
    %p43 = scmp.eq.s32.totalorder %s17, 0
    %p44 = por %p42, %p43
    %s46 = sadd.s32 %s45, 1
    %p49 = scmp.eq.s32.totalorder %s11, 3
    %p50 = scmp.ne.s32.totalorder %s45, %s47
    %p51 = scmp.eq.s32.totalorder %s11, 0
    %p52 = por %p50, %p51
    %p53 = scmp.ne.s32.totalorder %s45, %s47
    %p54 = scmp.eq.s32.totalorder %s16, 3
    %p55 = por %p53, %p54
    %p56 = scmp.ne.s32.totalorder %s47, %s48
    %p57 = scmp.eq.s32.totalorder %s16, 0
    %p58 = por %p56, %p57
    %p59 = scmp.ne.s32.totalorder %s47, %s48
    %p60 = scmp.eq.s32.totalorder %s17, 3
    %p61 = por %p59, %p60
    %p63 = scmp.ne.s32.totalorder %s48, %s62
    %p64 = scmp.eq.s32.totalorder %s17, 0
    %p65 = por %p63, %p64
    %s67 = sadd.s32 %s66, 1
    %p70 = scmp.eq.s32.totalorder %s11, 3
    %p71 = scmp.ne.s32.totalorder %s66, %s68
    %p72 = scmp.eq.s32.totalorder %s11, 0
    %p73 = por %p71, %p72
    %p74 = scmp.ne.s32.totalorder %s66, %s68
    %p75 = scmp.eq.s32.totalorder %s16, 3
    %p76 = por %p74, %p75
    %p77 = scmp.ne.s32.totalorder %s68, %s69
    %p78 = scmp.eq.s32.totalorder %s16, 0
    %p79 = por %p77, %p78
    %p80 = scmp.ne.s32.totalorder %s68, %s69
    %p81 = scmp.eq.s32.totalorder %s17, 3
    %p82 = por %p80, %p81
    %p84 = scmp.ne.s32.totalorder %s69, %s83
    %p85 = scmp.eq.s32.totalorder %s17, 0
    %p86 = por %p84, %p85
    %s88 = sadd.s32 %s87, 1
    %p91 = scmp.eq.s32.totalorder %s11, 3
    %p92 = scmp.ne.s32.totalorder %s87, %s89
    %p93 = scmp.eq.s32.totalorder %s11, 0
    %p94 = por %p92, %p93
    %p95 = scmp.ne.s32.totalorder %s87, %s89
    %p96 = scmp.eq.s32.totalorder %s16, 3
    %p97 = por %p95, %p96
    %p98 = scmp.ne.s32.totalorder %s89, %s90
    %p99 = scmp.eq.s32.totalorder %s16, 0
    %p100 = por %p98, %p99
    %p101 = scmp.ne.s32.totalorder %s89, %s90
    %p102 = scmp.eq.s32.totalorder %s17, 3
    %p103 = por %p101, %p102
    %p105 = scmp.ne.s32.totalorder %s90, %s104
    %p106 = scmp.eq.s32.totalorder %s17, 0
    %p107 = por %p105, %p106
    %s108 = ssub.s32 %s11, %s18
    %p109 = scmp.eq.s32.totalorder %s108, 0
    %s111 = sadd.s32 %s110, 1
    %s112 = scalar_select %p109, %s110, %s111
    %p115 = pneg %p109
    %p116 = scmp.eq.s32.totalorder %s11, 3
    %p117 = por %p115, %p116
    %p118 = scmp.ne.s32.totalorder %s110, %s113
    %p119 = scmp.eq.s32.totalorder %s11, 0
    %p120 = por %p118, %p119
    %p121 = scmp.ne.s32.totalorder %s110, %s113
    %p122 = scmp.eq.s32.totalorder %s16, 3
    %p123 = por %p121, %p122
    %p124 = scmp.ne.s32.totalorder %s113, %s114
    %p125 = scmp.eq.s32.totalorder %s16, 0
    %p126 = por %p124, %p125
    %p127 = scmp.ne.s32.totalorder %s113, %s114
    %p128 = scmp.eq.s32.totalorder %s17, 3
    %p129 = por %p127, %p128
    %p131 = scmp.ne.s32.totalorder %s114, %s130
    %p132 = scmp.eq.s32.totalorder %s17, 0
    %p133 = por %p131, %p132
    %s134 = ssub.s32 %s11, %s18
    %p135 = scmp.eq.s32.totalorder %s134, 0
    %s137 = sadd.s32 %s136, 1
    %s138 = scalar_select %p135, %s136, %s137
    %p141 = pneg %p135
    %p142 = scmp.eq.s32.totalorder %s11, 3
    %p143 = por %p141, %p142
    %p144 = scmp.ne.s32.totalorder %s136, %s139
    %p145 = scmp.eq.s32.totalorder %s11, 0
    %p146 = por %p144, %p145
    %p147 = scmp.ne.s32.totalorder %s136, %s139
    %p148 = scmp.eq.s32.totalorder %s16, 3
    %p149 = por %p147, %p148
    %p150 = scmp.ne.s32.totalorder %s139, %s140
    %p151 = scmp.eq.s32.totalorder %s16, 0
    %p152 = por %p150, %p151
    %p153 = scmp.ne.s32.totalorder %s139, %s140
    %p154 = scmp.eq.s32.totalorder %s17, 3
    %p155 = por %p153, %p154
    %p157 = scmp.ne.s32.totalorder %s140, %s156
    %p158 = scmp.eq.s32.totalorder %s17, 0
    %p159 = por %p157, %p158
    %p160 = scmp.le.s32.totalorder 1, %s11
    %p161 = scmp.lt.s32.totalorder %s11, 5
    %p162 = pnand %p160, %p161
    %p163 = pneg %p162
    // Predicated region
    $region9: #{ggo_forward.12} parent=5 // pred_check
      _
    $region10: #{ggo_forward.12} parent=5 // pred_check_branch
      %165 = sbr.rel (%p162) target = $region12
    $region11: #{ggo_forward.12} parent=5 // pred_region
      %s166 = ssub.s32 %s11, 1
      // Predicated region
      $region13: #{ggo_forward.12} parent=11 // pred_check
        %p167 = pneg %p58
      $region14: #{ggo_forward.12} parent=11 // pred_check_branch
        %169 = sbr.rel (%p167) target = $region16
      $region15: #{ggo_forward.12} parent=11 // pred_region
        _
      $region16: #{ggo_forward.12} parent=11 // pred_fallthru
        _
      // Predicated region
      $region17: #{ggo_forward.12} parent=11 // pred_check
        %p170 = pneg %p79
      $region18: #{ggo_forward.12} parent=11 // pred_check_branch
        %172 = sbr.rel (%p170) target = $region20
      $region19: #{ggo_forward.12} parent=11 // pred_region
        _
      $region20: #{ggo_forward.12} parent=11 // pred_fallthru
        _
      // Predicated region
      $region21: #{ggo_forward.12} parent=11 // pred_check
        %p173 = pneg %p100
      $region22: #{ggo_forward.12} parent=11 // pred_check_branch
        %175 = sbr.rel (%p173) target = $region24
      $region23: #{ggo_forward.12} parent=11 // pred_region
        _
      $region24: #{ggo_forward.12} parent=11 // pred_fallthru
        _
    $region12: #{ggo_forward.12} parent=5 // pred_fallthru
      _
    %p176 = scmp.lt.s32.totalorder %s11, 4
    // Predicated region
    $region25: #{ggo_forward.12} parent=5 // pred_check
      %p177 = pneg %p176
    $region26: #{ggo_forward.12} parent=5 // pred_check_branch
      %179 = sbr.rel (%p177) target = $region28
    $region27: #{ggo_forward.12} parent=5 // pred_region
      // Predicated region
      $region29: #{ggo_forward.12} parent=27 // pred_check
        %p180 = pneg %p31
      $region30: #{ggo_forward.12} parent=27 // pred_check_branch
        %182 = sbr.rel (%p180) target = $region32
      $region31: #{ggo_forward.12} parent=27 // pred_region
        %s183 = smul.u32 32, %s11
        %p184 = scmp.lt.s32.totalorder %s183, 127
        %s185 = scalar_select %p184, %s183, 127
        %s186 = smul.addr %s185, 7
        %s187 = smul.addr %s186, 4
        %s188 = scalar_lea.vmem %s0, %s187
        %s189 = smul.u32 32, %s11
      $region32: #{ggo_forward.12} parent=27 // pred_fallthru
        _
      // Predicated region
      $region33: #{ggo_forward.12} parent=27 // pred_check
        %p190 = pneg %p120
      $region34: #{ggo_forward.12} parent=27 // pred_check_branch
        %192 = sbr.rel (%p190) target = $region36
      $region35: #{ggo_forward.12} parent=27 // pred_region
        %s193 = smul.u32 32, %s11
        %p194 = scmp.lt.s32.totalorder %s193, 127
        %s195 = scalar_select %p194, %s193, 127
        %s196 = smul.addr %s195, 8
        %s197 = scalar_lea.vmem %s4, %s196
        %s198 = smul.u32 32, %s11
      $region36: #{ggo_forward.12} parent=27 // pred_fallthru
        _
    $region28: #{ggo_forward.12} parent=5 // pred_fallthru
      _
    %p199 = scmp.le.s32.totalorder 1, %s11
    %p200 = scmp.lt.s32.totalorder %s11, 5
    %p201 = pnand %p199, %p200
    %p202 = pneg %p201
    // Predicated region
    $region37: #{ggo_forward.12} parent=5 // pred_check
      _
    $region38: #{ggo_forward.12} parent=5 // pred_check_branch
      %204 = sbr.rel (%p201) target = $region40
    $region39: #{ggo_forward.12} parent=5 // pred_region
      %s205 = ssub.s32 %s11, 1
      %s206 = smul.u32 32, %s16
      %p207 = scmp.lt.s32.totalorder %s206, 127
      %s208 = scalar_select %p207, %s206, 127
      %s209 = smul.addr %s208, 7
      %s210 = smul.addr %s209, 4
      %s211 = scalar_lea.vmem %s0, %s210
      %p212 = pneg %p37
      %p213 = pneg %p34
      %p214 = pneg %p58
      %p215 = pneg %p55
      %p216 = pneg %p79
      %p217 = pneg %p76
      %p218 = pneg %p100
      %p219 = pneg %p97
      %s220 = smul.u32 32, %s16
      %p221 = scmp.lt.s32.totalorder %s220, 127
      %s222 = scalar_select %p221, %s220, 127
      %s223 = smul.addr %s222, 8
      %s224 = scalar_lea.vmem %s4, %s223
      %p225 = pneg %p126
      %p226 = pneg %p123
      %p227 = pneg %p152
      %p228 = pneg %p149
      %s229 = smul.u32 32, %s16
      %p230 = scmp.lt.s32.totalorder %s229, 127
      %s231 = scalar_select %p230, %s229, 127
      %s232 = smul.addr %s231, 8
      %s233 = scalar_lea.vmem %s5, %s232
      %s234 = smul.u32 32, %s16
      %p235 = scmp.lt.s32.totalorder %s234, 127
      %s236 = scalar_select %p235, %s234, 127
      %s237 = smul.addr %s236, 7
      %s238 = smul.addr %s237, 4
      %s239 = scalar_lea.vmem %s0, %s238
      %s240 = smul.u32 32, %s16
      %s241 = smul.u32 32, %s16
      %p242 = scmp.lt.s32.totalorder %s241, 127
      %s243 = scalar_select %p242, %s241, 127
      %s244 = smul.addr %s243, 8
      %s245 = scalar_lea.vmem %s4, %s244
      %s246 = smul.u32 32, %s16
      %s247 = smul.u32 32, %s16
      %p248 = scmp.lt.s32.totalorder %s247, 127
      %s249 = scalar_select %p248, %s247, 127
      %s250 = smul.addr %s249, 8
      %s251 = scalar_lea.vmem %s5, %s250
      %s252 = smul.u32 32, %s16
      %v253 = vld [vmem:[%s239] sm:$0xff]
      %v254 = vld [vmem:[%s239 + $0x8] sm:$0xff]
      %v255 = vld [vmem:[%s239 + $0x10] sm:$0xff]
      %v256 = vld [vmem:[%s239 + $0x18] sm:$0xf]
      %v257 = vld [vmem:[%s239 + $0x1c] sm:$0xff]
      %v258 = vld [vmem:[%s239 + $0x24] sm:$0xff]
      %v259 = vld [vmem:[%s239 + $0x2c] sm:$0xff]
      %v260 = vld [vmem:[%s239 + $0x34] sm:$0xf]
      %v261 = vld [vmem:[%s239 + $0x38] sm:$0xff]
      %v262 = vld [vmem:[%s239 + $0x40] sm:$0xff]
      %v263 = vld [vmem:[%s239 + $0x48] sm:$0xff]
      %v264 = vld [vmem:[%s239 + $0x50] sm:$0xf]
      %v265 = vld [vmem:[%s239 + $0x54] sm:$0xff]
      %v266 = vld [vmem:[%s239 + $0x5c] sm:$0xff]
      %v267 = vld [vmem:[%s239 + $0x64] sm:$0xff]
      %v268 = vld [vmem:[%s239 + $0x6c] sm:$0xf]
      %v269 = vld [vmem:[%s239 + $0x70] sm:$0xff]
      %v270 = vld [vmem:[%s239 + $0x78] sm:$0xff]
      %v271 = vld [vmem:[%s239 + $0x80] sm:$0xff]
      %v272 = vld [vmem:[%s239 + $0x88] sm:$0xf]
      %v273 = vld [vmem:[%s239 + $0x8c] sm:$0xff]
      %v274 = vld [vmem:[%s239 + $0x94] sm:$0xff]
      %v275 = vld [vmem:[%s239 + $0x9c] sm:$0xff]
      %v276 = vld [vmem:[%s239 + $0xa4] sm:$0xf]
      %v277 = vld [vmem:[%s239 + $0xa8] sm:$0xff]
      %v278 = vld [vmem:[%s239 + $0xb0] sm:$0xff]
      %v279 = vld [vmem:[%s239 + $0xb8] sm:$0xff]
      %v280 = vld [vmem:[%s239 + $0xc0] sm:$0xf]
      %v281 = vld [vmem:[%s239 + $0xc4] sm:$0xff]
      %v282 = vld [vmem:[%s239 + $0xcc] sm:$0xff]
      %v283 = vld [vmem:[%s239 + $0xd4] sm:$0xff]
      %v284 = vld [vmem:[%s239 + $0xdc] sm:$0xf]
      %v285 = vld [vmem:[%s239 + $0xe0] sm:$0xff]
      %v286 = vld [vmem:[%s239 + $0xe8] sm:$0xff]
      %v287 = vld [vmem:[%s239 + $0xf0] sm:$0xff]
      %v288 = vld [vmem:[%s239 + $0xf8] sm:$0xf]
      %v289 = vld [vmem:[%s239 + $0xfc] sm:$0xff]
      %v290 = vld [vmem:[%s239 + $0x104] sm:$0xff]
      %v291 = vld [vmem:[%s239 + $0x10c] sm:$0xff]
      %v292 = vld [vmem:[%s239 + $0x114] sm:$0xf]
      %v293 = vld [vmem:[%s239 + $0x118] sm:$0xff]
      %v294 = vld [vmem:[%s239 + $0x120] sm:$0xff]
      %v295 = vld [vmem:[%s239 + $0x128] sm:$0xff]
      %v296 = vld [vmem:[%s239 + $0x130] sm:$0xf]
      %v297 = vld [vmem:[%s239 + $0x134] sm:$0xff]
      %v298 = vld [vmem:[%s239 + $0x13c] sm:$0xff]
      %v299 = vld [vmem:[%s239 + $0x144] sm:$0xff]
      %v300 = vld [vmem:[%s239 + $0x14c] sm:$0xf]
      %v301 = vld [vmem:[%s239 + $0x150] sm:$0xff]
      %v302 = vld [vmem:[%s239 + $0x158] sm:$0xff]
      %v303 = vld [vmem:[%s239 + $0x160] sm:$0xff]
      %v304 = vld [vmem:[%s239 + $0x168] sm:$0xf]
      %v305 = vld [vmem:[%s239 + $0x16c] sm:$0xff]
      %v306 = vld [vmem:[%s239 + $0x174] sm:$0xff]
      %v307 = vld [vmem:[%s239 + $0x17c] sm:$0xff]
      %v308 = vld [vmem:[%s239 + $0x184] sm:$0xf]
      %v309 = vld [vmem:[%s239 + $0x188] sm:$0xff]
      %v310 = vld [vmem:[%s239 + $0x190] sm:$0xff]
      %v311 = vld [vmem:[%s239 + $0x198] sm:$0xff]
      %v312 = vld [vmem:[%s239 + $0x1a0] sm:$0xf]
      %v313 = vld [vmem:[%s239 + $0x1a4] sm:$0xff]
      %v314 = vld [vmem:[%s239 + $0x1ac] sm:$0xff]
      %v315 = vld [vmem:[%s239 + $0x1b4] sm:$0xff]
      %v316 = vld [vmem:[%s239 + $0x1bc] sm:$0xf]
      %v317 = vld [vmem:[%s239 + $0x1c0] sm:$0xff]
      %v318 = vld [vmem:[%s239 + $0x1c8] sm:$0xff]
      %v319 = vld [vmem:[%s239 + $0x1d0] sm:$0xff]
      %v320 = vld [vmem:[%s239 + $0x1d8] sm:$0xf]
      %v321 = vld [vmem:[%s239 + $0x1dc] sm:$0xff]
      %v322 = vld [vmem:[%s239 + $0x1e4] sm:$0xff]
      %v323 = vld [vmem:[%s239 + $0x1ec] sm:$0xff]
      %v324 = vld [vmem:[%s239 + $0x1f4] sm:$0xf]
      %v325 = vld [vmem:[%s239 + $0x1f8] sm:$0xff]
      %v326 = vld [vmem:[%s239 + $0x200] sm:$0xff]
      %v327 = vld [vmem:[%s239 + $0x208] sm:$0xff]
      %v328 = vld [vmem:[%s239 + $0x210] sm:$0xf]
      %v329 = vld [vmem:[%s239 + $0x214] sm:$0xff]
      %v330 = vld [vmem:[%s239 + $0x21c] sm:$0xff]
      %v331 = vld [vmem:[%s239 + $0x224] sm:$0xff]
      %v332 = vld [vmem:[%s239 + $0x22c] sm:$0xf]
      %v333 = vld [vmem:[%s239 + $0x230] sm:$0xff]
      %v334 = vld [vmem:[%s239 + $0x238] sm:$0xff]
      %v335 = vld [vmem:[%s239 + $0x240] sm:$0xff]
      %v336 = vld [vmem:[%s239 + $0x248] sm:$0xf]
      %v337 = vld [vmem:[%s239 + $0x24c] sm:$0xff]
      %v338 = vld [vmem:[%s239 + $0x254] sm:$0xff]
      %v339 = vld [vmem:[%s239 + $0x25c] sm:$0xff]
      %v340 = vld [vmem:[%s239 + $0x264] sm:$0xf]
      %v341 = vld [vmem:[%s239 + $0x268] sm:$0xff]
      %v342 = vld [vmem:[%s239 + $0x270] sm:$0xff]
      %v343 = vld [vmem:[%s239 + $0x278] sm:$0xff]
      %v344 = vld [vmem:[%s239 + $0x280] sm:$0xf]
      %v345 = vld [vmem:[%s239 + $0x284] sm:$0xff]
      %v346 = vld [vmem:[%s239 + $0x28c] sm:$0xff]
      %v347 = vld [vmem:[%s239 + $0x294] sm:$0xff]
      %v348 = vld [vmem:[%s239 + $0x29c] sm:$0xf]
      %v349 = vld [vmem:[%s239 + $0x2a0] sm:$0xff]
      %v350 = vld [vmem:[%s239 + $0x2a8] sm:$0xff]
      %v351 = vld [vmem:[%s239 + $0x2b0] sm:$0xff]
      %v352 = vld [vmem:[%s239 + $0x2b8] sm:$0xf]
      %v353 = vld [vmem:[%s239 + $0x2bc] sm:$0xff]
      %v354 = vld [vmem:[%s239 + $0x2c4] sm:$0xff]
      %v355 = vld [vmem:[%s239 + $0x2cc] sm:$0xff]
      %v356 = vld [vmem:[%s239 + $0x2d4] sm:$0xf]
      %v357 = vld [vmem:[%s239 + $0x2d8] sm:$0xff]
      %v358 = vld [vmem:[%s239 + $0x2e0] sm:$0xff]
      %v359 = vld [vmem:[%s239 + $0x2e8] sm:$0xff]
      %v360 = vld [vmem:[%s239 + $0x2f0] sm:$0xf]
      %v361 = vld [vmem:[%s239 + $0x2f4] sm:$0xff]
      %v362 = vld [vmem:[%s239 + $0x2fc] sm:$0xff]
      %v363 = vld [vmem:[%s239 + $0x304] sm:$0xff]
      %v364 = vld [vmem:[%s239 + $0x30c] sm:$0xf]
      %v365 = vld [vmem:[%s239 + $0x310] sm:$0xff]
      %v366 = vld [vmem:[%s239 + $0x318] sm:$0xff]
      %v367 = vld [vmem:[%s239 + $0x320] sm:$0xff]
      %v368 = vld [vmem:[%s239 + $0x328] sm:$0xf]
      %v369 = vld [vmem:[%s239 + $0x32c] sm:$0xff]
      %v370 = vld [vmem:[%s239 + $0x334] sm:$0xff]
      %v371 = vld [vmem:[%s239 + $0x33c] sm:$0xff]
      %v372 = vld [vmem:[%s239 + $0x344] sm:$0xf]
      %v373 = vld [vmem:[%s239 + $0x348] sm:$0xff]
      %v374 = vld [vmem:[%s239 + $0x350] sm:$0xff]
      %v375 = vld [vmem:[%s239 + $0x358] sm:$0xff]
      %v376 = vld [vmem:[%s239 + $0x360] sm:$0xf]
      %v377 = vld [vmem:[%s239 + $0x364] sm:$0xff]
      %v378 = vld [vmem:[%s239 + $0x36c] sm:$0xff]
      %v379 = vld [vmem:[%s239 + $0x374] sm:$0xff]
      %v380 = vld [vmem:[%s239 + $0x37c] sm:$0xf]
      %v381 = vld [vmem:[%s1] sm:$0xf]
      %v382 = vld [vmem:[%s1 + $0x4] sm:$0xf]
      %v383 = vld [vmem:[%s1 + $0x8] sm:$0xf]
      %v384 = vld [vmem:[%s1 + $0xc] sm:$0xf]
      %v385 = vld [vmem:[%s1 + $0x10] sm:$0xf]
      %v386 = vld [vmem:[%s1 + $0x14] sm:$0xf]
      %v387 = vld [vmem:[%s1 + $0x18] sm:$0xf]
      %v388 = vld [vmem:[%s1 + $0x1c] sm:$0xf]
      %v389 = vld [vmem:[%s1 + $0x20] sm:$0xf]
      %v390 = vld [vmem:[%s1 + $0x24] sm:$0xf]
      %v391 = vld [vmem:[%s1 + $0x28] sm:$0xf]
      %v392 = vld [vmem:[%s1 + $0x2c] sm:$0xf]
      %v393 = vld [vmem:[%s1 + $0x30] sm:$0xf]
      %v394 = vld [vmem:[%s1 + $0x34] sm:$0xf]
      %v395 = vld [vmem:[%s1 + $0x38] sm:$0xf]
      %v396 = vld [vmem:[%s1 + $0x3c] sm:$0xf]
      %v397 = vld [vmem:[%s1 + $0x40] sm:$0xf]
      %v398 = vld [vmem:[%s1 + $0x44] sm:$0xf]
      %v399 = vld [vmem:[%s1 + $0x48] sm:$0xf]
      %v400 = vld [vmem:[%s1 + $0x4c] sm:$0xf]
      %v401 = vld [vmem:[%s1 + $0x50] sm:$0xf]
      %v402 = vld [vmem:[%s1 + $0x54] sm:$0xf]
      %v403 = vld [vmem:[%s1 + $0x58] sm:$0xf]
      %v404 = vld [vmem:[%s1 + $0x5c] sm:$0xf]
      %v405 = vld [vmem:[%s1 + $0x60] sm:$0xf]
      %v406 = vld [vmem:[%s1 + $0x64] sm:$0xf]
      %v407 = vld [vmem:[%s1 + $0x68] sm:$0xf]
      %v408 = vld [vmem:[%s1 + $0x6c] sm:$0xf]
      %v409 = vld [vmem:[%s1 + $0x70] sm:$0xf]
      %v410 = vld [vmem:[%s1 + $0x74] sm:$0xf]
      %v411 = vld [vmem:[%s1 + $0x78] sm:$0xf]
      %v412 = vld [vmem:[%s1 + $0x7c] sm:$0xf]
      %v413 = vld [vmem:[%s1 + $0x80] sm:$0xf]
      %v414 = vld [vmem:[%s1 + $0x84] sm:$0xf]
      %v415 = vld [vmem:[%s1 + $0x88] sm:$0xf]
      %v416 = vld [vmem:[%s1 + $0x8c] sm:$0xf]
      %v417 = vld [vmem:[%s1 + $0x90] sm:$0xf]
      %v418 = vld [vmem:[%s1 + $0x94] sm:$0xf]
      %v419 = vld [vmem:[%s1 + $0x98] sm:$0xf]
      %v420 = vld [vmem:[%s1 + $0x9c] sm:$0xf]
      %v421 = vld [vmem:[%s1 + $0xa0] sm:$0xf]
      %v422 = vld [vmem:[%s1 + $0xa4] sm:$0xf]
      %v423 = vld [vmem:[%s1 + $0xa8] sm:$0xf]
      %v424 = vld [vmem:[%s1 + $0xac] sm:$0xf]
      %v425 = vld [vmem:[%s1 + $0xb0] sm:$0xf]
      %v426 = vld [vmem:[%s1 + $0xb4] sm:$0xf]
      %v427 = vld [vmem:[%s1 + $0xb8] sm:$0xf]
      %v428 = vld [vmem:[%s1 + $0xbc] sm:$0xf]
      %v429 = vld [vmem:[%s1 + $0xc0] sm:$0xf]
      %v430 = vld [vmem:[%s1 + $0xc4] sm:$0xf]
      %v431 = vld [vmem:[%s1 + $0xc8] sm:$0xf]
      %v432 = vld [vmem:[%s1 + $0xcc] sm:$0xf]
      %v433 = vld [vmem:[%s1 + $0xd0] sm:$0xf]
      %v434 = vld [vmem:[%s1 + $0xd4] sm:$0xf]
      %v435 = vld [vmem:[%s1 + $0xd8] sm:$0xf]
      %v436 = vld [vmem:[%s1 + $0xdc] sm:$0xf]
      %v437 = vld [vmem:[%s1 + $0xe0] sm:$0xf]
      %v438 = vld [vmem:[%s1 + $0xe4] sm:$0xf]
      %v439 = vld [vmem:[%s1 + $0xe8] sm:$0xf]
      %v440 = vld [vmem:[%s1 + $0xec] sm:$0xf]
      %v441 = vld [vmem:[%s1 + $0xf0] sm:$0xf]
      %v442 = vld [vmem:[%s1 + $0xf4] sm:$0xf]
      %v443 = vld [vmem:[%s1 + $0xf8] sm:$0xf]
      %v444 = vld [vmem:[%s1 + $0xfc] sm:$0xf]
      %v445 = vld [vmem:[%s1 + $0x100] sm:$0xf]
      %v446 = vld [vmem:[%s1 + $0x104] sm:$0xf]
      %v447 = vld [vmem:[%s1 + $0x108] sm:$0xf]
      %v448 = vld [vmem:[%s1 + $0x10c] sm:$0xf]
      %v449 = vld [vmem:[%s1 + $0x110] sm:$0xf]
      %v450 = vld [vmem:[%s1 + $0x114] sm:$0xf]
      %v451 = vld [vmem:[%s1 + $0x118] sm:$0xf]
      %v452 = vld [vmem:[%s1 + $0x11c] sm:$0xf]
      %v453 = vld [vmem:[%s1 + $0x120] sm:$0xf]
      %v454 = vld [vmem:[%s1 + $0x124] sm:$0xf]
      %v455 = vld [vmem:[%s1 + $0x128] sm:$0xf]
      %v456 = vld [vmem:[%s1 + $0x12c] sm:$0xf]
      %v457 = vld [vmem:[%s1 + $0x130] sm:$0xf]
      %v458 = vld [vmem:[%s1 + $0x134] sm:$0xf]
      %v459 = vld [vmem:[%s1 + $0x138] sm:$0xf]
      %v460 = vld [vmem:[%s1 + $0x13c] sm:$0xf]
      %v461 = vld [vmem:[%s1 + $0x140] sm:$0xf]
      %v462 = vld [vmem:[%s1 + $0x144] sm:$0xf]
      %v463 = vld [vmem:[%s1 + $0x148] sm:$0xf]
      %v464 = vld [vmem:[%s1 + $0x14c] sm:$0xf]
      %v465 = vld [vmem:[%s1 + $0x150] sm:$0xf]
      %v466 = vld [vmem:[%s1 + $0x154] sm:$0xf]
      %v467 = vld [vmem:[%s1 + $0x158] sm:$0xf]
      %v468 = vld [vmem:[%s1 + $0x15c] sm:$0xf]
      %v469 = vld [vmem:[%s1 + $0x160] sm:$0xf]
      %v470 = vld [vmem:[%s1 + $0x164] sm:$0xf]
      %v471 = vld [vmem:[%s1 + $0x168] sm:$0xf]
      %v472 = vld [vmem:[%s1 + $0x16c] sm:$0xf]
      %v473 = vld [vmem:[%s1 + $0x170] sm:$0xf]
      %v474 = vld [vmem:[%s1 + $0x174] sm:$0xf]
      %v475 = vld [vmem:[%s1 + $0x178] sm:$0xf]
      %v476 = vld [vmem:[%s1 + $0x17c] sm:$0xf]
      %v477 = vld [vmem:[%s1 + $0x180] sm:$0xf]
      %v478 = vld [vmem:[%s1 + $0x184] sm:$0xf]
      %v479 = vld [vmem:[%s1 + $0x188] sm:$0xf]
      %v480 = vld [vmem:[%s1 + $0x18c] sm:$0xf]
      %v481 = vld [vmem:[%s1 + $0x190] sm:$0xf]
      %v482 = vld [vmem:[%s1 + $0x194] sm:$0xf]
      %v483 = vld [vmem:[%s1 + $0x198] sm:$0xf]
      %v484 = vld [vmem:[%s1 + $0x19c] sm:$0xf]
      %v485 = vld [vmem:[%s1 + $0x1a0] sm:$0xf]
      %v486 = vld [vmem:[%s1 + $0x1a4] sm:$0xf]
      %v487 = vld [vmem:[%s1 + $0x1a8] sm:$0xf]
      %v488 = vld [vmem:[%s1 + $0x1ac] sm:$0xf]
      %v489 = vld [vmem:[%s1 + $0x1b0] sm:$0xf]
      %v490 = vld [vmem:[%s1 + $0x1b4] sm:$0xf]
      %v491 = vld [vmem:[%s1 + $0x1b8] sm:$0xf]
      %v492 = vld [vmem:[%s1 + $0x1bc] sm:$0xf]
      %v621 = vunpack.c.l.b16 %v253
      %v622 = vunpack.c.h.b16 %v253
      %v623 = vunpack.c.l.b16 %v254
      %v624 = vunpack.c.h.b16 %v254
      %v625 = vunpack.c.l.b16 %v255
      %v626 = vunpack.c.h.b16 %v255
      %v627 = vunpack.c.l.b16 %v256
      %v628 = vunpack.c.l.b16 %v257
      %v629 = vunpack.c.h.b16 %v257
      %v630 = vunpack.c.l.b16 %v258
      %v631 = vunpack.c.h.b16 %v258
      %v632 = vunpack.c.l.b16 %v259
      %v633 = vunpack.c.h.b16 %v259
      %v634 = vunpack.c.l.b16 %v260
      %v635 = vunpack.c.l.b16 %v261
      %v636 = vunpack.c.h.b16 %v261
      %v637 = vunpack.c.l.b16 %v262
      %v638 = vunpack.c.h.b16 %v262
      %v639 = vunpack.c.l.b16 %v263
      %v640 = vunpack.c.h.b16 %v263
      %v641 = vunpack.c.l.b16 %v264
      %v642 = vunpack.c.l.b16 %v265
      %v643 = vunpack.c.h.b16 %v265
      %v644 = vunpack.c.l.b16 %v266
      %v645 = vunpack.c.h.b16 %v266
      %v646 = vunpack.c.l.b16 %v267
      %v647 = vunpack.c.h.b16 %v267
      %v648 = vunpack.c.l.b16 %v268
      %v649 = vunpack.c.l.b16 %v269
      %v650 = vunpack.c.h.b16 %v269
      %v651 = vunpack.c.l.b16 %v270
      %v652 = vunpack.c.h.b16 %v270
      %v653 = vunpack.c.l.b16 %v271
      %v654 = vunpack.c.h.b16 %v271
      %v655 = vunpack.c.l.b16 %v272
      %v656 = vunpack.c.l.b16 %v273
      %v657 = vunpack.c.h.b16 %v273
      %v658 = vunpack.c.l.b16 %v274
      %v659 = vunpack.c.h.b16 %v274
      %v660 = vunpack.c.l.b16 %v275
      %v661 = vunpack.c.h.b16 %v275
      %v662 = vunpack.c.l.b16 %v276
      %v663 = vunpack.c.l.b16 %v277
      %v664 = vunpack.c.h.b16 %v277
      %v665 = vunpack.c.l.b16 %v278
      %v666 = vunpack.c.h.b16 %v278
      %v667 = vunpack.c.l.b16 %v279
      %v668 = vunpack.c.h.b16 %v279
      %v669 = vunpack.c.l.b16 %v280
      %v670 = vunpack.c.l.b16 %v281
      %v671 = vunpack.c.h.b16 %v281
      %v672 = vunpack.c.l.b16 %v282
      %v673 = vunpack.c.h.b16 %v282
      %v674 = vunpack.c.l.b16 %v283
      %v675 = vunpack.c.h.b16 %v283
      %v676 = vunpack.c.l.b16 %v284
      %v677 = vunpack.c.l.b16 %v285
      %v678 = vunpack.c.h.b16 %v285
      %v679 = vunpack.c.l.b16 %v286
      %v680 = vunpack.c.h.b16 %v286
      %v681 = vunpack.c.l.b16 %v287
      %v682 = vunpack.c.h.b16 %v287
      %v683 = vunpack.c.l.b16 %v288
      %v684 = vunpack.c.l.b16 %v289
      %v685 = vunpack.c.h.b16 %v289
      %v686 = vunpack.c.l.b16 %v290
      %v687 = vunpack.c.h.b16 %v290
      %v688 = vunpack.c.l.b16 %v291
      %v689 = vunpack.c.h.b16 %v291
      %v690 = vunpack.c.l.b16 %v292
      %v691 = vunpack.c.l.b16 %v293
      %v692 = vunpack.c.h.b16 %v293
      %v693 = vunpack.c.l.b16 %v294
      %v694 = vunpack.c.h.b16 %v294
      %v695 = vunpack.c.l.b16 %v295
      %v696 = vunpack.c.h.b16 %v295
      %v697 = vunpack.c.l.b16 %v296
      %v698 = vunpack.c.l.b16 %v297
      %v699 = vunpack.c.h.b16 %v297
      %v700 = vunpack.c.l.b16 %v298
      %v701 = vunpack.c.h.b16 %v298
      %v702 = vunpack.c.l.b16 %v299
      %v703 = vunpack.c.h.b16 %v299
      %v704 = vunpack.c.l.b16 %v300
      %v705 = vunpack.c.l.b16 %v301
      %v706 = vunpack.c.h.b16 %v301
      %v707 = vunpack.c.l.b16 %v302
      %v708 = vunpack.c.h.b16 %v302
      %v709 = vunpack.c.l.b16 %v303
      %v710 = vunpack.c.h.b16 %v303
      %v711 = vunpack.c.l.b16 %v304
      %v712 = vunpack.c.l.b16 %v305
      %v713 = vunpack.c.h.b16 %v305
      %v714 = vunpack.c.l.b16 %v306
      %v715 = vunpack.c.h.b16 %v306
      %v716 = vunpack.c.l.b16 %v307
      %v717 = vunpack.c.h.b16 %v307
      %v718 = vunpack.c.l.b16 %v308
      %v719 = vunpack.c.l.b16 %v309
      %v720 = vunpack.c.h.b16 %v309
      %v721 = vunpack.c.l.b16 %v310
      %v722 = vunpack.c.h.b16 %v310
      %v723 = vunpack.c.l.b16 %v311
      %v724 = vunpack.c.h.b16 %v311
      %v725 = vunpack.c.l.b16 %v312
      %v726 = vunpack.c.l.b16 %v313
      %v727 = vunpack.c.h.b16 %v313
      %v728 = vunpack.c.l.b16 %v314
      %v729 = vunpack.c.h.b16 %v314
      %v730 = vunpack.c.l.b16 %v315
      %v731 = vunpack.c.h.b16 %v315
      %v732 = vunpack.c.l.b16 %v316
      %v733 = vunpack.c.l.b16 %v317
      %v734 = vunpack.c.h.b16 %v317
      %v735 = vunpack.c.l.b16 %v318
      %v736 = vunpack.c.h.b16 %v318
      %v737 = vunpack.c.l.b16 %v319
      %v738 = vunpack.c.h.b16 %v319
      %v739 = vunpack.c.l.b16 %v320
      %v740 = vunpack.c.l.b16 %v321
      %v741 = vunpack.c.h.b16 %v321
      %v742 = vunpack.c.l.b16 %v322
      %v743 = vunpack.c.h.b16 %v322
      %v744 = vunpack.c.l.b16 %v323
      %v745 = vunpack.c.h.b16 %v323
      %v746 = vunpack.c.l.b16 %v324
      %v747 = vunpack.c.l.b16 %v325
      %v748 = vunpack.c.h.b16 %v325
      %v749 = vunpack.c.l.b16 %v326
      %v750 = vunpack.c.h.b16 %v326
      %v751 = vunpack.c.l.b16 %v327
      %v752 = vunpack.c.h.b16 %v327
      %v753 = vunpack.c.l.b16 %v328
      %v754 = vunpack.c.l.b16 %v329
      %v755 = vunpack.c.h.b16 %v329
      %v756 = vunpack.c.l.b16 %v330
      %v757 = vunpack.c.h.b16 %v330
      %v758 = vunpack.c.l.b16 %v331
      %v759 = vunpack.c.h.b16 %v331
      %v760 = vunpack.c.l.b16 %v332
      %v761 = vunpack.c.l.b16 %v333
      %v762 = vunpack.c.h.b16 %v333
      %v763 = vunpack.c.l.b16 %v334
      %v764 = vunpack.c.h.b16 %v334
      %v765 = vunpack.c.l.b16 %v335
      %v766 = vunpack.c.h.b16 %v335
      %v767 = vunpack.c.l.b16 %v336
      %v768 = vunpack.c.l.b16 %v337
      %v769 = vunpack.c.h.b16 %v337
      %v770 = vunpack.c.l.b16 %v338
      %v771 = vunpack.c.h.b16 %v338
      %v772 = vunpack.c.l.b16 %v339
      %v773 = vunpack.c.h.b16 %v339
      %v774 = vunpack.c.l.b16 %v340
      %v775 = vunpack.c.l.b16 %v341
      %v776 = vunpack.c.h.b16 %v341
      %v777 = vunpack.c.l.b16 %v342
      %v778 = vunpack.c.h.b16 %v342
      %v779 = vunpack.c.l.b16 %v343
      %v780 = vunpack.c.h.b16 %v343
      %v781 = vunpack.c.l.b16 %v344
      %v782 = vunpack.c.l.b16 %v345
      %v783 = vunpack.c.h.b16 %v345
      %v784 = vunpack.c.l.b16 %v346
      %v785 = vunpack.c.h.b16 %v346
      %v786 = vunpack.c.l.b16 %v347
      %v787 = vunpack.c.h.b16 %v347
      %v788 = vunpack.c.l.b16 %v348
      %v789 = vunpack.c.l.b16 %v349
      %v790 = vunpack.c.h.b16 %v349
      %v791 = vunpack.c.l.b16 %v350
      %v792 = vunpack.c.h.b16 %v350
      %v793 = vunpack.c.l.b16 %v351
      %v794 = vunpack.c.h.b16 %v351
      %v795 = vunpack.c.l.b16 %v352
      %v796 = vunpack.c.l.b16 %v353
      %v797 = vunpack.c.h.b16 %v353
      %v798 = vunpack.c.l.b16 %v354
      %v799 = vunpack.c.h.b16 %v354
      %v800 = vunpack.c.l.b16 %v355
      %v801 = vunpack.c.h.b16 %v355
      %v802 = vunpack.c.l.b16 %v356
      %v803 = vunpack.c.l.b16 %v357
      %v804 = vunpack.c.h.b16 %v357
      %v805 = vunpack.c.l.b16 %v358
      %v806 = vunpack.c.h.b16 %v358
      %v807 = vunpack.c.l.b16 %v359
      %v808 = vunpack.c.h.b16 %v359
      %v809 = vunpack.c.l.b16 %v360
      %v810 = vunpack.c.l.b16 %v361
      %v811 = vunpack.c.h.b16 %v361
      %v812 = vunpack.c.l.b16 %v362
      %v813 = vunpack.c.h.b16 %v362
      %v814 = vunpack.c.l.b16 %v363
      %v815 = vunpack.c.h.b16 %v363
      %v816 = vunpack.c.l.b16 %v364
      %v817 = vunpack.c.l.b16 %v365
      %v818 = vunpack.c.h.b16 %v365
      %v819 = vunpack.c.l.b16 %v366
      %v820 = vunpack.c.h.b16 %v366
      %v821 = vunpack.c.l.b16 %v367
      %v822 = vunpack.c.h.b16 %v367
      %v823 = vunpack.c.l.b16 %v368
      %v824 = vunpack.c.l.b16 %v369
      %v825 = vunpack.c.h.b16 %v369
      %v826 = vunpack.c.l.b16 %v370
      %v827 = vunpack.c.h.b16 %v370
      %v828 = vunpack.c.l.b16 %v371
      %v829 = vunpack.c.h.b16 %v371
      %v830 = vunpack.c.l.b16 %v372
      %v831 = vunpack.c.l.b16 %v373
      %v832 = vunpack.c.h.b16 %v373
      %v833 = vunpack.c.l.b16 %v374
      %v834 = vunpack.c.h.b16 %v374
      %v835 = vunpack.c.l.b16 %v375
      %v836 = vunpack.c.h.b16 %v375
      %v837 = vunpack.c.l.b16 %v376
      %v838 = vunpack.c.l.b16 %v377
      %v839 = vunpack.c.h.b16 %v377
      %v840 = vunpack.c.l.b16 %v378
      %v841 = vunpack.c.h.b16 %v378
      %v842 = vunpack.c.l.b16 %v379
      %v843 = vunpack.c.h.b16 %v379
      %v844 = vunpack.c.l.b16 %v380
      %v845 = vpack.c.b16 %v628, %v621
      %v846 = vpack.c.b16 %v629, %v622
      %v847 = vpack.c.b16 %v630, %v623
      %v848 = vpack.c.b16 %v631, %v624
      %v849 = vpack.c.b16 %v632, %v625
      %v850 = vpack.c.b16 %v633, %v626
      %v851 = vpack.c.b16 %v634, %v627
      %v852 = vpack.c.b16 %v642, %v635
      %v853 = vpack.c.b16 %v643, %v636
      %v854 = vpack.c.b16 %v644, %v637
      %v855 = vpack.c.b16 %v645, %v638
      %v856 = vpack.c.b16 %v646, %v639
      %v857 = vpack.c.b16 %v647, %v640
      %v858 = vpack.c.b16 %v648, %v641
      %v859 = vpack.c.b16 %v656, %v649
      %v860 = vpack.c.b16 %v657, %v650
      %v861 = vpack.c.b16 %v658, %v651
      %v862 = vpack.c.b16 %v659, %v652
      %v863 = vpack.c.b16 %v660, %v653
      %v864 = vpack.c.b16 %v661, %v654
      %v865 = vpack.c.b16 %v662, %v655
      %v866 = vpack.c.b16 %v670, %v663
      %v867 = vpack.c.b16 %v671, %v664
      %v868 = vpack.c.b16 %v672, %v665
      %v869 = vpack.c.b16 %v673, %v666
      %v870 = vpack.c.b16 %v674, %v667
      %v871 = vpack.c.b16 %v675, %v668
      %v872 = vpack.c.b16 %v676, %v669
      %v873 = vpack.c.b16 %v684, %v677
      %v874 = vpack.c.b16 %v685, %v678
      %v875 = vpack.c.b16 %v686, %v679
      %v876 = vpack.c.b16 %v687, %v680
      %v877 = vpack.c.b16 %v688, %v681
      %v878 = vpack.c.b16 %v689, %v682
      %v879 = vpack.c.b16 %v690, %v683
      %v880 = vpack.c.b16 %v698, %v691
      %v881 = vpack.c.b16 %v699, %v692
      %v882 = vpack.c.b16 %v700, %v693
      %v883 = vpack.c.b16 %v701, %v694
      %v884 = vpack.c.b16 %v702, %v695
      %v885 = vpack.c.b16 %v703, %v696
      %v886 = vpack.c.b16 %v704, %v697
      %v887 = vpack.c.b16 %v712, %v705
      %v888 = vpack.c.b16 %v713, %v706
      %v889 = vpack.c.b16 %v714, %v707
      %v890 = vpack.c.b16 %v715, %v708
      %v891 = vpack.c.b16 %v716, %v709
      %v892 = vpack.c.b16 %v717, %v710
      %v893 = vpack.c.b16 %v718, %v711
      %v894 = vpack.c.b16 %v726, %v719
      %v895 = vpack.c.b16 %v727, %v720
      %v896 = vpack.c.b16 %v728, %v721
      %v897 = vpack.c.b16 %v729, %v722
      %v898 = vpack.c.b16 %v730, %v723
      %v899 = vpack.c.b16 %v731, %v724
      %v900 = vpack.c.b16 %v732, %v725
      %v901 = vpack.c.b16 %v740, %v733
      %v902 = vpack.c.b16 %v741, %v734
      %v903 = vpack.c.b16 %v742, %v735
      %v904 = vpack.c.b16 %v743, %v736
      %v905 = vpack.c.b16 %v744, %v737
      %v906 = vpack.c.b16 %v745, %v738
      %v907 = vpack.c.b16 %v746, %v739
      %v908 = vpack.c.b16 %v754, %v747
      %v909 = vpack.c.b16 %v755, %v748
      %v910 = vpack.c.b16 %v756, %v749
      %v911 = vpack.c.b16 %v757, %v750
      %v912 = vpack.c.b16 %v758, %v751
      %v913 = vpack.c.b16 %v759, %v752
      %v914 = vpack.c.b16 %v760, %v753
      %v915 = vpack.c.b16 %v768, %v761
      %v916 = vpack.c.b16 %v769, %v762
      %v917 = vpack.c.b16 %v770, %v763
      %v918 = vpack.c.b16 %v771, %v764
      %v919 = vpack.c.b16 %v772, %v765
      %v920 = vpack.c.b16 %v773, %v766
      %v921 = vpack.c.b16 %v774, %v767
      %v922 = vpack.c.b16 %v782, %v775
      %v923 = vpack.c.b16 %v783, %v776
      %v924 = vpack.c.b16 %v784, %v777
      %v925 = vpack.c.b16 %v785, %v778
      %v926 = vpack.c.b16 %v786, %v779
      %v927 = vpack.c.b16 %v787, %v780
      %v928 = vpack.c.b16 %v788, %v781
      %v929 = vpack.c.b16 %v796, %v789
      %v930 = vpack.c.b16 %v797, %v790
      %v931 = vpack.c.b16 %v798, %v791
      %v932 = vpack.c.b16 %v799, %v792
      %v933 = vpack.c.b16 %v800, %v793
      %v934 = vpack.c.b16 %v801, %v794
      %v935 = vpack.c.b16 %v802, %v795
      %v936 = vpack.c.b16 %v810, %v803
      %v937 = vpack.c.b16 %v811, %v804
      %v938 = vpack.c.b16 %v812, %v805
      %v939 = vpack.c.b16 %v813, %v806
      %v940 = vpack.c.b16 %v814, %v807
      %v941 = vpack.c.b16 %v815, %v808
      %v942 = vpack.c.b16 %v816, %v809
      %v943 = vpack.c.b16 %v824, %v817
      %v944 = vpack.c.b16 %v825, %v818
      %v945 = vpack.c.b16 %v826, %v819
      %v946 = vpack.c.b16 %v827, %v820
      %v947 = vpack.c.b16 %v828, %v821
      %v948 = vpack.c.b16 %v829, %v822
      %v949 = vpack.c.b16 %v830, %v823
      %v950 = vpack.c.b16 %v838, %v831
      %v951 = vpack.c.b16 %v839, %v832
      %v952 = vpack.c.b16 %v840, %v833
      %v953 = vpack.c.b16 %v841, %v834
      %v954 = vpack.c.b16 %v842, %v835
      %v955 = vpack.c.b16 %v843, %v836
      %v956 = vpack.c.b16 %v844, %v837
      %v1181 = vunpack.c.l.b16 %v381
      %v1182 = vunpack.c.l.b16 %v382
      %v1183 = vunpack.c.l.b16 %v383
      %v1184 = vunpack.c.l.b16 %v384
      %v1185 = vunpack.c.l.b16 %v385
      %v1186 = vunpack.c.l.b16 %v386
      %v1187 = vunpack.c.l.b16 %v387
      %v1188 = vunpack.c.l.b16 %v388
      %v1189 = vunpack.c.l.b16 %v389
      %v1190 = vunpack.c.l.b16 %v390
      %v1191 = vunpack.c.l.b16 %v391
      %v1192 = vunpack.c.l.b16 %v392
      %v1193 = vunpack.c.l.b16 %v393
      %v1194 = vunpack.c.l.b16 %v394
      %v1195 = vunpack.c.l.b16 %v395
      %v1196 = vunpack.c.l.b16 %v396
      %v1197 = vunpack.c.l.b16 %v397
      %v1198 = vunpack.c.l.b16 %v398
      %v1199 = vunpack.c.l.b16 %v399
      %v1200 = vunpack.c.l.b16 %v400
      %v1201 = vunpack.c.l.b16 %v401
      %v1202 = vunpack.c.l.b16 %v402
      %v1203 = vunpack.c.l.b16 %v403
      %v1204 = vunpack.c.l.b16 %v404
      %v1205 = vunpack.c.l.b16 %v405
      %v1206 = vunpack.c.l.b16 %v406
      %v1207 = vunpack.c.l.b16 %v407
      %v1208 = vunpack.c.l.b16 %v408
      %v1209 = vunpack.c.l.b16 %v409
      %v1210 = vunpack.c.l.b16 %v410
      %v1211 = vunpack.c.l.b16 %v411
      %v1212 = vunpack.c.l.b16 %v412
      %v1213 = vunpack.c.l.b16 %v413
      %v1214 = vunpack.c.l.b16 %v414
      %v1215 = vunpack.c.l.b16 %v415
      %v1216 = vunpack.c.l.b16 %v416
      %v1217 = vunpack.c.l.b16 %v417
      %v1218 = vunpack.c.l.b16 %v418
      %v1219 = vunpack.c.l.b16 %v419
      %v1220 = vunpack.c.l.b16 %v420
      %v1221 = vunpack.c.l.b16 %v421
      %v1222 = vunpack.c.l.b16 %v422
      %v1223 = vunpack.c.l.b16 %v423
      %v1224 = vunpack.c.l.b16 %v424
      %v1225 = vunpack.c.l.b16 %v425
      %v1226 = vunpack.c.l.b16 %v426
      %v1227 = vunpack.c.l.b16 %v427
      %v1228 = vunpack.c.l.b16 %v428
      %v1229 = vunpack.c.l.b16 %v429
      %v1230 = vunpack.c.l.b16 %v430
      %v1231 = vunpack.c.l.b16 %v431
      %v1232 = vunpack.c.l.b16 %v432
      %v1233 = vunpack.c.l.b16 %v433
      %v1234 = vunpack.c.l.b16 %v434
      %v1235 = vunpack.c.l.b16 %v435
      %v1236 = vunpack.c.l.b16 %v436
      %v1237 = vunpack.c.l.b16 %v437
      %v1238 = vunpack.c.l.b16 %v438
      %v1239 = vunpack.c.l.b16 %v439
      %v1240 = vunpack.c.l.b16 %v440
      %v1241 = vunpack.c.l.b16 %v441
      %v1242 = vunpack.c.l.b16 %v442
      %v1243 = vunpack.c.l.b16 %v443
      %v1244 = vunpack.c.l.b16 %v444
      %v1245 = vunpack.c.l.b16 %v445
      %v1246 = vunpack.c.l.b16 %v446
      %v1247 = vunpack.c.l.b16 %v447
      %v1248 = vunpack.c.l.b16 %v448
      %v1249 = vunpack.c.l.b16 %v449
      %v1250 = vunpack.c.l.b16 %v450
      %v1251 = vunpack.c.l.b16 %v451
      %v1252 = vunpack.c.l.b16 %v452
      %v1253 = vunpack.c.l.b16 %v453
      %v1254 = vunpack.c.l.b16 %v454
      %v1255 = vunpack.c.l.b16 %v455
      %v1256 = vunpack.c.l.b16 %v456
      %v1257 = vunpack.c.l.b16 %v457
      %v1258 = vunpack.c.l.b16 %v458
      %v1259 = vunpack.c.l.b16 %v459
      %v1260 = vunpack.c.l.b16 %v460
      %v1261 = vunpack.c.l.b16 %v461
      %v1262 = vunpack.c.l.b16 %v462
      %v1263 = vunpack.c.l.b16 %v463
      %v1264 = vunpack.c.l.b16 %v464
      %v1265 = vunpack.c.l.b16 %v465
      %v1266 = vunpack.c.l.b16 %v466
      %v1267 = vunpack.c.l.b16 %v467
      %v1268 = vunpack.c.l.b16 %v468
      %v1269 = vunpack.c.l.b16 %v469
      %v1270 = vunpack.c.l.b16 %v470
      %v1271 = vunpack.c.l.b16 %v471
      %v1272 = vunpack.c.l.b16 %v472
      %v1273 = vunpack.c.l.b16 %v473
      %v1274 = vunpack.c.l.b16 %v474
      %v1275 = vunpack.c.l.b16 %v475
      %v1276 = vunpack.c.l.b16 %v476
      %v1277 = vunpack.c.l.b16 %v477
      %v1278 = vunpack.c.l.b16 %v478
      %v1279 = vunpack.c.l.b16 %v479
      %v1280 = vunpack.c.l.b16 %v480
      %v1281 = vunpack.c.l.b16 %v481
      %v1282 = vunpack.c.l.b16 %v482
      %v1283 = vunpack.c.l.b16 %v483
      %v1284 = vunpack.c.l.b16 %v484
      %v1285 = vunpack.c.l.b16 %v485
      %v1286 = vunpack.c.l.b16 %v486
      %v1287 = vunpack.c.l.b16 %v487
      %v1288 = vunpack.c.l.b16 %v488
      %v1289 = vunpack.c.l.b16 %v489
      %v1290 = vunpack.c.l.b16 %v490
      %v1291 = vunpack.c.l.b16 %v491
      %v1292 = vunpack.c.l.b16 %v492
      %v1293 = vpack.c.b16 %v1182, %v1181
      %v1294 = vpack.c.b16 %v1184, %v1183
      %v1295 = vpack.c.b16 %v1186, %v1185
      %v1296 = vpack.c.b16 %v1188, %v1187
      %v1297 = vpack.c.b16 %v1190, %v1189
      %v1298 = vpack.c.b16 %v1192, %v1191
      %v1299 = vpack.c.b16 %v1194, %v1193
      %v1300 = vpack.c.b16 %v1196, %v1195
      %v1301 = vpack.c.b16 %v1198, %v1197
      %v1302 = vpack.c.b16 %v1200, %v1199
      %v1303 = vpack.c.b16 %v1202, %v1201
      %v1304 = vpack.c.b16 %v1204, %v1203
      %v1305 = vpack.c.b16 %v1206, %v1205
      %v1306 = vpack.c.b16 %v1208, %v1207
      %v1307 = vpack.c.b16 %v1210, %v1209
      %v1308 = vpack.c.b16 %v1212, %v1211
      %v1309 = vpack.c.b16 %v1214, %v1213
      %v1310 = vpack.c.b16 %v1216, %v1215
      %v1311 = vpack.c.b16 %v1218, %v1217
      %v1312 = vpack.c.b16 %v1220, %v1219
      %v1313 = vpack.c.b16 %v1222, %v1221
      %v1314 = vpack.c.b16 %v1224, %v1223
      %v1315 = vpack.c.b16 %v1226, %v1225
      %v1316 = vpack.c.b16 %v1228, %v1227
      %v1317 = vpack.c.b16 %v1230, %v1229
      %v1318 = vpack.c.b16 %v1232, %v1231
      %v1319 = vpack.c.b16 %v1234, %v1233
      %v1320 = vpack.c.b16 %v1236, %v1235
      %v1321 = vpack.c.b16 %v1238, %v1237
      %v1322 = vpack.c.b16 %v1240, %v1239
      %v1323 = vpack.c.b16 %v1242, %v1241
      %v1324 = vpack.c.b16 %v1244, %v1243
      %v1325 = vpack.c.b16 %v1246, %v1245
      %v1326 = vpack.c.b16 %v1248, %v1247
      %v1327 = vpack.c.b16 %v1250, %v1249
      %v1328 = vpack.c.b16 %v1252, %v1251
      %v1329 = vpack.c.b16 %v1254, %v1253
      %v1330 = vpack.c.b16 %v1256, %v1255
      %v1331 = vpack.c.b16 %v1258, %v1257
      %v1332 = vpack.c.b16 %v1260, %v1259
      %v1333 = vpack.c.b16 %v1262, %v1261
      %v1334 = vpack.c.b16 %v1264, %v1263
      %v1335 = vpack.c.b16 %v1266, %v1265
      %v1336 = vpack.c.b16 %v1268, %v1267
      %v1337 = vpack.c.b16 %v1270, %v1269
      %v1338 = vpack.c.b16 %v1272, %v1271
      %v1339 = vpack.c.b16 %v1274, %v1273
      %v1340 = vpack.c.b16 %v1276, %v1275
      %v1341 = vpack.c.b16 %v1278, %v1277
      %v1342 = vpack.c.b16 %v1280, %v1279
      %v1343 = vpack.c.b16 %v1282, %v1281
      %v1344 = vpack.c.b16 %v1284, %v1283
      %v1345 = vpack.c.b16 %v1286, %v1285
      %v1346 = vpack.c.b16 %v1288, %v1287
      %v1347 = vpack.c.b16 %v1290, %v1289
      %v1348 = vpack.c.b16 %v1292, %v1291
      %1405 = vmatpush.bf16.msra.mxu0 %v1300
      %1406 = vmatpush.bf16.msra.mxu0 %v1299
      %1407 = vmatpush.bf16.msra.mxu0 %v1298
      %1408 = vmatpush.bf16.msra.mxu0 %v1297
      %1409 = vmatpush.bf16.msra.mxu0 %v1296
      %1410 = vmatpush.bf16.msra.mxu0 %v1295
      %1411 = vmatpush.bf16.msra.mxu0 %v1294
      %1412 = vmatpush.bf16.msra.mxu0 %v1293
      %1413 = vmatmul.bf16.gmra.mxu0 %v845
      %v1414 = vpop.f32.mrf.mxu0
      %v1415 = vadd.f32 0.0, %v1414
      %v1416 = vpop.f32.mrf.mxu0
      %v1417 = vadd.f32 0.0, %v1416
      %1418 = vmatmul.bf16.gmra.mxu0 %v852
      %v1419 = vpop.f32.mrf.mxu0
      %v1420 = vadd.f32 0.0, %v1419
      %v1421 = vpop.f32.mrf.mxu0
      %v1422 = vadd.f32 0.0, %v1421
      %1423 = vmatmul.bf16.gmra.mxu0 %v859
      %v1424 = vpop.f32.mrf.mxu0
      %v1425 = vadd.f32 0.0, %v1424
      %v1426 = vpop.f32.mrf.mxu0
      %v1427 = vadd.f32 0.0, %v1426
      %1428 = vmatmul.bf16.gmra.mxu0 %v866
      %v1429 = vpop.f32.mrf.mxu0
      %v1430 = vadd.f32 0.0, %v1429
      %v1431 = vpop.f32.mrf.mxu0
      %v1432 = vadd.f32 0.0, %v1431
      %1433 = vmatmul.bf16.gmra.mxu0 %v873
      %v1434 = vpop.f32.mrf.mxu0
      %v1435 = vadd.f32 0.0, %v1434
      %v1436 = vpop.f32.mrf.mxu0
      %v1437 = vadd.f32 0.0, %v1436
      %1438 = vmatmul.bf16.gmra.mxu0 %v880
      %v1439 = vpop.f32.mrf.mxu0
      %v1440 = vadd.f32 0.0, %v1439
      %v1441 = vpop.f32.mrf.mxu0
      %v1442 = vadd.f32 0.0, %v1441
      %1443 = vmatmul.bf16.gmra.mxu0 %v887
      %v1444 = vpop.f32.mrf.mxu0
      %v1445 = vadd.f32 0.0, %v1444
      %v1446 = vpop.f32.mrf.mxu0
      %v1447 = vadd.f32 0.0, %v1446
      %1448 = vmatmul.bf16.gmra.mxu0 %v894
      %v1449 = vpop.f32.mrf.mxu0
      %v1450 = vadd.f32 0.0, %v1449
      %v1451 = vpop.f32.mrf.mxu0
      %v1452 = vadd.f32 0.0, %v1451
      %1453 = vmatmul.bf16.gmra.mxu0 %v901
      %v1454 = vpop.f32.mrf.mxu0
      %v1455 = vadd.f32 0.0, %v1454
      %v1456 = vpop.f32.mrf.mxu0
      %v1457 = vadd.f32 0.0, %v1456
      %1458 = vmatmul.bf16.gmra.mxu0 %v908
      %v1459 = vpop.f32.mrf.mxu0
      %v1460 = vadd.f32 0.0, %v1459
      %v1461 = vpop.f32.mrf.mxu0
      %v1462 = vadd.f32 0.0, %v1461
      %1463 = vmatmul.bf16.gmra.mxu0 %v915
      %v1464 = vpop.f32.mrf.mxu0
      %v1465 = vadd.f32 0.0, %v1464
      %v1466 = vpop.f32.mrf.mxu0
      %v1467 = vadd.f32 0.0, %v1466
      %1468 = vmatmul.bf16.gmra.mxu0 %v922
      %v1469 = vpop.f32.mrf.mxu0
      %v1470 = vadd.f32 0.0, %v1469
      %v1471 = vpop.f32.mrf.mxu0
      %v1472 = vadd.f32 0.0, %v1471
      %1473 = vmatmul.bf16.gmra.mxu0 %v929
      %v1474 = vpop.f32.mrf.mxu0
      %v1475 = vadd.f32 0.0, %v1474
      %v1476 = vpop.f32.mrf.mxu0
      %v1477 = vadd.f32 0.0, %v1476
      %1478 = vmatmul.bf16.gmra.mxu0 %v936
      %v1479 = vpop.f32.mrf.mxu0
      %v1480 = vadd.f32 0.0, %v1479
      %v1481 = vpop.f32.mrf.mxu0
      %v1482 = vadd.f32 0.0, %v1481
      %1483 = vmatmul.bf16.gmra.mxu0 %v943
      %v1484 = vpop.f32.mrf.mxu0
      %v1485 = vadd.f32 0.0, %v1484
      %v1486 = vpop.f32.mrf.mxu0
      %v1487 = vadd.f32 0.0, %v1486
      %1488 = vmatmul.bf16.gmra.mxu0 %v950
      %v1489 = vpop.f32.mrf.mxu0
      %v1490 = vadd.f32 0.0, %v1489
      %v1491 = vpop.f32.mrf.mxu0
      %v1492 = vadd.f32 0.0, %v1491
      %1493 = vdwg.mxu0
      %1494 = vmatpush.bf16.msra.mxu0 %v1308
      %1495 = vmatpush.bf16.msra.mxu0 %v1307
      %1496 = vmatpush.bf16.msra.mxu0 %v1306
      %1497 = vmatpush.bf16.msra.mxu0 %v1305
      %1498 = vmatpush.bf16.msra.mxu0 %v1304
      %1499 = vmatpush.bf16.msra.mxu0 %v1303
      %1500 = vmatpush.bf16.msra.mxu0 %v1302
      %1501 = vmatpush.bf16.msra.mxu0 %v1301
      %1502 = vmatmul.bf16.gmra.mxu0 %v846
      %v1503 = vpop.f32.mrf.mxu0
      %v1504 = vadd.f32 %v1415, %v1503
      %v1505 = vpop.f32.mrf.mxu0
      %v1506 = vadd.f32 %v1417, %v1505
      %1507 = vmatmul.bf16.gmra.mxu0 %v853
      %v1508 = vpop.f32.mrf.mxu0
      %v1509 = vadd.f32 %v1420, %v1508
      %v1510 = vpop.f32.mrf.mxu0
      %v1511 = vadd.f32 %v1422, %v1510
      %1512 = vmatmul.bf16.gmra.mxu0 %v860
      %v1513 = vpop.f32.mrf.mxu0
      %v1514 = vadd.f32 %v1425, %v1513
      %v1515 = vpop.f32.mrf.mxu0
      %v1516 = vadd.f32 %v1427, %v1515
      %1517 = vmatmul.bf16.gmra.mxu0 %v867
      %v1518 = vpop.f32.mrf.mxu0
      %v1519 = vadd.f32 %v1430, %v1518
      %v1520 = vpop.f32.mrf.mxu0
      %v1521 = vadd.f32 %v1432, %v1520
      %1522 = vmatmul.bf16.gmra.mxu0 %v874
      %v1523 = vpop.f32.mrf.mxu0
      %v1524 = vadd.f32 %v1435, %v1523
      %v1525 = vpop.f32.mrf.mxu0
      %v1526 = vadd.f32 %v1437, %v1525
      %1527 = vmatmul.bf16.gmra.mxu0 %v881
      %v1528 = vpop.f32.mrf.mxu0
      %v1529 = vadd.f32 %v1440, %v1528
      %v1530 = vpop.f32.mrf.mxu0
      %v1531 = vadd.f32 %v1442, %v1530
      %1532 = vmatmul.bf16.gmra.mxu0 %v888
      %v1533 = vpop.f32.mrf.mxu0
      %v1534 = vadd.f32 %v1445, %v1533
      %v1535 = vpop.f32.mrf.mxu0
      %v1536 = vadd.f32 %v1447, %v1535
      %1537 = vmatmul.bf16.gmra.mxu0 %v895
      %v1538 = vpop.f32.mrf.mxu0
      %v1539 = vadd.f32 %v1450, %v1538
      %v1540 = vpop.f32.mrf.mxu0
      %v1541 = vadd.f32 %v1452, %v1540
      %1542 = vmatmul.bf16.gmra.mxu0 %v902
      %v1543 = vpop.f32.mrf.mxu0
      %v1544 = vadd.f32 %v1455, %v1543
      %v1545 = vpop.f32.mrf.mxu0
      %v1546 = vadd.f32 %v1457, %v1545
      %1547 = vmatmul.bf16.gmra.mxu0 %v909
      %v1548 = vpop.f32.mrf.mxu0
      %v1549 = vadd.f32 %v1460, %v1548
      %v1550 = vpop.f32.mrf.mxu0
      %v1551 = vadd.f32 %v1462, %v1550
      %1552 = vmatmul.bf16.gmra.mxu0 %v916
      %v1553 = vpop.f32.mrf.mxu0
      %v1554 = vadd.f32 %v1465, %v1553
      %v1555 = vpop.f32.mrf.mxu0
      %v1556 = vadd.f32 %v1467, %v1555
      %1557 = vmatmul.bf16.gmra.mxu0 %v923
      %v1558 = vpop.f32.mrf.mxu0
      %v1559 = vadd.f32 %v1470, %v1558
      %v1560 = vpop.f32.mrf.mxu0
      %v1561 = vadd.f32 %v1472, %v1560
      %1562 = vmatmul.bf16.gmra.mxu0 %v930
      %v1563 = vpop.f32.mrf.mxu0
      %v1564 = vadd.f32 %v1475, %v1563
      %v1565 = vpop.f32.mrf.mxu0
      %v1566 = vadd.f32 %v1477, %v1565
      %1567 = vmatmul.bf16.gmra.mxu0 %v937
      %v1568 = vpop.f32.mrf.mxu0
      %v1569 = vadd.f32 %v1480, %v1568
      %v1570 = vpop.f32.mrf.mxu0
      %v1571 = vadd.f32 %v1482, %v1570
      %1572 = vmatmul.bf16.gmra.mxu0 %v944
      %v1573 = vpop.f32.mrf.mxu0
      %v1574 = vadd.f32 %v1485, %v1573
      %v1575 = vpop.f32.mrf.mxu0
      %v1576 = vadd.f32 %v1487, %v1575
      %1577 = vmatmul.bf16.gmra.mxu0 %v951
      %v1578 = vpop.f32.mrf.mxu0
      %v1579 = vadd.f32 %v1490, %v1578
      %v1580 = vpop.f32.mrf.mxu0
      %v1581 = vadd.f32 %v1492, %v1580
      %1582 = vdwg.mxu0
      %1583 = vmatpush.bf16.msra.mxu0 %v1316
      %1584 = vmatpush.bf16.msra.mxu0 %v1315
      %1585 = vmatpush.bf16.msra.mxu0 %v1314
      %1586 = vmatpush.bf16.msra.mxu0 %v1313
      %1587 = vmatpush.bf16.msra.mxu0 %v1312
      %1588 = vmatpush.bf16.msra.mxu0 %v1311
      %1589 = vmatpush.bf16.msra.mxu0 %v1310
      %1590 = vmatpush.bf16.msra.mxu0 %v1309
      %1591 = vmatmul.bf16.gmra.mxu0 %v847
      %v1592 = vpop.f32.mrf.mxu0
      %v1593 = vadd.f32 %v1504, %v1592
      %v1594 = vpop.f32.mrf.mxu0
      %v1595 = vadd.f32 %v1506, %v1594
      %1596 = vmatmul.bf16.gmra.mxu0 %v854
      %v1597 = vpop.f32.mrf.mxu0
      %v1598 = vadd.f32 %v1509, %v1597
      %v1599 = vpop.f32.mrf.mxu0
      %v1600 = vadd.f32 %v1511, %v1599
      %1601 = vmatmul.bf16.gmra.mxu0 %v861
      %v1602 = vpop.f32.mrf.mxu0
      %v1603 = vadd.f32 %v1514, %v1602
      %v1604 = vpop.f32.mrf.mxu0
      %v1605 = vadd.f32 %v1516, %v1604
      %1606 = vmatmul.bf16.gmra.mxu0 %v868
      %v1607 = vpop.f32.mrf.mxu0
      %v1608 = vadd.f32 %v1519, %v1607
      %v1609 = vpop.f32.mrf.mxu0
      %v1610 = vadd.f32 %v1521, %v1609
      %1611 = vmatmul.bf16.gmra.mxu0 %v875
      %v1612 = vpop.f32.mrf.mxu0
      %v1613 = vadd.f32 %v1524, %v1612
      %v1614 = vpop.f32.mrf.mxu0
      %v1615 = vadd.f32 %v1526, %v1614
      %1616 = vmatmul.bf16.gmra.mxu0 %v882
      %v1617 = vpop.f32.mrf.mxu0
      %v1618 = vadd.f32 %v1529, %v1617
      %v1619 = vpop.f32.mrf.mxu0
      %v1620 = vadd.f32 %v1531, %v1619
      %1621 = vmatmul.bf16.gmra.mxu0 %v889
      %v1622 = vpop.f32.mrf.mxu0
      %v1623 = vadd.f32 %v1534, %v1622
      %v1624 = vpop.f32.mrf.mxu0
      %v1625 = vadd.f32 %v1536, %v1624
      %1626 = vmatmul.bf16.gmra.mxu0 %v896
      %v1627 = vpop.f32.mrf.mxu0
      %v1628 = vadd.f32 %v1539, %v1627
      %v1629 = vpop.f32.mrf.mxu0
      %v1630 = vadd.f32 %v1541, %v1629
      %1631 = vmatmul.bf16.gmra.mxu0 %v903
      %v1632 = vpop.f32.mrf.mxu0
      %v1633 = vadd.f32 %v1544, %v1632
      %v1634 = vpop.f32.mrf.mxu0
      %v1635 = vadd.f32 %v1546, %v1634
      %1636 = vmatmul.bf16.gmra.mxu0 %v910
      %v1637 = vpop.f32.mrf.mxu0
      %v1638 = vadd.f32 %v1549, %v1637
      %v1639 = vpop.f32.mrf.mxu0
      %v1640 = vadd.f32 %v1551, %v1639
      %1641 = vmatmul.bf16.gmra.mxu0 %v917
      %v1642 = vpop.f32.mrf.mxu0
      %v1643 = vadd.f32 %v1554, %v1642
      %v1644 = vpop.f32.mrf.mxu0
      %v1645 = vadd.f32 %v1556, %v1644
      %1646 = vmatmul.bf16.gmra.mxu0 %v924
      %v1647 = vpop.f32.mrf.mxu0
      %v1648 = vadd.f32 %v1559, %v1647
      %v1649 = vpop.f32.mrf.mxu0
      %v1650 = vadd.f32 %v1561, %v1649
      %1651 = vmatmul.bf16.gmra.mxu0 %v931
      %v1652 = vpop.f32.mrf.mxu0
      %v1653 = vadd.f32 %v1564, %v1652
      %v1654 = vpop.f32.mrf.mxu0
      %v1655 = vadd.f32 %v1566, %v1654
      %1656 = vmatmul.bf16.gmra.mxu0 %v938
      %v1657 = vpop.f32.mrf.mxu0
      %v1658 = vadd.f32 %v1569, %v1657
      %v1659 = vpop.f32.mrf.mxu0
      %v1660 = vadd.f32 %v1571, %v1659
      %1661 = vmatmul.bf16.gmra.mxu0 %v945
      %v1662 = vpop.f32.mrf.mxu0
      %v1663 = vadd.f32 %v1574, %v1662
      %v1664 = vpop.f32.mrf.mxu0
      %v1665 = vadd.f32 %v1576, %v1664
      %1666 = vmatmul.bf16.gmra.mxu0 %v952
      %v1667 = vpop.f32.mrf.mxu0
      %v1668 = vadd.f32 %v1579, %v1667
      %v1669 = vpop.f32.mrf.mxu0
      %v1670 = vadd.f32 %v1581, %v1669
      %1671 = vdwg.mxu0
      %1672 = vmatpush.bf16.msra.mxu0 %v1324
      %1673 = vmatpush.bf16.msra.mxu0 %v1323
      %1674 = vmatpush.bf16.msra.mxu0 %v1322
      %1675 = vmatpush.bf16.msra.mxu0 %v1321
      %1676 = vmatpush.bf16.msra.mxu0 %v1320
      %1677 = vmatpush.bf16.msra.mxu0 %v1319
      %1678 = vmatpush.bf16.msra.mxu0 %v1318
      %1679 = vmatpush.bf16.msra.mxu0 %v1317
      %1680 = vmatmul.bf16.gmra.mxu0 %v848
      %v1681 = vpop.f32.mrf.mxu0
      %v1682 = vadd.f32 %v1593, %v1681
      %v1683 = vpop.f32.mrf.mxu0
      %v1684 = vadd.f32 %v1595, %v1683
      %1685 = vmatmul.bf16.gmra.mxu0 %v855
      %v1686 = vpop.f32.mrf.mxu0
      %v1687 = vadd.f32 %v1598, %v1686
      %v1688 = vpop.f32.mrf.mxu0
      %v1689 = vadd.f32 %v1600, %v1688
      %1690 = vmatmul.bf16.gmra.mxu0 %v862
      %v1691 = vpop.f32.mrf.mxu0
      %v1692 = vadd.f32 %v1603, %v1691
      %v1693 = vpop.f32.mrf.mxu0
      %v1694 = vadd.f32 %v1605, %v1693
      %1695 = vmatmul.bf16.gmra.mxu0 %v869
      %v1696 = vpop.f32.mrf.mxu0
      %v1697 = vadd.f32 %v1608, %v1696
      %v1698 = vpop.f32.mrf.mxu0
      %v1699 = vadd.f32 %v1610, %v1698
      %1700 = vmatmul.bf16.gmra.mxu0 %v876
      %v1701 = vpop.f32.mrf.mxu0
      %v1702 = vadd.f32 %v1613, %v1701
      %v1703 = vpop.f32.mrf.mxu0
      %v1704 = vadd.f32 %v1615, %v1703
      %1705 = vmatmul.bf16.gmra.mxu0 %v883
      %v1706 = vpop.f32.mrf.mxu0
      %v1707 = vadd.f32 %v1618, %v1706
      %v1708 = vpop.f32.mrf.mxu0
      %v1709 = vadd.f32 %v1620, %v1708
      %1710 = vmatmul.bf16.gmra.mxu0 %v890
      %v1711 = vpop.f32.mrf.mxu0
      %v1712 = vadd.f32 %v1623, %v1711
      %v1713 = vpop.f32.mrf.mxu0
      %v1714 = vadd.f32 %v1625, %v1713
      %1715 = vmatmul.bf16.gmra.mxu0 %v897
      %v1716 = vpop.f32.mrf.mxu0
      %v1717 = vadd.f32 %v1628, %v1716
      %v1718 = vpop.f32.mrf.mxu0
      %v1719 = vadd.f32 %v1630, %v1718
      %1720 = vmatmul.bf16.gmra.mxu0 %v904
      %v1721 = vpop.f32.mrf.mxu0
      %v1722 = vadd.f32 %v1633, %v1721
      %v1723 = vpop.f32.mrf.mxu0
      %v1724 = vadd.f32 %v1635, %v1723
      %1725 = vmatmul.bf16.gmra.mxu0 %v911
      %v1726 = vpop.f32.mrf.mxu0
      %v1727 = vadd.f32 %v1638, %v1726
      %v1728 = vpop.f32.mrf.mxu0
      %v1729 = vadd.f32 %v1640, %v1728
      %1730 = vmatmul.bf16.gmra.mxu0 %v918
      %v1731 = vpop.f32.mrf.mxu0
      %v1732 = vadd.f32 %v1643, %v1731
      %v1733 = vpop.f32.mrf.mxu0
      %v1734 = vadd.f32 %v1645, %v1733
      %1735 = vmatmul.bf16.gmra.mxu0 %v925
      %v1736 = vpop.f32.mrf.mxu0
      %v1737 = vadd.f32 %v1648, %v1736
      %v1738 = vpop.f32.mrf.mxu0
      %v1739 = vadd.f32 %v1650, %v1738
      %1740 = vmatmul.bf16.gmra.mxu0 %v932
      %v1741 = vpop.f32.mrf.mxu0
      %v1742 = vadd.f32 %v1653, %v1741
      %v1743 = vpop.f32.mrf.mxu0
      %v1744 = vadd.f32 %v1655, %v1743
      %1745 = vmatmul.bf16.gmra.mxu0 %v939
      %v1746 = vpop.f32.mrf.mxu0
      %v1747 = vadd.f32 %v1658, %v1746
      %v1748 = vpop.f32.mrf.mxu0
      %v1749 = vadd.f32 %v1660, %v1748
      %1750 = vmatmul.bf16.gmra.mxu0 %v946
      %v1751 = vpop.f32.mrf.mxu0
      %v1752 = vadd.f32 %v1663, %v1751
      %v1753 = vpop.f32.mrf.mxu0
      %v1754 = vadd.f32 %v1665, %v1753
      %1755 = vmatmul.bf16.gmra.mxu0 %v953
      %v1756 = vpop.f32.mrf.mxu0
      %v1757 = vadd.f32 %v1668, %v1756
      %v1758 = vpop.f32.mrf.mxu0
      %v1759 = vadd.f32 %v1670, %v1758
      %1760 = vdwg.mxu0
      %1761 = vmatpush.bf16.msra.mxu0 %v1332
      %1762 = vmatpush.bf16.msra.mxu0 %v1331
      %1763 = vmatpush.bf16.msra.mxu0 %v1330
      %1764 = vmatpush.bf16.msra.mxu0 %v1329
      %1765 = vmatpush.bf16.msra.mxu0 %v1328
      %1766 = vmatpush.bf16.msra.mxu0 %v1327
      %1767 = vmatpush.bf16.msra.mxu0 %v1326
      %1768 = vmatpush.bf16.msra.mxu0 %v1325
      %1769 = vmatmul.bf16.gmra.mxu0 %v849
      %v1770 = vpop.f32.mrf.mxu0
      %v1771 = vadd.f32 %v1682, %v1770
      %v1772 = vpop.f32.mrf.mxu0
      %v1773 = vadd.f32 %v1684, %v1772
      %1774 = vmatmul.bf16.gmra.mxu0 %v856
      %v1775 = vpop.f32.mrf.mxu0
      %v1776 = vadd.f32 %v1687, %v1775
      %v1777 = vpop.f32.mrf.mxu0
      %v1778 = vadd.f32 %v1689, %v1777
      %1779 = vmatmul.bf16.gmra.mxu0 %v863
      %v1780 = vpop.f32.mrf.mxu0
      %v1781 = vadd.f32 %v1692, %v1780
      %v1782 = vpop.f32.mrf.mxu0
      %v1783 = vadd.f32 %v1694, %v1782
      %1784 = vmatmul.bf16.gmra.mxu0 %v870
      %v1785 = vpop.f32.mrf.mxu0
      %v1786 = vadd.f32 %v1697, %v1785
      %v1787 = vpop.f32.mrf.mxu0
      %v1788 = vadd.f32 %v1699, %v1787
      %1789 = vmatmul.bf16.gmra.mxu0 %v877
      %v1790 = vpop.f32.mrf.mxu0
      %v1791 = vadd.f32 %v1702, %v1790
      %v1792 = vpop.f32.mrf.mxu0
      %v1793 = vadd.f32 %v1704, %v1792
      %1794 = vmatmul.bf16.gmra.mxu0 %v884
      %v1795 = vpop.f32.mrf.mxu0
      %v1796 = vadd.f32 %v1707, %v1795
      %v1797 = vpop.f32.mrf.mxu0
      %v1798 = vadd.f32 %v1709, %v1797
      %1799 = vmatmul.bf16.gmra.mxu0 %v891
      %v1800 = vpop.f32.mrf.mxu0
      %v1801 = vadd.f32 %v1712, %v1800
      %v1802 = vpop.f32.mrf.mxu0
      %v1803 = vadd.f32 %v1714, %v1802
      %1804 = vmatmul.bf16.gmra.mxu0 %v898
      %v1805 = vpop.f32.mrf.mxu0
      %v1806 = vadd.f32 %v1717, %v1805
      %v1807 = vpop.f32.mrf.mxu0
      %v1808 = vadd.f32 %v1719, %v1807
      %1809 = vmatmul.bf16.gmra.mxu0 %v905
      %v1810 = vpop.f32.mrf.mxu0
      %v1811 = vadd.f32 %v1722, %v1810
      %v1812 = vpop.f32.mrf.mxu0
      %v1813 = vadd.f32 %v1724, %v1812
      %1814 = vmatmul.bf16.gmra.mxu0 %v912
      %v1815 = vpop.f32.mrf.mxu0
      %v1816 = vadd.f32 %v1727, %v1815
      %v1817 = vpop.f32.mrf.mxu0
      %v1818 = vadd.f32 %v1729, %v1817
      %1819 = vmatmul.bf16.gmra.mxu0 %v919
      %v1820 = vpop.f32.mrf.mxu0
      %v1821 = vadd.f32 %v1732, %v1820
      %v1822 = vpop.f32.mrf.mxu0
      %v1823 = vadd.f32 %v1734, %v1822
      %1824 = vmatmul.bf16.gmra.mxu0 %v926
      %v1825 = vpop.f32.mrf.mxu0
      %v1826 = vadd.f32 %v1737, %v1825
      %v1827 = vpop.f32.mrf.mxu0
      %v1828 = vadd.f32 %v1739, %v1827
      %1829 = vmatmul.bf16.gmra.mxu0 %v933
      %v1830 = vpop.f32.mrf.mxu0
      %v1831 = vadd.f32 %v1742, %v1830
      %v1832 = vpop.f32.mrf.mxu0
      %v1833 = vadd.f32 %v1744, %v1832
      %1834 = vmatmul.bf16.gmra.mxu0 %v940
      %v1835 = vpop.f32.mrf.mxu0
      %v1836 = vadd.f32 %v1747, %v1835
      %v1837 = vpop.f32.mrf.mxu0
      %v1838 = vadd.f32 %v1749, %v1837
      %1839 = vmatmul.bf16.gmra.mxu0 %v947
      %v1840 = vpop.f32.mrf.mxu0
      %v1841 = vadd.f32 %v1752, %v1840
      %v1842 = vpop.f32.mrf.mxu0
      %v1843 = vadd.f32 %v1754, %v1842
      %1844 = vmatmul.bf16.gmra.mxu0 %v954
      %v1845 = vpop.f32.mrf.mxu0
      %v1846 = vadd.f32 %v1757, %v1845
      %v1847 = vpop.f32.mrf.mxu0
      %v1848 = vadd.f32 %v1759, %v1847
      %1849 = vdwg.mxu0
      %1850 = vmatpush.bf16.msra.mxu0 %v1340
      %1851 = vmatpush.bf16.msra.mxu0 %v1339
      %1852 = vmatpush.bf16.msra.mxu0 %v1338
      %1853 = vmatpush.bf16.msra.mxu0 %v1337
      %1854 = vmatpush.bf16.msra.mxu0 %v1336
      %1855 = vmatpush.bf16.msra.mxu0 %v1335
      %1856 = vmatpush.bf16.msra.mxu0 %v1334
      %1857 = vmatpush.bf16.msra.mxu0 %v1333
      %1858 = vmatmul.bf16.gmra.mxu0 %v850
      %v1859 = vpop.f32.mrf.mxu0
      %v1860 = vadd.f32 %v1771, %v1859
      %v1861 = vpop.f32.mrf.mxu0
      %v1862 = vadd.f32 %v1773, %v1861
      %1863 = vmatmul.bf16.gmra.mxu0 %v857
      %v1864 = vpop.f32.mrf.mxu0
      %v1865 = vadd.f32 %v1776, %v1864
      %v1866 = vpop.f32.mrf.mxu0
      %v1867 = vadd.f32 %v1778, %v1866
      %1868 = vmatmul.bf16.gmra.mxu0 %v864
      %v1869 = vpop.f32.mrf.mxu0
      %v1870 = vadd.f32 %v1781, %v1869
      %v1871 = vpop.f32.mrf.mxu0
      %v1872 = vadd.f32 %v1783, %v1871
      %1873 = vmatmul.bf16.gmra.mxu0 %v871
      %v1874 = vpop.f32.mrf.mxu0
      %v1875 = vadd.f32 %v1786, %v1874
      %v1876 = vpop.f32.mrf.mxu0
      %v1877 = vadd.f32 %v1788, %v1876
      %1878 = vmatmul.bf16.gmra.mxu0 %v878
      %v1879 = vpop.f32.mrf.mxu0
      %v1880 = vadd.f32 %v1791, %v1879
      %v1881 = vpop.f32.mrf.mxu0
      %v1882 = vadd.f32 %v1793, %v1881
      %1883 = vmatmul.bf16.gmra.mxu0 %v885
      %v1884 = vpop.f32.mrf.mxu0
      %v1885 = vadd.f32 %v1796, %v1884
      %v1886 = vpop.f32.mrf.mxu0
      %v1887 = vadd.f32 %v1798, %v1886
      %1888 = vmatmul.bf16.gmra.mxu0 %v892
      %v1889 = vpop.f32.mrf.mxu0
      %v1890 = vadd.f32 %v1801, %v1889
      %v1891 = vpop.f32.mrf.mxu0
      %v1892 = vadd.f32 %v1803, %v1891
      %1893 = vmatmul.bf16.gmra.mxu0 %v899
      %v1894 = vpop.f32.mrf.mxu0
      %v1895 = vadd.f32 %v1806, %v1894
      %v1896 = vpop.f32.mrf.mxu0
      %v1897 = vadd.f32 %v1808, %v1896
      %1898 = vmatmul.bf16.gmra.mxu0 %v906
      %v1899 = vpop.f32.mrf.mxu0
      %v1900 = vadd.f32 %v1811, %v1899
      %v1901 = vpop.f32.mrf.mxu0
      %v1902 = vadd.f32 %v1813, %v1901
      %1903 = vmatmul.bf16.gmra.mxu0 %v913
      %v1904 = vpop.f32.mrf.mxu0
      %v1905 = vadd.f32 %v1816, %v1904
      %v1906 = vpop.f32.mrf.mxu0
      %v1907 = vadd.f32 %v1818, %v1906
      %1908 = vmatmul.bf16.gmra.mxu0 %v920
      %v1909 = vpop.f32.mrf.mxu0
      %v1910 = vadd.f32 %v1821, %v1909
      %v1911 = vpop.f32.mrf.mxu0
      %v1912 = vadd.f32 %v1823, %v1911
      %1913 = vmatmul.bf16.gmra.mxu0 %v927
      %v1914 = vpop.f32.mrf.mxu0
      %v1915 = vadd.f32 %v1826, %v1914
      %v1916 = vpop.f32.mrf.mxu0
      %v1917 = vadd.f32 %v1828, %v1916
      %1918 = vmatmul.bf16.gmra.mxu0 %v934
      %v1919 = vpop.f32.mrf.mxu0
      %v1920 = vadd.f32 %v1831, %v1919
      %v1921 = vpop.f32.mrf.mxu0
      %v1922 = vadd.f32 %v1833, %v1921
      %1923 = vmatmul.bf16.gmra.mxu0 %v941
      %v1924 = vpop.f32.mrf.mxu0
      %v1925 = vadd.f32 %v1836, %v1924
      %v1926 = vpop.f32.mrf.mxu0
      %v1927 = vadd.f32 %v1838, %v1926
      %1928 = vmatmul.bf16.gmra.mxu0 %v948
      %v1929 = vpop.f32.mrf.mxu0
      %v1930 = vadd.f32 %v1841, %v1929
      %v1931 = vpop.f32.mrf.mxu0
      %v1932 = vadd.f32 %v1843, %v1931
      %1933 = vmatmul.bf16.gmra.mxu0 %v955
      %v1934 = vpop.f32.mrf.mxu0
      %v1935 = vadd.f32 %v1846, %v1934
      %v1936 = vpop.f32.mrf.mxu0
      %v1937 = vadd.f32 %v1848, %v1936
      %1938 = vdwg.mxu0
      %1939 = vmatpush.bf16.msra.mxu0 %v1348
      %1940 = vmatpush.bf16.msra.mxu0 %v1347
      %1941 = vmatpush.bf16.msra.mxu0 %v1346
      %1942 = vmatpush.bf16.msra.mxu0 %v1345
      %1943 = vmatpush.bf16.msra.mxu0 %v1344
      %1944 = vmatpush.bf16.msra.mxu0 %v1343
      %1945 = vmatpush.bf16.msra.mxu0 %v1342
      %1946 = vmatpush.bf16.msra.mxu0 %v1341
      %1947 = vmatmul.bf16.gmra.mxu0 %v851
      %v1948 = vpop.f32.mrf.mxu0
      %v1949 = vadd.f32 %v1860, %v1948
      %v1950 = vpop.f32.mrf.mxu0
      %v1951 = vadd.f32 %v1862, %v1950
      %1952 = vmatmul.bf16.gmra.mxu0 %v858
      %v1953 = vpop.f32.mrf.mxu0
      %v1954 = vadd.f32 %v1865, %v1953
      %v1955 = vpop.f32.mrf.mxu0
      %v1956 = vadd.f32 %v1867, %v1955
      %1957 = vmatmul.bf16.gmra.mxu0 %v865
      %v1958 = vpop.f32.mrf.mxu0
      %v1959 = vadd.f32 %v1870, %v1958
      %v1960 = vpop.f32.mrf.mxu0
      %v1961 = vadd.f32 %v1872, %v1960
      %1962 = vmatmul.bf16.gmra.mxu0 %v872
      %v1963 = vpop.f32.mrf.mxu0
      %v1964 = vadd.f32 %v1875, %v1963
      %v1965 = vpop.f32.mrf.mxu0
      %v1966 = vadd.f32 %v1877, %v1965
      %1967 = vmatmul.bf16.gmra.mxu0 %v879
      %v1968 = vpop.f32.mrf.mxu0
      %v1969 = vadd.f32 %v1880, %v1968
      %v1970 = vpop.f32.mrf.mxu0
      %v1971 = vadd.f32 %v1882, %v1970
      %1972 = vmatmul.bf16.gmra.mxu0 %v886
      %v1973 = vpop.f32.mrf.mxu0
      %v1974 = vadd.f32 %v1885, %v1973
      %v1975 = vpop.f32.mrf.mxu0
      %v1976 = vadd.f32 %v1887, %v1975
      %1977 = vmatmul.bf16.gmra.mxu0 %v893
      %v1978 = vpop.f32.mrf.mxu0
      %v1979 = vadd.f32 %v1890, %v1978
      %v1980 = vpop.f32.mrf.mxu0
      %v1981 = vadd.f32 %v1892, %v1980
      %1982 = vmatmul.bf16.gmra.mxu0 %v900
      %v1983 = vpop.f32.mrf.mxu0
      %v1984 = vadd.f32 %v1895, %v1983
      %v1985 = vpop.f32.mrf.mxu0
      %v1986 = vadd.f32 %v1897, %v1985
      %1987 = vmatmul.bf16.gmra.mxu0 %v907
      %v1988 = vpop.f32.mrf.mxu0
      %v1989 = vadd.f32 %v1900, %v1988
      %v1990 = vpop.f32.mrf.mxu0
      %v1991 = vadd.f32 %v1902, %v1990
      %1992 = vmatmul.bf16.gmra.mxu0 %v914
      %v1993 = vpop.f32.mrf.mxu0
      %v1994 = vadd.f32 %v1905, %v1993
      %v1995 = vpop.f32.mrf.mxu0
      %v1996 = vadd.f32 %v1907, %v1995
      %1997 = vmatmul.bf16.gmra.mxu0 %v921
      %v1998 = vpop.f32.mrf.mxu0
      %v1999 = vadd.f32 %v1910, %v1998
      %v2000 = vpop.f32.mrf.mxu0
      %v2001 = vadd.f32 %v1912, %v2000
      %2002 = vmatmul.bf16.gmra.mxu0 %v928
      %v2003 = vpop.f32.mrf.mxu0
      %v2004 = vadd.f32 %v1915, %v2003
      %v2005 = vpop.f32.mrf.mxu0
      %v2006 = vadd.f32 %v1917, %v2005
      %2007 = vmatmul.bf16.gmra.mxu0 %v935
      %v2008 = vpop.f32.mrf.mxu0
      %v2009 = vadd.f32 %v1920, %v2008
      %v2010 = vpop.f32.mrf.mxu0
      %v2011 = vadd.f32 %v1922, %v2010
      %2012 = vmatmul.bf16.gmra.mxu0 %v942
      %v2013 = vpop.f32.mrf.mxu0
      %v2014 = vadd.f32 %v1925, %v2013
      %v2015 = vpop.f32.mrf.mxu0
      %v2016 = vadd.f32 %v1927, %v2015
      %2017 = vmatmul.bf16.gmra.mxu0 %v949
      %v2018 = vpop.f32.mrf.mxu0
      %v2019 = vadd.f32 %v1930, %v2018
      %v2020 = vpop.f32.mrf.mxu0
      %v2021 = vadd.f32 %v1932, %v2020
      %2022 = vmatmul.bf16.gmra.mxu0 %v956
      %v2023 = vpop.f32.mrf.mxu0
      %v2024 = vadd.f32 %v1935, %v2023
      %v2025 = vpop.f32.mrf.mxu0
      %v2026 = vadd.f32 %v1937, %v2025
      %2027 = vdwg.mxu0
      %v2028 = vld [vmem:[%s2] sm:$0x1]
      %v2030 = vperm.slane %v2028, 0
      %v2032 = vmul.f32 %v1949, %v2030
      %v2033 = vmul.f32 %v1951, %v2030
      %v2034 = vmul.f32 %v1954, %v2030
      %v2035 = vmul.f32 %v1956, %v2030
      %v2036 = vmul.f32 %v1959, %v2030
      %v2037 = vmul.f32 %v1961, %v2030
      %v2038 = vmul.f32 %v1964, %v2030
      %v2039 = vmul.f32 %v1966, %v2030
      %v2040 = vmul.f32 %v1969, %v2030
      %v2041 = vmul.f32 %v1971, %v2030
      %v2042 = vmul.f32 %v1974, %v2030
      %v2043 = vmul.f32 %v1976, %v2030
      %v2044 = vmul.f32 %v1979, %v2030
      %v2045 = vmul.f32 %v1981, %v2030
      %v2046 = vmul.f32 %v1984, %v2030
      %v2047 = vmul.f32 %v1986, %v2030
      %v2048 = vmul.f32 %v1989, %v2030
      %v2049 = vmul.f32 %v1991, %v2030
      %v2050 = vmul.f32 %v1994, %v2030
      %v2051 = vmul.f32 %v1996, %v2030
      %v2052 = vmul.f32 %v1999, %v2030
      %v2053 = vmul.f32 %v2001, %v2030
      %v2054 = vmul.f32 %v2004, %v2030
      %v2055 = vmul.f32 %v2006, %v2030
      %v2056 = vmul.f32 %v2009, %v2030
      %v2057 = vmul.f32 %v2011, %v2030
      %v2058 = vmul.f32 %v2014, %v2030
      %v2059 = vmul.f32 %v2016, %v2030
      %v2060 = vmul.f32 %v2019, %v2030
      %v2061 = vmul.f32 %v2021, %v2030
      %v2062 = vmul.f32 %v2024, %v2030
      %v2063 = vmul.f32 %v2026, %v2030
      %v2064 = vld [vmem:[%s3] sm:$0x1]
      %v2066 = vperm.slane %v2064, 0
      %v2068 = vadd.f32 %v2032, %v2066
      %v2069 = vadd.f32 %v2033, %v2066
      %v2070 = vadd.f32 %v2034, %v2066
      %v2071 = vadd.f32 %v2035, %v2066
      %v2072 = vadd.f32 %v2036, %v2066
      %v2073 = vadd.f32 %v2037, %v2066
      %v2074 = vadd.f32 %v2038, %v2066
      %v2075 = vadd.f32 %v2039, %v2066
      %v2076 = vadd.f32 %v2040, %v2066
      %v2077 = vadd.f32 %v2041, %v2066
      %v2078 = vadd.f32 %v2042, %v2066
      %v2079 = vadd.f32 %v2043, %v2066
      %v2080 = vadd.f32 %v2044, %v2066
      %v2081 = vadd.f32 %v2045, %v2066
      %v2082 = vadd.f32 %v2046, %v2066
      %v2083 = vadd.f32 %v2047, %v2066
      %v2084 = vadd.f32 %v2048, %v2066
      %v2085 = vadd.f32 %v2049, %v2066
      %v2086 = vadd.f32 %v2050, %v2066
      %v2087 = vadd.f32 %v2051, %v2066
      %v2088 = vadd.f32 %v2052, %v2066
      %v2089 = vadd.f32 %v2053, %v2066
      %v2090 = vadd.f32 %v2054, %v2066
      %v2091 = vadd.f32 %v2055, %v2066
      %v2092 = vadd.f32 %v2056, %v2066
      %v2093 = vadd.f32 %v2057, %v2066
      %v2094 = vadd.f32 %v2058, %v2066
      %v2095 = vadd.f32 %v2059, %v2066
      %v2096 = vadd.f32 %v2060, %v2066
      %v2097 = vadd.f32 %v2061, %v2066
      %v2098 = vadd.f32 %v2062, %v2066
      %v2099 = vadd.f32 %v2063, %v2066
      %v2100 = vld [vmem:[%s245] sm:$0xff]
      %v2101 = vld [vmem:[%s245 + $0x8] sm:$0xff]
      %v2102 = vld [vmem:[%s245 + $0x10] sm:$0xff]
      %v2103 = vld [vmem:[%s245 + $0x18] sm:$0xff]
      %v2104 = vld [vmem:[%s245 + $0x20] sm:$0xff]
      %v2105 = vld [vmem:[%s245 + $0x28] sm:$0xff]
      %v2106 = vld [vmem:[%s245 + $0x30] sm:$0xff]
      %v2107 = vld [vmem:[%s245 + $0x38] sm:$0xff]
      %v2108 = vld [vmem:[%s245 + $0x40] sm:$0xff]
      %v2109 = vld [vmem:[%s245 + $0x48] sm:$0xff]
      %v2110 = vld [vmem:[%s245 + $0x50] sm:$0xff]
      %v2111 = vld [vmem:[%s245 + $0x58] sm:$0xff]
      %v2112 = vld [vmem:[%s245 + $0x60] sm:$0xff]
      %v2113 = vld [vmem:[%s245 + $0x68] sm:$0xff]
      %v2114 = vld [vmem:[%s245 + $0x70] sm:$0xff]
      %v2115 = vld [vmem:[%s245 + $0x78] sm:$0xff]
      %v2116 = vld [vmem:[%s245 + $0x80] sm:$0xff]
      %v2117 = vld [vmem:[%s245 + $0x88] sm:$0xff]
      %v2118 = vld [vmem:[%s245 + $0x90] sm:$0xff]
      %v2119 = vld [vmem:[%s245 + $0x98] sm:$0xff]
      %v2120 = vld [vmem:[%s245 + $0xa0] sm:$0xff]
      %v2121 = vld [vmem:[%s245 + $0xa8] sm:$0xff]
      %v2122 = vld [vmem:[%s245 + $0xb0] sm:$0xff]
      %v2123 = vld [vmem:[%s245 + $0xb8] sm:$0xff]
      %v2124 = vld [vmem:[%s245 + $0xc0] sm:$0xff]
      %v2125 = vld [vmem:[%s245 + $0xc8] sm:$0xff]
      %v2126 = vld [vmem:[%s245 + $0xd0] sm:$0xff]
      %v2127 = vld [vmem:[%s245 + $0xd8] sm:$0xff]
      %v2128 = vld [vmem:[%s245 + $0xe0] sm:$0xff]
      %v2129 = vld [vmem:[%s245 + $0xe8] sm:$0xff]
      %v2130 = vld [vmem:[%s245 + $0xf0] sm:$0xff]
      %v2131 = vld [vmem:[%s245 + $0xf8] sm:$0xff]
      %v2132 = vadd.f32 %v2068, %v2100
      %v2133 = vadd.f32 %v2069, %v2101
      %v2134 = vadd.f32 %v2070, %v2102
      %v2135 = vadd.f32 %v2071, %v2103
      %v2136 = vadd.f32 %v2072, %v2104
      %v2137 = vadd.f32 %v2073, %v2105
      %v2138 = vadd.f32 %v2074, %v2106
      %v2139 = vadd.f32 %v2075, %v2107
      %v2140 = vadd.f32 %v2076, %v2108
      %v2141 = vadd.f32 %v2077, %v2109
      %v2142 = vadd.f32 %v2078, %v2110
      %v2143 = vadd.f32 %v2079, %v2111
      %v2144 = vadd.f32 %v2080, %v2112
      %v2145 = vadd.f32 %v2081, %v2113
      %v2146 = vadd.f32 %v2082, %v2114
      %v2147 = vadd.f32 %v2083, %v2115
      %v2148 = vadd.f32 %v2084, %v2116
      %v2149 = vadd.f32 %v2085, %v2117
      %v2150 = vadd.f32 %v2086, %v2118
      %v2151 = vadd.f32 %v2087, %v2119
      %v2152 = vadd.f32 %v2088, %v2120
      %v2153 = vadd.f32 %v2089, %v2121
      %v2154 = vadd.f32 %v2090, %v2122
      %v2155 = vadd.f32 %v2091, %v2123
      %v2156 = vadd.f32 %v2092, %v2124
      %v2157 = vadd.f32 %v2093, %v2125
      %v2158 = vadd.f32 %v2094, %v2126
      %v2159 = vadd.f32 %v2095, %v2127
      %v2160 = vadd.f32 %v2096, %v2128
      %v2161 = vadd.f32 %v2097, %v2129
      %v2162 = vadd.f32 %v2098, %v2130
      %v2163 = vadd.f32 %v2099, %v2131
      %v2164 = vmax.f32 %v2132, 0.0
      %v2165 = vmax.f32 %v2133, 0.0
      %v2166 = vmax.f32 %v2134, 0.0
      %v2167 = vmax.f32 %v2135, 0.0
      %v2168 = vmax.f32 %v2136, 0.0
      %v2169 = vmax.f32 %v2137, 0.0
      %v2170 = vmax.f32 %v2138, 0.0
      %v2171 = vmax.f32 %v2139, 0.0
      %v2172 = vmax.f32 %v2140, 0.0
      %v2173 = vmax.f32 %v2141, 0.0
      %v2174 = vmax.f32 %v2142, 0.0
      %v2175 = vmax.f32 %v2143, 0.0
      %v2176 = vmax.f32 %v2144, 0.0
      %v2177 = vmax.f32 %v2145, 0.0
      %v2178 = vmax.f32 %v2146, 0.0
      %v2179 = vmax.f32 %v2147, 0.0
      %v2180 = vmax.f32 %v2148, 0.0
      %v2181 = vmax.f32 %v2149, 0.0
      %v2182 = vmax.f32 %v2150, 0.0
      %v2183 = vmax.f32 %v2151, 0.0
      %v2184 = vmax.f32 %v2152, 0.0
      %v2185 = vmax.f32 %v2153, 0.0
      %v2186 = vmax.f32 %v2154, 0.0
      %v2187 = vmax.f32 %v2155, 0.0
      %v2188 = vmax.f32 %v2156, 0.0
      %v2189 = vmax.f32 %v2157, 0.0
      %v2190 = vmax.f32 %v2158, 0.0
      %v2191 = vmax.f32 %v2159, 0.0
      %v2192 = vmax.f32 %v2160, 0.0
      %v2193 = vmax.f32 %v2161, 0.0
      %v2194 = vmax.f32 %v2162, 0.0
      %v2195 = vmax.f32 %v2163, 0.0
      %vm2196 = vcmask 261120
      %2197 = vst.msk [vmem:[%s251] sm:$0xff] %vm2196, %v2164
      %2198 = vst.msk [vmem:[%s251 + $0x8] sm:$0xff] %vm2196, %v2165
      %2199 = vst.msk [vmem:[%s251 + $0x10] sm:$0xff] %vm2196, %v2166
      %2200 = vst.msk [vmem:[%s251 + $0x18] sm:$0xff] %vm2196, %v2167
      %2201 = vst.msk [vmem:[%s251 + $0x20] sm:$0xff] %vm2196, %v2168
      %2202 = vst.msk [vmem:[%s251 + $0x28] sm:$0xff] %vm2196, %v2169
      %2203 = vst.msk [vmem:[%s251 + $0x30] sm:$0xff] %vm2196, %v2170
      %2204 = vst.msk [vmem:[%s251 + $0x38] sm:$0xff] %vm2196, %v2171
      %2205 = vst.msk [vmem:[%s251 + $0x40] sm:$0xff] %vm2196, %v2172
      %2206 = vst.msk [vmem:[%s251 + $0x48] sm:$0xff] %vm2196, %v2173
      %2207 = vst.msk [vmem:[%s251 + $0x50] sm:$0xff] %vm2196, %v2174
      %2208 = vst.msk [vmem:[%s251 + $0x58] sm:$0xff] %vm2196, %v2175
      %2209 = vst.msk [vmem:[%s251 + $0x60] sm:$0xff] %vm2196, %v2176
      %2210 = vst.msk [vmem:[%s251 + $0x68] sm:$0xff] %vm2196, %v2177
      %2211 = vst.msk [vmem:[%s251 + $0x70] sm:$0xff] %vm2196, %v2178
      %2212 = vst.msk [vmem:[%s251 + $0x78] sm:$0xff] %vm2196, %v2179
      %2213 = vst.msk [vmem:[%s251 + $0x80] sm:$0xff] %vm2196, %v2180
      %2214 = vst.msk [vmem:[%s251 + $0x88] sm:$0xff] %vm2196, %v2181
      %2215 = vst.msk [vmem:[%s251 + $0x90] sm:$0xff] %vm2196, %v2182
      %2216 = vst.msk [vmem:[%s251 + $0x98] sm:$0xff] %vm2196, %v2183
      %2217 = vst.msk [vmem:[%s251 + $0xa0] sm:$0xff] %vm2196, %v2184
      %2218 = vst.msk [vmem:[%s251 + $0xa8] sm:$0xff] %vm2196, %v2185
      %2219 = vst.msk [vmem:[%s251 + $0xb0] sm:$0xff] %vm2196, %v2186
      %2220 = vst.msk [vmem:[%s251 + $0xb8] sm:$0xff] %vm2196, %v2187
      %2221 = vst.msk [vmem:[%s251 + $0xc0] sm:$0xff] %vm2196, %v2188
      %2222 = vst.msk [vmem:[%s251 + $0xc8] sm:$0xff] %vm2196, %v2189
      %2223 = vst.msk [vmem:[%s251 + $0xd0] sm:$0xff] %vm2196, %v2190
      %2224 = vst.msk [vmem:[%s251 + $0xd8] sm:$0xff] %vm2196, %v2191
      %2225 = vst.msk [vmem:[%s251 + $0xe0] sm:$0xff] %vm2196, %v2192
      %2226 = vst.msk [vmem:[%s251 + $0xe8] sm:$0xff] %vm2196, %v2193
      %2227 = vst.msk [vmem:[%s251 + $0xf0] sm:$0xff] %vm2196, %v2194
      %2228 = vst.msk [vmem:[%s251 + $0xf8] sm:$0xff] %vm2196, %v2195
      %s2229 = smul.u32 32, %s16
      %p2230 = scmp.lt.s32.totalorder %s2229, 127
      %s2231 = scalar_select %p2230, %s2229, 127
      %s2232 = smul.addr %s2231, 8
      %s2233 = scalar_lea.vmem %s5, %s2232
      // Predicated region
      $region41: #{ggo_forward.12} parent=39 // pred_check
        %p2234 = pneg %p149
      $region42: #{ggo_forward.12} parent=39 // pred_check_branch
        %2236 = sbr.rel (%p2234) target = $region44
      $region43: #{ggo_forward.12} parent=39 // pred_region
        %s2237 = smul.u32 32, %s16
      $region44: #{ggo_forward.12} parent=39 // pred_fallthru
        _
    $region40: #{ggo_forward.12} parent=5 // pred_fallthru
      _
    %p2238 = scmp.le.s32.totalorder 2, %s11
    // Predicated region
    $region45: #{ggo_forward.12} parent=5 // pred_check
      %p2239 = pneg %p2238
    $region46: #{ggo_forward.12} parent=5 // pred_check_branch
      %2241 = sbr.rel (%p2239) target = $region48
    $region47: #{ggo_forward.12} parent=5 // pred_region
      %s2242 = ssub.s32 %s11, 2
      // Predicated region
      $region49: #{ggo_forward.12} parent=47 // pred_check
        %p2243 = pneg %p155
      $region50: #{ggo_forward.12} parent=47 // pred_check_branch
        %2245 = sbr.rel (%p2243) target = $region52
      $region51: #{ggo_forward.12} parent=47 // pred_region
        %s2246 = smul.u32 32, %s17
        %p2247 = scmp.lt.s32.totalorder %s2246, 127
        %s2248 = scalar_select %p2247, %s2246, 127
        %s2249 = smul.addr %s2248, 8
        %s2250 = scalar_lea.vmem %s5, %s2249
      $region52: #{ggo_forward.12} parent=47 // pred_fallthru
        _
    $region48: #{ggo_forward.12} parent=5 // pred_fallthru
      _
  $region6: #{ggo_forward.12} parent=0 // loop_footer
    %s15 = sadd.s32 1, %s11
  $region7: #{ggo_forward.12} parent=0 // loop_footer_branch
    %10 = sbr.rel target = $region3
  $region8: #{ggo_forward.12} parent=0 // loop_exit
    _

// kernel: ggo_forward.11
$region0: #{ggo_forward.11}
  #allocation0 [shape = 'u32[]', space=smem, size = 0x4, offset = 0x4, fixed_abs, tag = 'smem constant byte address 0x4 - core index']
  #allocation1 [shape = 'u32[72,128]{1,0:T(1,128)}', space=vmem, size = 0x9000, scoped, tag = 'internal scratch']
  %s0 = inlined_call_operand.vmem [shape: bf16[1024,896], index: 0, kind: input, shape index: {}]
  %s1 = inlined_call_operand.vmem [shape: bf16[896,32], index: 1, kind: input, shape index: {}]
  %s2 = inlined_call_operand.vmem [shape: f32[1,32], index: 2, kind: input, shape index: {}]
  %s3 = inlined_call_operand.vmem [shape: f32[1,32], index: 3, kind: input, shape index: {}]
  %s4 = inlined_call_operand.vmem [shape: f32[1024,32], index: 4, kind: output, shape index: {}]
  %s5 = sld [smem:[#allocation0]]
  $region49: #{ggo_forward.11} parent=0
    _
  %s7 = ssub.s32 1, %s5
  %s8 = scalar_select 0, %s7, %s5
  loop: start=0, step=1, limit=6
  $region2: #{ggo_forward.11} parent=0 // loop_pre_header
    _
  $region3: #{ggo_forward.11} parent=0 // loop_header
    %s10 = sphi 0, %s14
    %p11 = scmp.ge.s32.totalorder %s10, 6
    %s20 = sphi 0, %s22
    %s23 = sphi 0, %s20
    %s24 = sphi 0, %s23
    %s40 = sphi 0, %s24
    %s44 = sphi 0, %s44
    %s46 = sphi 0, %s44
    %s47 = sphi 0, %s46
    %s61 = sphi 0, %s47
    %s65 = sphi 0, %s65
    %s67 = sphi 0, %s65
    %s68 = sphi 0, %s67
    %s82 = sphi 0, %s68
    %s86 = sphi 0, %s86
    %s88 = sphi 0, %s86
    %s89 = sphi 0, %s88
    %s103 = sphi 0, %s89
    %s109 = sphi 0, %s111
    %s112 = sphi 0, %s109
    %s113 = sphi 0, %s112
    %s129 = sphi 0, %s113
  $region4: #{ggo_forward.11} parent=0 // loop_header_branch
    %13 = sbr.rel (%p11) target = $region8
  $region5: #{ggo_forward.11} parent=0 // loop_body
    %s15 = ssub.s32 %s10, 1
    %s16 = ssub.s32 %s10, 2
    %s17 = sadd.s32 %s10, 1
    %s18 = ssub.s32 %s10, %s17
    %p19 = scmp.eq.s32.totalorder %s18, 0
    %s21 = sadd.s32 %s20, 1
    %s22 = scalar_select %p19, %s20, %s21
    %p25 = pneg %p19
    %p26 = scmp.eq.s32.totalorder %s10, 3
    %p27 = por %p25, %p26
    %p28 = scmp.ne.s32.totalorder %s20, %s23
    %p29 = scmp.eq.s32.totalorder %s10, 0
    %p30 = por %p28, %p29
    %p31 = scmp.ne.s32.totalorder %s20, %s23
    %p32 = scmp.eq.s32.totalorder %s15, 3
    %p33 = por %p31, %p32
    %p34 = scmp.ne.s32.totalorder %s23, %s24
    %p35 = scmp.eq.s32.totalorder %s15, 0
    %p36 = por %p34, %p35
    %p37 = scmp.ne.s32.totalorder %s23, %s24
    %p38 = scmp.eq.s32.totalorder %s16, 3
    %p39 = por %p37, %p38
    %p41 = scmp.ne.s32.totalorder %s24, %s40
    %p42 = scmp.eq.s32.totalorder %s16, 0
    %p43 = por %p41, %p42
    %s45 = sadd.s32 %s44, 1
    %p48 = scmp.eq.s32.totalorder %s10, 3
    %p49 = scmp.ne.s32.totalorder %s44, %s46
    %p50 = scmp.eq.s32.totalorder %s10, 0
    %p51 = por %p49, %p50
    %p52 = scmp.ne.s32.totalorder %s44, %s46
    %p53 = scmp.eq.s32.totalorder %s15, 3
    %p54 = por %p52, %p53
    %p55 = scmp.ne.s32.totalorder %s46, %s47
    %p56 = scmp.eq.s32.totalorder %s15, 0
    %p57 = por %p55, %p56
    %p58 = scmp.ne.s32.totalorder %s46, %s47
    %p59 = scmp.eq.s32.totalorder %s16, 3
    %p60 = por %p58, %p59
    %p62 = scmp.ne.s32.totalorder %s47, %s61
    %p63 = scmp.eq.s32.totalorder %s16, 0
    %p64 = por %p62, %p63
    %s66 = sadd.s32 %s65, 1
    %p69 = scmp.eq.s32.totalorder %s10, 3
    %p70 = scmp.ne.s32.totalorder %s65, %s67
    %p71 = scmp.eq.s32.totalorder %s10, 0
    %p72 = por %p70, %p71
    %p73 = scmp.ne.s32.totalorder %s65, %s67
    %p74 = scmp.eq.s32.totalorder %s15, 3
    %p75 = por %p73, %p74
    %p76 = scmp.ne.s32.totalorder %s67, %s68
    %p77 = scmp.eq.s32.totalorder %s15, 0
    %p78 = por %p76, %p77
    %p79 = scmp.ne.s32.totalorder %s67, %s68
    %p80 = scmp.eq.s32.totalorder %s16, 3
    %p81 = por %p79, %p80
    %p83 = scmp.ne.s32.totalorder %s68, %s82
    %p84 = scmp.eq.s32.totalorder %s16, 0
    %p85 = por %p83, %p84
    %s87 = sadd.s32 %s86, 1
    %p90 = scmp.eq.s32.totalorder %s10, 3
    %p91 = scmp.ne.s32.totalorder %s86, %s88
    %p92 = scmp.eq.s32.totalorder %s10, 0
    %p93 = por %p91, %p92
    %p94 = scmp.ne.s32.totalorder %s86, %s88
    %p95 = scmp.eq.s32.totalorder %s15, 3
    %p96 = por %p94, %p95
    %p97 = scmp.ne.s32.totalorder %s88, %s89
    %p98 = scmp.eq.s32.totalorder %s15, 0
    %p99 = por %p97, %p98
    %p100 = scmp.ne.s32.totalorder %s88, %s89
    %p101 = scmp.eq.s32.totalorder %s16, 3
    %p102 = por %p100, %p101
    %p104 = scmp.ne.s32.totalorder %s89, %s103
    %p105 = scmp.eq.s32.totalorder %s16, 0
    %p106 = por %p104, %p105
    %s107 = ssub.s32 %s10, %s17
    %p108 = scmp.eq.s32.totalorder %s107, 0
    %s110 = sadd.s32 %s109, 1
    %s111 = scalar_select %p108, %s109, %s110
    %p114 = pneg %p108
    %p115 = scmp.eq.s32.totalorder %s10, 3
    %p116 = por %p114, %p115
    %p117 = scmp.ne.s32.totalorder %s109, %s112
    %p118 = scmp.eq.s32.totalorder %s10, 0
    %p119 = por %p117, %p118
    %p120 = scmp.ne.s32.totalorder %s109, %s112
    %p121 = scmp.eq.s32.totalorder %s15, 3
    %p122 = por %p120, %p121
    %p123 = scmp.ne.s32.totalorder %s112, %s113
    %p124 = scmp.eq.s32.totalorder %s15, 0
    %p125 = por %p123, %p124
    %p126 = scmp.ne.s32.totalorder %s112, %s113
    %p127 = scmp.eq.s32.totalorder %s16, 3
    %p128 = por %p126, %p127
    %p130 = scmp.ne.s32.totalorder %s113, %s129
    %p131 = scmp.eq.s32.totalorder %s16, 0
    %p132 = por %p130, %p131
    %p133 = scmp.le.s32.totalorder 1, %s10
    %p134 = scmp.lt.s32.totalorder %s10, 5
    %p135 = pnand %p133, %p134
    %p136 = pneg %p135
    // Predicated region
    $region9: #{ggo_forward.11} parent=5 // pred_check
      _
    $region10: #{ggo_forward.11} parent=5 // pred_check_branch
      %138 = sbr.rel (%p135) target = $region12
    $region11: #{ggo_forward.11} parent=5 // pred_region
      %s139 = ssub.s32 %s10, 1
      // Predicated region
      $region13: #{ggo_forward.11} parent=11 // pred_check
        %p140 = pneg %p57
      $region14: #{ggo_forward.11} parent=11 // pred_check_branch
        %142 = sbr.rel (%p140) target = $region16
      $region15: #{ggo_forward.11} parent=11 // pred_region
        _
      $region16: #{ggo_forward.11} parent=11 // pred_fallthru
        _
      // Predicated region
      $region17: #{ggo_forward.11} parent=11 // pred_check
        %p143 = pneg %p78
      $region18: #{ggo_forward.11} parent=11 // pred_check_branch
        %145 = sbr.rel (%p143) target = $region20
      $region19: #{ggo_forward.11} parent=11 // pred_region
        _
      $region20: #{ggo_forward.11} parent=11 // pred_fallthru
        _
      // Predicated region
      $region21: #{ggo_forward.11} parent=11 // pred_check
        %p146 = pneg %p99
      $region22: #{ggo_forward.11} parent=11 // pred_check_branch
        %148 = sbr.rel (%p146) target = $region24
      $region23: #{ggo_forward.11} parent=11 // pred_region
        _
      $region24: #{ggo_forward.11} parent=11 // pred_fallthru
        _
    $region12: #{ggo_forward.11} parent=5 // pred_fallthru
      _
    %p149 = scmp.lt.s32.totalorder %s10, 4
    // Predicated region
    $region25: #{ggo_forward.11} parent=5 // pred_check
      %p150 = pneg %p149
    $region26: #{ggo_forward.11} parent=5 // pred_check_branch
      %152 = sbr.rel (%p150) target = $region28
    $region27: #{ggo_forward.11} parent=5 // pred_region
      // Predicated region
      $region29: #{ggo_forward.11} parent=27 // pred_check
        %p153 = pneg %p30
      $region30: #{ggo_forward.11} parent=27 // pred_check_branch
        %155 = sbr.rel (%p153) target = $region32
      $region31: #{ggo_forward.11} parent=27 // pred_region
        %s156 = smul.u32 32, %s10
        %p157 = scmp.lt.s32.totalorder %s156, 127
        %s158 = scalar_select %p157, %s156, 127
        %s159 = smul.addr %s158, 7
        %s160 = smul.addr %s159, 4
        %s161 = scalar_lea.vmem %s0, %s160
        %s162 = smul.u32 32, %s10
      $region32: #{ggo_forward.11} parent=27 // pred_fallthru
        _
    $region28: #{ggo_forward.11} parent=5 // pred_fallthru
      _
    %p163 = scmp.le.s32.totalorder 1, %s10
    %p164 = scmp.lt.s32.totalorder %s10, 5
    %p165 = pnand %p163, %p164
    %p166 = pneg %p165
    // Predicated region
    $region33: #{ggo_forward.11} parent=5 // pred_check
      _
    $region34: #{ggo_forward.11} parent=5 // pred_check_branch
      %168 = sbr.rel (%p165) target = $region36
    $region35: #{ggo_forward.11} parent=5 // pred_region
      %s169 = ssub.s32 %s10, 1
      %s170 = smul.u32 32, %s15
      %p171 = scmp.lt.s32.totalorder %s170, 127
      %s172 = scalar_select %p171, %s170, 127
      %s173 = smul.addr %s172, 7
      %s174 = smul.addr %s173, 4
      %s175 = scalar_lea.vmem %s0, %s174
      %p176 = pneg %p36
      %p177 = pneg %p33
      %p178 = pneg %p57
      %p179 = pneg %p54
      %p180 = pneg %p78
      %p181 = pneg %p75
      %p182 = pneg %p99
      %p183 = pneg %p96
      %p184 = pneg %p125
      %p185 = pneg %p122
      %s186 = smul.u32 32, %s15
      %p187 = scmp.lt.s32.totalorder %s186, 127
      %s188 = scalar_select %p187, %s186, 127
      %s189 = smul.addr %s188, 8
      %s190 = scalar_lea.vmem %s4, %s189
      %s191 = smul.u32 32, %s15
      %p192 = scmp.lt.s32.totalorder %s191, 127
      %s193 = scalar_select %p192, %s191, 127
      %s194 = smul.addr %s193, 7
      %s195 = smul.addr %s194, 4
      %s196 = scalar_lea.vmem %s0, %s195
      %s197 = smul.u32 32, %s15
      %s198 = smul.u32 32, %s15
      %p199 = scmp.lt.s32.totalorder %s198, 127
      %s200 = scalar_select %p199, %s198, 127
      %s201 = smul.addr %s200, 8
      %s202 = scalar_lea.vmem %s4, %s201
      %s203 = smul.u32 32, %s15
      %v204 = vld [vmem:[%s196] sm:$0xff]
      %v205 = vld [vmem:[%s196 + $0x8] sm:$0xff]
      %v206 = vld [vmem:[%s196 + $0x10] sm:$0xff]
      %v207 = vld [vmem:[%s196 + $0x18] sm:$0xf]
      %v208 = vld [vmem:[%s196 + $0x1c] sm:$0xff]
      %v209 = vld [vmem:[%s196 + $0x24] sm:$0xff]
      %v210 = vld [vmem:[%s196 + $0x2c] sm:$0xff]
      %v211 = vld [vmem:[%s196 + $0x34] sm:$0xf]
      %v212 = vld [vmem:[%s196 + $0x38] sm:$0xff]
      %v213 = vld [vmem:[%s196 + $0x40] sm:$0xff]
      %v214 = vld [vmem:[%s196 + $0x48] sm:$0xff]
      %v215 = vld [vmem:[%s196 + $0x50] sm:$0xf]
      %v216 = vld [vmem:[%s196 + $0x54] sm:$0xff]
      %v217 = vld [vmem:[%s196 + $0x5c] sm:$0xff]
      %v218 = vld [vmem:[%s196 + $0x64] sm:$0xff]
      %v219 = vld [vmem:[%s196 + $0x6c] sm:$0xf]
      %v220 = vld [vmem:[%s196 + $0x70] sm:$0xff]
      %v221 = vld [vmem:[%s196 + $0x78] sm:$0xff]
      %v222 = vld [vmem:[%s196 + $0x80] sm:$0xff]
      %v223 = vld [vmem:[%s196 + $0x88] sm:$0xf]
      %v224 = vld [vmem:[%s196 + $0x8c] sm:$0xff]
      %v225 = vld [vmem:[%s196 + $0x94] sm:$0xff]
      %v226 = vld [vmem:[%s196 + $0x9c] sm:$0xff]
      %v227 = vld [vmem:[%s196 + $0xa4] sm:$0xf]
      %v228 = vld [vmem:[%s196 + $0xa8] sm:$0xff]
      %v229 = vld [vmem:[%s196 + $0xb0] sm:$0xff]
      %v230 = vld [vmem:[%s196 + $0xb8] sm:$0xff]
      %v231 = vld [vmem:[%s196 + $0xc0] sm:$0xf]
      %v232 = vld [vmem:[%s196 + $0xc4] sm:$0xff]
      %v233 = vld [vmem:[%s196 + $0xcc] sm:$0xff]
      %v234 = vld [vmem:[%s196 + $0xd4] sm:$0xff]
      %v235 = vld [vmem:[%s196 + $0xdc] sm:$0xf]
      %v236 = vld [vmem:[%s196 + $0xe0] sm:$0xff]
      %v237 = vld [vmem:[%s196 + $0xe8] sm:$0xff]
      %v238 = vld [vmem:[%s196 + $0xf0] sm:$0xff]
      %v239 = vld [vmem:[%s196 + $0xf8] sm:$0xf]
      %v240 = vld [vmem:[%s196 + $0xfc] sm:$0xff]
      %v241 = vld [vmem:[%s196 + $0x104] sm:$0xff]
      %v242 = vld [vmem:[%s196 + $0x10c] sm:$0xff]
      %v243 = vld [vmem:[%s196 + $0x114] sm:$0xf]
      %v244 = vld [vmem:[%s196 + $0x118] sm:$0xff]
      %v245 = vld [vmem:[%s196 + $0x120] sm:$0xff]
      %v246 = vld [vmem:[%s196 + $0x128] sm:$0xff]
      %v247 = vld [vmem:[%s196 + $0x130] sm:$0xf]
      %v248 = vld [vmem:[%s196 + $0x134] sm:$0xff]
      %v249 = vld [vmem:[%s196 + $0x13c] sm:$0xff]
      %v250 = vld [vmem:[%s196 + $0x144] sm:$0xff]
      %v251 = vld [vmem:[%s196 + $0x14c] sm:$0xf]
      %v252 = vld [vmem:[%s196 + $0x150] sm:$0xff]
      %v253 = vld [vmem:[%s196 + $0x158] sm:$0xff]
      %v254 = vld [vmem:[%s196 + $0x160] sm:$0xff]
      %v255 = vld [vmem:[%s196 + $0x168] sm:$0xf]
      %v256 = vld [vmem:[%s196 + $0x16c] sm:$0xff]
      %v257 = vld [vmem:[%s196 + $0x174] sm:$0xff]
      %v258 = vld [vmem:[%s196 + $0x17c] sm:$0xff]
      %v259 = vld [vmem:[%s196 + $0x184] sm:$0xf]
      %v260 = vld [vmem:[%s196 + $0x188] sm:$0xff]
      %v261 = vld [vmem:[%s196 + $0x190] sm:$0xff]
      %v262 = vld [vmem:[%s196 + $0x198] sm:$0xff]
      %v263 = vld [vmem:[%s196 + $0x1a0] sm:$0xf]
      %v264 = vld [vmem:[%s196 + $0x1a4] sm:$0xff]
      %v265 = vld [vmem:[%s196 + $0x1ac] sm:$0xff]
      %v266 = vld [vmem:[%s196 + $0x1b4] sm:$0xff]
      %v267 = vld [vmem:[%s196 + $0x1bc] sm:$0xf]
      %v268 = vld [vmem:[%s196 + $0x1c0] sm:$0xff]
      %v269 = vld [vmem:[%s196 + $0x1c8] sm:$0xff]
      %v270 = vld [vmem:[%s196 + $0x1d0] sm:$0xff]
      %v271 = vld [vmem:[%s196 + $0x1d8] sm:$0xf]
      %v272 = vld [vmem:[%s196 + $0x1dc] sm:$0xff]
      %v273 = vld [vmem:[%s196 + $0x1e4] sm:$0xff]
      %v274 = vld [vmem:[%s196 + $0x1ec] sm:$0xff]
      %v275 = vld [vmem:[%s196 + $0x1f4] sm:$0xf]
      %v276 = vld [vmem:[%s196 + $0x1f8] sm:$0xff]
      %v277 = vld [vmem:[%s196 + $0x200] sm:$0xff]
      %v278 = vld [vmem:[%s196 + $0x208] sm:$0xff]
      %v279 = vld [vmem:[%s196 + $0x210] sm:$0xf]
      %v280 = vld [vmem:[%s196 + $0x214] sm:$0xff]
      %v281 = vld [vmem:[%s196 + $0x21c] sm:$0xff]
      %v282 = vld [vmem:[%s196 + $0x224] sm:$0xff]
      %v283 = vld [vmem:[%s196 + $0x22c] sm:$0xf]
      %v284 = vld [vmem:[%s196 + $0x230] sm:$0xff]
      %v285 = vld [vmem:[%s196 + $0x238] sm:$0xff]
      %v286 = vld [vmem:[%s196 + $0x240] sm:$0xff]
      %v287 = vld [vmem:[%s196 + $0x248] sm:$0xf]
      %v288 = vld [vmem:[%s196 + $0x24c] sm:$0xff]
      %v289 = vld [vmem:[%s196 + $0x254] sm:$0xff]
      %v290 = vld [vmem:[%s196 + $0x25c] sm:$0xff]
      %v291 = vld [vmem:[%s196 + $0x264] sm:$0xf]
      %v292 = vld [vmem:[%s196 + $0x268] sm:$0xff]
      %v293 = vld [vmem:[%s196 + $0x270] sm:$0xff]
      %v294 = vld [vmem:[%s196 + $0x278] sm:$0xff]
      %v295 = vld [vmem:[%s196 + $0x280] sm:$0xf]
      %v296 = vld [vmem:[%s196 + $0x284] sm:$0xff]
      %v297 = vld [vmem:[%s196 + $0x28c] sm:$0xff]
      %v298 = vld [vmem:[%s196 + $0x294] sm:$0xff]
      %v299 = vld [vmem:[%s196 + $0x29c] sm:$0xf]
      %v300 = vld [vmem:[%s196 + $0x2a0] sm:$0xff]
      %v301 = vld [vmem:[%s196 + $0x2a8] sm:$0xff]
      %v302 = vld [vmem:[%s196 + $0x2b0] sm:$0xff]
      %v303 = vld [vmem:[%s196 + $0x2b8] sm:$0xf]
      %v304 = vld [vmem:[%s196 + $0x2bc] sm:$0xff]
      %v305 = vld [vmem:[%s196 + $0x2c4] sm:$0xff]
      %v306 = vld [vmem:[%s196 + $0x2cc] sm:$0xff]
      %v307 = vld [vmem:[%s196 + $0x2d4] sm:$0xf]
      %v308 = vld [vmem:[%s196 + $0x2d8] sm:$0xff]
      %v309 = vld [vmem:[%s196 + $0x2e0] sm:$0xff]
      %v310 = vld [vmem:[%s196 + $0x2e8] sm:$0xff]
      %v311 = vld [vmem:[%s196 + $0x2f0] sm:$0xf]
      %v312 = vld [vmem:[%s196 + $0x2f4] sm:$0xff]
      %v313 = vld [vmem:[%s196 + $0x2fc] sm:$0xff]
      %v314 = vld [vmem:[%s196 + $0x304] sm:$0xff]
      %v315 = vld [vmem:[%s196 + $0x30c] sm:$0xf]
      %v316 = vld [vmem:[%s196 + $0x310] sm:$0xff]
      %v317 = vld [vmem:[%s196 + $0x318] sm:$0xff]
      %v318 = vld [vmem:[%s196 + $0x320] sm:$0xff]
      %v319 = vld [vmem:[%s196 + $0x328] sm:$0xf]
      %v320 = vld [vmem:[%s196 + $0x32c] sm:$0xff]
      %v321 = vld [vmem:[%s196 + $0x334] sm:$0xff]
      %v322 = vld [vmem:[%s196 + $0x33c] sm:$0xff]
      %v323 = vld [vmem:[%s196 + $0x344] sm:$0xf]
      %v324 = vld [vmem:[%s196 + $0x348] sm:$0xff]
      %v325 = vld [vmem:[%s196 + $0x350] sm:$0xff]
      %v326 = vld [vmem:[%s196 + $0x358] sm:$0xff]
      %v327 = vld [vmem:[%s196 + $0x360] sm:$0xf]
      %v328 = vld [vmem:[%s196 + $0x364] sm:$0xff]
      %v329 = vld [vmem:[%s196 + $0x36c] sm:$0xff]
      %v330 = vld [vmem:[%s196 + $0x374] sm:$0xff]
      %v331 = vld [vmem:[%s196 + $0x37c] sm:$0xf]
      %v332 = vld [vmem:[%s1] sm:$0xf]
      %v333 = vld [vmem:[%s1 + $0x4] sm:$0xf]
      %v334 = vld [vmem:[%s1 + $0x8] sm:$0xf]
      %v335 = vld [vmem:[%s1 + $0xc] sm:$0xf]
      %v336 = vld [vmem:[%s1 + $0x10] sm:$0xf]
      %v337 = vld [vmem:[%s1 + $0x14] sm:$0xf]
      %v338 = vld [vmem:[%s1 + $0x18] sm:$0xf]
      %v339 = vld [vmem:[%s1 + $0x1c] sm:$0xf]
      %v340 = vld [vmem:[%s1 + $0x20] sm:$0xf]
      %v341 = vld [vmem:[%s1 + $0x24] sm:$0xf]
      %v342 = vld [vmem:[%s1 + $0x28] sm:$0xf]
      %v343 = vld [vmem:[%s1 + $0x2c] sm:$0xf]
      %v344 = vld [vmem:[%s1 + $0x30] sm:$0xf]
      %v345 = vld [vmem:[%s1 + $0x34] sm:$0xf]
      %v346 = vld [vmem:[%s1 + $0x38] sm:$0xf]
      %v347 = vld [vmem:[%s1 + $0x3c] sm:$0xf]
      %v348 = vld [vmem:[%s1 + $0x40] sm:$0xf]
      %v349 = vld [vmem:[%s1 + $0x44] sm:$0xf]
      %v350 = vld [vmem:[%s1 + $0x48] sm:$0xf]
      %v351 = vld [vmem:[%s1 + $0x4c] sm:$0xf]
      %v352 = vld [vmem:[%s1 + $0x50] sm:$0xf]
      %v353 = vld [vmem:[%s1 + $0x54] sm:$0xf]
      %v354 = vld [vmem:[%s1 + $0x58] sm:$0xf]
      %v355 = vld [vmem:[%s1 + $0x5c] sm:$0xf]
      %v356 = vld [vmem:[%s1 + $0x60] sm:$0xf]
      %v357 = vld [vmem:[%s1 + $0x64] sm:$0xf]
      %v358 = vld [vmem:[%s1 + $0x68] sm:$0xf]
      %v359 = vld [vmem:[%s1 + $0x6c] sm:$0xf]
      %v360 = vld [vmem:[%s1 + $0x70] sm:$0xf]
      %v361 = vld [vmem:[%s1 + $0x74] sm:$0xf]
      %v362 = vld [vmem:[%s1 + $0x78] sm:$0xf]
      %v363 = vld [vmem:[%s1 + $0x7c] sm:$0xf]
      %v364 = vld [vmem:[%s1 + $0x80] sm:$0xf]
      %v365 = vld [vmem:[%s1 + $0x84] sm:$0xf]
      %v366 = vld [vmem:[%s1 + $0x88] sm:$0xf]
      %v367 = vld [vmem:[%s1 + $0x8c] sm:$0xf]
      %v368 = vld [vmem:[%s1 + $0x90] sm:$0xf]
      %v369 = vld [vmem:[%s1 + $0x94] sm:$0xf]
      %v370 = vld [vmem:[%s1 + $0x98] sm:$0xf]
      %v371 = vld [vmem:[%s1 + $0x9c] sm:$0xf]
      %v372 = vld [vmem:[%s1 + $0xa0] sm:$0xf]
      %v373 = vld [vmem:[%s1 + $0xa4] sm:$0xf]
      %v374 = vld [vmem:[%s1 + $0xa8] sm:$0xf]
      %v375 = vld [vmem:[%s1 + $0xac] sm:$0xf]
      %v376 = vld [vmem:[%s1 + $0xb0] sm:$0xf]
      %v377 = vld [vmem:[%s1 + $0xb4] sm:$0xf]
      %v378 = vld [vmem:[%s1 + $0xb8] sm:$0xf]
      %v379 = vld [vmem:[%s1 + $0xbc] sm:$0xf]
      %v380 = vld [vmem:[%s1 + $0xc0] sm:$0xf]
      %v381 = vld [vmem:[%s1 + $0xc4] sm:$0xf]
      %v382 = vld [vmem:[%s1 + $0xc8] sm:$0xf]
      %v383 = vld [vmem:[%s1 + $0xcc] sm:$0xf]
      %v384 = vld [vmem:[%s1 + $0xd0] sm:$0xf]
      %v385 = vld [vmem:[%s1 + $0xd4] sm:$0xf]
      %v386 = vld [vmem:[%s1 + $0xd8] sm:$0xf]
      %v387 = vld [vmem:[%s1 + $0xdc] sm:$0xf]
      %v388 = vld [vmem:[%s1 + $0xe0] sm:$0xf]
      %v389 = vld [vmem:[%s1 + $0xe4] sm:$0xf]
      %v390 = vld [vmem:[%s1 + $0xe8] sm:$0xf]
      %v391 = vld [vmem:[%s1 + $0xec] sm:$0xf]
      %v392 = vld [vmem:[%s1 + $0xf0] sm:$0xf]
      %v393 = vld [vmem:[%s1 + $0xf4] sm:$0xf]
      %v394 = vld [vmem:[%s1 + $0xf8] sm:$0xf]
      %v395 = vld [vmem:[%s1 + $0xfc] sm:$0xf]
      %v396 = vld [vmem:[%s1 + $0x100] sm:$0xf]
      %v397 = vld [vmem:[%s1 + $0x104] sm:$0xf]
      %v398 = vld [vmem:[%s1 + $0x108] sm:$0xf]
      %v399 = vld [vmem:[%s1 + $0x10c] sm:$0xf]
      %v400 = vld [vmem:[%s1 + $0x110] sm:$0xf]
      %v401 = vld [vmem:[%s1 + $0x114] sm:$0xf]
      %v402 = vld [vmem:[%s1 + $0x118] sm:$0xf]
      %v403 = vld [vmem:[%s1 + $0x11c] sm:$0xf]
      %v404 = vld [vmem:[%s1 + $0x120] sm:$0xf]
      %v405 = vld [vmem:[%s1 + $0x124] sm:$0xf]
      %v406 = vld [vmem:[%s1 + $0x128] sm:$0xf]
      %v407 = vld [vmem:[%s1 + $0x12c] sm:$0xf]
      %v408 = vld [vmem:[%s1 + $0x130] sm:$0xf]
      %v409 = vld [vmem:[%s1 + $0x134] sm:$0xf]
      %v410 = vld [vmem:[%s1 + $0x138] sm:$0xf]
      %v411 = vld [vmem:[%s1 + $0x13c] sm:$0xf]
      %v412 = vld [vmem:[%s1 + $0x140] sm:$0xf]
      %v413 = vld [vmem:[%s1 + $0x144] sm:$0xf]
      %v414 = vld [vmem:[%s1 + $0x148] sm:$0xf]
      %v415 = vld [vmem:[%s1 + $0x14c] sm:$0xf]
      %v416 = vld [vmem:[%s1 + $0x150] sm:$0xf]
      %v417 = vld [vmem:[%s1 + $0x154] sm:$0xf]
      %v418 = vld [vmem:[%s1 + $0x158] sm:$0xf]
      %v419 = vld [vmem:[%s1 + $0x15c] sm:$0xf]
      %v420 = vld [vmem:[%s1 + $0x160] sm:$0xf]
      %v421 = vld [vmem:[%s1 + $0x164] sm:$0xf]
      %v422 = vld [vmem:[%s1 + $0x168] sm:$0xf]
      %v423 = vld [vmem:[%s1 + $0x16c] sm:$0xf]
      %v424 = vld [vmem:[%s1 + $0x170] sm:$0xf]
      %v425 = vld [vmem:[%s1 + $0x174] sm:$0xf]
      %v426 = vld [vmem:[%s1 + $0x178] sm:$0xf]
      %v427 = vld [vmem:[%s1 + $0x17c] sm:$0xf]
      %v428 = vld [vmem:[%s1 + $0x180] sm:$0xf]
      %v429 = vld [vmem:[%s1 + $0x184] sm:$0xf]
      %v430 = vld [vmem:[%s1 + $0x188] sm:$0xf]
      %v431 = vld [vmem:[%s1 + $0x18c] sm:$0xf]
      %v432 = vld [vmem:[%s1 + $0x190] sm:$0xf]
      %v433 = vld [vmem:[%s1 + $0x194] sm:$0xf]
      %v434 = vld [vmem:[%s1 + $0x198] sm:$0xf]
      %v435 = vld [vmem:[%s1 + $0x19c] sm:$0xf]
      %v436 = vld [vmem:[%s1 + $0x1a0] sm:$0xf]
      %v437 = vld [vmem:[%s1 + $0x1a4] sm:$0xf]
      %v438 = vld [vmem:[%s1 + $0x1a8] sm:$0xf]
      %v439 = vld [vmem:[%s1 + $0x1ac] sm:$0xf]
      %v440 = vld [vmem:[%s1 + $0x1b0] sm:$0xf]
      %v441 = vld [vmem:[%s1 + $0x1b4] sm:$0xf]
      %v442 = vld [vmem:[%s1 + $0x1b8] sm:$0xf]
      %v443 = vld [vmem:[%s1 + $0x1bc] sm:$0xf]
      %v572 = vunpack.c.l.b16 %v204
      %v573 = vunpack.c.h.b16 %v204
      %v574 = vunpack.c.l.b16 %v205
      %v575 = vunpack.c.h.b16 %v205
      %v576 = vunpack.c.l.b16 %v206
      %v577 = vunpack.c.h.b16 %v206
      %v578 = vunpack.c.l.b16 %v207
      %v579 = vunpack.c.l.b16 %v208
      %v580 = vunpack.c.h.b16 %v208
      %v581 = vunpack.c.l.b16 %v209
      %v582 = vunpack.c.h.b16 %v209
      %v583 = vunpack.c.l.b16 %v210
      %v584 = vunpack.c.h.b16 %v210
      %v585 = vunpack.c.l.b16 %v211
      %v586 = vunpack.c.l.b16 %v212
      %v587 = vunpack.c.h.b16 %v212
      %v588 = vunpack.c.l.b16 %v213
      %v589 = vunpack.c.h.b16 %v213
      %v590 = vunpack.c.l.b16 %v214
      %v591 = vunpack.c.h.b16 %v214
      %v592 = vunpack.c.l.b16 %v215
      %v593 = vunpack.c.l.b16 %v216
      %v594 = vunpack.c.h.b16 %v216
      %v595 = vunpack.c.l.b16 %v217
      %v596 = vunpack.c.h.b16 %v217
      %v597 = vunpack.c.l.b16 %v218
      %v598 = vunpack.c.h.b16 %v218
      %v599 = vunpack.c.l.b16 %v219
      %v600 = vunpack.c.l.b16 %v220
      %v601 = vunpack.c.h.b16 %v220
      %v602 = vunpack.c.l.b16 %v221
      %v603 = vunpack.c.h.b16 %v221
      %v604 = vunpack.c.l.b16 %v222
      %v605 = vunpack.c.h.b16 %v222
      %v606 = vunpack.c.l.b16 %v223
      %v607 = vunpack.c.l.b16 %v224
      %v608 = vunpack.c.h.b16 %v224
      %v609 = vunpack.c.l.b16 %v225
      %v610 = vunpack.c.h.b16 %v225
      %v611 = vunpack.c.l.b16 %v226
      %v612 = vunpack.c.h.b16 %v226
      %v613 = vunpack.c.l.b16 %v227
      %v614 = vunpack.c.l.b16 %v228
      %v615 = vunpack.c.h.b16 %v228
      %v616 = vunpack.c.l.b16 %v229
      %v617 = vunpack.c.h.b16 %v229
      %v618 = vunpack.c.l.b16 %v230
      %v619 = vunpack.c.h.b16 %v230
      %v620 = vunpack.c.l.b16 %v231
      %v621 = vunpack.c.l.b16 %v232
      %v622 = vunpack.c.h.b16 %v232
      %v623 = vunpack.c.l.b16 %v233
      %v624 = vunpack.c.h.b16 %v233
      %v625 = vunpack.c.l.b16 %v234
      %v626 = vunpack.c.h.b16 %v234
      %v627 = vunpack.c.l.b16 %v235
      %v628 = vunpack.c.l.b16 %v236
      %v629 = vunpack.c.h.b16 %v236
      %v630 = vunpack.c.l.b16 %v237
      %v631 = vunpack.c.h.b16 %v237
      %v632 = vunpack.c.l.b16 %v238
      %v633 = vunpack.c.h.b16 %v238
      %v634 = vunpack.c.l.b16 %v239
      %v635 = vunpack.c.l.b16 %v240
      %v636 = vunpack.c.h.b16 %v240
      %v637 = vunpack.c.l.b16 %v241
      %v638 = vunpack.c.h.b16 %v241
      %v639 = vunpack.c.l.b16 %v242
      %v640 = vunpack.c.h.b16 %v242
      %v641 = vunpack.c.l.b16 %v243
      %v642 = vunpack.c.l.b16 %v244
      %v643 = vunpack.c.h.b16 %v244
      %v644 = vunpack.c.l.b16 %v245
      %v645 = vunpack.c.h.b16 %v245
      %v646 = vunpack.c.l.b16 %v246
      %v647 = vunpack.c.h.b16 %v246
      %v648 = vunpack.c.l.b16 %v247
      %v649 = vunpack.c.l.b16 %v248
      %v650 = vunpack.c.h.b16 %v248
      %v651 = vunpack.c.l.b16 %v249
      %v652 = vunpack.c.h.b16 %v249
      %v653 = vunpack.c.l.b16 %v250
      %v654 = vunpack.c.h.b16 %v250
      %v655 = vunpack.c.l.b16 %v251
      %v656 = vunpack.c.l.b16 %v252
      %v657 = vunpack.c.h.b16 %v252
      %v658 = vunpack.c.l.b16 %v253
      %v659 = vunpack.c.h.b16 %v253
      %v660 = vunpack.c.l.b16 %v254
      %v661 = vunpack.c.h.b16 %v254
      %v662 = vunpack.c.l.b16 %v255
      %v663 = vunpack.c.l.b16 %v256
      %v664 = vunpack.c.h.b16 %v256
      %v665 = vunpack.c.l.b16 %v257
      %v666 = vunpack.c.h.b16 %v257
      %v667 = vunpack.c.l.b16 %v258
      %v668 = vunpack.c.h.b16 %v258
      %v669 = vunpack.c.l.b16 %v259
      %v670 = vunpack.c.l.b16 %v260
      %v671 = vunpack.c.h.b16 %v260
      %v672 = vunpack.c.l.b16 %v261
      %v673 = vunpack.c.h.b16 %v261
      %v674 = vunpack.c.l.b16 %v262
      %v675 = vunpack.c.h.b16 %v262
      %v676 = vunpack.c.l.b16 %v263
      %v677 = vunpack.c.l.b16 %v264
      %v678 = vunpack.c.h.b16 %v264
      %v679 = vunpack.c.l.b16 %v265
      %v680 = vunpack.c.h.b16 %v265
      %v681 = vunpack.c.l.b16 %v266
      %v682 = vunpack.c.h.b16 %v266
      %v683 = vunpack.c.l.b16 %v267
      %v684 = vunpack.c.l.b16 %v268
      %v685 = vunpack.c.h.b16 %v268
      %v686 = vunpack.c.l.b16 %v269
      %v687 = vunpack.c.h.b16 %v269
      %v688 = vunpack.c.l.b16 %v270
      %v689 = vunpack.c.h.b16 %v270
      %v690 = vunpack.c.l.b16 %v271
      %v691 = vunpack.c.l.b16 %v272
      %v692 = vunpack.c.h.b16 %v272
      %v693 = vunpack.c.l.b16 %v273
      %v694 = vunpack.c.h.b16 %v273
      %v695 = vunpack.c.l.b16 %v274
      %v696 = vunpack.c.h.b16 %v274
      %v697 = vunpack.c.l.b16 %v275
      %v698 = vunpack.c.l.b16 %v276
      %v699 = vunpack.c.h.b16 %v276
      %v700 = vunpack.c.l.b16 %v277
      %v701 = vunpack.c.h.b16 %v277
      %v702 = vunpack.c.l.b16 %v278
      %v703 = vunpack.c.h.b16 %v278
      %v704 = vunpack.c.l.b16 %v279
      %v705 = vunpack.c.l.b16 %v280
      %v706 = vunpack.c.h.b16 %v280
      %v707 = vunpack.c.l.b16 %v281
      %v708 = vunpack.c.h.b16 %v281
      %v709 = vunpack.c.l.b16 %v282
      %v710 = vunpack.c.h.b16 %v282
      %v711 = vunpack.c.l.b16 %v283
      %v712 = vunpack.c.l.b16 %v284
      %v713 = vunpack.c.h.b16 %v284
      %v714 = vunpack.c.l.b16 %v285
      %v715 = vunpack.c.h.b16 %v285
      %v716 = vunpack.c.l.b16 %v286
      %v717 = vunpack.c.h.b16 %v286
      %v718 = vunpack.c.l.b16 %v287
      %v719 = vunpack.c.l.b16 %v288
      %v720 = vunpack.c.h.b16 %v288
      %v721 = vunpack.c.l.b16 %v289
      %v722 = vunpack.c.h.b16 %v289
      %v723 = vunpack.c.l.b16 %v290
      %v724 = vunpack.c.h.b16 %v290
      %v725 = vunpack.c.l.b16 %v291
      %v726 = vunpack.c.l.b16 %v292
      %v727 = vunpack.c.h.b16 %v292
      %v728 = vunpack.c.l.b16 %v293
      %v729 = vunpack.c.h.b16 %v293
      %v730 = vunpack.c.l.b16 %v294
      %v731 = vunpack.c.h.b16 %v294
      %v732 = vunpack.c.l.b16 %v295
      %v733 = vunpack.c.l.b16 %v296
      %v734 = vunpack.c.h.b16 %v296
      %v735 = vunpack.c.l.b16 %v297
      %v736 = vunpack.c.h.b16 %v297
      %v737 = vunpack.c.l.b16 %v298
      %v738 = vunpack.c.h.b16 %v298
      %v739 = vunpack.c.l.b16 %v299
      %v740 = vunpack.c.l.b16 %v300
      %v741 = vunpack.c.h.b16 %v300
      %v742 = vunpack.c.l.b16 %v301
      %v743 = vunpack.c.h.b16 %v301
      %v744 = vunpack.c.l.b16 %v302
      %v745 = vunpack.c.h.b16 %v302
      %v746 = vunpack.c.l.b16 %v303
      %v747 = vunpack.c.l.b16 %v304
      %v748 = vunpack.c.h.b16 %v304
      %v749 = vunpack.c.l.b16 %v305
      %v750 = vunpack.c.h.b16 %v305
      %v751 = vunpack.c.l.b16 %v306
      %v752 = vunpack.c.h.b16 %v306
      %v753 = vunpack.c.l.b16 %v307
      %v754 = vunpack.c.l.b16 %v308
      %v755 = vunpack.c.h.b16 %v308
      %v756 = vunpack.c.l.b16 %v309
      %v757 = vunpack.c.h.b16 %v309
      %v758 = vunpack.c.l.b16 %v310
      %v759 = vunpack.c.h.b16 %v310
      %v760 = vunpack.c.l.b16 %v311
      %v761 = vunpack.c.l.b16 %v312
      %v762 = vunpack.c.h.b16 %v312
      %v763 = vunpack.c.l.b16 %v313
      %v764 = vunpack.c.h.b16 %v313
      %v765 = vunpack.c.l.b16 %v314
      %v766 = vunpack.c.h.b16 %v314
      %v767 = vunpack.c.l.b16 %v315
      %v768 = vunpack.c.l.b16 %v316
      %v769 = vunpack.c.h.b16 %v316
      %v770 = vunpack.c.l.b16 %v317
      %v771 = vunpack.c.h.b16 %v317
      %v772 = vunpack.c.l.b16 %v318
      %v773 = vunpack.c.h.b16 %v318
      %v774 = vunpack.c.l.b16 %v319
      %v775 = vunpack.c.l.b16 %v320
      %v776 = vunpack.c.h.b16 %v320
      %v777 = vunpack.c.l.b16 %v321
      %v778 = vunpack.c.h.b16 %v321
      %v779 = vunpack.c.l.b16 %v322
      %v780 = vunpack.c.h.b16 %v322
      %v781 = vunpack.c.l.b16 %v323
      %v782 = vunpack.c.l.b16 %v324
      %v783 = vunpack.c.h.b16 %v324
      %v784 = vunpack.c.l.b16 %v325
      %v785 = vunpack.c.h.b16 %v325
      %v786 = vunpack.c.l.b16 %v326
      %v787 = vunpack.c.h.b16 %v326
      %v788 = vunpack.c.l.b16 %v327
      %v789 = vunpack.c.l.b16 %v328
      %v790 = vunpack.c.h.b16 %v328
      %v791 = vunpack.c.l.b16 %v329
      %v792 = vunpack.c.h.b16 %v329
      %v793 = vunpack.c.l.b16 %v330
      %v794 = vunpack.c.h.b16 %v330
      %v795 = vunpack.c.l.b16 %v331
      %v796 = vpack.c.b16 %v579, %v572
      %v797 = vpack.c.b16 %v580, %v573
      %v798 = vpack.c.b16 %v581, %v574
      %v799 = vpack.c.b16 %v582, %v575
      %v800 = vpack.c.b16 %v583, %v576
      %v801 = vpack.c.b16 %v584, %v577
      %v802 = vpack.c.b16 %v585, %v578
      %v803 = vpack.c.b16 %v593, %v586
      %v804 = vpack.c.b16 %v594, %v587
      %v805 = vpack.c.b16 %v595, %v588
      %v806 = vpack.c.b16 %v596, %v589
      %v807 = vpack.c.b16 %v597, %v590
      %v808 = vpack.c.b16 %v598, %v591
      %v809 = vpack.c.b16 %v599, %v592
      %v810 = vpack.c.b16 %v607, %v600
      %v811 = vpack.c.b16 %v608, %v601
      %v812 = vpack.c.b16 %v609, %v602
      %v813 = vpack.c.b16 %v610, %v603
      %v814 = vpack.c.b16 %v611, %v604
      %v815 = vpack.c.b16 %v612, %v605
      %v816 = vpack.c.b16 %v613, %v606
      %v817 = vpack.c.b16 %v621, %v614
      %v818 = vpack.c.b16 %v622, %v615
      %v819 = vpack.c.b16 %v623, %v616
      %v820 = vpack.c.b16 %v624, %v617
      %v821 = vpack.c.b16 %v625, %v618
      %v822 = vpack.c.b16 %v626, %v619
      %v823 = vpack.c.b16 %v627, %v620
      %v824 = vpack.c.b16 %v635, %v628
      %v825 = vpack.c.b16 %v636, %v629
      %v826 = vpack.c.b16 %v637, %v630
      %v827 = vpack.c.b16 %v638, %v631
      %v828 = vpack.c.b16 %v639, %v632
      %v829 = vpack.c.b16 %v640, %v633
      %v830 = vpack.c.b16 %v641, %v634
      %v831 = vpack.c.b16 %v649, %v642
      %v832 = vpack.c.b16 %v650, %v643
      %v833 = vpack.c.b16 %v651, %v644
      %v834 = vpack.c.b16 %v652, %v645
      %v835 = vpack.c.b16 %v653, %v646
      %v836 = vpack.c.b16 %v654, %v647
      %v837 = vpack.c.b16 %v655, %v648
      %v838 = vpack.c.b16 %v663, %v656
      %v839 = vpack.c.b16 %v664, %v657
      %v840 = vpack.c.b16 %v665, %v658
      %v841 = vpack.c.b16 %v666, %v659
      %v842 = vpack.c.b16 %v667, %v660
      %v843 = vpack.c.b16 %v668, %v661
      %v844 = vpack.c.b16 %v669, %v662
      %v845 = vpack.c.b16 %v677, %v670
      %v846 = vpack.c.b16 %v678, %v671
      %v847 = vpack.c.b16 %v679, %v672
      %v848 = vpack.c.b16 %v680, %v673
      %v849 = vpack.c.b16 %v681, %v674
      %v850 = vpack.c.b16 %v682, %v675
      %v851 = vpack.c.b16 %v683, %v676
      %v852 = vpack.c.b16 %v691, %v684
      %v853 = vpack.c.b16 %v692, %v685
      %v854 = vpack.c.b16 %v693, %v686
      %v855 = vpack.c.b16 %v694, %v687
      %v856 = vpack.c.b16 %v695, %v688
      %v857 = vpack.c.b16 %v696, %v689
      %v858 = vpack.c.b16 %v697, %v690
      %v859 = vpack.c.b16 %v705, %v698
      %v860 = vpack.c.b16 %v706, %v699
      %v861 = vpack.c.b16 %v707, %v700
      %v862 = vpack.c.b16 %v708, %v701
      %v863 = vpack.c.b16 %v709, %v702
      %v864 = vpack.c.b16 %v710, %v703
      %v865 = vpack.c.b16 %v711, %v704
      %v866 = vpack.c.b16 %v719, %v712
      %v867 = vpack.c.b16 %v720, %v713
      %v868 = vpack.c.b16 %v721, %v714
      %v869 = vpack.c.b16 %v722, %v715
      %v870 = vpack.c.b16 %v723, %v716
      %v871 = vpack.c.b16 %v724, %v717
      %v872 = vpack.c.b16 %v725, %v718
      %v873 = vpack.c.b16 %v733, %v726
      %v874 = vpack.c.b16 %v734, %v727
      %v875 = vpack.c.b16 %v735, %v728
      %v876 = vpack.c.b16 %v736, %v729
      %v877 = vpack.c.b16 %v737, %v730
      %v878 = vpack.c.b16 %v738, %v731
      %v879 = vpack.c.b16 %v739, %v732
      %v880 = vpack.c.b16 %v747, %v740
      %v881 = vpack.c.b16 %v748, %v741
      %v882 = vpack.c.b16 %v749, %v742
      %v883 = vpack.c.b16 %v750, %v743
      %v884 = vpack.c.b16 %v751, %v744
      %v885 = vpack.c.b16 %v752, %v745
      %v886 = vpack.c.b16 %v753, %v746
      %v887 = vpack.c.b16 %v761, %v754
      %v888 = vpack.c.b16 %v762, %v755
      %v889 = vpack.c.b16 %v763, %v756
      %v890 = vpack.c.b16 %v764, %v757
      %v891 = vpack.c.b16 %v765, %v758
      %v892 = vpack.c.b16 %v766, %v759
      %v893 = vpack.c.b16 %v767, %v760
      %v894 = vpack.c.b16 %v775, %v768
      %v895 = vpack.c.b16 %v776, %v769
      %v896 = vpack.c.b16 %v777, %v770
      %v897 = vpack.c.b16 %v778, %v771
      %v898 = vpack.c.b16 %v779, %v772
      %v899 = vpack.c.b16 %v780, %v773
      %v900 = vpack.c.b16 %v781, %v774
      %v901 = vpack.c.b16 %v789, %v782
      %v902 = vpack.c.b16 %v790, %v783
      %v903 = vpack.c.b16 %v791, %v784
      %v904 = vpack.c.b16 %v792, %v785
      %v905 = vpack.c.b16 %v793, %v786
      %v906 = vpack.c.b16 %v794, %v787
      %v907 = vpack.c.b16 %v795, %v788
      %v1132 = vunpack.c.l.b16 %v332
      %v1133 = vunpack.c.l.b16 %v333
      %v1134 = vunpack.c.l.b16 %v334
      %v1135 = vunpack.c.l.b16 %v335
      %v1136 = vunpack.c.l.b16 %v336
      %v1137 = vunpack.c.l.b16 %v337
      %v1138 = vunpack.c.l.b16 %v338
      %v1139 = vunpack.c.l.b16 %v339
      %v1140 = vunpack.c.l.b16 %v340
      %v1141 = vunpack.c.l.b16 %v341
      %v1142 = vunpack.c.l.b16 %v342
      %v1143 = vunpack.c.l.b16 %v343
      %v1144 = vunpack.c.l.b16 %v344
      %v1145 = vunpack.c.l.b16 %v345
      %v1146 = vunpack.c.l.b16 %v346
      %v1147 = vunpack.c.l.b16 %v347
      %v1148 = vunpack.c.l.b16 %v348
      %v1149 = vunpack.c.l.b16 %v349
      %v1150 = vunpack.c.l.b16 %v350
      %v1151 = vunpack.c.l.b16 %v351
      %v1152 = vunpack.c.l.b16 %v352
      %v1153 = vunpack.c.l.b16 %v353
      %v1154 = vunpack.c.l.b16 %v354
      %v1155 = vunpack.c.l.b16 %v355
      %v1156 = vunpack.c.l.b16 %v356
      %v1157 = vunpack.c.l.b16 %v357
      %v1158 = vunpack.c.l.b16 %v358
      %v1159 = vunpack.c.l.b16 %v359
      %v1160 = vunpack.c.l.b16 %v360
      %v1161 = vunpack.c.l.b16 %v361
      %v1162 = vunpack.c.l.b16 %v362
      %v1163 = vunpack.c.l.b16 %v363
      %v1164 = vunpack.c.l.b16 %v364
      %v1165 = vunpack.c.l.b16 %v365
      %v1166 = vunpack.c.l.b16 %v366
      %v1167 = vunpack.c.l.b16 %v367
      %v1168 = vunpack.c.l.b16 %v368
      %v1169 = vunpack.c.l.b16 %v369
      %v1170 = vunpack.c.l.b16 %v370
      %v1171 = vunpack.c.l.b16 %v371
      %v1172 = vunpack.c.l.b16 %v372
      %v1173 = vunpack.c.l.b16 %v373
      %v1174 = vunpack.c.l.b16 %v374
      %v1175 = vunpack.c.l.b16 %v375
      %v1176 = vunpack.c.l.b16 %v376
      %v1177 = vunpack.c.l.b16 %v377
      %v1178 = vunpack.c.l.b16 %v378
      %v1179 = vunpack.c.l.b16 %v379
      %v1180 = vunpack.c.l.b16 %v380
      %v1181 = vunpack.c.l.b16 %v381
      %v1182 = vunpack.c.l.b16 %v382
      %v1183 = vunpack.c.l.b16 %v383
      %v1184 = vunpack.c.l.b16 %v384
      %v1185 = vunpack.c.l.b16 %v385
      %v1186 = vunpack.c.l.b16 %v386
      %v1187 = vunpack.c.l.b16 %v387
      %v1188 = vunpack.c.l.b16 %v388
      %v1189 = vunpack.c.l.b16 %v389
      %v1190 = vunpack.c.l.b16 %v390
      %v1191 = vunpack.c.l.b16 %v391
      %v1192 = vunpack.c.l.b16 %v392
      %v1193 = vunpack.c.l.b16 %v393
      %v1194 = vunpack.c.l.b16 %v394
      %v1195 = vunpack.c.l.b16 %v395
      %v1196 = vunpack.c.l.b16 %v396
      %v1197 = vunpack.c.l.b16 %v397
      %v1198 = vunpack.c.l.b16 %v398
      %v1199 = vunpack.c.l.b16 %v399
      %v1200 = vunpack.c.l.b16 %v400
      %v1201 = vunpack.c.l.b16 %v401
      %v1202 = vunpack.c.l.b16 %v402
      %v1203 = vunpack.c.l.b16 %v403
      %v1204 = vunpack.c.l.b16 %v404
      %v1205 = vunpack.c.l.b16 %v405
      %v1206 = vunpack.c.l.b16 %v406
      %v1207 = vunpack.c.l.b16 %v407
      %v1208 = vunpack.c.l.b16 %v408
      %v1209 = vunpack.c.l.b16 %v409
      %v1210 = vunpack.c.l.b16 %v410
      %v1211 = vunpack.c.l.b16 %v411
      %v1212 = vunpack.c.l.b16 %v412
      %v1213 = vunpack.c.l.b16 %v413
      %v1214 = vunpack.c.l.b16 %v414
      %v1215 = vunpack.c.l.b16 %v415
      %v1216 = vunpack.c.l.b16 %v416
      %v1217 = vunpack.c.l.b16 %v417
      %v1218 = vunpack.c.l.b16 %v418
      %v1219 = vunpack.c.l.b16 %v419
      %v1220 = vunpack.c.l.b16 %v420
      %v1221 = vunpack.c.l.b16 %v421
      %v1222 = vunpack.c.l.b16 %v422
      %v1223 = vunpack.c.l.b16 %v423
      %v1224 = vunpack.c.l.b16 %v424
      %v1225 = vunpack.c.l.b16 %v425
      %v1226 = vunpack.c.l.b16 %v426
      %v1227 = vunpack.c.l.b16 %v427
      %v1228 = vunpack.c.l.b16 %v428
      %v1229 = vunpack.c.l.b16 %v429
      %v1230 = vunpack.c.l.b16 %v430
      %v1231 = vunpack.c.l.b16 %v431
      %v1232 = vunpack.c.l.b16 %v432
      %v1233 = vunpack.c.l.b16 %v433
      %v1234 = vunpack.c.l.b16 %v434
      %v1235 = vunpack.c.l.b16 %v435
      %v1236 = vunpack.c.l.b16 %v436
      %v1237 = vunpack.c.l.b16 %v437
      %v1238 = vunpack.c.l.b16 %v438
      %v1239 = vunpack.c.l.b16 %v439
      %v1240 = vunpack.c.l.b16 %v440
      %v1241 = vunpack.c.l.b16 %v441
      %v1242 = vunpack.c.l.b16 %v442
      %v1243 = vunpack.c.l.b16 %v443
      %v1244 = vpack.c.b16 %v1133, %v1132
      %v1245 = vpack.c.b16 %v1135, %v1134
      %v1246 = vpack.c.b16 %v1137, %v1136
      %v1247 = vpack.c.b16 %v1139, %v1138
      %v1248 = vpack.c.b16 %v1141, %v1140
      %v1249 = vpack.c.b16 %v1143, %v1142
      %v1250 = vpack.c.b16 %v1145, %v1144
      %v1251 = vpack.c.b16 %v1147, %v1146
      %v1252 = vpack.c.b16 %v1149, %v1148
      %v1253 = vpack.c.b16 %v1151, %v1150
      %v1254 = vpack.c.b16 %v1153, %v1152
      %v1255 = vpack.c.b16 %v1155, %v1154
      %v1256 = vpack.c.b16 %v1157, %v1156
      %v1257 = vpack.c.b16 %v1159, %v1158
      %v1258 = vpack.c.b16 %v1161, %v1160
      %v1259 = vpack.c.b16 %v1163, %v1162
      %v1260 = vpack.c.b16 %v1165, %v1164
      %v1261 = vpack.c.b16 %v1167, %v1166
      %v1262 = vpack.c.b16 %v1169, %v1168
      %v1263 = vpack.c.b16 %v1171, %v1170
      %v1264 = vpack.c.b16 %v1173, %v1172
      %v1265 = vpack.c.b16 %v1175, %v1174
      %v1266 = vpack.c.b16 %v1177, %v1176
      %v1267 = vpack.c.b16 %v1179, %v1178
      %v1268 = vpack.c.b16 %v1181, %v1180
      %v1269 = vpack.c.b16 %v1183, %v1182
      %v1270 = vpack.c.b16 %v1185, %v1184
      %v1271 = vpack.c.b16 %v1187, %v1186
      %v1272 = vpack.c.b16 %v1189, %v1188
      %v1273 = vpack.c.b16 %v1191, %v1190
      %v1274 = vpack.c.b16 %v1193, %v1192
      %v1275 = vpack.c.b16 %v1195, %v1194
      %v1276 = vpack.c.b16 %v1197, %v1196
      %v1277 = vpack.c.b16 %v1199, %v1198
      %v1278 = vpack.c.b16 %v1201, %v1200
      %v1279 = vpack.c.b16 %v1203, %v1202
      %v1280 = vpack.c.b16 %v1205, %v1204
      %v1281 = vpack.c.b16 %v1207, %v1206
      %v1282 = vpack.c.b16 %v1209, %v1208
      %v1283 = vpack.c.b16 %v1211, %v1210
      %v1284 = vpack.c.b16 %v1213, %v1212
      %v1285 = vpack.c.b16 %v1215, %v1214
      %v1286 = vpack.c.b16 %v1217, %v1216
      %v1287 = vpack.c.b16 %v1219, %v1218
      %v1288 = vpack.c.b16 %v1221, %v1220
      %v1289 = vpack.c.b16 %v1223, %v1222
      %v1290 = vpack.c.b16 %v1225, %v1224
      %v1291 = vpack.c.b16 %v1227, %v1226
      %v1292 = vpack.c.b16 %v1229, %v1228
      %v1293 = vpack.c.b16 %v1231, %v1230
      %v1294 = vpack.c.b16 %v1233, %v1232
      %v1295 = vpack.c.b16 %v1235, %v1234
      %v1296 = vpack.c.b16 %v1237, %v1236
      %v1297 = vpack.c.b16 %v1239, %v1238
      %v1298 = vpack.c.b16 %v1241, %v1240
      %v1299 = vpack.c.b16 %v1243, %v1242
      %1356 = vmatpush.bf16.msra.mxu0 %v1251
      %1357 = vmatpush.bf16.msra.mxu0 %v1250
      %1358 = vmatpush.bf16.msra.mxu0 %v1249
      %1359 = vmatpush.bf16.msra.mxu0 %v1248
      %1360 = vmatpush.bf16.msra.mxu0 %v1247
      %1361 = vmatpush.bf16.msra.mxu0 %v1246
      %1362 = vmatpush.bf16.msra.mxu0 %v1245
      %1363 = vmatpush.bf16.msra.mxu0 %v1244
      %1364 = vmatmul.bf16.gmra.mxu0 %v796
      %v1365 = vpop.f32.mrf.mxu0
      %v1366 = vadd.f32 0.0, %v1365
      %v1367 = vpop.f32.mrf.mxu0
      %v1368 = vadd.f32 0.0, %v1367
      %1369 = vmatmul.bf16.gmra.mxu0 %v803
      %v1370 = vpop.f32.mrf.mxu0
      %v1371 = vadd.f32 0.0, %v1370
      %v1372 = vpop.f32.mrf.mxu0
      %v1373 = vadd.f32 0.0, %v1372
      %1374 = vmatmul.bf16.gmra.mxu0 %v810
      %v1375 = vpop.f32.mrf.mxu0
      %v1376 = vadd.f32 0.0, %v1375
      %v1377 = vpop.f32.mrf.mxu0
      %v1378 = vadd.f32 0.0, %v1377
      %1379 = vmatmul.bf16.gmra.mxu0 %v817
      %v1380 = vpop.f32.mrf.mxu0
      %v1381 = vadd.f32 0.0, %v1380
      %v1382 = vpop.f32.mrf.mxu0
      %v1383 = vadd.f32 0.0, %v1382
      %1384 = vmatmul.bf16.gmra.mxu0 %v824
      %v1385 = vpop.f32.mrf.mxu0
      %v1386 = vadd.f32 0.0, %v1385
      %v1387 = vpop.f32.mrf.mxu0
      %v1388 = vadd.f32 0.0, %v1387
      %1389 = vmatmul.bf16.gmra.mxu0 %v831
      %v1390 = vpop.f32.mrf.mxu0
      %v1391 = vadd.f32 0.0, %v1390
      %v1392 = vpop.f32.mrf.mxu0
      %v1393 = vadd.f32 0.0, %v1392
      %1394 = vmatmul.bf16.gmra.mxu0 %v838
      %v1395 = vpop.f32.mrf.mxu0
      %v1396 = vadd.f32 0.0, %v1395
      %v1397 = vpop.f32.mrf.mxu0
      %v1398 = vadd.f32 0.0, %v1397
      %1399 = vmatmul.bf16.gmra.mxu0 %v845
      %v1400 = vpop.f32.mrf.mxu0
      %v1401 = vadd.f32 0.0, %v1400
      %v1402 = vpop.f32.mrf.mxu0
      %v1403 = vadd.f32 0.0, %v1402
      %1404 = vmatmul.bf16.gmra.mxu0 %v852
      %v1405 = vpop.f32.mrf.mxu0
      %v1406 = vadd.f32 0.0, %v1405
      %v1407 = vpop.f32.mrf.mxu0
      %v1408 = vadd.f32 0.0, %v1407
      %1409 = vmatmul.bf16.gmra.mxu0 %v859
      %v1410 = vpop.f32.mrf.mxu0
      %v1411 = vadd.f32 0.0, %v1410
      %v1412 = vpop.f32.mrf.mxu0
      %v1413 = vadd.f32 0.0, %v1412
      %1414 = vmatmul.bf16.gmra.mxu0 %v866
      %v1415 = vpop.f32.mrf.mxu0
      %v1416 = vadd.f32 0.0, %v1415
      %v1417 = vpop.f32.mrf.mxu0
      %v1418 = vadd.f32 0.0, %v1417
      %1419 = vmatmul.bf16.gmra.mxu0 %v873
      %v1420 = vpop.f32.mrf.mxu0
      %v1421 = vadd.f32 0.0, %v1420
      %v1422 = vpop.f32.mrf.mxu0
      %v1423 = vadd.f32 0.0, %v1422
      %1424 = vmatmul.bf16.gmra.mxu0 %v880
      %v1425 = vpop.f32.mrf.mxu0
      %v1426 = vadd.f32 0.0, %v1425
      %v1427 = vpop.f32.mrf.mxu0
      %v1428 = vadd.f32 0.0, %v1427
      %1429 = vmatmul.bf16.gmra.mxu0 %v887
      %v1430 = vpop.f32.mrf.mxu0
      %v1431 = vadd.f32 0.0, %v1430
      %v1432 = vpop.f32.mrf.mxu0
      %v1433 = vadd.f32 0.0, %v1432
      %1434 = vmatmul.bf16.gmra.mxu0 %v894
      %v1435 = vpop.f32.mrf.mxu0
      %v1436 = vadd.f32 0.0, %v1435
      %v1437 = vpop.f32.mrf.mxu0
      %v1438 = vadd.f32 0.0, %v1437
      %1439 = vmatmul.bf16.gmra.mxu0 %v901
      %v1440 = vpop.f32.mrf.mxu0
      %v1441 = vadd.f32 0.0, %v1440
      %v1442 = vpop.f32.mrf.mxu0
      %v1443 = vadd.f32 0.0, %v1442
      %1444 = vdwg.mxu0
      %1445 = vmatpush.bf16.msra.mxu0 %v1259
      %1446 = vmatpush.bf16.msra.mxu0 %v1258
      %1447 = vmatpush.bf16.msra.mxu0 %v1257
      %1448 = vmatpush.bf16.msra.mxu0 %v1256
      %1449 = vmatpush.bf16.msra.mxu0 %v1255
      %1450 = vmatpush.bf16.msra.mxu0 %v1254
      %1451 = vmatpush.bf16.msra.mxu0 %v1253
      %1452 = vmatpush.bf16.msra.mxu0 %v1252
      %1453 = vmatmul.bf16.gmra.mxu0 %v797
      %v1454 = vpop.f32.mrf.mxu0
      %v1455 = vadd.f32 %v1366, %v1454
      %v1456 = vpop.f32.mrf.mxu0
      %v1457 = vadd.f32 %v1368, %v1456
      %1458 = vmatmul.bf16.gmra.mxu0 %v804
      %v1459 = vpop.f32.mrf.mxu0
      %v1460 = vadd.f32 %v1371, %v1459
      %v1461 = vpop.f32.mrf.mxu0
      %v1462 = vadd.f32 %v1373, %v1461
      %1463 = vmatmul.bf16.gmra.mxu0 %v811
      %v1464 = vpop.f32.mrf.mxu0
      %v1465 = vadd.f32 %v1376, %v1464
      %v1466 = vpop.f32.mrf.mxu0
      %v1467 = vadd.f32 %v1378, %v1466
      %1468 = vmatmul.bf16.gmra.mxu0 %v818
      %v1469 = vpop.f32.mrf.mxu0
      %v1470 = vadd.f32 %v1381, %v1469
      %v1471 = vpop.f32.mrf.mxu0
      %v1472 = vadd.f32 %v1383, %v1471
      %1473 = vmatmul.bf16.gmra.mxu0 %v825
      %v1474 = vpop.f32.mrf.mxu0
      %v1475 = vadd.f32 %v1386, %v1474
      %v1476 = vpop.f32.mrf.mxu0
      %v1477 = vadd.f32 %v1388, %v1476
      %1478 = vmatmul.bf16.gmra.mxu0 %v832
      %v1479 = vpop.f32.mrf.mxu0
      %v1480 = vadd.f32 %v1391, %v1479
      %v1481 = vpop.f32.mrf.mxu0
      %v1482 = vadd.f32 %v1393, %v1481
      %1483 = vmatmul.bf16.gmra.mxu0 %v839
      %v1484 = vpop.f32.mrf.mxu0
      %v1485 = vadd.f32 %v1396, %v1484
      %v1486 = vpop.f32.mrf.mxu0
      %v1487 = vadd.f32 %v1398, %v1486
      %1488 = vmatmul.bf16.gmra.mxu0 %v846
      %v1489 = vpop.f32.mrf.mxu0
      %v1490 = vadd.f32 %v1401, %v1489
      %v1491 = vpop.f32.mrf.mxu0
      %v1492 = vadd.f32 %v1403, %v1491
      %1493 = vmatmul.bf16.gmra.mxu0 %v853
      %v1494 = vpop.f32.mrf.mxu0
      %v1495 = vadd.f32 %v1406, %v1494
      %v1496 = vpop.f32.mrf.mxu0
      %v1497 = vadd.f32 %v1408, %v1496
      %1498 = vmatmul.bf16.gmra.mxu0 %v860
      %v1499 = vpop.f32.mrf.mxu0
      %v1500 = vadd.f32 %v1411, %v1499
      %v1501 = vpop.f32.mrf.mxu0
      %v1502 = vadd.f32 %v1413, %v1501
      %1503 = vmatmul.bf16.gmra.mxu0 %v867
      %v1504 = vpop.f32.mrf.mxu0
      %v1505 = vadd.f32 %v1416, %v1504
      %v1506 = vpop.f32.mrf.mxu0
      %v1507 = vadd.f32 %v1418, %v1506
      %1508 = vmatmul.bf16.gmra.mxu0 %v874
      %v1509 = vpop.f32.mrf.mxu0
      %v1510 = vadd.f32 %v1421, %v1509
      %v1511 = vpop.f32.mrf.mxu0
      %v1512 = vadd.f32 %v1423, %v1511
      %1513 = vmatmul.bf16.gmra.mxu0 %v881
      %v1514 = vpop.f32.mrf.mxu0
      %v1515 = vadd.f32 %v1426, %v1514
      %v1516 = vpop.f32.mrf.mxu0
      %v1517 = vadd.f32 %v1428, %v1516
      %1518 = vmatmul.bf16.gmra.mxu0 %v888
      %v1519 = vpop.f32.mrf.mxu0
      %v1520 = vadd.f32 %v1431, %v1519
      %v1521 = vpop.f32.mrf.mxu0
      %v1522 = vadd.f32 %v1433, %v1521
      %1523 = vmatmul.bf16.gmra.mxu0 %v895
      %v1524 = vpop.f32.mrf.mxu0
      %v1525 = vadd.f32 %v1436, %v1524
      %v1526 = vpop.f32.mrf.mxu0
      %v1527 = vadd.f32 %v1438, %v1526
      %1528 = vmatmul.bf16.gmra.mxu0 %v902
      %v1529 = vpop.f32.mrf.mxu0
      %v1530 = vadd.f32 %v1441, %v1529
      %v1531 = vpop.f32.mrf.mxu0
      %v1532 = vadd.f32 %v1443, %v1531
      %1533 = vdwg.mxu0
      %1534 = vmatpush.bf16.msra.mxu0 %v1267
      %1535 = vmatpush.bf16.msra.mxu0 %v1266
      %1536 = vmatpush.bf16.msra.mxu0 %v1265
      %1537 = vmatpush.bf16.msra.mxu0 %v1264
      %1538 = vmatpush.bf16.msra.mxu0 %v1263
      %1539 = vmatpush.bf16.msra.mxu0 %v1262
      %1540 = vmatpush.bf16.msra.mxu0 %v1261
      %1541 = vmatpush.bf16.msra.mxu0 %v1260
      %1542 = vmatmul.bf16.gmra.mxu0 %v798
      %v1543 = vpop.f32.mrf.mxu0
      %v1544 = vadd.f32 %v1455, %v1543
      %v1545 = vpop.f32.mrf.mxu0
      %v1546 = vadd.f32 %v1457, %v1545
      %1547 = vmatmul.bf16.gmra.mxu0 %v805
      %v1548 = vpop.f32.mrf.mxu0
      %v1549 = vadd.f32 %v1460, %v1548
      %v1550 = vpop.f32.mrf.mxu0
      %v1551 = vadd.f32 %v1462, %v1550
      %1552 = vmatmul.bf16.gmra.mxu0 %v812
      %v1553 = vpop.f32.mrf.mxu0
      %v1554 = vadd.f32 %v1465, %v1553
      %v1555 = vpop.f32.mrf.mxu0
      %v1556 = vadd.f32 %v1467, %v1555
      %1557 = vmatmul.bf16.gmra.mxu0 %v819
      %v1558 = vpop.f32.mrf.mxu0
      %v1559 = vadd.f32 %v1470, %v1558
      %v1560 = vpop.f32.mrf.mxu0
      %v1561 = vadd.f32 %v1472, %v1560
      %1562 = vmatmul.bf16.gmra.mxu0 %v826
      %v1563 = vpop.f32.mrf.mxu0
      %v1564 = vadd.f32 %v1475, %v1563
      %v1565 = vpop.f32.mrf.mxu0
      %v1566 = vadd.f32 %v1477, %v1565
      %1567 = vmatmul.bf16.gmra.mxu0 %v833
      %v1568 = vpop.f32.mrf.mxu0
      %v1569 = vadd.f32 %v1480, %v1568
      %v1570 = vpop.f32.mrf.mxu0
      %v1571 = vadd.f32 %v1482, %v1570
      %1572 = vmatmul.bf16.gmra.mxu0 %v840
      %v1573 = vpop.f32.mrf.mxu0
      %v1574 = vadd.f32 %v1485, %v1573
      %v1575 = vpop.f32.mrf.mxu0
      %v1576 = vadd.f32 %v1487, %v1575
      %1577 = vmatmul.bf16.gmra.mxu0 %v847
      %v1578 = vpop.f32.mrf.mxu0
      %v1579 = vadd.f32 %v1490, %v1578
      %v1580 = vpop.f32.mrf.mxu0
      %v1581 = vadd.f32 %v1492, %v1580
      %1582 = vmatmul.bf16.gmra.mxu0 %v854
      %v1583 = vpop.f32.mrf.mxu0
      %v1584 = vadd.f32 %v1495, %v1583
      %v1585 = vpop.f32.mrf.mxu0
      %v1586 = vadd.f32 %v1497, %v1585
      %1587 = vmatmul.bf16.gmra.mxu0 %v861
      %v1588 = vpop.f32.mrf.mxu0
      %v1589 = vadd.f32 %v1500, %v1588
      %v1590 = vpop.f32.mrf.mxu0
      %v1591 = vadd.f32 %v1502, %v1590
      %1592 = vmatmul.bf16.gmra.mxu0 %v868
      %v1593 = vpop.f32.mrf.mxu0
      %v1594 = vadd.f32 %v1505, %v1593
      %v1595 = vpop.f32.mrf.mxu0
      %v1596 = vadd.f32 %v1507, %v1595
      %1597 = vmatmul.bf16.gmra.mxu0 %v875
      %v1598 = vpop.f32.mrf.mxu0
      %v1599 = vadd.f32 %v1510, %v1598
      %v1600 = vpop.f32.mrf.mxu0
      %v1601 = vadd.f32 %v1512, %v1600
      %1602 = vmatmul.bf16.gmra.mxu0 %v882
      %v1603 = vpop.f32.mrf.mxu0
      %v1604 = vadd.f32 %v1515, %v1603
      %v1605 = vpop.f32.mrf.mxu0
      %v1606 = vadd.f32 %v1517, %v1605
      %1607 = vmatmul.bf16.gmra.mxu0 %v889
      %v1608 = vpop.f32.mrf.mxu0
      %v1609 = vadd.f32 %v1520, %v1608
      %v1610 = vpop.f32.mrf.mxu0
      %v1611 = vadd.f32 %v1522, %v1610
      %1612 = vmatmul.bf16.gmra.mxu0 %v896
      %v1613 = vpop.f32.mrf.mxu0
      %v1614 = vadd.f32 %v1525, %v1613
      %v1615 = vpop.f32.mrf.mxu0
      %v1616 = vadd.f32 %v1527, %v1615
      %1617 = vmatmul.bf16.gmra.mxu0 %v903
      %v1618 = vpop.f32.mrf.mxu0
      %v1619 = vadd.f32 %v1530, %v1618
      %v1620 = vpop.f32.mrf.mxu0
      %v1621 = vadd.f32 %v1532, %v1620
      %1622 = vdwg.mxu0
      %1623 = vmatpush.bf16.msra.mxu0 %v1275
      %1624 = vmatpush.bf16.msra.mxu0 %v1274
      %1625 = vmatpush.bf16.msra.mxu0 %v1273
      %1626 = vmatpush.bf16.msra.mxu0 %v1272
      %1627 = vmatpush.bf16.msra.mxu0 %v1271
      %1628 = vmatpush.bf16.msra.mxu0 %v1270
      %1629 = vmatpush.bf16.msra.mxu0 %v1269
      %1630 = vmatpush.bf16.msra.mxu0 %v1268
      %1631 = vmatmul.bf16.gmra.mxu0 %v799
      %v1632 = vpop.f32.mrf.mxu0
      %v1633 = vadd.f32 %v1544, %v1632
      %v1634 = vpop.f32.mrf.mxu0
      %v1635 = vadd.f32 %v1546, %v1634
      %1636 = vmatmul.bf16.gmra.mxu0 %v806
      %v1637 = vpop.f32.mrf.mxu0
      %v1638 = vadd.f32 %v1549, %v1637
      %v1639 = vpop.f32.mrf.mxu0
      %v1640 = vadd.f32 %v1551, %v1639
      %1641 = vmatmul.bf16.gmra.mxu0 %v813
      %v1642 = vpop.f32.mrf.mxu0
      %v1643 = vadd.f32 %v1554, %v1642
      %v1644 = vpop.f32.mrf.mxu0
      %v1645 = vadd.f32 %v1556, %v1644
      %1646 = vmatmul.bf16.gmra.mxu0 %v820
      %v1647 = vpop.f32.mrf.mxu0
      %v1648 = vadd.f32 %v1559, %v1647
      %v1649 = vpop.f32.mrf.mxu0
      %v1650 = vadd.f32 %v1561, %v1649
      %1651 = vmatmul.bf16.gmra.mxu0 %v827
      %v1652 = vpop.f32.mrf.mxu0
      %v1653 = vadd.f32 %v1564, %v1652
      %v1654 = vpop.f32.mrf.mxu0
      %v1655 = vadd.f32 %v1566, %v1654
      %1656 = vmatmul.bf16.gmra.mxu0 %v834
      %v1657 = vpop.f32.mrf.mxu0
      %v1658 = vadd.f32 %v1569, %v1657
      %v1659 = vpop.f32.mrf.mxu0
      %v1660 = vadd.f32 %v1571, %v1659
      %1661 = vmatmul.bf16.gmra.mxu0 %v841
      %v1662 = vpop.f32.mrf.mxu0
      %v1663 = vadd.f32 %v1574, %v1662
      %v1664 = vpop.f32.mrf.mxu0
      %v1665 = vadd.f32 %v1576, %v1664
      %1666 = vmatmul.bf16.gmra.mxu0 %v848
      %v1667 = vpop.f32.mrf.mxu0
      %v1668 = vadd.f32 %v1579, %v1667
      %v1669 = vpop.f32.mrf.mxu0
      %v1670 = vadd.f32 %v1581, %v1669
      %1671 = vmatmul.bf16.gmra.mxu0 %v855
      %v1672 = vpop.f32.mrf.mxu0
      %v1673 = vadd.f32 %v1584, %v1672
      %v1674 = vpop.f32.mrf.mxu0
      %v1675 = vadd.f32 %v1586, %v1674
      %1676 = vmatmul.bf16.gmra.mxu0 %v862
      %v1677 = vpop.f32.mrf.mxu0
      %v1678 = vadd.f32 %v1589, %v1677
      %v1679 = vpop.f32.mrf.mxu0
      %v1680 = vadd.f32 %v1591, %v1679
      %1681 = vmatmul.bf16.gmra.mxu0 %v869
      %v1682 = vpop.f32.mrf.mxu0
      %v1683 = vadd.f32 %v1594, %v1682
      %v1684 = vpop.f32.mrf.mxu0
      %v1685 = vadd.f32 %v1596, %v1684
      %1686 = vmatmul.bf16.gmra.mxu0 %v876
      %v1687 = vpop.f32.mrf.mxu0
      %v1688 = vadd.f32 %v1599, %v1687
      %v1689 = vpop.f32.mrf.mxu0
      %v1690 = vadd.f32 %v1601, %v1689
      %1691 = vmatmul.bf16.gmra.mxu0 %v883
      %v1692 = vpop.f32.mrf.mxu0
      %v1693 = vadd.f32 %v1604, %v1692
      %v1694 = vpop.f32.mrf.mxu0
      %v1695 = vadd.f32 %v1606, %v1694
      %1696 = vmatmul.bf16.gmra.mxu0 %v890
      %v1697 = vpop.f32.mrf.mxu0
      %v1698 = vadd.f32 %v1609, %v1697
      %v1699 = vpop.f32.mrf.mxu0
      %v1700 = vadd.f32 %v1611, %v1699
      %1701 = vmatmul.bf16.gmra.mxu0 %v897
      %v1702 = vpop.f32.mrf.mxu0
      %v1703 = vadd.f32 %v1614, %v1702
      %v1704 = vpop.f32.mrf.mxu0
      %v1705 = vadd.f32 %v1616, %v1704
      %1706 = vmatmul.bf16.gmra.mxu0 %v904
      %v1707 = vpop.f32.mrf.mxu0
      %v1708 = vadd.f32 %v1619, %v1707
      %v1709 = vpop.f32.mrf.mxu0
      %v1710 = vadd.f32 %v1621, %v1709
      %1711 = vdwg.mxu0
      %1712 = vmatpush.bf16.msra.mxu0 %v1283
      %1713 = vmatpush.bf16.msra.mxu0 %v1282
      %1714 = vmatpush.bf16.msra.mxu0 %v1281
      %1715 = vmatpush.bf16.msra.mxu0 %v1280
      %1716 = vmatpush.bf16.msra.mxu0 %v1279
      %1717 = vmatpush.bf16.msra.mxu0 %v1278
      %1718 = vmatpush.bf16.msra.mxu0 %v1277
      %1719 = vmatpush.bf16.msra.mxu0 %v1276
      %1720 = vmatmul.bf16.gmra.mxu0 %v800
      %v1721 = vpop.f32.mrf.mxu0
      %v1722 = vadd.f32 %v1633, %v1721
      %v1723 = vpop.f32.mrf.mxu0
      %v1724 = vadd.f32 %v1635, %v1723
      %1725 = vmatmul.bf16.gmra.mxu0 %v807
      %v1726 = vpop.f32.mrf.mxu0
      %v1727 = vadd.f32 %v1638, %v1726
      %v1728 = vpop.f32.mrf.mxu0
      %v1729 = vadd.f32 %v1640, %v1728
      %1730 = vmatmul.bf16.gmra.mxu0 %v814
      %v1731 = vpop.f32.mrf.mxu0
      %v1732 = vadd.f32 %v1643, %v1731
      %v1733 = vpop.f32.mrf.mxu0
      %v1734 = vadd.f32 %v1645, %v1733
      %1735 = vmatmul.bf16.gmra.mxu0 %v821
      %v1736 = vpop.f32.mrf.mxu0
      %v1737 = vadd.f32 %v1648, %v1736
      %v1738 = vpop.f32.mrf.mxu0
      %v1739 = vadd.f32 %v1650, %v1738
      %1740 = vmatmul.bf16.gmra.mxu0 %v828
      %v1741 = vpop.f32.mrf.mxu0
      %v1742 = vadd.f32 %v1653, %v1741
      %v1743 = vpop.f32.mrf.mxu0
      %v1744 = vadd.f32 %v1655, %v1743
      %1745 = vmatmul.bf16.gmra.mxu0 %v835
      %v1746 = vpop.f32.mrf.mxu0
      %v1747 = vadd.f32 %v1658, %v1746
      %v1748 = vpop.f32.mrf.mxu0
      %v1749 = vadd.f32 %v1660, %v1748
      %1750 = vmatmul.bf16.gmra.mxu0 %v842
      %v1751 = vpop.f32.mrf.mxu0
      %v1752 = vadd.f32 %v1663, %v1751
      %v1753 = vpop.f32.mrf.mxu0
      %v1754 = vadd.f32 %v1665, %v1753
      %1755 = vmatmul.bf16.gmra.mxu0 %v849
      %v1756 = vpop.f32.mrf.mxu0
      %v1757 = vadd.f32 %v1668, %v1756
      %v1758 = vpop.f32.mrf.mxu0
      %v1759 = vadd.f32 %v1670, %v1758
      %1760 = vmatmul.bf16.gmra.mxu0 %v856
      %v1761 = vpop.f32.mrf.mxu0
      %v1762 = vadd.f32 %v1673, %v1761
      %v1763 = vpop.f32.mrf.mxu0
      %v1764 = vadd.f32 %v1675, %v1763
      %1765 = vmatmul.bf16.gmra.mxu0 %v863
      %v1766 = vpop.f32.mrf.mxu0
      %v1767 = vadd.f32 %v1678, %v1766
      %v1768 = vpop.f32.mrf.mxu0
      %v1769 = vadd.f32 %v1680, %v1768
      %1770 = vmatmul.bf16.gmra.mxu0 %v870
      %v1771 = vpop.f32.mrf.mxu0
      %v1772 = vadd.f32 %v1683, %v1771
      %v1773 = vpop.f32.mrf.mxu0
      %v1774 = vadd.f32 %v1685, %v1773
      %1775 = vmatmul.bf16.gmra.mxu0 %v877
      %v1776 = vpop.f32.mrf.mxu0
      %v1777 = vadd.f32 %v1688, %v1776
      %v1778 = vpop.f32.mrf.mxu0
      %v1779 = vadd.f32 %v1690, %v1778
      %1780 = vmatmul.bf16.gmra.mxu0 %v884
      %v1781 = vpop.f32.mrf.mxu0
      %v1782 = vadd.f32 %v1693, %v1781
      %v1783 = vpop.f32.mrf.mxu0
      %v1784 = vadd.f32 %v1695, %v1783
      %1785 = vmatmul.bf16.gmra.mxu0 %v891
      %v1786 = vpop.f32.mrf.mxu0
      %v1787 = vadd.f32 %v1698, %v1786
      %v1788 = vpop.f32.mrf.mxu0
      %v1789 = vadd.f32 %v1700, %v1788
      %1790 = vmatmul.bf16.gmra.mxu0 %v898
      %v1791 = vpop.f32.mrf.mxu0
      %v1792 = vadd.f32 %v1703, %v1791
      %v1793 = vpop.f32.mrf.mxu0
      %v1794 = vadd.f32 %v1705, %v1793
      %1795 = vmatmul.bf16.gmra.mxu0 %v905
      %v1796 = vpop.f32.mrf.mxu0
      %v1797 = vadd.f32 %v1708, %v1796
      %v1798 = vpop.f32.mrf.mxu0
      %v1799 = vadd.f32 %v1710, %v1798
      %1800 = vdwg.mxu0
      %1801 = vmatpush.bf16.msra.mxu0 %v1291
      %1802 = vmatpush.bf16.msra.mxu0 %v1290
      %1803 = vmatpush.bf16.msra.mxu0 %v1289
      %1804 = vmatpush.bf16.msra.mxu0 %v1288
      %1805 = vmatpush.bf16.msra.mxu0 %v1287
      %1806 = vmatpush.bf16.msra.mxu0 %v1286
      %1807 = vmatpush.bf16.msra.mxu0 %v1285
      %1808 = vmatpush.bf16.msra.mxu0 %v1284
      %1809 = vmatmul.bf16.gmra.mxu0 %v801
      %v1810 = vpop.f32.mrf.mxu0
      %v1811 = vadd.f32 %v1722, %v1810
      %v1812 = vpop.f32.mrf.mxu0
      %v1813 = vadd.f32 %v1724, %v1812
      %1814 = vmatmul.bf16.gmra.mxu0 %v808
      %v1815 = vpop.f32.mrf.mxu0
      %v1816 = vadd.f32 %v1727, %v1815
      %v1817 = vpop.f32.mrf.mxu0
      %v1818 = vadd.f32 %v1729, %v1817
      %1819 = vmatmul.bf16.gmra.mxu0 %v815
      %v1820 = vpop.f32.mrf.mxu0
      %v1821 = vadd.f32 %v1732, %v1820
      %v1822 = vpop.f32.mrf.mxu0
      %v1823 = vadd.f32 %v1734, %v1822
      %1824 = vmatmul.bf16.gmra.mxu0 %v822
      %v1825 = vpop.f32.mrf.mxu0
      %v1826 = vadd.f32 %v1737, %v1825
      %v1827 = vpop.f32.mrf.mxu0
      %v1828 = vadd.f32 %v1739, %v1827
      %1829 = vmatmul.bf16.gmra.mxu0 %v829
      %v1830 = vpop.f32.mrf.mxu0
      %v1831 = vadd.f32 %v1742, %v1830
      %v1832 = vpop.f32.mrf.mxu0
      %v1833 = vadd.f32 %v1744, %v1832
      %1834 = vmatmul.bf16.gmra.mxu0 %v836
      %v1835 = vpop.f32.mrf.mxu0
      %v1836 = vadd.f32 %v1747, %v1835
      %v1837 = vpop.f32.mrf.mxu0
      %v1838 = vadd.f32 %v1749, %v1837
      %1839 = vmatmul.bf16.gmra.mxu0 %v843
      %v1840 = vpop.f32.mrf.mxu0
      %v1841 = vadd.f32 %v1752, %v1840
      %v1842 = vpop.f32.mrf.mxu0
      %v1843 = vadd.f32 %v1754, %v1842
      %1844 = vmatmul.bf16.gmra.mxu0 %v850
      %v1845 = vpop.f32.mrf.mxu0
      %v1846 = vadd.f32 %v1757, %v1845
      %v1847 = vpop.f32.mrf.mxu0
      %v1848 = vadd.f32 %v1759, %v1847
      %1849 = vmatmul.bf16.gmra.mxu0 %v857
      %v1850 = vpop.f32.mrf.mxu0
      %v1851 = vadd.f32 %v1762, %v1850
      %v1852 = vpop.f32.mrf.mxu0
      %v1853 = vadd.f32 %v1764, %v1852
      %1854 = vmatmul.bf16.gmra.mxu0 %v864
      %v1855 = vpop.f32.mrf.mxu0
      %v1856 = vadd.f32 %v1767, %v1855
      %v1857 = vpop.f32.mrf.mxu0
      %v1858 = vadd.f32 %v1769, %v1857
      %1859 = vmatmul.bf16.gmra.mxu0 %v871
      %v1860 = vpop.f32.mrf.mxu0
      %v1861 = vadd.f32 %v1772, %v1860
      %v1862 = vpop.f32.mrf.mxu0
      %v1863 = vadd.f32 %v1774, %v1862
      %1864 = vmatmul.bf16.gmra.mxu0 %v878
      %v1865 = vpop.f32.mrf.mxu0
      %v1866 = vadd.f32 %v1777, %v1865
      %v1867 = vpop.f32.mrf.mxu0
      %v1868 = vadd.f32 %v1779, %v1867
      %1869 = vmatmul.bf16.gmra.mxu0 %v885
      %v1870 = vpop.f32.mrf.mxu0
      %v1871 = vadd.f32 %v1782, %v1870
      %v1872 = vpop.f32.mrf.mxu0
      %v1873 = vadd.f32 %v1784, %v1872
      %1874 = vmatmul.bf16.gmra.mxu0 %v892
      %v1875 = vpop.f32.mrf.mxu0
      %v1876 = vadd.f32 %v1787, %v1875
      %v1877 = vpop.f32.mrf.mxu0
      %v1878 = vadd.f32 %v1789, %v1877
      %1879 = vmatmul.bf16.gmra.mxu0 %v899
      %v1880 = vpop.f32.mrf.mxu0
      %v1881 = vadd.f32 %v1792, %v1880
      %v1882 = vpop.f32.mrf.mxu0
      %v1883 = vadd.f32 %v1794, %v1882
      %1884 = vmatmul.bf16.gmra.mxu0 %v906
      %v1885 = vpop.f32.mrf.mxu0
      %v1886 = vadd.f32 %v1797, %v1885
      %v1887 = vpop.f32.mrf.mxu0
      %v1888 = vadd.f32 %v1799, %v1887
      %1889 = vdwg.mxu0
      %1890 = vmatpush.bf16.msra.mxu0 %v1299
      %1891 = vmatpush.bf16.msra.mxu0 %v1298
      %1892 = vmatpush.bf16.msra.mxu0 %v1297
      %1893 = vmatpush.bf16.msra.mxu0 %v1296
      %1894 = vmatpush.bf16.msra.mxu0 %v1295
      %1895 = vmatpush.bf16.msra.mxu0 %v1294
      %1896 = vmatpush.bf16.msra.mxu0 %v1293
      %1897 = vmatpush.bf16.msra.mxu0 %v1292
      %1898 = vmatmul.bf16.gmra.mxu0 %v802
      %v1899 = vpop.f32.mrf.mxu0
      %v1900 = vadd.f32 %v1811, %v1899
      %v1901 = vpop.f32.mrf.mxu0
      %v1902 = vadd.f32 %v1813, %v1901
      %1903 = vmatmul.bf16.gmra.mxu0 %v809
      %v1904 = vpop.f32.mrf.mxu0
      %v1905 = vadd.f32 %v1816, %v1904
      %v1906 = vpop.f32.mrf.mxu0
      %v1907 = vadd.f32 %v1818, %v1906
      %1908 = vmatmul.bf16.gmra.mxu0 %v816
      %v1909 = vpop.f32.mrf.mxu0
      %v1910 = vadd.f32 %v1821, %v1909
      %v1911 = vpop.f32.mrf.mxu0
      %v1912 = vadd.f32 %v1823, %v1911
      %1913 = vmatmul.bf16.gmra.mxu0 %v823
      %v1914 = vpop.f32.mrf.mxu0
      %v1915 = vadd.f32 %v1826, %v1914
      %v1916 = vpop.f32.mrf.mxu0
      %v1917 = vadd.f32 %v1828, %v1916
      %1918 = vmatmul.bf16.gmra.mxu0 %v830
      %v1919 = vpop.f32.mrf.mxu0
      %v1920 = vadd.f32 %v1831, %v1919
      %v1921 = vpop.f32.mrf.mxu0
      %v1922 = vadd.f32 %v1833, %v1921
      %1923 = vmatmul.bf16.gmra.mxu0 %v837
      %v1924 = vpop.f32.mrf.mxu0
      %v1925 = vadd.f32 %v1836, %v1924
      %v1926 = vpop.f32.mrf.mxu0
      %v1927 = vadd.f32 %v1838, %v1926
      %1928 = vmatmul.bf16.gmra.mxu0 %v844
      %v1929 = vpop.f32.mrf.mxu0
      %v1930 = vadd.f32 %v1841, %v1929
      %v1931 = vpop.f32.mrf.mxu0
      %v1932 = vadd.f32 %v1843, %v1931
      %1933 = vmatmul.bf16.gmra.mxu0 %v851
      %v1934 = vpop.f32.mrf.mxu0
      %v1935 = vadd.f32 %v1846, %v1934
      %v1936 = vpop.f32.mrf.mxu0
      %v1937 = vadd.f32 %v1848, %v1936
      %1938 = vmatmul.bf16.gmra.mxu0 %v858
      %v1939 = vpop.f32.mrf.mxu0
      %v1940 = vadd.f32 %v1851, %v1939
      %v1941 = vpop.f32.mrf.mxu0
      %v1942 = vadd.f32 %v1853, %v1941
      %1943 = vmatmul.bf16.gmra.mxu0 %v865
      %v1944 = vpop.f32.mrf.mxu0
      %v1945 = vadd.f32 %v1856, %v1944
      %v1946 = vpop.f32.mrf.mxu0
      %v1947 = vadd.f32 %v1858, %v1946
      %1948 = vmatmul.bf16.gmra.mxu0 %v872
      %v1949 = vpop.f32.mrf.mxu0
      %v1950 = vadd.f32 %v1861, %v1949
      %v1951 = vpop.f32.mrf.mxu0
      %v1952 = vadd.f32 %v1863, %v1951
      %1953 = vmatmul.bf16.gmra.mxu0 %v879
      %v1954 = vpop.f32.mrf.mxu0
      %v1955 = vadd.f32 %v1866, %v1954
      %v1956 = vpop.f32.mrf.mxu0
      %v1957 = vadd.f32 %v1868, %v1956
      %1958 = vmatmul.bf16.gmra.mxu0 %v886
      %v1959 = vpop.f32.mrf.mxu0
      %v1960 = vadd.f32 %v1871, %v1959
      %v1961 = vpop.f32.mrf.mxu0
      %v1962 = vadd.f32 %v1873, %v1961
      %1963 = vmatmul.bf16.gmra.mxu0 %v893
      %v1964 = vpop.f32.mrf.mxu0
      %v1965 = vadd.f32 %v1876, %v1964
      %v1966 = vpop.f32.mrf.mxu0
      %v1967 = vadd.f32 %v1878, %v1966
      %1968 = vmatmul.bf16.gmra.mxu0 %v900
      %v1969 = vpop.f32.mrf.mxu0
      %v1970 = vadd.f32 %v1881, %v1969
      %v1971 = vpop.f32.mrf.mxu0
      %v1972 = vadd.f32 %v1883, %v1971
      %1973 = vmatmul.bf16.gmra.mxu0 %v907
      %v1974 = vpop.f32.mrf.mxu0
      %v1975 = vadd.f32 %v1886, %v1974
      %v1976 = vpop.f32.mrf.mxu0
      %v1977 = vadd.f32 %v1888, %v1976
      %1978 = vdwg.mxu0
      %v1979 = vld [vmem:[%s2] sm:$0x1]
      %v1981 = vperm.slane %v1979, 0
      %v1983 = vmul.f32 %v1900, %v1981
      %v1984 = vmul.f32 %v1902, %v1981
      %v1985 = vmul.f32 %v1905, %v1981
      %v1986 = vmul.f32 %v1907, %v1981
      %v1987 = vmul.f32 %v1910, %v1981
      %v1988 = vmul.f32 %v1912, %v1981
      %v1989 = vmul.f32 %v1915, %v1981
      %v1990 = vmul.f32 %v1917, %v1981
      %v1991 = vmul.f32 %v1920, %v1981
      %v1992 = vmul.f32 %v1922, %v1981
      %v1993 = vmul.f32 %v1925, %v1981
      %v1994 = vmul.f32 %v1927, %v1981
      %v1995 = vmul.f32 %v1930, %v1981
      %v1996 = vmul.f32 %v1932, %v1981
      %v1997 = vmul.f32 %v1935, %v1981
      %v1998 = vmul.f32 %v1937, %v1981
      %v1999 = vmul.f32 %v1940, %v1981
      %v2000 = vmul.f32 %v1942, %v1981
      %v2001 = vmul.f32 %v1945, %v1981
      %v2002 = vmul.f32 %v1947, %v1981
      %v2003 = vmul.f32 %v1950, %v1981
      %v2004 = vmul.f32 %v1952, %v1981
      %v2005 = vmul.f32 %v1955, %v1981
      %v2006 = vmul.f32 %v1957, %v1981
      %v2007 = vmul.f32 %v1960, %v1981
      %v2008 = vmul.f32 %v1962, %v1981
      %v2009 = vmul.f32 %v1965, %v1981
      %v2010 = vmul.f32 %v1967, %v1981
      %v2011 = vmul.f32 %v1970, %v1981
      %v2012 = vmul.f32 %v1972, %v1981
      %v2013 = vmul.f32 %v1975, %v1981
      %v2014 = vmul.f32 %v1977, %v1981
      %v2015 = vld [vmem:[%s3] sm:$0x1]
      %v2017 = vperm.slane %v2015, 0
      %v2019 = vadd.f32 %v1983, %v2017
      %v2020 = vadd.f32 %v1984, %v2017
      %v2021 = vadd.f32 %v1985, %v2017
      %v2022 = vadd.f32 %v1986, %v2017
      %v2023 = vadd.f32 %v1987, %v2017
      %v2024 = vadd.f32 %v1988, %v2017
      %v2025 = vadd.f32 %v1989, %v2017
      %v2026 = vadd.f32 %v1990, %v2017
      %v2027 = vadd.f32 %v1991, %v2017
      %v2028 = vadd.f32 %v1992, %v2017
      %v2029 = vadd.f32 %v1993, %v2017
      %v2030 = vadd.f32 %v1994, %v2017
      %v2031 = vadd.f32 %v1995, %v2017
      %v2032 = vadd.f32 %v1996, %v2017
      %v2033 = vadd.f32 %v1997, %v2017
      %v2034 = vadd.f32 %v1998, %v2017
      %v2035 = vadd.f32 %v1999, %v2017
      %v2036 = vadd.f32 %v2000, %v2017
      %v2037 = vadd.f32 %v2001, %v2017
      %v2038 = vadd.f32 %v2002, %v2017
      %v2039 = vadd.f32 %v2003, %v2017
      %v2040 = vadd.f32 %v2004, %v2017
      %v2041 = vadd.f32 %v2005, %v2017
      %v2042 = vadd.f32 %v2006, %v2017
      %v2043 = vadd.f32 %v2007, %v2017
      %v2044 = vadd.f32 %v2008, %v2017
      %v2045 = vadd.f32 %v2009, %v2017
      %v2046 = vadd.f32 %v2010, %v2017
      %v2047 = vadd.f32 %v2011, %v2017
      %v2048 = vadd.f32 %v2012, %v2017
      %v2049 = vadd.f32 %v2013, %v2017
      %v2050 = vadd.f32 %v2014, %v2017
      %v2051 = vmax.f32 %v2019, 0.0
      %v2052 = vmax.f32 %v2020, 0.0
      %v2053 = vmax.f32 %v2021, 0.0
      %v2054 = vmax.f32 %v2022, 0.0
      %v2055 = vmax.f32 %v2023, 0.0
      %v2056 = vmax.f32 %v2024, 0.0
      %v2057 = vmax.f32 %v2025, 0.0
      %v2058 = vmax.f32 %v2026, 0.0
      %v2059 = vmax.f32 %v2027, 0.0
      %v2060 = vmax.f32 %v2028, 0.0
      %v2061 = vmax.f32 %v2029, 0.0
      %v2062 = vmax.f32 %v2030, 0.0
      %v2063 = vmax.f32 %v2031, 0.0
      %v2064 = vmax.f32 %v2032, 0.0
      %v2065 = vmax.f32 %v2033, 0.0
      %v2066 = vmax.f32 %v2034, 0.0
      %v2067 = vmax.f32 %v2035, 0.0
      %v2068 = vmax.f32 %v2036, 0.0
      %v2069 = vmax.f32 %v2037, 0.0
      %v2070 = vmax.f32 %v2038, 0.0
      %v2071 = vmax.f32 %v2039, 0.0
      %v2072 = vmax.f32 %v2040, 0.0
      %v2073 = vmax.f32 %v2041, 0.0
      %v2074 = vmax.f32 %v2042, 0.0
      %v2075 = vmax.f32 %v2043, 0.0
      %v2076 = vmax.f32 %v2044, 0.0
      %v2077 = vmax.f32 %v2045, 0.0
      %v2078 = vmax.f32 %v2046, 0.0
      %v2079 = vmax.f32 %v2047, 0.0
      %v2080 = vmax.f32 %v2048, 0.0
      %v2081 = vmax.f32 %v2049, 0.0
      %v2082 = vmax.f32 %v2050, 0.0
      %vm2083 = vcmask 261120
      %2084 = vst.msk [vmem:[%s202] sm:$0xff] %vm2083, %v2051
      %2085 = vst.msk [vmem:[%s202 + $0x8] sm:$0xff] %vm2083, %v2052
      %2086 = vst.msk [vmem:[%s202 + $0x10] sm:$0xff] %vm2083, %v2053
      %2087 = vst.msk [vmem:[%s202 + $0x18] sm:$0xff] %vm2083, %v2054
      %2088 = vst.msk [vmem:[%s202 + $0x20] sm:$0xff] %vm2083, %v2055
      %2089 = vst.msk [vmem:[%s202 + $0x28] sm:$0xff] %vm2083, %v2056
      %2090 = vst.msk [vmem:[%s202 + $0x30] sm:$0xff] %vm2083, %v2057
      %2091 = vst.msk [vmem:[%s202 + $0x38] sm:$0xff] %vm2083, %v2058
      %2092 = vst.msk [vmem:[%s202 + $0x40] sm:$0xff] %vm2083, %v2059
      %2093 = vst.msk [vmem:[%s202 + $0x48] sm:$0xff] %vm2083, %v2060
      %2094 = vst.msk [vmem:[%s202 + $0x50] sm:$0xff] %vm2083, %v2061
      %2095 = vst.msk [vmem:[%s202 + $0x58] sm:$0xff] %vm2083, %v2062
      %2096 = vst.msk [vmem:[%s202 + $0x60] sm:$0xff] %vm2083, %v2063
      %2097 = vst.msk [vmem:[%s202 + $0x68] sm:$0xff] %vm2083, %v2064
      %2098 = vst.msk [vmem:[%s202 + $0x70] sm:$0xff] %vm2083, %v2065
      %2099 = vst.msk [vmem:[%s202 + $0x78] sm:$0xff] %vm2083, %v2066
      %2100 = vst.msk [vmem:[%s202 + $0x80] sm:$0xff] %vm2083, %v2067
      %2101 = vst.msk [vmem:[%s202 + $0x88] sm:$0xff] %vm2083, %v2068
      %2102 = vst.msk [vmem:[%s202 + $0x90] sm:$0xff] %vm2083, %v2069
      %2103 = vst.msk [vmem:[%s202 + $0x98] sm:$0xff] %vm2083, %v2070
      %2104 = vst.msk [vmem:[%s202 + $0xa0] sm:$0xff] %vm2083, %v2071
      %2105 = vst.msk [vmem:[%s202 + $0xa8] sm:$0xff] %vm2083, %v2072
      %2106 = vst.msk [vmem:[%s202 + $0xb0] sm:$0xff] %vm2083, %v2073
      %2107 = vst.msk [vmem:[%s202 + $0xb8] sm:$0xff] %vm2083, %v2074
      %2108 = vst.msk [vmem:[%s202 + $0xc0] sm:$0xff] %vm2083, %v2075
      %2109 = vst.msk [vmem:[%s202 + $0xc8] sm:$0xff] %vm2083, %v2076
      %2110 = vst.msk [vmem:[%s202 + $0xd0] sm:$0xff] %vm2083, %v2077
      %2111 = vst.msk [vmem:[%s202 + $0xd8] sm:$0xff] %vm2083, %v2078
      %2112 = vst.msk [vmem:[%s202 + $0xe0] sm:$0xff] %vm2083, %v2079
      %2113 = vst.msk [vmem:[%s202 + $0xe8] sm:$0xff] %vm2083, %v2080
      %2114 = vst.msk [vmem:[%s202 + $0xf0] sm:$0xff] %vm2083, %v2081
      %2115 = vst.msk [vmem:[%s202 + $0xf8] sm:$0xff] %vm2083, %v2082
      %s2116 = smul.u32 32, %s15
      %p2117 = scmp.lt.s32.totalorder %s2116, 127
      %s2118 = scalar_select %p2117, %s2116, 127
      %s2119 = smul.addr %s2118, 8
      %s2120 = scalar_lea.vmem %s4, %s2119
      // Predicated region
      $region37: #{ggo_forward.11} parent=35 // pred_check
        %p2121 = pneg %p122
      $region38: #{ggo_forward.11} parent=35 // pred_check_branch
        %2123 = sbr.rel (%p2121) target = $region40
      $region39: #{ggo_forward.11} parent=35 // pred_region
        %s2124 = smul.u32 32, %s15
      $region40: #{ggo_forward.11} parent=35 // pred_fallthru
        _
    $region36: #{ggo_forward.11} parent=5 // pred_fallthru
      _
    %p2125 = scmp.le.s32.totalorder 2, %s10
    // Predicated region
    $region41: #{ggo_forward.11} parent=5 // pred_check
      %p2126 = pneg %p2125
    $region42: #{ggo_forward.11} parent=5 // pred_check_branch
      %2128 = sbr.rel (%p2126) target = $region44
    $region43: #{ggo_forward.11} parent=5 // pred_region
      %s2129 = ssub.s32 %s10, 2
      // Predicated region
      $region45: #{ggo_forward.11} parent=43 // pred_check
        %p2130 = pneg %p128
      $region46: #{ggo_forward.11} parent=43 // pred_check_branch
        %2132 = sbr.rel (%p2130) target = $region48
      $region47: #{ggo_forward.11} parent=43 // pred_region
        %s2133 = smul.u32 32, %s16
        %p2134 = scmp.lt.s32.totalorder %s2133, 127
        %s2135 = scalar_select %p2134, %s2133, 127
        %s2136 = smul.addr %s2135, 8
        %s2137 = scalar_lea.vmem %s4, %s2136
      $region48: #{ggo_forward.11} parent=43 // pred_fallthru
        _
    $region44: #{ggo_forward.11} parent=5 // pred_fallthru
      _
  $region6: #{ggo_forward.11} parent=0 // loop_footer
    %s14 = sadd.s32 1, %s10
  $region7: #{ggo_forward.11} parent=0 // loop_footer_branch
    %9 = sbr.rel target = $region3
  $region8: #{ggo_forward.11} parent=0 // loop_exit
    _

// kernel: ggo_forward.16
$region0: #{ggo_forward.16}
  #allocation0 [shape = 'u32[]', space=smem, size = 0x4, offset = 0x4, fixed_abs, tag = 'smem constant byte address 0x4 - core index']
  #allocation1 [shape = 'u32[72,128]{1,0:T(1,128)}', space=vmem, size = 0x9000, scoped, tag = 'internal scratch']
  %s0 = inlined_call_operand.vmem [shape: bf16[128,896], index: 0, kind: input, shape index: {}]
  %s1 = inlined_call_operand.vmem [shape: bf16[896,64], index: 1, kind: input, shape index: {}]
  %s2 = inlined_call_operand.vmem [shape: f32[1,64], index: 2, kind: input, shape index: {}]
  %s3 = inlined_call_operand.vmem [shape: f32[1,64], index: 3, kind: input, shape index: {}]
  %s4 = inlined_call_operand.vmem [shape: f32[128,64], index: 4, kind: output, shape index: {}]
  %s5 = sld [smem:[#allocation0]]
  $region26: #{ggo_forward.16} parent=0
    _
  %s7 = ssub.s32 1, %s5
  %s8 = scalar_select 0, %s7, %s5
  // Predicated region
  $region2: #{ggo_forward.16} parent=0 // pred_check
    _
  $region3: #{ggo_forward.16} parent=0 // pred_check_branch
    %10 = sbr.rel (0) target = $region5
  $region4: #{ggo_forward.16} parent=0 // pred_region
    _
  $region5: #{ggo_forward.16} parent=0 // pred_fallthru
    _
  // Predicated region
  $region6: #{ggo_forward.16} parent=0 // pred_check
    _
  $region7: #{ggo_forward.16} parent=0 // pred_check_branch
    %12 = sbr.rel (0) target = $region9
  $region8: #{ggo_forward.16} parent=0 // pred_region
    _
  $region9: #{ggo_forward.16} parent=0 // pred_fallthru
    _
  // Predicated region
  $region10: #{ggo_forward.16} parent=0 // pred_check
    _
  $region11: #{ggo_forward.16} parent=0 // pred_check_branch
    %14 = sbr.rel (0) target = $region13
  $region12: #{ggo_forward.16} parent=0 // pred_region
    _
  $region13: #{ggo_forward.16} parent=0 // pred_fallthru
    _
  // Predicated region
  $region14: #{ggo_forward.16} parent=0 // pred_check
    _
  $region15: #{ggo_forward.16} parent=0 // pred_check_branch
    %16 = sbr.rel (0) target = $region17
  $region16: #{ggo_forward.16} parent=0 // pred_region
    _
  $region17: #{ggo_forward.16} parent=0 // pred_fallthru
    _
  %v17 = vld [vmem:[%s0] sm:$0xff]
  %v18 = vld [vmem:[%s0 + $0x8] sm:$0xff]
  %v19 = vld [vmem:[%s0 + $0x10] sm:$0xff]
  %v20 = vld [vmem:[%s0 + $0x18] sm:$0xf]
  %v21 = vld [vmem:[%s0 + $0x1c] sm:$0xff]
  %v22 = vld [vmem:[%s0 + $0x24] sm:$0xff]
  %v23 = vld [vmem:[%s0 + $0x2c] sm:$0xff]
  %v24 = vld [vmem:[%s0 + $0x34] sm:$0xf]
  %v25 = vld [vmem:[%s0 + $0x38] sm:$0xff]
  %v26 = vld [vmem:[%s0 + $0x40] sm:$0xff]
  %v27 = vld [vmem:[%s0 + $0x48] sm:$0xff]
  %v28 = vld [vmem:[%s0 + $0x50] sm:$0xf]
  %v29 = vld [vmem:[%s0 + $0x54] sm:$0xff]
  %v30 = vld [vmem:[%s0 + $0x5c] sm:$0xff]
  %v31 = vld [vmem:[%s0 + $0x64] sm:$0xff]
  %v32 = vld [vmem:[%s0 + $0x6c] sm:$0xf]
  %v33 = vld [vmem:[%s0 + $0x70] sm:$0xff]
  %v34 = vld [vmem:[%s0 + $0x78] sm:$0xff]
  %v35 = vld [vmem:[%s0 + $0x80] sm:$0xff]
  %v36 = vld [vmem:[%s0 + $0x88] sm:$0xf]
  %v37 = vld [vmem:[%s0 + $0x8c] sm:$0xff]
  %v38 = vld [vmem:[%s0 + $0x94] sm:$0xff]
  %v39 = vld [vmem:[%s0 + $0x9c] sm:$0xff]
  %v40 = vld [vmem:[%s0 + $0xa4] sm:$0xf]
  %v41 = vld [vmem:[%s0 + $0xa8] sm:$0xff]
  %v42 = vld [vmem:[%s0 + $0xb0] sm:$0xff]
  %v43 = vld [vmem:[%s0 + $0xb8] sm:$0xff]
  %v44 = vld [vmem:[%s0 + $0xc0] sm:$0xf]
  %v45 = vld [vmem:[%s0 + $0xc4] sm:$0xff]
  %v46 = vld [vmem:[%s0 + $0xcc] sm:$0xff]
  %v47 = vld [vmem:[%s0 + $0xd4] sm:$0xff]
  %v48 = vld [vmem:[%s0 + $0xdc] sm:$0xf]
  %v49 = vld [vmem:[%s0 + $0xe0] sm:$0xff]
  %v50 = vld [vmem:[%s0 + $0xe8] sm:$0xff]
  %v51 = vld [vmem:[%s0 + $0xf0] sm:$0xff]
  %v52 = vld [vmem:[%s0 + $0xf8] sm:$0xf]
  %v53 = vld [vmem:[%s0 + $0xfc] sm:$0xff]
  %v54 = vld [vmem:[%s0 + $0x104] sm:$0xff]
  %v55 = vld [vmem:[%s0 + $0x10c] sm:$0xff]
  %v56 = vld [vmem:[%s0 + $0x114] sm:$0xf]
  %v57 = vld [vmem:[%s0 + $0x118] sm:$0xff]
  %v58 = vld [vmem:[%s0 + $0x120] sm:$0xff]
  %v59 = vld [vmem:[%s0 + $0x128] sm:$0xff]
  %v60 = vld [vmem:[%s0 + $0x130] sm:$0xf]
  %v61 = vld [vmem:[%s0 + $0x134] sm:$0xff]
  %v62 = vld [vmem:[%s0 + $0x13c] sm:$0xff]
  %v63 = vld [vmem:[%s0 + $0x144] sm:$0xff]
  %v64 = vld [vmem:[%s0 + $0x14c] sm:$0xf]
  %v65 = vld [vmem:[%s0 + $0x150] sm:$0xff]
  %v66 = vld [vmem:[%s0 + $0x158] sm:$0xff]
  %v67 = vld [vmem:[%s0 + $0x160] sm:$0xff]
  %v68 = vld [vmem:[%s0 + $0x168] sm:$0xf]
  %v69 = vld [vmem:[%s0 + $0x16c] sm:$0xff]
  %v70 = vld [vmem:[%s0 + $0x174] sm:$0xff]
  %v71 = vld [vmem:[%s0 + $0x17c] sm:$0xff]
  %v72 = vld [vmem:[%s0 + $0x184] sm:$0xf]
  %v73 = vld [vmem:[%s0 + $0x188] sm:$0xff]
  %v74 = vld [vmem:[%s0 + $0x190] sm:$0xff]
  %v75 = vld [vmem:[%s0 + $0x198] sm:$0xff]
  %v76 = vld [vmem:[%s0 + $0x1a0] sm:$0xf]
  %v77 = vld [vmem:[%s0 + $0x1a4] sm:$0xff]
  %v78 = vld [vmem:[%s0 + $0x1ac] sm:$0xff]
  %v79 = vld [vmem:[%s0 + $0x1b4] sm:$0xff]
  %v80 = vld [vmem:[%s0 + $0x1bc] sm:$0xf]
  %v81 = vld [vmem:[%s1] sm:$0xf]
  %v82 = vld [vmem:[%s1 + $0x4] sm:$0xf]
  %v83 = vld [vmem:[%s1 + $0x8] sm:$0xf]
  %v84 = vld [vmem:[%s1 + $0xc] sm:$0xf]
  %v85 = vld [vmem:[%s1 + $0x10] sm:$0xf]
  %v86 = vld [vmem:[%s1 + $0x14] sm:$0xf]
  %v87 = vld [vmem:[%s1 + $0x18] sm:$0xf]
  %v88 = vld [vmem:[%s1 + $0x1c] sm:$0xf]
  %v89 = vld [vmem:[%s1 + $0x20] sm:$0xf]
  %v90 = vld [vmem:[%s1 + $0x24] sm:$0xf]
  %v91 = vld [vmem:[%s1 + $0x28] sm:$0xf]
  %v92 = vld [vmem:[%s1 + $0x2c] sm:$0xf]
  %v93 = vld [vmem:[%s1 + $0x30] sm:$0xf]
  %v94 = vld [vmem:[%s1 + $0x34] sm:$0xf]
  %v95 = vld [vmem:[%s1 + $0x38] sm:$0xf]
  %v96 = vld [vmem:[%s1 + $0x3c] sm:$0xf]
  %v97 = vld [vmem:[%s1 + $0x40] sm:$0xf]
  %v98 = vld [vmem:[%s1 + $0x44] sm:$0xf]
  %v99 = vld [vmem:[%s1 + $0x48] sm:$0xf]
  %v100 = vld [vmem:[%s1 + $0x4c] sm:$0xf]
  %v101 = vld [vmem:[%s1 + $0x50] sm:$0xf]
  %v102 = vld [vmem:[%s1 + $0x54] sm:$0xf]
  %v103 = vld [vmem:[%s1 + $0x58] sm:$0xf]
  %v104 = vld [vmem:[%s1 + $0x5c] sm:$0xf]
  %v105 = vld [vmem:[%s1 + $0x60] sm:$0xf]
  %v106 = vld [vmem:[%s1 + $0x64] sm:$0xf]
  %v107 = vld [vmem:[%s1 + $0x68] sm:$0xf]
  %v108 = vld [vmem:[%s1 + $0x6c] sm:$0xf]
  %v109 = vld [vmem:[%s1 + $0x70] sm:$0xf]
  %v110 = vld [vmem:[%s1 + $0x74] sm:$0xf]
  %v111 = vld [vmem:[%s1 + $0x78] sm:$0xf]
  %v112 = vld [vmem:[%s1 + $0x7c] sm:$0xf]
  %v113 = vld [vmem:[%s1 + $0x80] sm:$0xf]
  %v114 = vld [vmem:[%s1 + $0x84] sm:$0xf]
  %v115 = vld [vmem:[%s1 + $0x88] sm:$0xf]
  %v116 = vld [vmem:[%s1 + $0x8c] sm:$0xf]
  %v117 = vld [vmem:[%s1 + $0x90] sm:$0xf]
  %v118 = vld [vmem:[%s1 + $0x94] sm:$0xf]
  %v119 = vld [vmem:[%s1 + $0x98] sm:$0xf]
  %v120 = vld [vmem:[%s1 + $0x9c] sm:$0xf]
  %v121 = vld [vmem:[%s1 + $0xa0] sm:$0xf]
  %v122 = vld [vmem:[%s1 + $0xa4] sm:$0xf]
  %v123 = vld [vmem:[%s1 + $0xa8] sm:$0xf]
  %v124 = vld [vmem:[%s1 + $0xac] sm:$0xf]
  %v125 = vld [vmem:[%s1 + $0xb0] sm:$0xf]
  %v126 = vld [vmem:[%s1 + $0xb4] sm:$0xf]
  %v127 = vld [vmem:[%s1 + $0xb8] sm:$0xf]
  %v128 = vld [vmem:[%s1 + $0xbc] sm:$0xf]
  %v129 = vld [vmem:[%s1 + $0xc0] sm:$0xf]
  %v130 = vld [vmem:[%s1 + $0xc4] sm:$0xf]
  %v131 = vld [vmem:[%s1 + $0xc8] sm:$0xf]
  %v132 = vld [vmem:[%s1 + $0xcc] sm:$0xf]
  %v133 = vld [vmem:[%s1 + $0xd0] sm:$0xf]
  %v134 = vld [vmem:[%s1 + $0xd4] sm:$0xf]
  %v135 = vld [vmem:[%s1 + $0xd8] sm:$0xf]
  %v136 = vld [vmem:[%s1 + $0xdc] sm:$0xf]
  %v137 = vld [vmem:[%s1 + $0xe0] sm:$0xf]
  %v138 = vld [vmem:[%s1 + $0xe4] sm:$0xf]
  %v139 = vld [vmem:[%s1 + $0xe8] sm:$0xf]
  %v140 = vld [vmem:[%s1 + $0xec] sm:$0xf]
  %v141 = vld [vmem:[%s1 + $0xf0] sm:$0xf]
  %v142 = vld [vmem:[%s1 + $0xf4] sm:$0xf]
  %v143 = vld [vmem:[%s1 + $0xf8] sm:$0xf]
  %v144 = vld [vmem:[%s1 + $0xfc] sm:$0xf]
  %v145 = vld [vmem:[%s1 + $0x100] sm:$0xf]
  %v146 = vld [vmem:[%s1 + $0x104] sm:$0xf]
  %v147 = vld [vmem:[%s1 + $0x108] sm:$0xf]
  %v148 = vld [vmem:[%s1 + $0x10c] sm:$0xf]
  %v149 = vld [vmem:[%s1 + $0x110] sm:$0xf]
  %v150 = vld [vmem:[%s1 + $0x114] sm:$0xf]
  %v151 = vld [vmem:[%s1 + $0x118] sm:$0xf]
  %v152 = vld [vmem:[%s1 + $0x11c] sm:$0xf]
  %v153 = vld [vmem:[%s1 + $0x120] sm:$0xf]
  %v154 = vld [vmem:[%s1 + $0x124] sm:$0xf]
  %v155 = vld [vmem:[%s1 + $0x128] sm:$0xf]
  %v156 = vld [vmem:[%s1 + $0x12c] sm:$0xf]
  %v157 = vld [vmem:[%s1 + $0x130] sm:$0xf]
  %v158 = vld [vmem:[%s1 + $0x134] sm:$0xf]
  %v159 = vld [vmem:[%s1 + $0x138] sm:$0xf]
  %v160 = vld [vmem:[%s1 + $0x13c] sm:$0xf]
  %v161 = vld [vmem:[%s1 + $0x140] sm:$0xf]
  %v162 = vld [vmem:[%s1 + $0x144] sm:$0xf]
  %v163 = vld [vmem:[%s1 + $0x148] sm:$0xf]
  %v164 = vld [vmem:[%s1 + $0x14c] sm:$0xf]
  %v165 = vld [vmem:[%s1 + $0x150] sm:$0xf]
  %v166 = vld [vmem:[%s1 + $0x154] sm:$0xf]
  %v167 = vld [vmem:[%s1 + $0x158] sm:$0xf]
  %v168 = vld [vmem:[%s1 + $0x15c] sm:$0xf]
  %v169 = vld [vmem:[%s1 + $0x160] sm:$0xf]
  %v170 = vld [vmem:[%s1 + $0x164] sm:$0xf]
  %v171 = vld [vmem:[%s1 + $0x168] sm:$0xf]
  %v172 = vld [vmem:[%s1 + $0x16c] sm:$0xf]
  %v173 = vld [vmem:[%s1 + $0x170] sm:$0xf]
  %v174 = vld [vmem:[%s1 + $0x174] sm:$0xf]
  %v175 = vld [vmem:[%s1 + $0x178] sm:$0xf]
  %v176 = vld [vmem:[%s1 + $0x17c] sm:$0xf]
  %v177 = vld [vmem:[%s1 + $0x180] sm:$0xf]
  %v178 = vld [vmem:[%s1 + $0x184] sm:$0xf]
  %v179 = vld [vmem:[%s1 + $0x188] sm:$0xf]
  %v180 = vld [vmem:[%s1 + $0x18c] sm:$0xf]
  %v181 = vld [vmem:[%s1 + $0x190] sm:$0xf]
  %v182 = vld [vmem:[%s1 + $0x194] sm:$0xf]
  %v183 = vld [vmem:[%s1 + $0x198] sm:$0xf]
  %v184 = vld [vmem:[%s1 + $0x19c] sm:$0xf]
  %v185 = vld [vmem:[%s1 + $0x1a0] sm:$0xf]
  %v186 = vld [vmem:[%s1 + $0x1a4] sm:$0xf]
  %v187 = vld [vmem:[%s1 + $0x1a8] sm:$0xf]
  %v188 = vld [vmem:[%s1 + $0x1ac] sm:$0xf]
  %v189 = vld [vmem:[%s1 + $0x1b0] sm:$0xf]
  %v190 = vld [vmem:[%s1 + $0x1b4] sm:$0xf]
  %v191 = vld [vmem:[%s1 + $0x1b8] sm:$0xf]
  %v192 = vld [vmem:[%s1 + $0x1bc] sm:$0xf]
  %v257 = vunpack.c.l.b16 %v17
  %v258 = vunpack.c.h.b16 %v17
  %v259 = vunpack.c.l.b16 %v18
  %v260 = vunpack.c.h.b16 %v18
  %v261 = vunpack.c.l.b16 %v19
  %v262 = vunpack.c.h.b16 %v19
  %v263 = vunpack.c.l.b16 %v20
  %v264 = vunpack.c.l.b16 %v21
  %v265 = vunpack.c.h.b16 %v21
  %v266 = vunpack.c.l.b16 %v22
  %v267 = vunpack.c.h.b16 %v22
  %v268 = vunpack.c.l.b16 %v23
  %v269 = vunpack.c.h.b16 %v23
  %v270 = vunpack.c.l.b16 %v24
  %v271 = vunpack.c.l.b16 %v25
  %v272 = vunpack.c.h.b16 %v25
  %v273 = vunpack.c.l.b16 %v26
  %v274 = vunpack.c.h.b16 %v26
  %v275 = vunpack.c.l.b16 %v27
  %v276 = vunpack.c.h.b16 %v27
  %v277 = vunpack.c.l.b16 %v28
  %v278 = vunpack.c.l.b16 %v29
  %v279 = vunpack.c.h.b16 %v29
  %v280 = vunpack.c.l.b16 %v30
  %v281 = vunpack.c.h.b16 %v30
  %v282 = vunpack.c.l.b16 %v31
  %v283 = vunpack.c.h.b16 %v31
  %v284 = vunpack.c.l.b16 %v32
  %v285 = vunpack.c.l.b16 %v33
  %v286 = vunpack.c.h.b16 %v33
  %v287 = vunpack.c.l.b16 %v34
  %v288 = vunpack.c.h.b16 %v34
  %v289 = vunpack.c.l.b16 %v35
  %v290 = vunpack.c.h.b16 %v35
  %v291 = vunpack.c.l.b16 %v36
  %v292 = vunpack.c.l.b16 %v37
  %v293 = vunpack.c.h.b16 %v37
  %v294 = vunpack.c.l.b16 %v38
  %v295 = vunpack.c.h.b16 %v38
  %v296 = vunpack.c.l.b16 %v39
  %v297 = vunpack.c.h.b16 %v39
  %v298 = vunpack.c.l.b16 %v40
  %v299 = vunpack.c.l.b16 %v41
  %v300 = vunpack.c.h.b16 %v41
  %v301 = vunpack.c.l.b16 %v42
  %v302 = vunpack.c.h.b16 %v42
  %v303 = vunpack.c.l.b16 %v43
  %v304 = vunpack.c.h.b16 %v43
  %v305 = vunpack.c.l.b16 %v44
  %v306 = vunpack.c.l.b16 %v45
  %v307 = vunpack.c.h.b16 %v45
  %v308 = vunpack.c.l.b16 %v46
  %v309 = vunpack.c.h.b16 %v46
  %v310 = vunpack.c.l.b16 %v47
  %v311 = vunpack.c.h.b16 %v47
  %v312 = vunpack.c.l.b16 %v48
  %v313 = vunpack.c.l.b16 %v49
  %v314 = vunpack.c.h.b16 %v49
  %v315 = vunpack.c.l.b16 %v50
  %v316 = vunpack.c.h.b16 %v50
  %v317 = vunpack.c.l.b16 %v51
  %v318 = vunpack.c.h.b16 %v51
  %v319 = vunpack.c.l.b16 %v52
  %v320 = vunpack.c.l.b16 %v53
  %v321 = vunpack.c.h.b16 %v53
  %v322 = vunpack.c.l.b16 %v54
  %v323 = vunpack.c.h.b16 %v54
  %v324 = vunpack.c.l.b16 %v55
  %v325 = vunpack.c.h.b16 %v55
  %v326 = vunpack.c.l.b16 %v56
  %v327 = vunpack.c.l.b16 %v57
  %v328 = vunpack.c.h.b16 %v57
  %v329 = vunpack.c.l.b16 %v58
  %v330 = vunpack.c.h.b16 %v58
  %v331 = vunpack.c.l.b16 %v59
  %v332 = vunpack.c.h.b16 %v59
  %v333 = vunpack.c.l.b16 %v60
  %v334 = vunpack.c.l.b16 %v61
  %v335 = vunpack.c.h.b16 %v61
  %v336 = vunpack.c.l.b16 %v62
  %v337 = vunpack.c.h.b16 %v62
  %v338 = vunpack.c.l.b16 %v63
  %v339 = vunpack.c.h.b16 %v63
  %v340 = vunpack.c.l.b16 %v64
  %v341 = vunpack.c.l.b16 %v65
  %v342 = vunpack.c.h.b16 %v65
  %v343 = vunpack.c.l.b16 %v66
  %v344 = vunpack.c.h.b16 %v66
  %v345 = vunpack.c.l.b16 %v67
  %v346 = vunpack.c.h.b16 %v67
  %v347 = vunpack.c.l.b16 %v68
  %v348 = vunpack.c.l.b16 %v69
  %v349 = vunpack.c.h.b16 %v69
  %v350 = vunpack.c.l.b16 %v70
  %v351 = vunpack.c.h.b16 %v70
  %v352 = vunpack.c.l.b16 %v71
  %v353 = vunpack.c.h.b16 %v71
  %v354 = vunpack.c.l.b16 %v72
  %v355 = vunpack.c.l.b16 %v73
  %v356 = vunpack.c.h.b16 %v73
  %v357 = vunpack.c.l.b16 %v74
  %v358 = vunpack.c.h.b16 %v74
  %v359 = vunpack.c.l.b16 %v75
  %v360 = vunpack.c.h.b16 %v75
  %v361 = vunpack.c.l.b16 %v76
  %v362 = vunpack.c.l.b16 %v77
  %v363 = vunpack.c.h.b16 %v77
  %v364 = vunpack.c.l.b16 %v78
  %v365 = vunpack.c.h.b16 %v78
  %v366 = vunpack.c.l.b16 %v79
  %v367 = vunpack.c.h.b16 %v79
  %v368 = vunpack.c.l.b16 %v80
  %v369 = vpack.c.b16 %v264, %v257
  %v370 = vpack.c.b16 %v265, %v258
  %v371 = vpack.c.b16 %v266, %v259
  %v372 = vpack.c.b16 %v267, %v260
  %v373 = vpack.c.b16 %v268, %v261
  %v374 = vpack.c.b16 %v269, %v262
  %v375 = vpack.c.b16 %v270, %v263
  %v376 = vpack.c.b16 %v278, %v271
  %v377 = vpack.c.b16 %v279, %v272
  %v378 = vpack.c.b16 %v280, %v273
  %v379 = vpack.c.b16 %v281, %v274
  %v380 = vpack.c.b16 %v282, %v275
  %v381 = vpack.c.b16 %v283, %v276
  %v382 = vpack.c.b16 %v284, %v277
  %v383 = vpack.c.b16 %v292, %v285
  %v384 = vpack.c.b16 %v293, %v286
  %v385 = vpack.c.b16 %v294, %v287
  %v386 = vpack.c.b16 %v295, %v288
  %v387 = vpack.c.b16 %v296, %v289
  %v388 = vpack.c.b16 %v297, %v290
  %v389 = vpack.c.b16 %v298, %v291
  %v390 = vpack.c.b16 %v306, %v299
  %v391 = vpack.c.b16 %v307, %v300
  %v392 = vpack.c.b16 %v308, %v301
  %v393 = vpack.c.b16 %v309, %v302
  %v394 = vpack.c.b16 %v310, %v303
  %v395 = vpack.c.b16 %v311, %v304
  %v396 = vpack.c.b16 %v312, %v305
  %v397 = vpack.c.b16 %v320, %v313
  %v398 = vpack.c.b16 %v321, %v314
  %v399 = vpack.c.b16 %v322, %v315
  %v400 = vpack.c.b16 %v323, %v316
  %v401 = vpack.c.b16 %v324, %v317
  %v402 = vpack.c.b16 %v325, %v318
  %v403 = vpack.c.b16 %v326, %v319
  %v404 = vpack.c.b16 %v334, %v327
  %v405 = vpack.c.b16 %v335, %v328
  %v406 = vpack.c.b16 %v336, %v329
  %v407 = vpack.c.b16 %v337, %v330
  %v408 = vpack.c.b16 %v338, %v331
  %v409 = vpack.c.b16 %v339, %v332
  %v410 = vpack.c.b16 %v340, %v333
  %v411 = vpack.c.b16 %v348, %v341
  %v412 = vpack.c.b16 %v349, %v342
  %v413 = vpack.c.b16 %v350, %v343
  %v414 = vpack.c.b16 %v351, %v344
  %v415 = vpack.c.b16 %v352, %v345
  %v416 = vpack.c.b16 %v353, %v346
  %v417 = vpack.c.b16 %v354, %v347
  %v418 = vpack.c.b16 %v362, %v355
  %v419 = vpack.c.b16 %v363, %v356
  %v420 = vpack.c.b16 %v364, %v357
  %v421 = vpack.c.b16 %v365, %v358
  %v422 = vpack.c.b16 %v366, %v359
  %v423 = vpack.c.b16 %v367, %v360
  %v424 = vpack.c.b16 %v368, %v361
  %v593 = vunpack.c.l.b16 %v81
  %v594 = vunpack.c.l.b16 %v82
  %v595 = vunpack.c.l.b16 %v83
  %v596 = vunpack.c.l.b16 %v84
  %v597 = vunpack.c.l.b16 %v85
  %v598 = vunpack.c.l.b16 %v86
  %v599 = vunpack.c.l.b16 %v87
  %v600 = vunpack.c.l.b16 %v88
  %v601 = vunpack.c.l.b16 %v89
  %v602 = vunpack.c.l.b16 %v90
  %v603 = vunpack.c.l.b16 %v91
  %v604 = vunpack.c.l.b16 %v92
  %v605 = vunpack.c.l.b16 %v93
  %v606 = vunpack.c.l.b16 %v94
  %v607 = vunpack.c.l.b16 %v95
  %v608 = vunpack.c.l.b16 %v96
  %v609 = vunpack.c.l.b16 %v97
  %v610 = vunpack.c.l.b16 %v98
  %v611 = vunpack.c.l.b16 %v99
  %v612 = vunpack.c.l.b16 %v100
  %v613 = vunpack.c.l.b16 %v101
  %v614 = vunpack.c.l.b16 %v102
  %v615 = vunpack.c.l.b16 %v103
  %v616 = vunpack.c.l.b16 %v104
  %v617 = vunpack.c.l.b16 %v105
  %v618 = vunpack.c.l.b16 %v106
  %v619 = vunpack.c.l.b16 %v107
  %v620 = vunpack.c.l.b16 %v108
  %v621 = vunpack.c.l.b16 %v109
  %v622 = vunpack.c.l.b16 %v110
  %v623 = vunpack.c.l.b16 %v111
  %v624 = vunpack.c.l.b16 %v112
  %v625 = vunpack.c.l.b16 %v113
  %v626 = vunpack.c.l.b16 %v114
  %v627 = vunpack.c.l.b16 %v115
  %v628 = vunpack.c.l.b16 %v116
  %v629 = vunpack.c.l.b16 %v117
  %v630 = vunpack.c.l.b16 %v118
  %v631 = vunpack.c.l.b16 %v119
  %v632 = vunpack.c.l.b16 %v120
  %v633 = vunpack.c.l.b16 %v121
  %v634 = vunpack.c.l.b16 %v122
  %v635 = vunpack.c.l.b16 %v123
  %v636 = vunpack.c.l.b16 %v124
  %v637 = vunpack.c.l.b16 %v125
  %v638 = vunpack.c.l.b16 %v126
  %v639 = vunpack.c.l.b16 %v127
  %v640 = vunpack.c.l.b16 %v128
  %v641 = vunpack.c.l.b16 %v129
  %v642 = vunpack.c.l.b16 %v130
  %v643 = vunpack.c.l.b16 %v131
  %v644 = vunpack.c.l.b16 %v132
  %v645 = vunpack.c.l.b16 %v133
  %v646 = vunpack.c.l.b16 %v134
  %v647 = vunpack.c.l.b16 %v135
  %v648 = vunpack.c.l.b16 %v136
  %v649 = vunpack.c.l.b16 %v137
  %v650 = vunpack.c.l.b16 %v138
  %v651 = vunpack.c.l.b16 %v139
  %v652 = vunpack.c.l.b16 %v140
  %v653 = vunpack.c.l.b16 %v141
  %v654 = vunpack.c.l.b16 %v142
  %v655 = vunpack.c.l.b16 %v143
  %v656 = vunpack.c.l.b16 %v144
  %v657 = vunpack.c.l.b16 %v145
  %v658 = vunpack.c.l.b16 %v146
  %v659 = vunpack.c.l.b16 %v147
  %v660 = vunpack.c.l.b16 %v148
  %v661 = vunpack.c.l.b16 %v149
  %v662 = vunpack.c.l.b16 %v150
  %v663 = vunpack.c.l.b16 %v151
  %v664 = vunpack.c.l.b16 %v152
  %v665 = vunpack.c.l.b16 %v153
  %v666 = vunpack.c.l.b16 %v154
  %v667 = vunpack.c.l.b16 %v155
  %v668 = vunpack.c.l.b16 %v156
  %v669 = vunpack.c.l.b16 %v157
  %v670 = vunpack.c.l.b16 %v158
  %v671 = vunpack.c.l.b16 %v159
  %v672 = vunpack.c.l.b16 %v160
  %v673 = vunpack.c.l.b16 %v161
  %v674 = vunpack.c.l.b16 %v162
  %v675 = vunpack.c.l.b16 %v163
  %v676 = vunpack.c.l.b16 %v164
  %v677 = vunpack.c.l.b16 %v165
  %v678 = vunpack.c.l.b16 %v166
  %v679 = vunpack.c.l.b16 %v167
  %v680 = vunpack.c.l.b16 %v168
  %v681 = vunpack.c.l.b16 %v169
  %v682 = vunpack.c.l.b16 %v170
  %v683 = vunpack.c.l.b16 %v171
  %v684 = vunpack.c.l.b16 %v172
  %v685 = vunpack.c.l.b16 %v173
  %v686 = vunpack.c.l.b16 %v174
  %v687 = vunpack.c.l.b16 %v175
  %v688 = vunpack.c.l.b16 %v176
  %v689 = vunpack.c.l.b16 %v177
  %v690 = vunpack.c.l.b16 %v178
  %v691 = vunpack.c.l.b16 %v179
  %v692 = vunpack.c.l.b16 %v180
  %v693 = vunpack.c.l.b16 %v181
  %v694 = vunpack.c.l.b16 %v182
  %v695 = vunpack.c.l.b16 %v183
  %v696 = vunpack.c.l.b16 %v184
  %v697 = vunpack.c.l.b16 %v185
  %v698 = vunpack.c.l.b16 %v186
  %v699 = vunpack.c.l.b16 %v187
  %v700 = vunpack.c.l.b16 %v188
  %v701 = vunpack.c.l.b16 %v189
  %v702 = vunpack.c.l.b16 %v190
  %v703 = vunpack.c.l.b16 %v191
  %v704 = vunpack.c.l.b16 %v192
  %v705 = vpack.c.b16 %v594, %v593
  %v706 = vpack.c.b16 %v596, %v595
  %v707 = vpack.c.b16 %v598, %v597
  %v708 = vpack.c.b16 %v600, %v599
  %v709 = vpack.c.b16 %v602, %v601
  %v710 = vpack.c.b16 %v604, %v603
  %v711 = vpack.c.b16 %v606, %v605
  %v712 = vpack.c.b16 %v608, %v607
  %v713 = vpack.c.b16 %v610, %v609
  %v714 = vpack.c.b16 %v612, %v611
  %v715 = vpack.c.b16 %v614, %v613
  %v716 = vpack.c.b16 %v616, %v615
  %v717 = vpack.c.b16 %v618, %v617
  %v718 = vpack.c.b16 %v620, %v619
  %v719 = vpack.c.b16 %v622, %v621
  %v720 = vpack.c.b16 %v624, %v623
  %v721 = vpack.c.b16 %v626, %v625
  %v722 = vpack.c.b16 %v628, %v627
  %v723 = vpack.c.b16 %v630, %v629
  %v724 = vpack.c.b16 %v632, %v631
  %v725 = vpack.c.b16 %v634, %v633
  %v726 = vpack.c.b16 %v636, %v635
  %v727 = vpack.c.b16 %v638, %v637
  %v728 = vpack.c.b16 %v640, %v639
  %v729 = vpack.c.b16 %v642, %v641
  %v730 = vpack.c.b16 %v644, %v643
  %v731 = vpack.c.b16 %v646, %v645
  %v732 = vpack.c.b16 %v648, %v647
  %v733 = vpack.c.b16 %v650, %v649
  %v734 = vpack.c.b16 %v652, %v651
  %v735 = vpack.c.b16 %v654, %v653
  %v736 = vpack.c.b16 %v656, %v655
  %v737 = vpack.c.b16 %v658, %v657
  %v738 = vpack.c.b16 %v660, %v659
  %v739 = vpack.c.b16 %v662, %v661
  %v740 = vpack.c.b16 %v664, %v663
  %v741 = vpack.c.b16 %v666, %v665
  %v742 = vpack.c.b16 %v668, %v667
  %v743 = vpack.c.b16 %v670, %v669
  %v744 = vpack.c.b16 %v672, %v671
  %v745 = vpack.c.b16 %v674, %v673
  %v746 = vpack.c.b16 %v676, %v675
  %v747 = vpack.c.b16 %v678, %v677
  %v748 = vpack.c.b16 %v680, %v679
  %v749 = vpack.c.b16 %v682, %v681
  %v750 = vpack.c.b16 %v684, %v683
  %v751 = vpack.c.b16 %v686, %v685
  %v752 = vpack.c.b16 %v688, %v687
  %v753 = vpack.c.b16 %v690, %v689
  %v754 = vpack.c.b16 %v692, %v691
  %v755 = vpack.c.b16 %v694, %v693
  %v756 = vpack.c.b16 %v696, %v695
  %v757 = vpack.c.b16 %v698, %v697
  %v758 = vpack.c.b16 %v700, %v699
  %v759 = vpack.c.b16 %v702, %v701
  %v760 = vpack.c.b16 %v704, %v703
  %817 = vmatpush.bf16.msra.mxu0 %v712
  %818 = vmatpush.bf16.msra.mxu0 %v711
  %819 = vmatpush.bf16.msra.mxu0 %v710
  %820 = vmatpush.bf16.msra.mxu0 %v709
  %821 = vmatpush.bf16.msra.mxu0 %v708
  %822 = vmatpush.bf16.msra.mxu0 %v707
  %823 = vmatpush.bf16.msra.mxu0 %v706
  %824 = vmatpush.bf16.msra.mxu0 %v705
  %825 = vmatmul.bf16.gmra.mxu0 %v369
  %v826 = vpop.f32.mrf.mxu0
  %v827 = vadd.f32 0.0, %v826
  %v828 = vpop.f32.mrf.mxu0
  %v829 = vadd.f32 0.0, %v828
  %830 = vmatmul.bf16.gmra.mxu0 %v376
  %v831 = vpop.f32.mrf.mxu0
  %v832 = vadd.f32 0.0, %v831
  %v833 = vpop.f32.mrf.mxu0
  %v834 = vadd.f32 0.0, %v833
  %835 = vmatmul.bf16.gmra.mxu0 %v383
  %v836 = vpop.f32.mrf.mxu0
  %v837 = vadd.f32 0.0, %v836
  %v838 = vpop.f32.mrf.mxu0
  %v839 = vadd.f32 0.0, %v838
  %840 = vmatmul.bf16.gmra.mxu0 %v390
  %v841 = vpop.f32.mrf.mxu0
  %v842 = vadd.f32 0.0, %v841
  %v843 = vpop.f32.mrf.mxu0
  %v844 = vadd.f32 0.0, %v843
  %845 = vmatmul.bf16.gmra.mxu0 %v397
  %v846 = vpop.f32.mrf.mxu0
  %v847 = vadd.f32 0.0, %v846
  %v848 = vpop.f32.mrf.mxu0
  %v849 = vadd.f32 0.0, %v848
  %850 = vmatmul.bf16.gmra.mxu0 %v404
  %v851 = vpop.f32.mrf.mxu0
  %v852 = vadd.f32 0.0, %v851
  %v853 = vpop.f32.mrf.mxu0
  %v854 = vadd.f32 0.0, %v853
  %855 = vmatmul.bf16.gmra.mxu0 %v411
  %v856 = vpop.f32.mrf.mxu0
  %v857 = vadd.f32 0.0, %v856
  %v858 = vpop.f32.mrf.mxu0
  %v859 = vadd.f32 0.0, %v858
  %860 = vmatmul.bf16.gmra.mxu0 %v418
  %v861 = vpop.f32.mrf.mxu0
  %v862 = vadd.f32 0.0, %v861
  %v863 = vpop.f32.mrf.mxu0
  %v864 = vadd.f32 0.0, %v863
  %865 = vdwg.mxu0
  %866 = vmatpush.bf16.msra.mxu0 %v720
  %867 = vmatpush.bf16.msra.mxu0 %v719
  %868 = vmatpush.bf16.msra.mxu0 %v718
  %869 = vmatpush.bf16.msra.mxu0 %v717
  %870 = vmatpush.bf16.msra.mxu0 %v716
  %871 = vmatpush.bf16.msra.mxu0 %v715
  %872 = vmatpush.bf16.msra.mxu0 %v714
  %873 = vmatpush.bf16.msra.mxu0 %v713
  %874 = vmatmul.bf16.gmra.mxu0 %v370
  %v875 = vpop.f32.mrf.mxu0
  %v876 = vadd.f32 %v827, %v875
  %v877 = vpop.f32.mrf.mxu0
  %v878 = vadd.f32 %v829, %v877
  %879 = vmatmul.bf16.gmra.mxu0 %v377
  %v880 = vpop.f32.mrf.mxu0
  %v881 = vadd.f32 %v832, %v880
  %v882 = vpop.f32.mrf.mxu0
  %v883 = vadd.f32 %v834, %v882
  %884 = vmatmul.bf16.gmra.mxu0 %v384
  %v885 = vpop.f32.mrf.mxu0
  %v886 = vadd.f32 %v837, %v885
  %v887 = vpop.f32.mrf.mxu0
  %v888 = vadd.f32 %v839, %v887
  %889 = vmatmul.bf16.gmra.mxu0 %v391
  %v890 = vpop.f32.mrf.mxu0
  %v891 = vadd.f32 %v842, %v890
  %v892 = vpop.f32.mrf.mxu0
  %v893 = vadd.f32 %v844, %v892
  %894 = vmatmul.bf16.gmra.mxu0 %v398
  %v895 = vpop.f32.mrf.mxu0
  %v896 = vadd.f32 %v847, %v895
  %v897 = vpop.f32.mrf.mxu0
  %v898 = vadd.f32 %v849, %v897
  %899 = vmatmul.bf16.gmra.mxu0 %v405
  %v900 = vpop.f32.mrf.mxu0
  %v901 = vadd.f32 %v852, %v900
  %v902 = vpop.f32.mrf.mxu0
  %v903 = vadd.f32 %v854, %v902
  %904 = vmatmul.bf16.gmra.mxu0 %v412
  %v905 = vpop.f32.mrf.mxu0
  %v906 = vadd.f32 %v857, %v905
  %v907 = vpop.f32.mrf.mxu0
  %v908 = vadd.f32 %v859, %v907
  %909 = vmatmul.bf16.gmra.mxu0 %v419
  %v910 = vpop.f32.mrf.mxu0
  %v911 = vadd.f32 %v862, %v910
  %v912 = vpop.f32.mrf.mxu0
  %v913 = vadd.f32 %v864, %v912
  %914 = vdwg.mxu0
  %915 = vmatpush.bf16.msra.mxu0 %v728
  %916 = vmatpush.bf16.msra.mxu0 %v727
  %917 = vmatpush.bf16.msra.mxu0 %v726
  %918 = vmatpush.bf16.msra.mxu0 %v725
  %919 = vmatpush.bf16.msra.mxu0 %v724
  %920 = vmatpush.bf16.msra.mxu0 %v723
  %921 = vmatpush.bf16.msra.mxu0 %v722
  %922 = vmatpush.bf16.msra.mxu0 %v721
  %923 = vmatmul.bf16.gmra.mxu0 %v371
  %v924 = vpop.f32.mrf.mxu0
  %v925 = vadd.f32 %v876, %v924
  %v926 = vpop.f32.mrf.mxu0
  %v927 = vadd.f32 %v878, %v926
  %928 = vmatmul.bf16.gmra.mxu0 %v378
  %v929 = vpop.f32.mrf.mxu0
  %v930 = vadd.f32 %v881, %v929
  %v931 = vpop.f32.mrf.mxu0
  %v932 = vadd.f32 %v883, %v931
  %933 = vmatmul.bf16.gmra.mxu0 %v385
  %v934 = vpop.f32.mrf.mxu0
  %v935 = vadd.f32 %v886, %v934
  %v936 = vpop.f32.mrf.mxu0
  %v937 = vadd.f32 %v888, %v936
  %938 = vmatmul.bf16.gmra.mxu0 %v392
  %v939 = vpop.f32.mrf.mxu0
  %v940 = vadd.f32 %v891, %v939
  %v941 = vpop.f32.mrf.mxu0
  %v942 = vadd.f32 %v893, %v941
  %943 = vmatmul.bf16.gmra.mxu0 %v399
  %v944 = vpop.f32.mrf.mxu0
  %v945 = vadd.f32 %v896, %v944
  %v946 = vpop.f32.mrf.mxu0
  %v947 = vadd.f32 %v898, %v946
  %948 = vmatmul.bf16.gmra.mxu0 %v406
  %v949 = vpop.f32.mrf.mxu0
  %v950 = vadd.f32 %v901, %v949
  %v951 = vpop.f32.mrf.mxu0
  %v952 = vadd.f32 %v903, %v951
  %953 = vmatmul.bf16.gmra.mxu0 %v413
  %v954 = vpop.f32.mrf.mxu0
  %v955 = vadd.f32 %v906, %v954
  %v956 = vpop.f32.mrf.mxu0
  %v957 = vadd.f32 %v908, %v956
  %958 = vmatmul.bf16.gmra.mxu0 %v420
  %v959 = vpop.f32.mrf.mxu0
  %v960 = vadd.f32 %v911, %v959
  %v961 = vpop.f32.mrf.mxu0
  %v962 = vadd.f32 %v913, %v961
  %963 = vdwg.mxu0
  %964 = vmatpush.bf16.msra.mxu0 %v736
  %965 = vmatpush.bf16.msra.mxu0 %v735
  %966 = vmatpush.bf16.msra.mxu0 %v734
  %967 = vmatpush.bf16.msra.mxu0 %v733
  %968 = vmatpush.bf16.msra.mxu0 %v732
  %969 = vmatpush.bf16.msra.mxu0 %v731
  %970 = vmatpush.bf16.msra.mxu0 %v730
  %971 = vmatpush.bf16.msra.mxu0 %v729
  %972 = vmatmul.bf16.gmra.mxu0 %v372
  %v973 = vpop.f32.mrf.mxu0
  %v974 = vadd.f32 %v925, %v973
  %v975 = vpop.f32.mrf.mxu0
  %v976 = vadd.f32 %v927, %v975
  %977 = vmatmul.bf16.gmra.mxu0 %v379
  %v978 = vpop.f32.mrf.mxu0
  %v979 = vadd.f32 %v930, %v978
  %v980 = vpop.f32.mrf.mxu0
  %v981 = vadd.f32 %v932, %v980
  %982 = vmatmul.bf16.gmra.mxu0 %v386
  %v983 = vpop.f32.mrf.mxu0
  %v984 = vadd.f32 %v935, %v983
  %v985 = vpop.f32.mrf.mxu0
  %v986 = vadd.f32 %v937, %v985
  %987 = vmatmul.bf16.gmra.mxu0 %v393
  %v988 = vpop.f32.mrf.mxu0
  %v989 = vadd.f32 %v940, %v988
  %v990 = vpop.f32.mrf.mxu0
  %v991 = vadd.f32 %v942, %v990
  %992 = vmatmul.bf16.gmra.mxu0 %v400
  %v993 = vpop.f32.mrf.mxu0
  %v994 = vadd.f32 %v945, %v993
  %v995 = vpop.f32.mrf.mxu0
  %v996 = vadd.f32 %v947, %v995
  %997 = vmatmul.bf16.gmra.mxu0 %v407
  %v998 = vpop.f32.mrf.mxu0
  %v999 = vadd.f32 %v950, %v998
  %v1000 = vpop.f32.mrf.mxu0
  %v1001 = vadd.f32 %v952, %v1000
  %1002 = vmatmul.bf16.gmra.mxu0 %v414
  %v1003 = vpop.f32.mrf.mxu0
  %v1004 = vadd.f32 %v955, %v1003
  %v1005 = vpop.f32.mrf.mxu0
  %v1006 = vadd.f32 %v957, %v1005
  %1007 = vmatmul.bf16.gmra.mxu0 %v421
  %v1008 = vpop.f32.mrf.mxu0
  %v1009 = vadd.f32 %v960, %v1008
  %v1010 = vpop.f32.mrf.mxu0
  %v1011 = vadd.f32 %v962, %v1010
  %1012 = vdwg.mxu0
  %1013 = vmatpush.bf16.msra.mxu0 %v744
  %1014 = vmatpush.bf16.msra.mxu0 %v743
  %1015 = vmatpush.bf16.msra.mxu0 %v742
  %1016 = vmatpush.bf16.msra.mxu0 %v741
  %1017 = vmatpush.bf16.msra.mxu0 %v740
  %1018 = vmatpush.bf16.msra.mxu0 %v739
  %1019 = vmatpush.bf16.msra.mxu0 %v738
  %1020 = vmatpush.bf16.msra.mxu0 %v737
  %1021 = vmatmul.bf16.gmra.mxu0 %v373
  %v1022 = vpop.f32.mrf.mxu0
  %v1023 = vadd.f32 %v974, %v1022
  %v1024 = vpop.f32.mrf.mxu0
  %v1025 = vadd.f32 %v976, %v1024
  %1026 = vmatmul.bf16.gmra.mxu0 %v380
  %v1027 = vpop.f32.mrf.mxu0
  %v1028 = vadd.f32 %v979, %v1027
  %v1029 = vpop.f32.mrf.mxu0
  %v1030 = vadd.f32 %v981, %v1029
  %1031 = vmatmul.bf16.gmra.mxu0 %v387
  %v1032 = vpop.f32.mrf.mxu0
  %v1033 = vadd.f32 %v984, %v1032
  %v1034 = vpop.f32.mrf.mxu0
  %v1035 = vadd.f32 %v986, %v1034
  %1036 = vmatmul.bf16.gmra.mxu0 %v394
  %v1037 = vpop.f32.mrf.mxu0
  %v1038 = vadd.f32 %v989, %v1037
  %v1039 = vpop.f32.mrf.mxu0
  %v1040 = vadd.f32 %v991, %v1039
  %1041 = vmatmul.bf16.gmra.mxu0 %v401
  %v1042 = vpop.f32.mrf.mxu0
  %v1043 = vadd.f32 %v994, %v1042
  %v1044 = vpop.f32.mrf.mxu0
  %v1045 = vadd.f32 %v996, %v1044
  %1046 = vmatmul.bf16.gmra.mxu0 %v408
  %v1047 = vpop.f32.mrf.mxu0
  %v1048 = vadd.f32 %v999, %v1047
  %v1049 = vpop.f32.mrf.mxu0
  %v1050 = vadd.f32 %v1001, %v1049
  %1051 = vmatmul.bf16.gmra.mxu0 %v415
  %v1052 = vpop.f32.mrf.mxu0
  %v1053 = vadd.f32 %v1004, %v1052
  %v1054 = vpop.f32.mrf.mxu0
  %v1055 = vadd.f32 %v1006, %v1054
  %1056 = vmatmul.bf16.gmra.mxu0 %v422
  %v1057 = vpop.f32.mrf.mxu0
  %v1058 = vadd.f32 %v1009, %v1057
  %v1059 = vpop.f32.mrf.mxu0
  %v1060 = vadd.f32 %v1011, %v1059
  %1061 = vdwg.mxu0
  %1062 = vmatpush.bf16.msra.mxu0 %v752
  %1063 = vmatpush.bf16.msra.mxu0 %v751
  %1064 = vmatpush.bf16.msra.mxu0 %v750
  %1065 = vmatpush.bf16.msra.mxu0 %v749
  %1066 = vmatpush.bf16.msra.mxu0 %v748
  %1067 = vmatpush.bf16.msra.mxu0 %v747
  %1068 = vmatpush.bf16.msra.mxu0 %v746
  %1069 = vmatpush.bf16.msra.mxu0 %v745
  %1070 = vmatmul.bf16.gmra.mxu0 %v374
  %v1071 = vpop.f32.mrf.mxu0
  %v1072 = vadd.f32 %v1023, %v1071
  %v1073 = vpop.f32.mrf.mxu0
  %v1074 = vadd.f32 %v1025, %v1073
  %1075 = vmatmul.bf16.gmra.mxu0 %v381
  %v1076 = vpop.f32.mrf.mxu0
  %v1077 = vadd.f32 %v1028, %v1076
  %v1078 = vpop.f32.mrf.mxu0
  %v1079 = vadd.f32 %v1030, %v1078
  %1080 = vmatmul.bf16.gmra.mxu0 %v388
  %v1081 = vpop.f32.mrf.mxu0
  %v1082 = vadd.f32 %v1033, %v1081
  %v1083 = vpop.f32.mrf.mxu0
  %v1084 = vadd.f32 %v1035, %v1083
  %1085 = vmatmul.bf16.gmra.mxu0 %v395
  %v1086 = vpop.f32.mrf.mxu0
  %v1087 = vadd.f32 %v1038, %v1086
  %v1088 = vpop.f32.mrf.mxu0
  %v1089 = vadd.f32 %v1040, %v1088
  %1090 = vmatmul.bf16.gmra.mxu0 %v402
  %v1091 = vpop.f32.mrf.mxu0
  %v1092 = vadd.f32 %v1043, %v1091
  %v1093 = vpop.f32.mrf.mxu0
  %v1094 = vadd.f32 %v1045, %v1093
  %1095 = vmatmul.bf16.gmra.mxu0 %v409
  %v1096 = vpop.f32.mrf.mxu0
  %v1097 = vadd.f32 %v1048, %v1096
  %v1098 = vpop.f32.mrf.mxu0
  %v1099 = vadd.f32 %v1050, %v1098
  %1100 = vmatmul.bf16.gmra.mxu0 %v416
  %v1101 = vpop.f32.mrf.mxu0
  %v1102 = vadd.f32 %v1053, %v1101
  %v1103 = vpop.f32.mrf.mxu0
  %v1104 = vadd.f32 %v1055, %v1103
  %1105 = vmatmul.bf16.gmra.mxu0 %v423
  %v1106 = vpop.f32.mrf.mxu0
  %v1107 = vadd.f32 %v1058, %v1106
  %v1108 = vpop.f32.mrf.mxu0
  %v1109 = vadd.f32 %v1060, %v1108
  %1110 = vdwg.mxu0
  %1111 = vmatpush.bf16.msra.mxu0 %v760
  %1112 = vmatpush.bf16.msra.mxu0 %v759
  %1113 = vmatpush.bf16.msra.mxu0 %v758
  %1114 = vmatpush.bf16.msra.mxu0 %v757
  %1115 = vmatpush.bf16.msra.mxu0 %v756
  %1116 = vmatpush.bf16.msra.mxu0 %v755
  %1117 = vmatpush.bf16.msra.mxu0 %v754
  %1118 = vmatpush.bf16.msra.mxu0 %v753
  %1119 = vmatmul.bf16.gmra.mxu0 %v375
  %v1120 = vpop.f32.mrf.mxu0
  %v1121 = vadd.f32 %v1072, %v1120
  %v1122 = vpop.f32.mrf.mxu0
  %v1123 = vadd.f32 %v1074, %v1122
  %1124 = vmatmul.bf16.gmra.mxu0 %v382
  %v1125 = vpop.f32.mrf.mxu0
  %v1126 = vadd.f32 %v1077, %v1125
  %v1127 = vpop.f32.mrf.mxu0
  %v1128 = vadd.f32 %v1079, %v1127
  %1129 = vmatmul.bf16.gmra.mxu0 %v389
  %v1130 = vpop.f32.mrf.mxu0
  %v1131 = vadd.f32 %v1082, %v1130
  %v1132 = vpop.f32.mrf.mxu0
  %v1133 = vadd.f32 %v1084, %v1132
  %1134 = vmatmul.bf16.gmra.mxu0 %v396
  %v1135 = vpop.f32.mrf.mxu0
  %v1136 = vadd.f32 %v1087, %v1135
  %v1137 = vpop.f32.mrf.mxu0
  %v1138 = vadd.f32 %v1089, %v1137
  %1139 = vmatmul.bf16.gmra.mxu0 %v403
  %v1140 = vpop.f32.mrf.mxu0
  %v1141 = vadd.f32 %v1092, %v1140
  %v1142 = vpop.f32.mrf.mxu0
  %v1143 = vadd.f32 %v1094, %v1142
  %1144 = vmatmul.bf16.gmra.mxu0 %v410
  %v1145 = vpop.f32.mrf.mxu0
  %v1146 = vadd.f32 %v1097, %v1145
  %v1147 = vpop.f32.mrf.mxu0
  %v1148 = vadd.f32 %v1099, %v1147
  %1149 = vmatmul.bf16.gmra.mxu0 %v417
  %v1150 = vpop.f32.mrf.mxu0
  %v1151 = vadd.f32 %v1102, %v1150
  %v1152 = vpop.f32.mrf.mxu0
  %v1153 = vadd.f32 %v1104, %v1152
  %1154 = vmatmul.bf16.gmra.mxu0 %v424
  %v1155 = vpop.f32.mrf.mxu0
  %v1156 = vadd.f32 %v1107, %v1155
  %v1157 = vpop.f32.mrf.mxu0
  %v1158 = vadd.f32 %v1109, %v1157
  %1159 = vdwg.mxu0
  %v1160 = vld [vmem:[%s2] sm:$0x1]
  %v1162 = vperm.slane %v1160, 0
  %v1164 = vmul.f32 %v1121, %v1162
  %v1165 = vmul.f32 %v1123, %v1162
  %v1166 = vmul.f32 %v1126, %v1162
  %v1167 = vmul.f32 %v1128, %v1162
  %v1168 = vmul.f32 %v1131, %v1162
  %v1169 = vmul.f32 %v1133, %v1162
  %v1170 = vmul.f32 %v1136, %v1162
  %v1171 = vmul.f32 %v1138, %v1162
  %v1172 = vmul.f32 %v1141, %v1162
  %v1173 = vmul.f32 %v1143, %v1162
  %v1174 = vmul.f32 %v1146, %v1162
  %v1175 = vmul.f32 %v1148, %v1162
  %v1176 = vmul.f32 %v1151, %v1162
  %v1177 = vmul.f32 %v1153, %v1162
  %v1178 = vmul.f32 %v1156, %v1162
  %v1179 = vmul.f32 %v1158, %v1162
  %v1180 = vld [vmem:[%s3] sm:$0x1]
  %v1182 = vperm.slane %v1180, 0
  %v1184 = vadd.f32 %v1164, %v1182
  %v1185 = vadd.f32 %v1165, %v1182
  %v1186 = vadd.f32 %v1166, %v1182
  %v1187 = vadd.f32 %v1167, %v1182
  %v1188 = vadd.f32 %v1168, %v1182
  %v1189 = vadd.f32 %v1169, %v1182
  %v1190 = vadd.f32 %v1170, %v1182
  %v1191 = vadd.f32 %v1171, %v1182
  %v1192 = vadd.f32 %v1172, %v1182
  %v1193 = vadd.f32 %v1173, %v1182
  %v1194 = vadd.f32 %v1174, %v1182
  %v1195 = vadd.f32 %v1175, %v1182
  %v1196 = vadd.f32 %v1176, %v1182
  %v1197 = vadd.f32 %v1177, %v1182
  %v1198 = vadd.f32 %v1178, %v1182
  %v1199 = vadd.f32 %v1179, %v1182
  %v1200 = vmax.f32 %v1184, 0.0
  %v1201 = vmax.f32 %v1185, 0.0
  %v1202 = vmax.f32 %v1186, 0.0
  %v1203 = vmax.f32 %v1187, 0.0
  %v1204 = vmax.f32 %v1188, 0.0
  %v1205 = vmax.f32 %v1189, 0.0
  %v1206 = vmax.f32 %v1190, 0.0
  %v1207 = vmax.f32 %v1191, 0.0
  %v1208 = vmax.f32 %v1192, 0.0
  %v1209 = vmax.f32 %v1193, 0.0
  %v1210 = vmax.f32 %v1194, 0.0
  %v1211 = vmax.f32 %v1195, 0.0
  %v1212 = vmax.f32 %v1196, 0.0
  %v1213 = vmax.f32 %v1197, 0.0
  %v1214 = vmax.f32 %v1198, 0.0
  %v1215 = vmax.f32 %v1199, 0.0
  %vm1216 = vcmask 523264
  %1217 = vst.msk [vmem:[%s4] sm:$0xff] %vm1216, %v1200
  %1218 = vst.msk [vmem:[%s4 + $0x8] sm:$0xff] %vm1216, %v1201
  %1219 = vst.msk [vmem:[%s4 + $0x10] sm:$0xff] %vm1216, %v1202
  %1220 = vst.msk [vmem:[%s4 + $0x18] sm:$0xff] %vm1216, %v1203
  %1221 = vst.msk [vmem:[%s4 + $0x20] sm:$0xff] %vm1216, %v1204
  %1222 = vst.msk [vmem:[%s4 + $0x28] sm:$0xff] %vm1216, %v1205
  %1223 = vst.msk [vmem:[%s4 + $0x30] sm:$0xff] %vm1216, %v1206
  %1224 = vst.msk [vmem:[%s4 + $0x38] sm:$0xff] %vm1216, %v1207
  %1225 = vst.msk [vmem:[%s4 + $0x40] sm:$0xff] %vm1216, %v1208
  %1226 = vst.msk [vmem:[%s4 + $0x48] sm:$0xff] %vm1216, %v1209
  %1227 = vst.msk [vmem:[%s4 + $0x50] sm:$0xff] %vm1216, %v1210
  %1228 = vst.msk [vmem:[%s4 + $0x58] sm:$0xff] %vm1216, %v1211
  %1229 = vst.msk [vmem:[%s4 + $0x60] sm:$0xff] %vm1216, %v1212
  %1230 = vst.msk [vmem:[%s4 + $0x68] sm:$0xff] %vm1216, %v1213
  %1231 = vst.msk [vmem:[%s4 + $0x70] sm:$0xff] %vm1216, %v1214
  %1232 = vst.msk [vmem:[%s4 + $0x78] sm:$0xff] %vm1216, %v1215
  // Predicated region
  $region18: #{ggo_forward.16} parent=0 // pred_check
    _
  $region19: #{ggo_forward.16} parent=0 // pred_check_branch
    %1234 = sbr.rel (0) target = $region21
  $region20: #{ggo_forward.16} parent=0 // pred_region
    _
  $region21: #{ggo_forward.16} parent=0 // pred_fallthru
    _
  // Predicated region
  $region22: #{ggo_forward.16} parent=0 // pred_check
    _
  $region23: #{ggo_forward.16} parent=0 // pred_check_branch
    %1236 = sbr.rel (0) target = $region25
  $region24: #{ggo_forward.16} parent=0 // pred_region
    _
  $region25: #{ggo_forward.16} parent=0 // pred_fallthru
    _

// kernel: ggo_forward.15
$region0: #{ggo_forward.15}
  #allocation0 [shape = 'u32[]', space=smem, size = 0x4, offset = 0x4, fixed_abs, tag = 'smem constant byte address 0x4 - core index']
  #allocation1 [shape = 'u32[72,128]{1,0:T(1,128)}', space=vmem, size = 0x9000, scoped, tag = 'internal scratch']
  %s0 = inlined_call_operand.vmem [shape: bf16[128,32], index: 0, kind: input, shape index: {}]
  %s1 = inlined_call_operand.vmem [shape: bf16[32,64], index: 1, kind: input, shape index: {}]
  %s2 = inlined_call_operand.vmem [shape: f32[1,64], index: 2, kind: input, shape index: {}]
  %s3 = inlined_call_operand.vmem [shape: f32[1,64], index: 3, kind: input, shape index: {}]
  %s4 = inlined_call_operand.vmem [shape: f32[128,64], index: 4, kind: output, shape index: {}]
  %s5 = sld [smem:[#allocation0]]
  $region26: #{ggo_forward.15} parent=0
    _
  %s7 = ssub.s32 1, %s5
  %s8 = scalar_select 0, %s7, %s5
  // Predicated region
  $region2: #{ggo_forward.15} parent=0 // pred_check
    _
  $region3: #{ggo_forward.15} parent=0 // pred_check_branch
    %10 = sbr.rel (0) target = $region5
  $region4: #{ggo_forward.15} parent=0 // pred_region
    _
  $region5: #{ggo_forward.15} parent=0 // pred_fallthru
    _
  // Predicated region
  $region6: #{ggo_forward.15} parent=0 // pred_check
    _
  $region7: #{ggo_forward.15} parent=0 // pred_check_branch
    %12 = sbr.rel (0) target = $region9
  $region8: #{ggo_forward.15} parent=0 // pred_region
    _
  $region9: #{ggo_forward.15} parent=0 // pred_fallthru
    _
  // Predicated region
  $region10: #{ggo_forward.15} parent=0 // pred_check
    _
  $region11: #{ggo_forward.15} parent=0 // pred_check_branch
    %14 = sbr.rel (0) target = $region13
  $region12: #{ggo_forward.15} parent=0 // pred_region
    _
  $region13: #{ggo_forward.15} parent=0 // pred_fallthru
    _
  // Predicated region
  $region14: #{ggo_forward.15} parent=0 // pred_check
    _
  $region15: #{ggo_forward.15} parent=0 // pred_check_branch
    %16 = sbr.rel (0) target = $region17
  $region16: #{ggo_forward.15} parent=0 // pred_region
    _
  $region17: #{ggo_forward.15} parent=0 // pred_fallthru
    _
  %v18 = vld [vmem:[%s0] sm:$0xf]
  %v19 = vld [vmem:[%s0 + $0x4] sm:$0xf]
  %v20 = vld [vmem:[%s0 + $0x8] sm:$0xf]
  %v21 = vld [vmem:[%s0 + $0xc] sm:$0xf]
  %v22 = vld [vmem:[%s0 + $0x10] sm:$0xf]
  %v23 = vld [vmem:[%s0 + $0x14] sm:$0xf]
  %v24 = vld [vmem:[%s0 + $0x18] sm:$0xf]
  %v25 = vld [vmem:[%s0 + $0x1c] sm:$0xf]
  %v26 = vld [vmem:[%s0 + $0x20] sm:$0xf]
  %v27 = vld [vmem:[%s0 + $0x24] sm:$0xf]
  %v28 = vld [vmem:[%s0 + $0x28] sm:$0xf]
  %v29 = vld [vmem:[%s0 + $0x2c] sm:$0xf]
  %v30 = vld [vmem:[%s0 + $0x30] sm:$0xf]
  %v31 = vld [vmem:[%s0 + $0x34] sm:$0xf]
  %v32 = vld [vmem:[%s0 + $0x38] sm:$0xf]
  %v33 = vld [vmem:[%s0 + $0x3c] sm:$0xf]
  %v34 = vld [vmem:[%s1] sm:$0xf]
  %v35 = vld [vmem:[%s1 + $0x4] sm:$0xf]
  %v36 = vld [vmem:[%s1 + $0x8] sm:$0xf]
  %v37 = vld [vmem:[%s1 + $0xc] sm:$0xf]
  %v54 = vunpack.c.l.b16 %v18
  %v55 = vunpack.c.l.b16 %v19
  %v56 = vunpack.c.l.b16 %v20
  %v57 = vunpack.c.l.b16 %v21
  %v58 = vunpack.c.l.b16 %v22
  %v59 = vunpack.c.l.b16 %v23
  %v60 = vunpack.c.l.b16 %v24
  %v61 = vunpack.c.l.b16 %v25
  %v62 = vunpack.c.l.b16 %v26
  %v63 = vunpack.c.l.b16 %v27
  %v64 = vunpack.c.l.b16 %v28
  %v65 = vunpack.c.l.b16 %v29
  %v66 = vunpack.c.l.b16 %v30
  %v67 = vunpack.c.l.b16 %v31
  %v68 = vunpack.c.l.b16 %v32
  %v69 = vunpack.c.l.b16 %v33
  %v70 = vpack.c.b16 %v55, %v54
  %v71 = vpack.c.b16 %v57, %v56
  %v72 = vpack.c.b16 %v59, %v58
  %v73 = vpack.c.b16 %v61, %v60
  %v74 = vpack.c.b16 %v63, %v62
  %v75 = vpack.c.b16 %v65, %v64
  %v76 = vpack.c.b16 %v67, %v66
  %v77 = vpack.c.b16 %v69, %v68
  %v82 = vunpack.c.l.b16 %v34
  %v83 = vunpack.c.l.b16 %v35
  %v84 = vunpack.c.l.b16 %v36
  %v85 = vunpack.c.l.b16 %v37
  %v86 = vpack.c.b16 %v83, %v82
  %v87 = vpack.c.b16 %v85, %v84
  %vm90 = vcmask 261120
  %v92 = vsel %vm90, %v70, 0
  %v95 = vsel %vm90, %v71, 0
  %v98 = vsel %vm90, %v72, 0
  %v101 = vsel %vm90, %v73, 0
  %v104 = vsel %vm90, %v74, 0
  %v107 = vsel %vm90, %v75, 0
  %v110 = vsel %vm90, %v76, 0
  %v113 = vsel %vm90, %v77, 0
  %115 = vmatpush.bf16.msra.mxu0 0
  %116 = vmatpush.bf16.msra.mxu0 0
  %117 = vmatpush.bf16.msra.mxu0 0
  %118 = vmatpush.bf16.msra.mxu0 0
  %119 = vmatpush.bf16.msra.mxu0 0
  %120 = vmatpush.bf16.msra.mxu0 0
  %121 = vmatpush.bf16.msra.mxu0 %v87
  %122 = vmatpush.bf16.msra.mxu0 %v86
  %123 = vmatmul.bf16.gmra.mxu0 %v92
  %v124 = vpop.f32.mrf.mxu0
  %v125 = vadd.f32 0.0, %v124
  %v126 = vpop.f32.mrf.mxu0
  %v127 = vadd.f32 0.0, %v126
  %128 = vmatmul.bf16.gmra.mxu0 %v95
  %v129 = vpop.f32.mrf.mxu0
  %v130 = vadd.f32 0.0, %v129
  %v131 = vpop.f32.mrf.mxu0
  %v132 = vadd.f32 0.0, %v131
  %133 = vmatmul.bf16.gmra.mxu0 %v98
  %v134 = vpop.f32.mrf.mxu0
  %v135 = vadd.f32 0.0, %v134
  %v136 = vpop.f32.mrf.mxu0
  %v137 = vadd.f32 0.0, %v136
  %138 = vmatmul.bf16.gmra.mxu0 %v101
  %v139 = vpop.f32.mrf.mxu0
  %v140 = vadd.f32 0.0, %v139
  %v141 = vpop.f32.mrf.mxu0
  %v142 = vadd.f32 0.0, %v141
  %143 = vmatmul.bf16.gmra.mxu0 %v104
  %v144 = vpop.f32.mrf.mxu0
  %v145 = vadd.f32 0.0, %v144
  %v146 = vpop.f32.mrf.mxu0
  %v147 = vadd.f32 0.0, %v146
  %148 = vmatmul.bf16.gmra.mxu0 %v107
  %v149 = vpop.f32.mrf.mxu0
  %v150 = vadd.f32 0.0, %v149
  %v151 = vpop.f32.mrf.mxu0
  %v152 = vadd.f32 0.0, %v151
  %153 = vmatmul.bf16.gmra.mxu0 %v110
  %v154 = vpop.f32.mrf.mxu0
  %v155 = vadd.f32 0.0, %v154
  %v156 = vpop.f32.mrf.mxu0
  %v157 = vadd.f32 0.0, %v156
  %158 = vmatmul.bf16.gmra.mxu0 %v113
  %v159 = vpop.f32.mrf.mxu0
  %v160 = vadd.f32 0.0, %v159
  %v161 = vpop.f32.mrf.mxu0
  %v162 = vadd.f32 0.0, %v161
  %163 = vdwg.mxu0
  %v164 = vld [vmem:[%s2] sm:$0x1]
  %v166 = vperm.slane %v164, 0
  %v168 = vmul.f32 %v125, %v166
  %v169 = vmul.f32 %v127, %v166
  %v170 = vmul.f32 %v130, %v166
  %v171 = vmul.f32 %v132, %v166
  %v172 = vmul.f32 %v135, %v166
  %v173 = vmul.f32 %v137, %v166
  %v174 = vmul.f32 %v140, %v166
  %v175 = vmul.f32 %v142, %v166
  %v176 = vmul.f32 %v145, %v166
  %v177 = vmul.f32 %v147, %v166
  %v178 = vmul.f32 %v150, %v166
  %v179 = vmul.f32 %v152, %v166
  %v180 = vmul.f32 %v155, %v166
  %v181 = vmul.f32 %v157, %v166
  %v182 = vmul.f32 %v160, %v166
  %v183 = vmul.f32 %v162, %v166
  %v184 = vld [vmem:[%s3] sm:$0x1]
  %v186 = vperm.slane %v184, 0
  %v188 = vadd.f32 %v168, %v186
  %v189 = vadd.f32 %v169, %v186
  %v190 = vadd.f32 %v170, %v186
  %v191 = vadd.f32 %v171, %v186
  %v192 = vadd.f32 %v172, %v186
  %v193 = vadd.f32 %v173, %v186
  %v194 = vadd.f32 %v174, %v186
  %v195 = vadd.f32 %v175, %v186
  %v196 = vadd.f32 %v176, %v186
  %v197 = vadd.f32 %v177, %v186
  %v198 = vadd.f32 %v178, %v186
  %v199 = vadd.f32 %v179, %v186
  %v200 = vadd.f32 %v180, %v186
  %v201 = vadd.f32 %v181, %v186
  %v202 = vadd.f32 %v182, %v186
  %v203 = vadd.f32 %v183, %v186
  %vm204 = vcmask 523264
  %205 = vst.msk [vmem:[%s4] sm:$0xff] %vm204, %v188
  %206 = vst.msk [vmem:[%s4 + $0x8] sm:$0xff] %vm204, %v189
  %207 = vst.msk [vmem:[%s4 + $0x10] sm:$0xff] %vm204, %v190
  %208 = vst.msk [vmem:[%s4 + $0x18] sm:$0xff] %vm204, %v191
  %209 = vst.msk [vmem:[%s4 + $0x20] sm:$0xff] %vm204, %v192
  %210 = vst.msk [vmem:[%s4 + $0x28] sm:$0xff] %vm204, %v193
  %211 = vst.msk [vmem:[%s4 + $0x30] sm:$0xff] %vm204, %v194
  %212 = vst.msk [vmem:[%s4 + $0x38] sm:$0xff] %vm204, %v195
  %213 = vst.msk [vmem:[%s4 + $0x40] sm:$0xff] %vm204, %v196
  %214 = vst.msk [vmem:[%s4 + $0x48] sm:$0xff] %vm204, %v197
  %215 = vst.msk [vmem:[%s4 + $0x50] sm:$0xff] %vm204, %v198
  %216 = vst.msk [vmem:[%s4 + $0x58] sm:$0xff] %vm204, %v199
  %217 = vst.msk [vmem:[%s4 + $0x60] sm:$0xff] %vm204, %v200
  %218 = vst.msk [vmem:[%s4 + $0x68] sm:$0xff] %vm204, %v201
  %219 = vst.msk [vmem:[%s4 + $0x70] sm:$0xff] %vm204, %v202
  %220 = vst.msk [vmem:[%s4 + $0x78] sm:$0xff] %vm204, %v203
  // Predicated region
  $region18: #{ggo_forward.15} parent=0 // pred_check
    _
  $region19: #{ggo_forward.15} parent=0 // pred_check_branch
    %222 = sbr.rel (0) target = $region21
  $region20: #{ggo_forward.15} parent=0 // pred_region
    _
  $region21: #{ggo_forward.15} parent=0 // pred_fallthru
    _
  // Predicated region
  $region22: #{ggo_forward.15} parent=0 // pred_check
    _
  $region23: #{ggo_forward.15} parent=0 // pred_check_branch
    %224 = sbr.rel (0) target = $region25
  $region24: #{ggo_forward.15} parent=0 // pred_region
    _
  $region25: #{ggo_forward.15} parent=0 // pred_fallthru
    _

// kernel: ggo_forward.17
$region0: #{ggo_forward.17}
  #allocation0 [shape = 'u32[]', space=smem, size = 0x4, offset = 0x4, fixed_abs, tag = 'smem constant byte address 0x4 - core index']
  #allocation1 [shape = 'u32[72,128]{1,0:T(1,128)}', space=vmem, size = 0x9000, scoped, tag = 'internal scratch']
  %s0 = inlined_call_operand.vmem [shape: bf16[128,1792], index: 0, kind: input, shape index: {}]
  %s1 = inlined_call_operand.vmem [shape: bf16[1792,64], index: 1, kind: input, shape index: {}]
  %s2 = inlined_call_operand.vmem [shape: f32[1,64], index: 2, kind: input, shape index: {}]
  %s3 = inlined_call_operand.vmem [shape: f32[1,64], index: 3, kind: input, shape index: {}]
  %s4 = inlined_call_operand.vmem [shape: f32[128,64], index: 4, kind: input, shape index: {}]
  %s5 = inlined_call_operand.vmem [shape: f32[128,64], index: 5, kind: output, shape index: {}]
  %s6 = sld [smem:[#allocation0]]
  $region30: #{ggo_forward.17} parent=0
    _
  %s8 = ssub.s32 1, %s6
  %s9 = scalar_select 0, %s8, %s6
  // Predicated region
  $region2: #{ggo_forward.17} parent=0 // pred_check
    _
  $region3: #{ggo_forward.17} parent=0 // pred_check_branch
    %11 = sbr.rel (0) target = $region5
  $region4: #{ggo_forward.17} parent=0 // pred_region
    _
  $region5: #{ggo_forward.17} parent=0 // pred_fallthru
    _
  // Predicated region
  $region6: #{ggo_forward.17} parent=0 // pred_check
    _
  $region7: #{ggo_forward.17} parent=0 // pred_check_branch
    %13 = sbr.rel (0) target = $region9
  $region8: #{ggo_forward.17} parent=0 // pred_region
    _
  $region9: #{ggo_forward.17} parent=0 // pred_fallthru
    _
  // Predicated region
  $region10: #{ggo_forward.17} parent=0 // pred_check
    _
  $region11: #{ggo_forward.17} parent=0 // pred_check_branch
    %15 = sbr.rel (0) target = $region13
  $region12: #{ggo_forward.17} parent=0 // pred_region
    _
  $region13: #{ggo_forward.17} parent=0 // pred_fallthru
    _
  // Predicated region
  $region14: #{ggo_forward.17} parent=0 // pred_check
    _
  $region15: #{ggo_forward.17} parent=0 // pred_check_branch
    %17 = sbr.rel (0) target = $region17
  $region16: #{ggo_forward.17} parent=0 // pred_region
    _
  $region17: #{ggo_forward.17} parent=0 // pred_fallthru
    _
  // Predicated region
  $region18: #{ggo_forward.17} parent=0 // pred_check
    _
  $region19: #{ggo_forward.17} parent=0 // pred_check_branch
    %19 = sbr.rel (0) target = $region21
  $region20: #{ggo_forward.17} parent=0 // pred_region
    _
  $region21: #{ggo_forward.17} parent=0 // pred_fallthru
    _
  %v20 = vld [vmem:[%s0] sm:$0xff]
  %v21 = vld [vmem:[%s0 + $0x8] sm:$0xff]
  %v22 = vld [vmem:[%s0 + $0x10] sm:$0xff]
  %v23 = vld [vmem:[%s0 + $0x18] sm:$0xff]
  %v24 = vld [vmem:[%s0 + $0x20] sm:$0xff]
  %v25 = vld [vmem:[%s0 + $0x28] sm:$0xff]
  %v26 = vld [vmem:[%s0 + $0x30] sm:$0xff]
  %v27 = vld [vmem:[%s0 + $0x38] sm:$0xff]
  %v28 = vld [vmem:[%s0 + $0x40] sm:$0xff]
  %v29 = vld [vmem:[%s0 + $0x48] sm:$0xff]
  %v30 = vld [vmem:[%s0 + $0x50] sm:$0xff]
  %v31 = vld [vmem:[%s0 + $0x58] sm:$0xff]
  %v32 = vld [vmem:[%s0 + $0x60] sm:$0xff]
  %v33 = vld [vmem:[%s0 + $0x68] sm:$0xff]
  %v34 = vld [vmem:[%s0 + $0x70] sm:$0xff]
  %v35 = vld [vmem:[%s0 + $0x78] sm:$0xff]
  %v36 = vld [vmem:[%s0 + $0x80] sm:$0xff]
  %v37 = vld [vmem:[%s0 + $0x88] sm:$0xff]
  %v38 = vld [vmem:[%s0 + $0x90] sm:$0xff]
  %v39 = vld [vmem:[%s0 + $0x98] sm:$0xff]
  %v40 = vld [vmem:[%s0 + $0xa0] sm:$0xff]
  %v41 = vld [vmem:[%s0 + $0xa8] sm:$0xff]
  %v42 = vld [vmem:[%s0 + $0xb0] sm:$0xff]
  %v43 = vld [vmem:[%s0 + $0xb8] sm:$0xff]
  %v44 = vld [vmem:[%s0 + $0xc0] sm:$0xff]
  %v45 = vld [vmem:[%s0 + $0xc8] sm:$0xff]
  %v46 = vld [vmem:[%s0 + $0xd0] sm:$0xff]
  %v47 = vld [vmem:[%s0 + $0xd8] sm:$0xff]
  %v48 = vld [vmem:[%s0 + $0xe0] sm:$0xff]
  %v49 = vld [vmem:[%s0 + $0xe8] sm:$0xff]
  %v50 = vld [vmem:[%s0 + $0xf0] sm:$0xff]
  %v51 = vld [vmem:[%s0 + $0xf8] sm:$0xff]
  %v52 = vld [vmem:[%s0 + $0x100] sm:$0xff]
  %v53 = vld [vmem:[%s0 + $0x108] sm:$0xff]
  %v54 = vld [vmem:[%s0 + $0x110] sm:$0xff]
  %v55 = vld [vmem:[%s0 + $0x118] sm:$0xff]
  %v56 = vld [vmem:[%s0 + $0x120] sm:$0xff]
  %v57 = vld [vmem:[%s0 + $0x128] sm:$0xff]
  %v58 = vld [vmem:[%s0 + $0x130] sm:$0xff]
  %v59 = vld [vmem:[%s0 + $0x138] sm:$0xff]
  %v60 = vld [vmem:[%s0 + $0x140] sm:$0xff]
  %v61 = vld [vmem:[%s0 + $0x148] sm:$0xff]
  %v62 = vld [vmem:[%s0 + $0x150] sm:$0xff]
  %v63 = vld [vmem:[%s0 + $0x158] sm:$0xff]
  %v64 = vld [vmem:[%s0 + $0x160] sm:$0xff]
  %v65 = vld [vmem:[%s0 + $0x168] sm:$0xff]
  %v66 = vld [vmem:[%s0 + $0x170] sm:$0xff]
  %v67 = vld [vmem:[%s0 + $0x178] sm:$0xff]
  %v68 = vld [vmem:[%s0 + $0x180] sm:$0xff]
  %v69 = vld [vmem:[%s0 + $0x188] sm:$0xff]
  %v70 = vld [vmem:[%s0 + $0x190] sm:$0xff]
  %v71 = vld [vmem:[%s0 + $0x198] sm:$0xff]
  %v72 = vld [vmem:[%s0 + $0x1a0] sm:$0xff]
  %v73 = vld [vmem:[%s0 + $0x1a8] sm:$0xff]
  %v74 = vld [vmem:[%s0 + $0x1b0] sm:$0xff]
  %v75 = vld [vmem:[%s0 + $0x1b8] sm:$0xff]
  %v76 = vld [vmem:[%s0 + $0x1c0] sm:$0xff]
  %v77 = vld [vmem:[%s0 + $0x1c8] sm:$0xff]
  %v78 = vld [vmem:[%s0 + $0x1d0] sm:$0xff]
  %v79 = vld [vmem:[%s0 + $0x1d8] sm:$0xff]
  %v80 = vld [vmem:[%s0 + $0x1e0] sm:$0xff]
  %v81 = vld [vmem:[%s0 + $0x1e8] sm:$0xff]
  %v82 = vld [vmem:[%s0 + $0x1f0] sm:$0xff]
  %v83 = vld [vmem:[%s0 + $0x1f8] sm:$0xff]
  %v84 = vld [vmem:[%s0 + $0x200] sm:$0xff]
  %v85 = vld [vmem:[%s0 + $0x208] sm:$0xff]
  %v86 = vld [vmem:[%s0 + $0x210] sm:$0xff]
  %v87 = vld [vmem:[%s0 + $0x218] sm:$0xff]
  %v88 = vld [vmem:[%s0 + $0x220] sm:$0xff]
  %v89 = vld [vmem:[%s0 + $0x228] sm:$0xff]
  %v90 = vld [vmem:[%s0 + $0x230] sm:$0xff]
  %v91 = vld [vmem:[%s0 + $0x238] sm:$0xff]
  %v92 = vld [vmem:[%s0 + $0x240] sm:$0xff]
  %v93 = vld [vmem:[%s0 + $0x248] sm:$0xff]
  %v94 = vld [vmem:[%s0 + $0x250] sm:$0xff]
  %v95 = vld [vmem:[%s0 + $0x258] sm:$0xff]
  %v96 = vld [vmem:[%s0 + $0x260] sm:$0xff]
  %v97 = vld [vmem:[%s0 + $0x268] sm:$0xff]
  %v98 = vld [vmem:[%s0 + $0x270] sm:$0xff]
  %v99 = vld [vmem:[%s0 + $0x278] sm:$0xff]
  %v100 = vld [vmem:[%s0 + $0x280] sm:$0xff]
  %v101 = vld [vmem:[%s0 + $0x288] sm:$0xff]
  %v102 = vld [vmem:[%s0 + $0x290] sm:$0xff]
  %v103 = vld [vmem:[%s0 + $0x298] sm:$0xff]
  %v104 = vld [vmem:[%s0 + $0x2a0] sm:$0xff]
  %v105 = vld [vmem:[%s0 + $0x2a8] sm:$0xff]
  %v106 = vld [vmem:[%s0 + $0x2b0] sm:$0xff]
  %v107 = vld [vmem:[%s0 + $0x2b8] sm:$0xff]
  %v108 = vld [vmem:[%s0 + $0x2c0] sm:$0xff]
  %v109 = vld [vmem:[%s0 + $0x2c8] sm:$0xff]
  %v110 = vld [vmem:[%s0 + $0x2d0] sm:$0xff]
  %v111 = vld [vmem:[%s0 + $0x2d8] sm:$0xff]
  %v112 = vld [vmem:[%s0 + $0x2e0] sm:$0xff]
  %v113 = vld [vmem:[%s0 + $0x2e8] sm:$0xff]
  %v114 = vld [vmem:[%s0 + $0x2f0] sm:$0xff]
  %v115 = vld [vmem:[%s0 + $0x2f8] sm:$0xff]
  %v116 = vld [vmem:[%s0 + $0x300] sm:$0xff]
  %v117 = vld [vmem:[%s0 + $0x308] sm:$0xff]
  %v118 = vld [vmem:[%s0 + $0x310] sm:$0xff]
  %v119 = vld [vmem:[%s0 + $0x318] sm:$0xff]
  %v120 = vld [vmem:[%s0 + $0x320] sm:$0xff]
  %v121 = vld [vmem:[%s0 + $0x328] sm:$0xff]
  %v122 = vld [vmem:[%s0 + $0x330] sm:$0xff]
  %v123 = vld [vmem:[%s0 + $0x338] sm:$0xff]
  %v124 = vld [vmem:[%s0 + $0x340] sm:$0xff]
  %v125 = vld [vmem:[%s0 + $0x348] sm:$0xff]
  %v126 = vld [vmem:[%s0 + $0x350] sm:$0xff]
  %v127 = vld [vmem:[%s0 + $0x358] sm:$0xff]
  %v128 = vld [vmem:[%s0 + $0x360] sm:$0xff]
  %v129 = vld [vmem:[%s0 + $0x368] sm:$0xff]
  %v130 = vld [vmem:[%s0 + $0x370] sm:$0xff]
  %v131 = vld [vmem:[%s0 + $0x378] sm:$0xff]
  %v132 = vld [vmem:[%s1] sm:$0xf]
  %v133 = vld [vmem:[%s1 + $0x4] sm:$0xf]
  %v134 = vld [vmem:[%s1 + $0x8] sm:$0xf]
  %v135 = vld [vmem:[%s1 + $0xc] sm:$0xf]
  %v136 = vld [vmem:[%s1 + $0x10] sm:$0xf]
  %v137 = vld [vmem:[%s1 + $0x14] sm:$0xf]
  %v138 = vld [vmem:[%s1 + $0x18] sm:$0xf]
  %v139 = vld [vmem:[%s1 + $0x1c] sm:$0xf]
  %v140 = vld [vmem:[%s1 + $0x20] sm:$0xf]
  %v141 = vld [vmem:[%s1 + $0x24] sm:$0xf]
  %v142 = vld [vmem:[%s1 + $0x28] sm:$0xf]
  %v143 = vld [vmem:[%s1 + $0x2c] sm:$0xf]
  %v144 = vld [vmem:[%s1 + $0x30] sm:$0xf]
  %v145 = vld [vmem:[%s1 + $0x34] sm:$0xf]
  %v146 = vld [vmem:[%s1 + $0x38] sm:$0xf]
  %v147 = vld [vmem:[%s1 + $0x3c] sm:$0xf]
  %v148 = vld [vmem:[%s1 + $0x40] sm:$0xf]
  %v149 = vld [vmem:[%s1 + $0x44] sm:$0xf]
  %v150 = vld [vmem:[%s1 + $0x48] sm:$0xf]
  %v151 = vld [vmem:[%s1 + $0x4c] sm:$0xf]
  %v152 = vld [vmem:[%s1 + $0x50] sm:$0xf]
  %v153 = vld [vmem:[%s1 + $0x54] sm:$0xf]
  %v154 = vld [vmem:[%s1 + $0x58] sm:$0xf]
  %v155 = vld [vmem:[%s1 + $0x5c] sm:$0xf]
  %v156 = vld [vmem:[%s1 + $0x60] sm:$0xf]
  %v157 = vld [vmem:[%s1 + $0x64] sm:$0xf]
  %v158 = vld [vmem:[%s1 + $0x68] sm:$0xf]
  %v159 = vld [vmem:[%s1 + $0x6c] sm:$0xf]
  %v160 = vld [vmem:[%s1 + $0x70] sm:$0xf]
  %v161 = vld [vmem:[%s1 + $0x74] sm:$0xf]
  %v162 = vld [vmem:[%s1 + $0x78] sm:$0xf]
  %v163 = vld [vmem:[%s1 + $0x7c] sm:$0xf]
  %v164 = vld [vmem:[%s1 + $0x80] sm:$0xf]
  %v165 = vld [vmem:[%s1 + $0x84] sm:$0xf]
  %v166 = vld [vmem:[%s1 + $0x88] sm:$0xf]
  %v167 = vld [vmem:[%s1 + $0x8c] sm:$0xf]
  %v168 = vld [vmem:[%s1 + $0x90] sm:$0xf]
  %v169 = vld [vmem:[%s1 + $0x94] sm:$0xf]
  %v170 = vld [vmem:[%s1 + $0x98] sm:$0xf]
  %v171 = vld [vmem:[%s1 + $0x9c] sm:$0xf]
  %v172 = vld [vmem:[%s1 + $0xa0] sm:$0xf]
  %v173 = vld [vmem:[%s1 + $0xa4] sm:$0xf]
  %v174 = vld [vmem:[%s1 + $0xa8] sm:$0xf]
  %v175 = vld [vmem:[%s1 + $0xac] sm:$0xf]
  %v176 = vld [vmem:[%s1 + $0xb0] sm:$0xf]
  %v177 = vld [vmem:[%s1 + $0xb4] sm:$0xf]
  %v178 = vld [vmem:[%s1 + $0xb8] sm:$0xf]
  %v179 = vld [vmem:[%s1 + $0xbc] sm:$0xf]
  %v180 = vld [vmem:[%s1 + $0xc0] sm:$0xf]
  %v181 = vld [vmem:[%s1 + $0xc4] sm:$0xf]
  %v182 = vld [vmem:[%s1 + $0xc8] sm:$0xf]
  %v183 = vld [vmem:[%s1 + $0xcc] sm:$0xf]
  %v184 = vld [vmem:[%s1 + $0xd0] sm:$0xf]
  %v185 = vld [vmem:[%s1 + $0xd4] sm:$0xf]
  %v186 = vld [vmem:[%s1 + $0xd8] sm:$0xf]
  %v187 = vld [vmem:[%s1 + $0xdc] sm:$0xf]
  %v188 = vld [vmem:[%s1 + $0xe0] sm:$0xf]
  %v189 = vld [vmem:[%s1 + $0xe4] sm:$0xf]
  %v190 = vld [vmem:[%s1 + $0xe8] sm:$0xf]
  %v191 = vld [vmem:[%s1 + $0xec] sm:$0xf]
  %v192 = vld [vmem:[%s1 + $0xf0] sm:$0xf]
  %v193 = vld [vmem:[%s1 + $0xf4] sm:$0xf]
  %v194 = vld [vmem:[%s1 + $0xf8] sm:$0xf]
  %v195 = vld [vmem:[%s1 + $0xfc] sm:$0xf]
  %v196 = vld [vmem:[%s1 + $0x100] sm:$0xf]
  %v197 = vld [vmem:[%s1 + $0x104] sm:$0xf]
  %v198 = vld [vmem:[%s1 + $0x108] sm:$0xf]
  %v199 = vld [vmem:[%s1 + $0x10c] sm:$0xf]
  %v200 = vld [vmem:[%s1 + $0x110] sm:$0xf]
  %v201 = vld [vmem:[%s1 + $0x114] sm:$0xf]
  %v202 = vld [vmem:[%s1 + $0x118] sm:$0xf]
  %v203 = vld [vmem:[%s1 + $0x11c] sm:$0xf]
  %v204 = vld [vmem:[%s1 + $0x120] sm:$0xf]
  %v205 = vld [vmem:[%s1 + $0x124] sm:$0xf]
  %v206 = vld [vmem:[%s1 + $0x128] sm:$0xf]
  %v207 = vld [vmem:[%s1 + $0x12c] sm:$0xf]
  %v208 = vld [vmem:[%s1 + $0x130] sm:$0xf]
  %v209 = vld [vmem:[%s1 + $0x134] sm:$0xf]
  %v210 = vld [vmem:[%s1 + $0x138] sm:$0xf]
  %v211 = vld [vmem:[%s1 + $0x13c] sm:$0xf]
  %v212 = vld [vmem:[%s1 + $0x140] sm:$0xf]
  %v213 = vld [vmem:[%s1 + $0x144] sm:$0xf]
  %v214 = vld [vmem:[%s1 + $0x148] sm:$0xf]
  %v215 = vld [vmem:[%s1 + $0x14c] sm:$0xf]
  %v216 = vld [vmem:[%s1 + $0x150] sm:$0xf]
  %v217 = vld [vmem:[%s1 + $0x154] sm:$0xf]
  %v218 = vld [vmem:[%s1 + $0x158] sm:$0xf]
  %v219 = vld [vmem:[%s1 + $0x15c] sm:$0xf]
  %v220 = vld [vmem:[%s1 + $0x160] sm:$0xf]
  %v221 = vld [vmem:[%s1 + $0x164] sm:$0xf]
  %v222 = vld [vmem:[%s1 + $0x168] sm:$0xf]
  %v223 = vld [vmem:[%s1 + $0x16c] sm:$0xf]
  %v224 = vld [vmem:[%s1 + $0x170] sm:$0xf]
  %v225 = vld [vmem:[%s1 + $0x174] sm:$0xf]
  %v226 = vld [vmem:[%s1 + $0x178] sm:$0xf]
  %v227 = vld [vmem:[%s1 + $0x17c] sm:$0xf]
  %v228 = vld [vmem:[%s1 + $0x180] sm:$0xf]
  %v229 = vld [vmem:[%s1 + $0x184] sm:$0xf]
  %v230 = vld [vmem:[%s1 + $0x188] sm:$0xf]
  %v231 = vld [vmem:[%s1 + $0x18c] sm:$0xf]
  %v232 = vld [vmem:[%s1 + $0x190] sm:$0xf]
  %v233 = vld [vmem:[%s1 + $0x194] sm:$0xf]
  %v234 = vld [vmem:[%s1 + $0x198] sm:$0xf]
  %v235 = vld [vmem:[%s1 + $0x19c] sm:$0xf]
  %v236 = vld [vmem:[%s1 + $0x1a0] sm:$0xf]
  %v237 = vld [vmem:[%s1 + $0x1a4] sm:$0xf]
  %v238 = vld [vmem:[%s1 + $0x1a8] sm:$0xf]
  %v239 = vld [vmem:[%s1 + $0x1ac] sm:$0xf]
  %v240 = vld [vmem:[%s1 + $0x1b0] sm:$0xf]
  %v241 = vld [vmem:[%s1 + $0x1b4] sm:$0xf]
  %v242 = vld [vmem:[%s1 + $0x1b8] sm:$0xf]
  %v243 = vld [vmem:[%s1 + $0x1bc] sm:$0xf]
  %v244 = vld [vmem:[%s1 + $0x1c0] sm:$0xf]
  %v245 = vld [vmem:[%s1 + $0x1c4] sm:$0xf]
  %v246 = vld [vmem:[%s1 + $0x1c8] sm:$0xf]
  %v247 = vld [vmem:[%s1 + $0x1cc] sm:$0xf]
  %v248 = vld [vmem:[%s1 + $0x1d0] sm:$0xf]
  %v249 = vld [vmem:[%s1 + $0x1d4] sm:$0xf]
  %v250 = vld [vmem:[%s1 + $0x1d8] sm:$0xf]
  %v251 = vld [vmem:[%s1 + $0x1dc] sm:$0xf]
  %v252 = vld [vmem:[%s1 + $0x1e0] sm:$0xf]
  %v253 = vld [vmem:[%s1 + $0x1e4] sm:$0xf]
  %v254 = vld [vmem:[%s1 + $0x1e8] sm:$0xf]
  %v255 = vld [vmem:[%s1 + $0x1ec] sm:$0xf]
  %v256 = vld [vmem:[%s1 + $0x1f0] sm:$0xf]
  %v257 = vld [vmem:[%s1 + $0x1f4] sm:$0xf]
  %v258 = vld [vmem:[%s1 + $0x1f8] sm:$0xf]
  %v259 = vld [vmem:[%s1 + $0x1fc] sm:$0xf]
  %v260 = vld [vmem:[%s1 + $0x200] sm:$0xf]
  %v261 = vld [vmem:[%s1 + $0x204] sm:$0xf]
  %v262 = vld [vmem:[%s1 + $0x208] sm:$0xf]
  %v263 = vld [vmem:[%s1 + $0x20c] sm:$0xf]
  %v264 = vld [vmem:[%s1 + $0x210] sm:$0xf]
  %v265 = vld [vmem:[%s1 + $0x214] sm:$0xf]
  %v266 = vld [vmem:[%s1 + $0x218] sm:$0xf]
  %v267 = vld [vmem:[%s1 + $0x21c] sm:$0xf]
  %v268 = vld [vmem:[%s1 + $0x220] sm:$0xf]
  %v269 = vld [vmem:[%s1 + $0x224] sm:$0xf]
  %v270 = vld [vmem:[%s1 + $0x228] sm:$0xf]
  %v271 = vld [vmem:[%s1 + $0x22c] sm:$0xf]
  %v272 = vld [vmem:[%s1 + $0x230] sm:$0xf]
  %v273 = vld [vmem:[%s1 + $0x234] sm:$0xf]
  %v274 = vld [vmem:[%s1 + $0x238] sm:$0xf]
  %v275 = vld [vmem:[%s1 + $0x23c] sm:$0xf]
  %v276 = vld [vmem:[%s1 + $0x240] sm:$0xf]
  %v277 = vld [vmem:[%s1 + $0x244] sm:$0xf]
  %v278 = vld [vmem:[%s1 + $0x248] sm:$0xf]
  %v279 = vld [vmem:[%s1 + $0x24c] sm:$0xf]
  %v280 = vld [vmem:[%s1 + $0x250] sm:$0xf]
  %v281 = vld [vmem:[%s1 + $0x254] sm:$0xf]
  %v282 = vld [vmem:[%s1 + $0x258] sm:$0xf]
  %v283 = vld [vmem:[%s1 + $0x25c] sm:$0xf]
  %v284 = vld [vmem:[%s1 + $0x260] sm:$0xf]
  %v285 = vld [vmem:[%s1 + $0x264] sm:$0xf]
  %v286 = vld [vmem:[%s1 + $0x268] sm:$0xf]
  %v287 = vld [vmem:[%s1 + $0x26c] sm:$0xf]
  %v288 = vld [vmem:[%s1 + $0x270] sm:$0xf]
  %v289 = vld [vmem:[%s1 + $0x274] sm:$0xf]
  %v290 = vld [vmem:[%s1 + $0x278] sm:$0xf]
  %v291 = vld [vmem:[%s1 + $0x27c] sm:$0xf]
  %v292 = vld [vmem:[%s1 + $0x280] sm:$0xf]
  %v293 = vld [vmem:[%s1 + $0x284] sm:$0xf]
  %v294 = vld [vmem:[%s1 + $0x288] sm:$0xf]
  %v295 = vld [vmem:[%s1 + $0x28c] sm:$0xf]
  %v296 = vld [vmem:[%s1 + $0x290] sm:$0xf]
  %v297 = vld [vmem:[%s1 + $0x294] sm:$0xf]
  %v298 = vld [vmem:[%s1 + $0x298] sm:$0xf]
  %v299 = vld [vmem:[%s1 + $0x29c] sm:$0xf]
  %v300 = vld [vmem:[%s1 + $0x2a0] sm:$0xf]
  %v301 = vld [vmem:[%s1 + $0x2a4] sm:$0xf]
  %v302 = vld [vmem:[%s1 + $0x2a8] sm:$0xf]
  %v303 = vld [vmem:[%s1 + $0x2ac] sm:$0xf]
  %v304 = vld [vmem:[%s1 + $0x2b0] sm:$0xf]
  %v305 = vld [vmem:[%s1 + $0x2b4] sm:$0xf]
  %v306 = vld [vmem:[%s1 + $0x2b8] sm:$0xf]
  %v307 = vld [vmem:[%s1 + $0x2bc] sm:$0xf]
  %v308 = vld [vmem:[%s1 + $0x2c0] sm:$0xf]
  %v309 = vld [vmem:[%s1 + $0x2c4] sm:$0xf]
  %v310 = vld [vmem:[%s1 + $0x2c8] sm:$0xf]
  %v311 = vld [vmem:[%s1 + $0x2cc] sm:$0xf]
  %v312 = vld [vmem:[%s1 + $0x2d0] sm:$0xf]
  %v313 = vld [vmem:[%s1 + $0x2d4] sm:$0xf]
  %v314 = vld [vmem:[%s1 + $0x2d8] sm:$0xf]
  %v315 = vld [vmem:[%s1 + $0x2dc] sm:$0xf]
  %v316 = vld [vmem:[%s1 + $0x2e0] sm:$0xf]
  %v317 = vld [vmem:[%s1 + $0x2e4] sm:$0xf]
  %v318 = vld [vmem:[%s1 + $0x2e8] sm:$0xf]
  %v319 = vld [vmem:[%s1 + $0x2ec] sm:$0xf]
  %v320 = vld [vmem:[%s1 + $0x2f0] sm:$0xf]
  %v321 = vld [vmem:[%s1 + $0x2f4] sm:$0xf]
  %v322 = vld [vmem:[%s1 + $0x2f8] sm:$0xf]
  %v323 = vld [vmem:[%s1 + $0x2fc] sm:$0xf]
  %v324 = vld [vmem:[%s1 + $0x300] sm:$0xf]
  %v325 = vld [vmem:[%s1 + $0x304] sm:$0xf]
  %v326 = vld [vmem:[%s1 + $0x308] sm:$0xf]
  %v327 = vld [vmem:[%s1 + $0x30c] sm:$0xf]
  %v328 = vld [vmem:[%s1 + $0x310] sm:$0xf]
  %v329 = vld [vmem:[%s1 + $0x314] sm:$0xf]
  %v330 = vld [vmem:[%s1 + $0x318] sm:$0xf]
  %v331 = vld [vmem:[%s1 + $0x31c] sm:$0xf]
  %v332 = vld [vmem:[%s1 + $0x320] sm:$0xf]
  %v333 = vld [vmem:[%s1 + $0x324] sm:$0xf]
  %v334 = vld [vmem:[%s1 + $0x328] sm:$0xf]
  %v335 = vld [vmem:[%s1 + $0x32c] sm:$0xf]
  %v336 = vld [vmem:[%s1 + $0x330] sm:$0xf]
  %v337 = vld [vmem:[%s1 + $0x334] sm:$0xf]
  %v338 = vld [vmem:[%s1 + $0x338] sm:$0xf]
  %v339 = vld [vmem:[%s1 + $0x33c] sm:$0xf]
  %v340 = vld [vmem:[%s1 + $0x340] sm:$0xf]
  %v341 = vld [vmem:[%s1 + $0x344] sm:$0xf]
  %v342 = vld [vmem:[%s1 + $0x348] sm:$0xf]
  %v343 = vld [vmem:[%s1 + $0x34c] sm:$0xf]
  %v344 = vld [vmem:[%s1 + $0x350] sm:$0xf]
  %v345 = vld [vmem:[%s1 + $0x354] sm:$0xf]
  %v346 = vld [vmem:[%s1 + $0x358] sm:$0xf]
  %v347 = vld [vmem:[%s1 + $0x35c] sm:$0xf]
  %v348 = vld [vmem:[%s1 + $0x360] sm:$0xf]
  %v349 = vld [vmem:[%s1 + $0x364] sm:$0xf]
  %v350 = vld [vmem:[%s1 + $0x368] sm:$0xf]
  %v351 = vld [vmem:[%s1 + $0x36c] sm:$0xf]
  %v352 = vld [vmem:[%s1 + $0x370] sm:$0xf]
  %v353 = vld [vmem:[%s1 + $0x374] sm:$0xf]
  %v354 = vld [vmem:[%s1 + $0x378] sm:$0xf]
  %v355 = vld [vmem:[%s1 + $0x37c] sm:$0xf]
  %v468 = vunpack.c.l.b16 %v20
  %v469 = vunpack.c.h.b16 %v20
  %v470 = vunpack.c.l.b16 %v21
  %v471 = vunpack.c.h.b16 %v21
  %v472 = vunpack.c.l.b16 %v22
  %v473 = vunpack.c.h.b16 %v22
  %v474 = vunpack.c.l.b16 %v23
  %v475 = vunpack.c.h.b16 %v23
  %v476 = vunpack.c.l.b16 %v24
  %v477 = vunpack.c.h.b16 %v24
  %v478 = vunpack.c.l.b16 %v25
  %v479 = vunpack.c.h.b16 %v25
  %v480 = vunpack.c.l.b16 %v26
  %v481 = vunpack.c.h.b16 %v26
  %v482 = vunpack.c.l.b16 %v27
  %v483 = vunpack.c.h.b16 %v27
  %v484 = vunpack.c.l.b16 %v28
  %v485 = vunpack.c.h.b16 %v28
  %v486 = vunpack.c.l.b16 %v29
  %v487 = vunpack.c.h.b16 %v29
  %v488 = vunpack.c.l.b16 %v30
  %v489 = vunpack.c.h.b16 %v30
  %v490 = vunpack.c.l.b16 %v31
  %v491 = vunpack.c.h.b16 %v31
  %v492 = vunpack.c.l.b16 %v32
  %v493 = vunpack.c.h.b16 %v32
  %v494 = vunpack.c.l.b16 %v33
  %v495 = vunpack.c.h.b16 %v33
  %v496 = vunpack.c.l.b16 %v34
  %v497 = vunpack.c.h.b16 %v34
  %v498 = vunpack.c.l.b16 %v35
  %v499 = vunpack.c.h.b16 %v35
  %v500 = vunpack.c.l.b16 %v36
  %v501 = vunpack.c.h.b16 %v36
  %v502 = vunpack.c.l.b16 %v37
  %v503 = vunpack.c.h.b16 %v37
  %v504 = vunpack.c.l.b16 %v38
  %v505 = vunpack.c.h.b16 %v38
  %v506 = vunpack.c.l.b16 %v39
  %v507 = vunpack.c.h.b16 %v39
  %v508 = vunpack.c.l.b16 %v40
  %v509 = vunpack.c.h.b16 %v40
  %v510 = vunpack.c.l.b16 %v41
  %v511 = vunpack.c.h.b16 %v41
  %v512 = vunpack.c.l.b16 %v42
  %v513 = vunpack.c.h.b16 %v42
  %v514 = vunpack.c.l.b16 %v43
  %v515 = vunpack.c.h.b16 %v43
  %v516 = vunpack.c.l.b16 %v44
  %v517 = vunpack.c.h.b16 %v44
  %v518 = vunpack.c.l.b16 %v45
  %v519 = vunpack.c.h.b16 %v45
  %v520 = vunpack.c.l.b16 %v46
  %v521 = vunpack.c.h.b16 %v46
  %v522 = vunpack.c.l.b16 %v47
  %v523 = vunpack.c.h.b16 %v47
  %v524 = vunpack.c.l.b16 %v48
  %v525 = vunpack.c.h.b16 %v48
  %v526 = vunpack.c.l.b16 %v49
  %v527 = vunpack.c.h.b16 %v49
  %v528 = vunpack.c.l.b16 %v50
  %v529 = vunpack.c.h.b16 %v50
  %v530 = vunpack.c.l.b16 %v51
  %v531 = vunpack.c.h.b16 %v51
  %v532 = vunpack.c.l.b16 %v52
  %v533 = vunpack.c.h.b16 %v52
  %v534 = vunpack.c.l.b16 %v53
  %v535 = vunpack.c.h.b16 %v53
  %v536 = vunpack.c.l.b16 %v54
  %v537 = vunpack.c.h.b16 %v54
  %v538 = vunpack.c.l.b16 %v55
  %v539 = vunpack.c.h.b16 %v55
  %v540 = vunpack.c.l.b16 %v56
  %v541 = vunpack.c.h.b16 %v56
  %v542 = vunpack.c.l.b16 %v57
  %v543 = vunpack.c.h.b16 %v57
  %v544 = vunpack.c.l.b16 %v58
  %v545 = vunpack.c.h.b16 %v58
  %v546 = vunpack.c.l.b16 %v59
  %v547 = vunpack.c.h.b16 %v59
  %v548 = vunpack.c.l.b16 %v60
  %v549 = vunpack.c.h.b16 %v60
  %v550 = vunpack.c.l.b16 %v61
  %v551 = vunpack.c.h.b16 %v61
  %v552 = vunpack.c.l.b16 %v62
  %v553 = vunpack.c.h.b16 %v62
  %v554 = vunpack.c.l.b16 %v63
  %v555 = vunpack.c.h.b16 %v63
  %v556 = vunpack.c.l.b16 %v64
  %v557 = vunpack.c.h.b16 %v64
  %v558 = vunpack.c.l.b16 %v65
  %v559 = vunpack.c.h.b16 %v65
  %v560 = vunpack.c.l.b16 %v66
  %v561 = vunpack.c.h.b16 %v66
  %v562 = vunpack.c.l.b16 %v67
  %v563 = vunpack.c.h.b16 %v67
  %v564 = vunpack.c.l.b16 %v68
  %v565 = vunpack.c.h.b16 %v68
  %v566 = vunpack.c.l.b16 %v69
  %v567 = vunpack.c.h.b16 %v69
  %v568 = vunpack.c.l.b16 %v70
  %v569 = vunpack.c.h.b16 %v70
  %v570 = vunpack.c.l.b16 %v71
  %v571 = vunpack.c.h.b16 %v71
  %v572 = vunpack.c.l.b16 %v72
  %v573 = vunpack.c.h.b16 %v72
  %v574 = vunpack.c.l.b16 %v73
  %v575 = vunpack.c.h.b16 %v73
  %v576 = vunpack.c.l.b16 %v74
  %v577 = vunpack.c.h.b16 %v74
  %v578 = vunpack.c.l.b16 %v75
  %v579 = vunpack.c.h.b16 %v75
  %v580 = vunpack.c.l.b16 %v76
  %v581 = vunpack.c.h.b16 %v76
  %v582 = vunpack.c.l.b16 %v77
  %v583 = vunpack.c.h.b16 %v77
  %v584 = vunpack.c.l.b16 %v78
  %v585 = vunpack.c.h.b16 %v78
  %v586 = vunpack.c.l.b16 %v79
  %v587 = vunpack.c.h.b16 %v79
  %v588 = vunpack.c.l.b16 %v80
  %v589 = vunpack.c.h.b16 %v80
  %v590 = vunpack.c.l.b16 %v81
  %v591 = vunpack.c.h.b16 %v81
  %v592 = vunpack.c.l.b16 %v82
  %v593 = vunpack.c.h.b16 %v82
  %v594 = vunpack.c.l.b16 %v83
  %v595 = vunpack.c.h.b16 %v83
  %v596 = vunpack.c.l.b16 %v84
  %v597 = vunpack.c.h.b16 %v84
  %v598 = vunpack.c.l.b16 %v85
  %v599 = vunpack.c.h.b16 %v85
  %v600 = vunpack.c.l.b16 %v86
  %v601 = vunpack.c.h.b16 %v86
  %v602 = vunpack.c.l.b16 %v87
  %v603 = vunpack.c.h.b16 %v87
  %v604 = vunpack.c.l.b16 %v88
  %v605 = vunpack.c.h.b16 %v88
  %v606 = vunpack.c.l.b16 %v89
  %v607 = vunpack.c.h.b16 %v89
  %v608 = vunpack.c.l.b16 %v90
  %v609 = vunpack.c.h.b16 %v90
  %v610 = vunpack.c.l.b16 %v91
  %v611 = vunpack.c.h.b16 %v91
  %v612 = vunpack.c.l.b16 %v92
  %v613 = vunpack.c.h.b16 %v92
  %v614 = vunpack.c.l.b16 %v93
  %v615 = vunpack.c.h.b16 %v93
  %v616 = vunpack.c.l.b16 %v94
  %v617 = vunpack.c.h.b16 %v94
  %v618 = vunpack.c.l.b16 %v95
  %v619 = vunpack.c.h.b16 %v95
  %v620 = vunpack.c.l.b16 %v96
  %v621 = vunpack.c.h.b16 %v96
  %v622 = vunpack.c.l.b16 %v97
  %v623 = vunpack.c.h.b16 %v97
  %v624 = vunpack.c.l.b16 %v98
  %v625 = vunpack.c.h.b16 %v98
  %v626 = vunpack.c.l.b16 %v99
  %v627 = vunpack.c.h.b16 %v99
  %v628 = vunpack.c.l.b16 %v100
  %v629 = vunpack.c.h.b16 %v100
  %v630 = vunpack.c.l.b16 %v101
  %v631 = vunpack.c.h.b16 %v101
  %v632 = vunpack.c.l.b16 %v102
  %v633 = vunpack.c.h.b16 %v102
  %v634 = vunpack.c.l.b16 %v103
  %v635 = vunpack.c.h.b16 %v103
  %v636 = vunpack.c.l.b16 %v104
  %v637 = vunpack.c.h.b16 %v104
  %v638 = vunpack.c.l.b16 %v105
  %v639 = vunpack.c.h.b16 %v105
  %v640 = vunpack.c.l.b16 %v106
  %v641 = vunpack.c.h.b16 %v106
  %v642 = vunpack.c.l.b16 %v107
  %v643 = vunpack.c.h.b16 %v107
  %v644 = vunpack.c.l.b16 %v108
  %v645 = vunpack.c.h.b16 %v108
  %v646 = vunpack.c.l.b16 %v109
  %v647 = vunpack.c.h.b16 %v109
  %v648 = vunpack.c.l.b16 %v110
  %v649 = vunpack.c.h.b16 %v110
  %v650 = vunpack.c.l.b16 %v111
  %v651 = vunpack.c.h.b16 %v111
  %v652 = vunpack.c.l.b16 %v112
  %v653 = vunpack.c.h.b16 %v112
  %v654 = vunpack.c.l.b16 %v113
  %v655 = vunpack.c.h.b16 %v113
  %v656 = vunpack.c.l.b16 %v114
  %v657 = vunpack.c.h.b16 %v114
  %v658 = vunpack.c.l.b16 %v115
  %v659 = vunpack.c.h.b16 %v115
  %v660 = vunpack.c.l.b16 %v116
  %v661 = vunpack.c.h.b16 %v116
  %v662 = vunpack.c.l.b16 %v117
  %v663 = vunpack.c.h.b16 %v117
  %v664 = vunpack.c.l.b16 %v118
  %v665 = vunpack.c.h.b16 %v118
  %v666 = vunpack.c.l.b16 %v119
  %v667 = vunpack.c.h.b16 %v119
  %v668 = vunpack.c.l.b16 %v120
  %v669 = vunpack.c.h.b16 %v120
  %v670 = vunpack.c.l.b16 %v121
  %v671 = vunpack.c.h.b16 %v121
  %v672 = vunpack.c.l.b16 %v122
  %v673 = vunpack.c.h.b16 %v122
  %v674 = vunpack.c.l.b16 %v123
  %v675 = vunpack.c.h.b16 %v123
  %v676 = vunpack.c.l.b16 %v124
  %v677 = vunpack.c.h.b16 %v124
  %v678 = vunpack.c.l.b16 %v125
  %v679 = vunpack.c.h.b16 %v125
  %v680 = vunpack.c.l.b16 %v126
  %v681 = vunpack.c.h.b16 %v126
  %v682 = vunpack.c.l.b16 %v127
  %v683 = vunpack.c.h.b16 %v127
  %v684 = vunpack.c.l.b16 %v128
  %v685 = vunpack.c.h.b16 %v128
  %v686 = vunpack.c.l.b16 %v129
  %v687 = vunpack.c.h.b16 %v129
  %v688 = vunpack.c.l.b16 %v130
  %v689 = vunpack.c.h.b16 %v130
  %v690 = vunpack.c.l.b16 %v131
  %v691 = vunpack.c.h.b16 %v131
  %v692 = vpack.c.b16 %v482, %v468
  %v693 = vpack.c.b16 %v483, %v469
  %v694 = vpack.c.b16 %v484, %v470
  %v695 = vpack.c.b16 %v485, %v471
  %v696 = vpack.c.b16 %v486, %v472
  %v697 = vpack.c.b16 %v487, %v473
  %v698 = vpack.c.b16 %v488, %v474
  %v699 = vpack.c.b16 %v489, %v475
  %v700 = vpack.c.b16 %v490, %v476
  %v701 = vpack.c.b16 %v491, %v477
  %v702 = vpack.c.b16 %v492, %v478
  %v703 = vpack.c.b16 %v493, %v479
  %v704 = vpack.c.b16 %v494, %v480
  %v705 = vpack.c.b16 %v495, %v481
  %v706 = vpack.c.b16 %v510, %v496
  %v707 = vpack.c.b16 %v511, %v497
  %v708 = vpack.c.b16 %v512, %v498
  %v709 = vpack.c.b16 %v513, %v499
  %v710 = vpack.c.b16 %v514, %v500
  %v711 = vpack.c.b16 %v515, %v501
  %v712 = vpack.c.b16 %v516, %v502
  %v713 = vpack.c.b16 %v517, %v503
  %v714 = vpack.c.b16 %v518, %v504
  %v715 = vpack.c.b16 %v519, %v505
  %v716 = vpack.c.b16 %v520, %v506
  %v717 = vpack.c.b16 %v521, %v507
  %v718 = vpack.c.b16 %v522, %v508
  %v719 = vpack.c.b16 %v523, %v509
  %v720 = vpack.c.b16 %v538, %v524
  %v721 = vpack.c.b16 %v539, %v525
  %v722 = vpack.c.b16 %v540, %v526
  %v723 = vpack.c.b16 %v541, %v527
  %v724 = vpack.c.b16 %v542, %v528
  %v725 = vpack.c.b16 %v543, %v529
  %v726 = vpack.c.b16 %v544, %v530
  %v727 = vpack.c.b16 %v545, %v531
  %v728 = vpack.c.b16 %v546, %v532
  %v729 = vpack.c.b16 %v547, %v533
  %v730 = vpack.c.b16 %v548, %v534
  %v731 = vpack.c.b16 %v549, %v535
  %v732 = vpack.c.b16 %v550, %v536
  %v733 = vpack.c.b16 %v551, %v537
  %v734 = vpack.c.b16 %v566, %v552
  %v735 = vpack.c.b16 %v567, %v553
  %v736 = vpack.c.b16 %v568, %v554
  %v737 = vpack.c.b16 %v569, %v555
  %v738 = vpack.c.b16 %v570, %v556
  %v739 = vpack.c.b16 %v571, %v557
  %v740 = vpack.c.b16 %v572, %v558
  %v741 = vpack.c.b16 %v573, %v559
  %v742 = vpack.c.b16 %v574, %v560
  %v743 = vpack.c.b16 %v575, %v561
  %v744 = vpack.c.b16 %v576, %v562
  %v745 = vpack.c.b16 %v577, %v563
  %v746 = vpack.c.b16 %v578, %v564
  %v747 = vpack.c.b16 %v579, %v565
  %v748 = vpack.c.b16 %v594, %v580
  %v749 = vpack.c.b16 %v595, %v581
  %v750 = vpack.c.b16 %v596, %v582
  %v751 = vpack.c.b16 %v597, %v583
  %v752 = vpack.c.b16 %v598, %v584
  %v753 = vpack.c.b16 %v599, %v585
  %v754 = vpack.c.b16 %v600, %v586
  %v755 = vpack.c.b16 %v601, %v587
  %v756 = vpack.c.b16 %v602, %v588
  %v757 = vpack.c.b16 %v603, %v589
  %v758 = vpack.c.b16 %v604, %v590
  %v759 = vpack.c.b16 %v605, %v591
  %v760 = vpack.c.b16 %v606, %v592
  %v761 = vpack.c.b16 %v607, %v593
  %v762 = vpack.c.b16 %v622, %v608
  %v763 = vpack.c.b16 %v623, %v609
  %v764 = vpack.c.b16 %v624, %v610
  %v765 = vpack.c.b16 %v625, %v611
  %v766 = vpack.c.b16 %v626, %v612
  %v767 = vpack.c.b16 %v627, %v613
  %v768 = vpack.c.b16 %v628, %v614
  %v769 = vpack.c.b16 %v629, %v615
  %v770 = vpack.c.b16 %v630, %v616
  %v771 = vpack.c.b16 %v631, %v617
  %v772 = vpack.c.b16 %v632, %v618
  %v773 = vpack.c.b16 %v633, %v619
  %v774 = vpack.c.b16 %v634, %v620
  %v775 = vpack.c.b16 %v635, %v621
  %v776 = vpack.c.b16 %v650, %v636
  %v777 = vpack.c.b16 %v651, %v637
  %v778 = vpack.c.b16 %v652, %v638
  %v779 = vpack.c.b16 %v653, %v639
  %v780 = vpack.c.b16 %v654, %v640
  %v781 = vpack.c.b16 %v655, %v641
  %v782 = vpack.c.b16 %v656, %v642
  %v783 = vpack.c.b16 %v657, %v643
  %v784 = vpack.c.b16 %v658, %v644
  %v785 = vpack.c.b16 %v659, %v645
  %v786 = vpack.c.b16 %v660, %v646
  %v787 = vpack.c.b16 %v661, %v647
  %v788 = vpack.c.b16 %v662, %v648
  %v789 = vpack.c.b16 %v663, %v649
  %v790 = vpack.c.b16 %v678, %v664
  %v791 = vpack.c.b16 %v679, %v665
  %v792 = vpack.c.b16 %v680, %v666
  %v793 = vpack.c.b16 %v681, %v667
  %v794 = vpack.c.b16 %v682, %v668
  %v795 = vpack.c.b16 %v683, %v669
  %v796 = vpack.c.b16 %v684, %v670
  %v797 = vpack.c.b16 %v685, %v671
  %v798 = vpack.c.b16 %v686, %v672
  %v799 = vpack.c.b16 %v687, %v673
  %v800 = vpack.c.b16 %v688, %v674
  %v801 = vpack.c.b16 %v689, %v675
  %v802 = vpack.c.b16 %v690, %v676
  %v803 = vpack.c.b16 %v691, %v677
  %v1140 = vunpack.c.l.b16 %v132
  %v1141 = vunpack.c.l.b16 %v133
  %v1142 = vunpack.c.l.b16 %v134
  %v1143 = vunpack.c.l.b16 %v135
  %v1144 = vunpack.c.l.b16 %v136
  %v1145 = vunpack.c.l.b16 %v137
  %v1146 = vunpack.c.l.b16 %v138
  %v1147 = vunpack.c.l.b16 %v139
  %v1148 = vunpack.c.l.b16 %v140
  %v1149 = vunpack.c.l.b16 %v141
  %v1150 = vunpack.c.l.b16 %v142
  %v1151 = vunpack.c.l.b16 %v143
  %v1152 = vunpack.c.l.b16 %v144
  %v1153 = vunpack.c.l.b16 %v145
  %v1154 = vunpack.c.l.b16 %v146
  %v1155 = vunpack.c.l.b16 %v147
  %v1156 = vunpack.c.l.b16 %v148
  %v1157 = vunpack.c.l.b16 %v149
  %v1158 = vunpack.c.l.b16 %v150
  %v1159 = vunpack.c.l.b16 %v151
  %v1160 = vunpack.c.l.b16 %v152
  %v1161 = vunpack.c.l.b16 %v153
  %v1162 = vunpack.c.l.b16 %v154
  %v1163 = vunpack.c.l.b16 %v155
  %v1164 = vunpack.c.l.b16 %v156
  %v1165 = vunpack.c.l.b16 %v157
  %v1166 = vunpack.c.l.b16 %v158
  %v1167 = vunpack.c.l.b16 %v159
  %v1168 = vunpack.c.l.b16 %v160
  %v1169 = vunpack.c.l.b16 %v161
  %v1170 = vunpack.c.l.b16 %v162
  %v1171 = vunpack.c.l.b16 %v163
  %v1172 = vunpack.c.l.b16 %v164
  %v1173 = vunpack.c.l.b16 %v165
  %v1174 = vunpack.c.l.b16 %v166
  %v1175 = vunpack.c.l.b16 %v167
  %v1176 = vunpack.c.l.b16 %v168
  %v1177 = vunpack.c.l.b16 %v169
  %v1178 = vunpack.c.l.b16 %v170
  %v1179 = vunpack.c.l.b16 %v171
  %v1180 = vunpack.c.l.b16 %v172
  %v1181 = vunpack.c.l.b16 %v173
  %v1182 = vunpack.c.l.b16 %v174
  %v1183 = vunpack.c.l.b16 %v175
  %v1184 = vunpack.c.l.b16 %v176
  %v1185 = vunpack.c.l.b16 %v177
  %v1186 = vunpack.c.l.b16 %v178
  %v1187 = vunpack.c.l.b16 %v179
  %v1188 = vunpack.c.l.b16 %v180
  %v1189 = vunpack.c.l.b16 %v181
  %v1190 = vunpack.c.l.b16 %v182
  %v1191 = vunpack.c.l.b16 %v183
  %v1192 = vunpack.c.l.b16 %v184
  %v1193 = vunpack.c.l.b16 %v185
  %v1194 = vunpack.c.l.b16 %v186
  %v1195 = vunpack.c.l.b16 %v187
  %v1196 = vunpack.c.l.b16 %v188
  %v1197 = vunpack.c.l.b16 %v189
  %v1198 = vunpack.c.l.b16 %v190
  %v1199 = vunpack.c.l.b16 %v191
  %v1200 = vunpack.c.l.b16 %v192
  %v1201 = vunpack.c.l.b16 %v193
  %v1202 = vunpack.c.l.b16 %v194
  %v1203 = vunpack.c.l.b16 %v195
  %v1204 = vunpack.c.l.b16 %v196
  %v1205 = vunpack.c.l.b16 %v197
  %v1206 = vunpack.c.l.b16 %v198
  %v1207 = vunpack.c.l.b16 %v199
  %v1208 = vunpack.c.l.b16 %v200
  %v1209 = vunpack.c.l.b16 %v201
  %v1210 = vunpack.c.l.b16 %v202
  %v1211 = vunpack.c.l.b16 %v203
  %v1212 = vunpack.c.l.b16 %v204
  %v1213 = vunpack.c.l.b16 %v205
  %v1214 = vunpack.c.l.b16 %v206
  %v1215 = vunpack.c.l.b16 %v207
  %v1216 = vunpack.c.l.b16 %v208
  %v1217 = vunpack.c.l.b16 %v209
  %v1218 = vunpack.c.l.b16 %v210
  %v1219 = vunpack.c.l.b16 %v211
  %v1220 = vunpack.c.l.b16 %v212
  %v1221 = vunpack.c.l.b16 %v213
  %v1222 = vunpack.c.l.b16 %v214
  %v1223 = vunpack.c.l.b16 %v215
  %v1224 = vunpack.c.l.b16 %v216
  %v1225 = vunpack.c.l.b16 %v217
  %v1226 = vunpack.c.l.b16 %v218
  %v1227 = vunpack.c.l.b16 %v219
  %v1228 = vunpack.c.l.b16 %v220
  %v1229 = vunpack.c.l.b16 %v221
  %v1230 = vunpack.c.l.b16 %v222
  %v1231 = vunpack.c.l.b16 %v223
  %v1232 = vunpack.c.l.b16 %v224
  %v1233 = vunpack.c.l.b16 %v225
  %v1234 = vunpack.c.l.b16 %v226
  %v1235 = vunpack.c.l.b16 %v227
  %v1236 = vunpack.c.l.b16 %v228
  %v1237 = vunpack.c.l.b16 %v229
  %v1238 = vunpack.c.l.b16 %v230
  %v1239 = vunpack.c.l.b16 %v231
  %v1240 = vunpack.c.l.b16 %v232
  %v1241 = vunpack.c.l.b16 %v233
  %v1242 = vunpack.c.l.b16 %v234
  %v1243 = vunpack.c.l.b16 %v235
  %v1244 = vunpack.c.l.b16 %v236
  %v1245 = vunpack.c.l.b16 %v237
  %v1246 = vunpack.c.l.b16 %v238
  %v1247 = vunpack.c.l.b16 %v239
  %v1248 = vunpack.c.l.b16 %v240
  %v1249 = vunpack.c.l.b16 %v241
  %v1250 = vunpack.c.l.b16 %v242
  %v1251 = vunpack.c.l.b16 %v243
  %v1252 = vunpack.c.l.b16 %v244
  %v1253 = vunpack.c.l.b16 %v245
  %v1254 = vunpack.c.l.b16 %v246
  %v1255 = vunpack.c.l.b16 %v247
  %v1256 = vunpack.c.l.b16 %v248
  %v1257 = vunpack.c.l.b16 %v249
  %v1258 = vunpack.c.l.b16 %v250
  %v1259 = vunpack.c.l.b16 %v251
  %v1260 = vunpack.c.l.b16 %v252
  %v1261 = vunpack.c.l.b16 %v253
  %v1262 = vunpack.c.l.b16 %v254
  %v1263 = vunpack.c.l.b16 %v255
  %v1264 = vunpack.c.l.b16 %v256
  %v1265 = vunpack.c.l.b16 %v257
  %v1266 = vunpack.c.l.b16 %v258
  %v1267 = vunpack.c.l.b16 %v259
  %v1268 = vunpack.c.l.b16 %v260
  %v1269 = vunpack.c.l.b16 %v261
  %v1270 = vunpack.c.l.b16 %v262
  %v1271 = vunpack.c.l.b16 %v263
  %v1272 = vunpack.c.l.b16 %v264
  %v1273 = vunpack.c.l.b16 %v265
  %v1274 = vunpack.c.l.b16 %v266
  %v1275 = vunpack.c.l.b16 %v267
  %v1276 = vunpack.c.l.b16 %v268
  %v1277 = vunpack.c.l.b16 %v269
  %v1278 = vunpack.c.l.b16 %v270
  %v1279 = vunpack.c.l.b16 %v271
  %v1280 = vunpack.c.l.b16 %v272
  %v1281 = vunpack.c.l.b16 %v273
  %v1282 = vunpack.c.l.b16 %v274
  %v1283 = vunpack.c.l.b16 %v275
  %v1284 = vunpack.c.l.b16 %v276
  %v1285 = vunpack.c.l.b16 %v277
  %v1286 = vunpack.c.l.b16 %v278
  %v1287 = vunpack.c.l.b16 %v279
  %v1288 = vunpack.c.l.b16 %v280
  %v1289 = vunpack.c.l.b16 %v281
  %v1290 = vunpack.c.l.b16 %v282
  %v1291 = vunpack.c.l.b16 %v283
  %v1292 = vunpack.c.l.b16 %v284
  %v1293 = vunpack.c.l.b16 %v285
  %v1294 = vunpack.c.l.b16 %v286
  %v1295 = vunpack.c.l.b16 %v287
  %v1296 = vunpack.c.l.b16 %v288
  %v1297 = vunpack.c.l.b16 %v289
  %v1298 = vunpack.c.l.b16 %v290
  %v1299 = vunpack.c.l.b16 %v291
  %v1300 = vunpack.c.l.b16 %v292
  %v1301 = vunpack.c.l.b16 %v293
  %v1302 = vunpack.c.l.b16 %v294
  %v1303 = vunpack.c.l.b16 %v295
  %v1304 = vunpack.c.l.b16 %v296
  %v1305 = vunpack.c.l.b16 %v297
  %v1306 = vunpack.c.l.b16 %v298
  %v1307 = vunpack.c.l.b16 %v299
  %v1308 = vunpack.c.l.b16 %v300
  %v1309 = vunpack.c.l.b16 %v301
  %v1310 = vunpack.c.l.b16 %v302
  %v1311 = vunpack.c.l.b16 %v303
  %v1312 = vunpack.c.l.b16 %v304
  %v1313 = vunpack.c.l.b16 %v305
  %v1314 = vunpack.c.l.b16 %v306
  %v1315 = vunpack.c.l.b16 %v307
  %v1316 = vunpack.c.l.b16 %v308
  %v1317 = vunpack.c.l.b16 %v309
  %v1318 = vunpack.c.l.b16 %v310
  %v1319 = vunpack.c.l.b16 %v311
  %v1320 = vunpack.c.l.b16 %v312
  %v1321 = vunpack.c.l.b16 %v313
  %v1322 = vunpack.c.l.b16 %v314
  %v1323 = vunpack.c.l.b16 %v315
  %v1324 = vunpack.c.l.b16 %v316
  %v1325 = vunpack.c.l.b16 %v317
  %v1326 = vunpack.c.l.b16 %v318
  %v1327 = vunpack.c.l.b16 %v319
  %v1328 = vunpack.c.l.b16 %v320
  %v1329 = vunpack.c.l.b16 %v321
  %v1330 = vunpack.c.l.b16 %v322
  %v1331 = vunpack.c.l.b16 %v323
  %v1332 = vunpack.c.l.b16 %v324
  %v1333 = vunpack.c.l.b16 %v325
  %v1334 = vunpack.c.l.b16 %v326
  %v1335 = vunpack.c.l.b16 %v327
  %v1336 = vunpack.c.l.b16 %v328
  %v1337 = vunpack.c.l.b16 %v329
  %v1338 = vunpack.c.l.b16 %v330
  %v1339 = vunpack.c.l.b16 %v331
  %v1340 = vunpack.c.l.b16 %v332
  %v1341 = vunpack.c.l.b16 %v333
  %v1342 = vunpack.c.l.b16 %v334
  %v1343 = vunpack.c.l.b16 %v335
  %v1344 = vunpack.c.l.b16 %v336
  %v1345 = vunpack.c.l.b16 %v337
  %v1346 = vunpack.c.l.b16 %v338
  %v1347 = vunpack.c.l.b16 %v339
  %v1348 = vunpack.c.l.b16 %v340
  %v1349 = vunpack.c.l.b16 %v341
  %v1350 = vunpack.c.l.b16 %v342
  %v1351 = vunpack.c.l.b16 %v343
  %v1352 = vunpack.c.l.b16 %v344
  %v1353 = vunpack.c.l.b16 %v345
  %v1354 = vunpack.c.l.b16 %v346
  %v1355 = vunpack.c.l.b16 %v347
  %v1356 = vunpack.c.l.b16 %v348
  %v1357 = vunpack.c.l.b16 %v349
  %v1358 = vunpack.c.l.b16 %v350
  %v1359 = vunpack.c.l.b16 %v351
  %v1360 = vunpack.c.l.b16 %v352
  %v1361 = vunpack.c.l.b16 %v353
  %v1362 = vunpack.c.l.b16 %v354
  %v1363 = vunpack.c.l.b16 %v355
  %v1364 = vpack.c.b16 %v1141, %v1140
  %v1365 = vpack.c.b16 %v1143, %v1142
  %v1366 = vpack.c.b16 %v1145, %v1144
  %v1367 = vpack.c.b16 %v1147, %v1146
  %v1368 = vpack.c.b16 %v1149, %v1148
  %v1369 = vpack.c.b16 %v1151, %v1150
  %v1370 = vpack.c.b16 %v1153, %v1152
  %v1371 = vpack.c.b16 %v1155, %v1154
  %v1372 = vpack.c.b16 %v1157, %v1156
  %v1373 = vpack.c.b16 %v1159, %v1158
  %v1374 = vpack.c.b16 %v1161, %v1160
  %v1375 = vpack.c.b16 %v1163, %v1162
  %v1376 = vpack.c.b16 %v1165, %v1164
  %v1377 = vpack.c.b16 %v1167, %v1166
  %v1378 = vpack.c.b16 %v1169, %v1168
  %v1379 = vpack.c.b16 %v1171, %v1170
  %v1380 = vpack.c.b16 %v1173, %v1172
  %v1381 = vpack.c.b16 %v1175, %v1174
  %v1382 = vpack.c.b16 %v1177, %v1176
  %v1383 = vpack.c.b16 %v1179, %v1178
  %v1384 = vpack.c.b16 %v1181, %v1180
  %v1385 = vpack.c.b16 %v1183, %v1182
  %v1386 = vpack.c.b16 %v1185, %v1184
  %v1387 = vpack.c.b16 %v1187, %v1186
  %v1388 = vpack.c.b16 %v1189, %v1188
  %v1389 = vpack.c.b16 %v1191, %v1190
  %v1390 = vpack.c.b16 %v1193, %v1192
  %v1391 = vpack.c.b16 %v1195, %v1194
  %v1392 = vpack.c.b16 %v1197, %v1196
  %v1393 = vpack.c.b16 %v1199, %v1198
  %v1394 = vpack.c.b16 %v1201, %v1200
  %v1395 = vpack.c.b16 %v1203, %v1202
  %v1396 = vpack.c.b16 %v1205, %v1204
  %v1397 = vpack.c.b16 %v1207, %v1206
  %v1398 = vpack.c.b16 %v1209, %v1208
  %v1399 = vpack.c.b16 %v1211, %v1210
  %v1400 = vpack.c.b16 %v1213, %v1212
  %v1401 = vpack.c.b16 %v1215, %v1214
  %v1402 = vpack.c.b16 %v1217, %v1216
  %v1403 = vpack.c.b16 %v1219, %v1218
  %v1404 = vpack.c.b16 %v1221, %v1220
  %v1405 = vpack.c.b16 %v1223, %v1222
  %v1406 = vpack.c.b16 %v1225, %v1224
  %v1407 = vpack.c.b16 %v1227, %v1226
  %v1408 = vpack.c.b16 %v1229, %v1228
  %v1409 = vpack.c.b16 %v1231, %v1230
  %v1410 = vpack.c.b16 %v1233, %v1232
  %v1411 = vpack.c.b16 %v1235, %v1234
  %v1412 = vpack.c.b16 %v1237, %v1236
  %v1413 = vpack.c.b16 %v1239, %v1238
  %v1414 = vpack.c.b16 %v1241, %v1240
  %v1415 = vpack.c.b16 %v1243, %v1242
  %v1416 = vpack.c.b16 %v1245, %v1244
  %v1417 = vpack.c.b16 %v1247, %v1246
  %v1418 = vpack.c.b16 %v1249, %v1248
  %v1419 = vpack.c.b16 %v1251, %v1250
  %v1420 = vpack.c.b16 %v1253, %v1252
  %v1421 = vpack.c.b16 %v1255, %v1254
  %v1422 = vpack.c.b16 %v1257, %v1256
  %v1423 = vpack.c.b16 %v1259, %v1258
  %v1424 = vpack.c.b16 %v1261, %v1260
  %v1425 = vpack.c.b16 %v1263, %v1262
  %v1426 = vpack.c.b16 %v1265, %v1264
  %v1427 = vpack.c.b16 %v1267, %v1266
  %v1428 = vpack.c.b16 %v1269, %v1268
  %v1429 = vpack.c.b16 %v1271, %v1270
  %v1430 = vpack.c.b16 %v1273, %v1272
  %v1431 = vpack.c.b16 %v1275, %v1274
  %v1432 = vpack.c.b16 %v1277, %v1276
  %v1433 = vpack.c.b16 %v1279, %v1278
  %v1434 = vpack.c.b16 %v1281, %v1280
  %v1435 = vpack.c.b16 %v1283, %v1282
  %v1436 = vpack.c.b16 %v1285, %v1284
  %v1437 = vpack.c.b16 %v1287, %v1286
  %v1438 = vpack.c.b16 %v1289, %v1288
  %v1439 = vpack.c.b16 %v1291, %v1290
  %v1440 = vpack.c.b16 %v1293, %v1292
  %v1441 = vpack.c.b16 %v1295, %v1294
  %v1442 = vpack.c.b16 %v1297, %v1296
  %v1443 = vpack.c.b16 %v1299, %v1298
  %v1444 = vpack.c.b16 %v1301, %v1300
  %v1445 = vpack.c.b16 %v1303, %v1302
  %v1446 = vpack.c.b16 %v1305, %v1304
  %v1447 = vpack.c.b16 %v1307, %v1306
  %v1448 = vpack.c.b16 %v1309, %v1308
  %v1449 = vpack.c.b16 %v1311, %v1310
  %v1450 = vpack.c.b16 %v1313, %v1312
  %v1451 = vpack.c.b16 %v1315, %v1314
  %v1452 = vpack.c.b16 %v1317, %v1316
  %v1453 = vpack.c.b16 %v1319, %v1318
  %v1454 = vpack.c.b16 %v1321, %v1320
  %v1455 = vpack.c.b16 %v1323, %v1322
  %v1456 = vpack.c.b16 %v1325, %v1324
  %v1457 = vpack.c.b16 %v1327, %v1326
  %v1458 = vpack.c.b16 %v1329, %v1328
  %v1459 = vpack.c.b16 %v1331, %v1330
  %v1460 = vpack.c.b16 %v1333, %v1332
  %v1461 = vpack.c.b16 %v1335, %v1334
  %v1462 = vpack.c.b16 %v1337, %v1336
  %v1463 = vpack.c.b16 %v1339, %v1338
  %v1464 = vpack.c.b16 %v1341, %v1340
  %v1465 = vpack.c.b16 %v1343, %v1342
  %v1466 = vpack.c.b16 %v1345, %v1344
  %v1467 = vpack.c.b16 %v1347, %v1346
  %v1468 = vpack.c.b16 %v1349, %v1348
  %v1469 = vpack.c.b16 %v1351, %v1350
  %v1470 = vpack.c.b16 %v1353, %v1352
  %v1471 = vpack.c.b16 %v1355, %v1354
  %v1472 = vpack.c.b16 %v1357, %v1356
  %v1473 = vpack.c.b16 %v1359, %v1358
  %v1474 = vpack.c.b16 %v1361, %v1360
  %v1475 = vpack.c.b16 %v1363, %v1362
  %1588 = vmatpush.bf16.msra.mxu0 %v1371
  %1589 = vmatpush.bf16.msra.mxu0 %v1370
  %1590 = vmatpush.bf16.msra.mxu0 %v1369
  %1591 = vmatpush.bf16.msra.mxu0 %v1368
  %1592 = vmatpush.bf16.msra.mxu0 %v1367
  %1593 = vmatpush.bf16.msra.mxu0 %v1366
  %1594 = vmatpush.bf16.msra.mxu0 %v1365
  %1595 = vmatpush.bf16.msra.mxu0 %v1364
  %1596 = vmatmul.bf16.gmra.mxu0 %v692
  %v1597 = vpop.f32.mrf.mxu0
  %v1598 = vadd.f32 0.0, %v1597
  %v1599 = vpop.f32.mrf.mxu0
  %v1600 = vadd.f32 0.0, %v1599
  %1601 = vmatmul.bf16.gmra.mxu0 %v706
  %v1602 = vpop.f32.mrf.mxu0
  %v1603 = vadd.f32 0.0, %v1602
  %v1604 = vpop.f32.mrf.mxu0
  %v1605 = vadd.f32 0.0, %v1604
  %1606 = vmatmul.bf16.gmra.mxu0 %v720
  %v1607 = vpop.f32.mrf.mxu0
  %v1608 = vadd.f32 0.0, %v1607
  %v1609 = vpop.f32.mrf.mxu0
  %v1610 = vadd.f32 0.0, %v1609
  %1611 = vmatmul.bf16.gmra.mxu0 %v734
  %v1612 = vpop.f32.mrf.mxu0
  %v1613 = vadd.f32 0.0, %v1612
  %v1614 = vpop.f32.mrf.mxu0
  %v1615 = vadd.f32 0.0, %v1614
  %1616 = vmatmul.bf16.gmra.mxu0 %v748
  %v1617 = vpop.f32.mrf.mxu0
  %v1618 = vadd.f32 0.0, %v1617
  %v1619 = vpop.f32.mrf.mxu0
  %v1620 = vadd.f32 0.0, %v1619
  %1621 = vmatmul.bf16.gmra.mxu0 %v762
  %v1622 = vpop.f32.mrf.mxu0
  %v1623 = vadd.f32 0.0, %v1622
  %v1624 = vpop.f32.mrf.mxu0
  %v1625 = vadd.f32 0.0, %v1624
  %1626 = vmatmul.bf16.gmra.mxu0 %v776
  %v1627 = vpop.f32.mrf.mxu0
  %v1628 = vadd.f32 0.0, %v1627
  %v1629 = vpop.f32.mrf.mxu0
  %v1630 = vadd.f32 0.0, %v1629
  %1631 = vmatmul.bf16.gmra.mxu0 %v790
  %v1632 = vpop.f32.mrf.mxu0
  %v1633 = vadd.f32 0.0, %v1632
  %v1634 = vpop.f32.mrf.mxu0
  %v1635 = vadd.f32 0.0, %v1634
  %1636 = vdwg.mxu0
  %1637 = vmatpush.bf16.msra.mxu0 %v1379
  %1638 = vmatpush.bf16.msra.mxu0 %v1378
  %1639 = vmatpush.bf16.msra.mxu0 %v1377
  %1640 = vmatpush.bf16.msra.mxu0 %v1376
  %1641 = vmatpush.bf16.msra.mxu0 %v1375
  %1642 = vmatpush.bf16.msra.mxu0 %v1374
  %1643 = vmatpush.bf16.msra.mxu0 %v1373
  %1644 = vmatpush.bf16.msra.mxu0 %v1372
  %1645 = vmatmul.bf16.gmra.mxu0 %v693
  %v1646 = vpop.f32.mrf.mxu0
  %v1647 = vadd.f32 %v1598, %v1646
  %v1648 = vpop.f32.mrf.mxu0
  %v1649 = vadd.f32 %v1600, %v1648
  %1650 = vmatmul.bf16.gmra.mxu0 %v707
  %v1651 = vpop.f32.mrf.mxu0
  %v1652 = vadd.f32 %v1603, %v1651
  %v1653 = vpop.f32.mrf.mxu0
  %v1654 = vadd.f32 %v1605, %v1653
  %1655 = vmatmul.bf16.gmra.mxu0 %v721
  %v1656 = vpop.f32.mrf.mxu0
  %v1657 = vadd.f32 %v1608, %v1656
  %v1658 = vpop.f32.mrf.mxu0
  %v1659 = vadd.f32 %v1610, %v1658
  %1660 = vmatmul.bf16.gmra.mxu0 %v735
  %v1661 = vpop.f32.mrf.mxu0
  %v1662 = vadd.f32 %v1613, %v1661
  %v1663 = vpop.f32.mrf.mxu0
  %v1664 = vadd.f32 %v1615, %v1663
  %1665 = vmatmul.bf16.gmra.mxu0 %v749
  %v1666 = vpop.f32.mrf.mxu0
  %v1667 = vadd.f32 %v1618, %v1666
  %v1668 = vpop.f32.mrf.mxu0
  %v1669 = vadd.f32 %v1620, %v1668
  %1670 = vmatmul.bf16.gmra.mxu0 %v763
  %v1671 = vpop.f32.mrf.mxu0
  %v1672 = vadd.f32 %v1623, %v1671
  %v1673 = vpop.f32.mrf.mxu0
  %v1674 = vadd.f32 %v1625, %v1673
  %1675 = vmatmul.bf16.gmra.mxu0 %v777
  %v1676 = vpop.f32.mrf.mxu0
  %v1677 = vadd.f32 %v1628, %v1676
  %v1678 = vpop.f32.mrf.mxu0
  %v1679 = vadd.f32 %v1630, %v1678
  %1680 = vmatmul.bf16.gmra.mxu0 %v791
  %v1681 = vpop.f32.mrf.mxu0
  %v1682 = vadd.f32 %v1633, %v1681
  %v1683 = vpop.f32.mrf.mxu0
  %v1684 = vadd.f32 %v1635, %v1683
  %1685 = vdwg.mxu0
  %1686 = vmatpush.bf16.msra.mxu0 %v1387
  %1687 = vmatpush.bf16.msra.mxu0 %v1386
  %1688 = vmatpush.bf16.msra.mxu0 %v1385
  %1689 = vmatpush.bf16.msra.mxu0 %v1384
  %1690 = vmatpush.bf16.msra.mxu0 %v1383
  %1691 = vmatpush.bf16.msra.mxu0 %v1382
  %1692 = vmatpush.bf16.msra.mxu0 %v1381
  %1693 = vmatpush.bf16.msra.mxu0 %v1380
  %1694 = vmatmul.bf16.gmra.mxu0 %v694
  %v1695 = vpop.f32.mrf.mxu0
  %v1696 = vadd.f32 %v1647, %v1695
  %v1697 = vpop.f32.mrf.mxu0
  %v1698 = vadd.f32 %v1649, %v1697
  %1699 = vmatmul.bf16.gmra.mxu0 %v708
  %v1700 = vpop.f32.mrf.mxu0
  %v1701 = vadd.f32 %v1652, %v1700
  %v1702 = vpop.f32.mrf.mxu0
  %v1703 = vadd.f32 %v1654, %v1702
  %1704 = vmatmul.bf16.gmra.mxu0 %v722
  %v1705 = vpop.f32.mrf.mxu0
  %v1706 = vadd.f32 %v1657, %v1705
  %v1707 = vpop.f32.mrf.mxu0
  %v1708 = vadd.f32 %v1659, %v1707
  %1709 = vmatmul.bf16.gmra.mxu0 %v736
  %v1710 = vpop.f32.mrf.mxu0
  %v1711 = vadd.f32 %v1662, %v1710
  %v1712 = vpop.f32.mrf.mxu0
  %v1713 = vadd.f32 %v1664, %v1712
  %1714 = vmatmul.bf16.gmra.mxu0 %v750
  %v1715 = vpop.f32.mrf.mxu0
  %v1716 = vadd.f32 %v1667, %v1715
  %v1717 = vpop.f32.mrf.mxu0
  %v1718 = vadd.f32 %v1669, %v1717
  %1719 = vmatmul.bf16.gmra.mxu0 %v764
  %v1720 = vpop.f32.mrf.mxu0
  %v1721 = vadd.f32 %v1672, %v1720
  %v1722 = vpop.f32.mrf.mxu0
  %v1723 = vadd.f32 %v1674, %v1722
  %1724 = vmatmul.bf16.gmra.mxu0 %v778
  %v1725 = vpop.f32.mrf.mxu0
  %v1726 = vadd.f32 %v1677, %v1725
  %v1727 = vpop.f32.mrf.mxu0
  %v1728 = vadd.f32 %v1679, %v1727
  %1729 = vmatmul.bf16.gmra.mxu0 %v792
  %v1730 = vpop.f32.mrf.mxu0
  %v1731 = vadd.f32 %v1682, %v1730
  %v1732 = vpop.f32.mrf.mxu0
  %v1733 = vadd.f32 %v1684, %v1732
  %1734 = vdwg.mxu0
  %1735 = vmatpush.bf16.msra.mxu0 %v1395
  %1736 = vmatpush.bf16.msra.mxu0 %v1394
  %1737 = vmatpush.bf16.msra.mxu0 %v1393
  %1738 = vmatpush.bf16.msra.mxu0 %v1392
  %1739 = vmatpush.bf16.msra.mxu0 %v1391
  %1740 = vmatpush.bf16.msra.mxu0 %v1390
  %1741 = vmatpush.bf16.msra.mxu0 %v1389
  %1742 = vmatpush.bf16.msra.mxu0 %v1388
  %1743 = vmatmul.bf16.gmra.mxu0 %v695
  %v1744 = vpop.f32.mrf.mxu0
  %v1745 = vadd.f32 %v1696, %v1744
  %v1746 = vpop.f32.mrf.mxu0
  %v1747 = vadd.f32 %v1698, %v1746
  %1748 = vmatmul.bf16.gmra.mxu0 %v709
  %v1749 = vpop.f32.mrf.mxu0
  %v1750 = vadd.f32 %v1701, %v1749
  %v1751 = vpop.f32.mrf.mxu0
  %v1752 = vadd.f32 %v1703, %v1751
  %1753 = vmatmul.bf16.gmra.mxu0 %v723
  %v1754 = vpop.f32.mrf.mxu0
  %v1755 = vadd.f32 %v1706, %v1754
  %v1756 = vpop.f32.mrf.mxu0
  %v1757 = vadd.f32 %v1708, %v1756
  %1758 = vmatmul.bf16.gmra.mxu0 %v737
  %v1759 = vpop.f32.mrf.mxu0
  %v1760 = vadd.f32 %v1711, %v1759
  %v1761 = vpop.f32.mrf.mxu0
  %v1762 = vadd.f32 %v1713, %v1761
  %1763 = vmatmul.bf16.gmra.mxu0 %v751
  %v1764 = vpop.f32.mrf.mxu0
  %v1765 = vadd.f32 %v1716, %v1764
  %v1766 = vpop.f32.mrf.mxu0
  %v1767 = vadd.f32 %v1718, %v1766
  %1768 = vmatmul.bf16.gmra.mxu0 %v765
  %v1769 = vpop.f32.mrf.mxu0
  %v1770 = vadd.f32 %v1721, %v1769
  %v1771 = vpop.f32.mrf.mxu0
  %v1772 = vadd.f32 %v1723, %v1771
  %1773 = vmatmul.bf16.gmra.mxu0 %v779
  %v1774 = vpop.f32.mrf.mxu0
  %v1775 = vadd.f32 %v1726, %v1774
  %v1776 = vpop.f32.mrf.mxu0
  %v1777 = vadd.f32 %v1728, %v1776
  %1778 = vmatmul.bf16.gmra.mxu0 %v793
  %v1779 = vpop.f32.mrf.mxu0
  %v1780 = vadd.f32 %v1731, %v1779
  %v1781 = vpop.f32.mrf.mxu0
  %v1782 = vadd.f32 %v1733, %v1781
  %1783 = vdwg.mxu0
  %1784 = vmatpush.bf16.msra.mxu0 %v1403
  %1785 = vmatpush.bf16.msra.mxu0 %v1402
  %1786 = vmatpush.bf16.msra.mxu0 %v1401
  %1787 = vmatpush.bf16.msra.mxu0 %v1400
  %1788 = vmatpush.bf16.msra.mxu0 %v1399
  %1789 = vmatpush.bf16.msra.mxu0 %v1398
  %1790 = vmatpush.bf16.msra.mxu0 %v1397
  %1791 = vmatpush.bf16.msra.mxu0 %v1396
  %1792 = vmatmul.bf16.gmra.mxu0 %v696
  %v1793 = vpop.f32.mrf.mxu0
  %v1794 = vadd.f32 %v1745, %v1793
  %v1795 = vpop.f32.mrf.mxu0
  %v1796 = vadd.f32 %v1747, %v1795
  %1797 = vmatmul.bf16.gmra.mxu0 %v710
  %v1798 = vpop.f32.mrf.mxu0
  %v1799 = vadd.f32 %v1750, %v1798
  %v1800 = vpop.f32.mrf.mxu0
  %v1801 = vadd.f32 %v1752, %v1800
  %1802 = vmatmul.bf16.gmra.mxu0 %v724
  %v1803 = vpop.f32.mrf.mxu0
  %v1804 = vadd.f32 %v1755, %v1803
  %v1805 = vpop.f32.mrf.mxu0
  %v1806 = vadd.f32 %v1757, %v1805
  %1807 = vmatmul.bf16.gmra.mxu0 %v738
  %v1808 = vpop.f32.mrf.mxu0
  %v1809 = vadd.f32 %v1760, %v1808
  %v1810 = vpop.f32.mrf.mxu0
  %v1811 = vadd.f32 %v1762, %v1810
  %1812 = vmatmul.bf16.gmra.mxu0 %v752
  %v1813 = vpop.f32.mrf.mxu0
  %v1814 = vadd.f32 %v1765, %v1813
  %v1815 = vpop.f32.mrf.mxu0
  %v1816 = vadd.f32 %v1767, %v1815
  %1817 = vmatmul.bf16.gmra.mxu0 %v766
  %v1818 = vpop.f32.mrf.mxu0
  %v1819 = vadd.f32 %v1770, %v1818
  %v1820 = vpop.f32.mrf.mxu0
  %v1821 = vadd.f32 %v1772, %v1820
  %1822 = vmatmul.bf16.gmra.mxu0 %v780
  %v1823 = vpop.f32.mrf.mxu0
  %v1824 = vadd.f32 %v1775, %v1823
  %v1825 = vpop.f32.mrf.mxu0
  %v1826 = vadd.f32 %v1777, %v1825
  %1827 = vmatmul.bf16.gmra.mxu0 %v794
  %v1828 = vpop.f32.mrf.mxu0
  %v1829 = vadd.f32 %v1780, %v1828
  %v1830 = vpop.f32.mrf.mxu0
  %v1831 = vadd.f32 %v1782, %v1830
  %1832 = vdwg.mxu0
  %1833 = vmatpush.bf16.msra.mxu0 %v1411
  %1834 = vmatpush.bf16.msra.mxu0 %v1410
  %1835 = vmatpush.bf16.msra.mxu0 %v1409
  %1836 = vmatpush.bf16.msra.mxu0 %v1408
  %1837 = vmatpush.bf16.msra.mxu0 %v1407
  %1838 = vmatpush.bf16.msra.mxu0 %v1406
  %1839 = vmatpush.bf16.msra.mxu0 %v1405
  %1840 = vmatpush.bf16.msra.mxu0 %v1404
  %1841 = vmatmul.bf16.gmra.mxu0 %v697
  %v1842 = vpop.f32.mrf.mxu0
  %v1843 = vadd.f32 %v1794, %v1842
  %v1844 = vpop.f32.mrf.mxu0
  %v1845 = vadd.f32 %v1796, %v1844
  %1846 = vmatmul.bf16.gmra.mxu0 %v711
  %v1847 = vpop.f32.mrf.mxu0
  %v1848 = vadd.f32 %v1799, %v1847
  %v1849 = vpop.f32.mrf.mxu0
  %v1850 = vadd.f32 %v1801, %v1849
  %1851 = vmatmul.bf16.gmra.mxu0 %v725
  %v1852 = vpop.f32.mrf.mxu0
  %v1853 = vadd.f32 %v1804, %v1852
  %v1854 = vpop.f32.mrf.mxu0
  %v1855 = vadd.f32 %v1806, %v1854
  %1856 = vmatmul.bf16.gmra.mxu0 %v739
  %v1857 = vpop.f32.mrf.mxu0
  %v1858 = vadd.f32 %v1809, %v1857
  %v1859 = vpop.f32.mrf.mxu0
  %v1860 = vadd.f32 %v1811, %v1859
  %1861 = vmatmul.bf16.gmra.mxu0 %v753
  %v1862 = vpop.f32.mrf.mxu0
  %v1863 = vadd.f32 %v1814, %v1862
  %v1864 = vpop.f32.mrf.mxu0
  %v1865 = vadd.f32 %v1816, %v1864
  %1866 = vmatmul.bf16.gmra.mxu0 %v767
  %v1867 = vpop.f32.mrf.mxu0
  %v1868 = vadd.f32 %v1819, %v1867
  %v1869 = vpop.f32.mrf.mxu0
  %v1870 = vadd.f32 %v1821, %v1869
  %1871 = vmatmul.bf16.gmra.mxu0 %v781
  %v1872 = vpop.f32.mrf.mxu0
  %v1873 = vadd.f32 %v1824, %v1872
  %v1874 = vpop.f32.mrf.mxu0
  %v1875 = vadd.f32 %v1826, %v1874
  %1876 = vmatmul.bf16.gmra.mxu0 %v795
  %v1877 = vpop.f32.mrf.mxu0
  %v1878 = vadd.f32 %v1829, %v1877
  %v1879 = vpop.f32.mrf.mxu0
  %v1880 = vadd.f32 %v1831, %v1879
  %1881 = vdwg.mxu0
  %1882 = vmatpush.bf16.msra.mxu0 %v1419
  %1883 = vmatpush.bf16.msra.mxu0 %v1418
  %1884 = vmatpush.bf16.msra.mxu0 %v1417
  %1885 = vmatpush.bf16.msra.mxu0 %v1416
  %1886 = vmatpush.bf16.msra.mxu0 %v1415
  %1887 = vmatpush.bf16.msra.mxu0 %v1414
  %1888 = vmatpush.bf16.msra.mxu0 %v1413
  %1889 = vmatpush.bf16.msra.mxu0 %v1412
  %1890 = vmatmul.bf16.gmra.mxu0 %v698
  %v1891 = vpop.f32.mrf.mxu0
  %v1892 = vadd.f32 %v1843, %v1891
  %v1893 = vpop.f32.mrf.mxu0
  %v1894 = vadd.f32 %v1845, %v1893
  %1895 = vmatmul.bf16.gmra.mxu0 %v712
  %v1896 = vpop.f32.mrf.mxu0
  %v1897 = vadd.f32 %v1848, %v1896
  %v1898 = vpop.f32.mrf.mxu0
  %v1899 = vadd.f32 %v1850, %v1898
  %1900 = vmatmul.bf16.gmra.mxu0 %v726
  %v1901 = vpop.f32.mrf.mxu0
  %v1902 = vadd.f32 %v1853, %v1901
  %v1903 = vpop.f32.mrf.mxu0
  %v1904 = vadd.f32 %v1855, %v1903
  %1905 = vmatmul.bf16.gmra.mxu0 %v740
  %v1906 = vpop.f32.mrf.mxu0
  %v1907 = vadd.f32 %v1858, %v1906
  %v1908 = vpop.f32.mrf.mxu0
  %v1909 = vadd.f32 %v1860, %v1908
  %1910 = vmatmul.bf16.gmra.mxu0 %v754
  %v1911 = vpop.f32.mrf.mxu0
  %v1912 = vadd.f32 %v1863, %v1911
  %v1913 = vpop.f32.mrf.mxu0
  %v1914 = vadd.f32 %v1865, %v1913
  %1915 = vmatmul.bf16.gmra.mxu0 %v768
  %v1916 = vpop.f32.mrf.mxu0
  %v1917 = vadd.f32 %v1868, %v1916
  %v1918 = vpop.f32.mrf.mxu0
  %v1919 = vadd.f32 %v1870, %v1918
  %1920 = vmatmul.bf16.gmra.mxu0 %v782
  %v1921 = vpop.f32.mrf.mxu0
  %v1922 = vadd.f32 %v1873, %v1921
  %v1923 = vpop.f32.mrf.mxu0
  %v1924 = vadd.f32 %v1875, %v1923
  %1925 = vmatmul.bf16.gmra.mxu0 %v796
  %v1926 = vpop.f32.mrf.mxu0
  %v1927 = vadd.f32 %v1878, %v1926
  %v1928 = vpop.f32.mrf.mxu0
  %v1929 = vadd.f32 %v1880, %v1928
  %1930 = vdwg.mxu0
  %1931 = vmatpush.bf16.msra.mxu0 %v1427
  %1932 = vmatpush.bf16.msra.mxu0 %v1426
  %1933 = vmatpush.bf16.msra.mxu0 %v1425
  %1934 = vmatpush.bf16.msra.mxu0 %v1424
  %1935 = vmatpush.bf16.msra.mxu0 %v1423
  %1936 = vmatpush.bf16.msra.mxu0 %v1422
  %1937 = vmatpush.bf16.msra.mxu0 %v1421
  %1938 = vmatpush.bf16.msra.mxu0 %v1420
  %1939 = vmatmul.bf16.gmra.mxu0 %v699
  %v1940 = vpop.f32.mrf.mxu0
  %v1941 = vadd.f32 %v1892, %v1940
  %v1942 = vpop.f32.mrf.mxu0
  %v1943 = vadd.f32 %v1894, %v1942
  %1944 = vmatmul.bf16.gmra.mxu0 %v713
  %v1945 = vpop.f32.mrf.mxu0
  %v1946 = vadd.f32 %v1897, %v1945
  %v1947 = vpop.f32.mrf.mxu0
  %v1948 = vadd.f32 %v1899, %v1947
  %1949 = vmatmul.bf16.gmra.mxu0 %v727
  %v1950 = vpop.f32.mrf.mxu0
  %v1951 = vadd.f32 %v1902, %v1950
  %v1952 = vpop.f32.mrf.mxu0
  %v1953 = vadd.f32 %v1904, %v1952
  %1954 = vmatmul.bf16.gmra.mxu0 %v741
  %v1955 = vpop.f32.mrf.mxu0
  %v1956 = vadd.f32 %v1907, %v1955
  %v1957 = vpop.f32.mrf.mxu0
  %v1958 = vadd.f32 %v1909, %v1957
  %1959 = vmatmul.bf16.gmra.mxu0 %v755
  %v1960 = vpop.f32.mrf.mxu0
  %v1961 = vadd.f32 %v1912, %v1960
  %v1962 = vpop.f32.mrf.mxu0
  %v1963 = vadd.f32 %v1914, %v1962
  %1964 = vmatmul.bf16.gmra.mxu0 %v769
  %v1965 = vpop.f32.mrf.mxu0
  %v1966 = vadd.f32 %v1917, %v1965
  %v1967 = vpop.f32.mrf.mxu0
  %v1968 = vadd.f32 %v1919, %v1967
  %1969 = vmatmul.bf16.gmra.mxu0 %v783
  %v1970 = vpop.f32.mrf.mxu0
  %v1971 = vadd.f32 %v1922, %v1970
  %v1972 = vpop.f32.mrf.mxu0
  %v1973 = vadd.f32 %v1924, %v1972
  %1974 = vmatmul.bf16.gmra.mxu0 %v797
  %v1975 = vpop.f32.mrf.mxu0
  %v1976 = vadd.f32 %v1927, %v1975
  %v1977 = vpop.f32.mrf.mxu0
  %v1978 = vadd.f32 %v1929, %v1977
  %1979 = vdwg.mxu0
  %1980 = vmatpush.bf16.msra.mxu0 %v1435
  %1981 = vmatpush.bf16.msra.mxu0 %v1434
  %1982 = vmatpush.bf16.msra.mxu0 %v1433
  %1983 = vmatpush.bf16.msra.mxu0 %v1432
  %1984 = vmatpush.bf16.msra.mxu0 %v1431
  %1985 = vmatpush.bf16.msra.mxu0 %v1430
  %1986 = vmatpush.bf16.msra.mxu0 %v1429
  %1987 = vmatpush.bf16.msra.mxu0 %v1428
  %1988 = vmatmul.bf16.gmra.mxu0 %v700
  %v1989 = vpop.f32.mrf.mxu0
  %v1990 = vadd.f32 %v1941, %v1989
  %v1991 = vpop.f32.mrf.mxu0
  %v1992 = vadd.f32 %v1943, %v1991
  %1993 = vmatmul.bf16.gmra.mxu0 %v714
  %v1994 = vpop.f32.mrf.mxu0
  %v1995 = vadd.f32 %v1946, %v1994
  %v1996 = vpop.f32.mrf.mxu0
  %v1997 = vadd.f32 %v1948, %v1996
  %1998 = vmatmul.bf16.gmra.mxu0 %v728
  %v1999 = vpop.f32.mrf.mxu0
  %v2000 = vadd.f32 %v1951, %v1999
  %v2001 = vpop.f32.mrf.mxu0
  %v2002 = vadd.f32 %v1953, %v2001
  %2003 = vmatmul.bf16.gmra.mxu0 %v742
  %v2004 = vpop.f32.mrf.mxu0
  %v2005 = vadd.f32 %v1956, %v2004
  %v2006 = vpop.f32.mrf.mxu0
  %v2007 = vadd.f32 %v1958, %v2006
  %2008 = vmatmul.bf16.gmra.mxu0 %v756
  %v2009 = vpop.f32.mrf.mxu0
  %v2010 = vadd.f32 %v1961, %v2009
  %v2011 = vpop.f32.mrf.mxu0
  %v2012 = vadd.f32 %v1963, %v2011
  %2013 = vmatmul.bf16.gmra.mxu0 %v770
  %v2014 = vpop.f32.mrf.mxu0
  %v2015 = vadd.f32 %v1966, %v2014
  %v2016 = vpop.f32.mrf.mxu0
  %v2017 = vadd.f32 %v1968, %v2016
  %2018 = vmatmul.bf16.gmra.mxu0 %v784
  %v2019 = vpop.f32.mrf.mxu0
  %v2020 = vadd.f32 %v1971, %v2019
  %v2021 = vpop.f32.mrf.mxu0
  %v2022 = vadd.f32 %v1973, %v2021
  %2023 = vmatmul.bf16.gmra.mxu0 %v798
  %v2024 = vpop.f32.mrf.mxu0
  %v2025 = vadd.f32 %v1976, %v2024
  %v2026 = vpop.f32.mrf.mxu0
  %v2027 = vadd.f32 %v1978, %v2026
  %2028 = vdwg.mxu0
  %2029 = vmatpush.bf16.msra.mxu0 %v1443
  %2030 = vmatpush.bf16.msra.mxu0 %v1442
  %2031 = vmatpush.bf16.msra.mxu0 %v1441
  %2032 = vmatpush.bf16.msra.mxu0 %v1440
  %2033 = vmatpush.bf16.msra.mxu0 %v1439
  %2034 = vmatpush.bf16.msra.mxu0 %v1438
  %2035 = vmatpush.bf16.msra.mxu0 %v1437
  %2036 = vmatpush.bf16.msra.mxu0 %v1436
  %2037 = vmatmul.bf16.gmra.mxu0 %v701
  %v2038 = vpop.f32.mrf.mxu0
  %v2039 = vadd.f32 %v1990, %v2038
  %v2040 = vpop.f32.mrf.mxu0
  %v2041 = vadd.f32 %v1992, %v2040
  %2042 = vmatmul.bf16.gmra.mxu0 %v715
  %v2043 = vpop.f32.mrf.mxu0
  %v2044 = vadd.f32 %v1995, %v2043
  %v2045 = vpop.f32.mrf.mxu0
  %v2046 = vadd.f32 %v1997, %v2045
  %2047 = vmatmul.bf16.gmra.mxu0 %v729
  %v2048 = vpop.f32.mrf.mxu0
  %v2049 = vadd.f32 %v2000, %v2048
  %v2050 = vpop.f32.mrf.mxu0
  %v2051 = vadd.f32 %v2002, %v2050
  %2052 = vmatmul.bf16.gmra.mxu0 %v743
  %v2053 = vpop.f32.mrf.mxu0
  %v2054 = vadd.f32 %v2005, %v2053
  %v2055 = vpop.f32.mrf.mxu0
  %v2056 = vadd.f32 %v2007, %v2055
  %2057 = vmatmul.bf16.gmra.mxu0 %v757
  %v2058 = vpop.f32.mrf.mxu0
  %v2059 = vadd.f32 %v2010, %v2058
  %v2060 = vpop.f32.mrf.mxu0
  %v2061 = vadd.f32 %v2012, %v2060
  %2062 = vmatmul.bf16.gmra.mxu0 %v771
  %v2063 = vpop.f32.mrf.mxu0
  %v2064 = vadd.f32 %v2015, %v2063
  %v2065 = vpop.f32.mrf.mxu0
  %v2066 = vadd.f32 %v2017, %v2065
  %2067 = vmatmul.bf16.gmra.mxu0 %v785
  %v2068 = vpop.f32.mrf.mxu0
  %v2069 = vadd.f32 %v2020, %v2068
  %v2070 = vpop.f32.mrf.mxu0
  %v2071 = vadd.f32 %v2022, %v2070
  %2072 = vmatmul.bf16.gmra.mxu0 %v799
  %v2073 = vpop.f32.mrf.mxu0
  %v2074 = vadd.f32 %v2025, %v2073
  %v2075 = vpop.f32.mrf.mxu0
  %v2076 = vadd.f32 %v2027, %v2075
  %2077 = vdwg.mxu0
  %2078 = vmatpush.bf16.msra.mxu0 %v1451
  %2079 = vmatpush.bf16.msra.mxu0 %v1450
  %2080 = vmatpush.bf16.msra.mxu0 %v1449
  %2081 = vmatpush.bf16.msra.mxu0 %v1448
  %2082 = vmatpush.bf16.msra.mxu0 %v1447
  %2083 = vmatpush.bf16.msra.mxu0 %v1446
  %2084 = vmatpush.bf16.msra.mxu0 %v1445
  %2085 = vmatpush.bf16.msra.mxu0 %v1444
  %2086 = vmatmul.bf16.gmra.mxu0 %v702
  %v2087 = vpop.f32.mrf.mxu0
  %v2088 = vadd.f32 %v2039, %v2087
  %v2089 = vpop.f32.mrf.mxu0
  %v2090 = vadd.f32 %v2041, %v2089
  %2091 = vmatmul.bf16.gmra.mxu0 %v716
  %v2092 = vpop.f32.mrf.mxu0
  %v2093 = vadd.f32 %v2044, %v2092
  %v2094 = vpop.f32.mrf.mxu0
  %v2095 = vadd.f32 %v2046, %v2094
  %2096 = vmatmul.bf16.gmra.mxu0 %v730
  %v2097 = vpop.f32.mrf.mxu0
  %v2098 = vadd.f32 %v2049, %v2097
  %v2099 = vpop.f32.mrf.mxu0
  %v2100 = vadd.f32 %v2051, %v2099
  %2101 = vmatmul.bf16.gmra.mxu0 %v744
  %v2102 = vpop.f32.mrf.mxu0
  %v2103 = vadd.f32 %v2054, %v2102
  %v2104 = vpop.f32.mrf.mxu0
  %v2105 = vadd.f32 %v2056, %v2104
  %2106 = vmatmul.bf16.gmra.mxu0 %v758
  %v2107 = vpop.f32.mrf.mxu0
  %v2108 = vadd.f32 %v2059, %v2107
  %v2109 = vpop.f32.mrf.mxu0
  %v2110 = vadd.f32 %v2061, %v2109
  %2111 = vmatmul.bf16.gmra.mxu0 %v772
  %v2112 = vpop.f32.mrf.mxu0
  %v2113 = vadd.f32 %v2064, %v2112
  %v2114 = vpop.f32.mrf.mxu0
  %v2115 = vadd.f32 %v2066, %v2114
  %2116 = vmatmul.bf16.gmra.mxu0 %v786
  %v2117 = vpop.f32.mrf.mxu0
  %v2118 = vadd.f32 %v2069, %v2117
  %v2119 = vpop.f32.mrf.mxu0
  %v2120 = vadd.f32 %v2071, %v2119
  %2121 = vmatmul.bf16.gmra.mxu0 %v800
  %v2122 = vpop.f32.mrf.mxu0
  %v2123 = vadd.f32 %v2074, %v2122
  %v2124 = vpop.f32.mrf.mxu0
  %v2125 = vadd.f32 %v2076, %v2124
  %2126 = vdwg.mxu0
  %2127 = vmatpush.bf16.msra.mxu0 %v1459
  %2128 = vmatpush.bf16.msra.mxu0 %v1458
  %2129 = vmatpush.bf16.msra.mxu0 %v1457
  %2130 = vmatpush.bf16.msra.mxu0 %v1456
  %2131 = vmatpush.bf16.msra.mxu0 %v1455
  %2132 = vmatpush.bf16.msra.mxu0 %v1454
  %2133 = vmatpush.bf16.msra.mxu0 %v1453
  %2134 = vmatpush.bf16.msra.mxu0 %v1452
  %2135 = vmatmul.bf16.gmra.mxu0 %v703
  %v2136 = vpop.f32.mrf.mxu0
  %v2137 = vadd.f32 %v2088, %v2136
  %v2138 = vpop.f32.mrf.mxu0
  %v2139 = vadd.f32 %v2090, %v2138
  %2140 = vmatmul.bf16.gmra.mxu0 %v717
  %v2141 = vpop.f32.mrf.mxu0
  %v2142 = vadd.f32 %v2093, %v2141
  %v2143 = vpop.f32.mrf.mxu0
  %v2144 = vadd.f32 %v2095, %v2143
  %2145 = vmatmul.bf16.gmra.mxu0 %v731
  %v2146 = vpop.f32.mrf.mxu0
  %v2147 = vadd.f32 %v2098, %v2146
  %v2148 = vpop.f32.mrf.mxu0
  %v2149 = vadd.f32 %v2100, %v2148
  %2150 = vmatmul.bf16.gmra.mxu0 %v745
  %v2151 = vpop.f32.mrf.mxu0
  %v2152 = vadd.f32 %v2103, %v2151
  %v2153 = vpop.f32.mrf.mxu0
  %v2154 = vadd.f32 %v2105, %v2153
  %2155 = vmatmul.bf16.gmra.mxu0 %v759
  %v2156 = vpop.f32.mrf.mxu0
  %v2157 = vadd.f32 %v2108, %v2156
  %v2158 = vpop.f32.mrf.mxu0
  %v2159 = vadd.f32 %v2110, %v2158
  %2160 = vmatmul.bf16.gmra.mxu0 %v773
  %v2161 = vpop.f32.mrf.mxu0
  %v2162 = vadd.f32 %v2113, %v2161
  %v2163 = vpop.f32.mrf.mxu0
  %v2164 = vadd.f32 %v2115, %v2163
  %2165 = vmatmul.bf16.gmra.mxu0 %v787
  %v2166 = vpop.f32.mrf.mxu0
  %v2167 = vadd.f32 %v2118, %v2166
  %v2168 = vpop.f32.mrf.mxu0
  %v2169 = vadd.f32 %v2120, %v2168
  %2170 = vmatmul.bf16.gmra.mxu0 %v801
  %v2171 = vpop.f32.mrf.mxu0
  %v2172 = vadd.f32 %v2123, %v2171
  %v2173 = vpop.f32.mrf.mxu0
  %v2174 = vadd.f32 %v2125, %v2173
  %2175 = vdwg.mxu0
  %2176 = vmatpush.bf16.msra.mxu0 %v1467
  %2177 = vmatpush.bf16.msra.mxu0 %v1466
  %2178 = vmatpush.bf16.msra.mxu0 %v1465
  %2179 = vmatpush.bf16.msra.mxu0 %v1464
  %2180 = vmatpush.bf16.msra.mxu0 %v1463
  %2181 = vmatpush.bf16.msra.mxu0 %v1462
  %2182 = vmatpush.bf16.msra.mxu0 %v1461
  %2183 = vmatpush.bf16.msra.mxu0 %v1460
  %2184 = vmatmul.bf16.gmra.mxu0 %v704
  %v2185 = vpop.f32.mrf.mxu0
  %v2186 = vadd.f32 %v2137, %v2185
  %v2187 = vpop.f32.mrf.mxu0
  %v2188 = vadd.f32 %v2139, %v2187
  %2189 = vmatmul.bf16.gmra.mxu0 %v718
  %v2190 = vpop.f32.mrf.mxu0
  %v2191 = vadd.f32 %v2142, %v2190
  %v2192 = vpop.f32.mrf.mxu0
  %v2193 = vadd.f32 %v2144, %v2192
  %2194 = vmatmul.bf16.gmra.mxu0 %v732
  %v2195 = vpop.f32.mrf.mxu0
  %v2196 = vadd.f32 %v2147, %v2195
  %v2197 = vpop.f32.mrf.mxu0
  %v2198 = vadd.f32 %v2149, %v2197
  %2199 = vmatmul.bf16.gmra.mxu0 %v746
  %v2200 = vpop.f32.mrf.mxu0
  %v2201 = vadd.f32 %v2152, %v2200
  %v2202 = vpop.f32.mrf.mxu0
  %v2203 = vadd.f32 %v2154, %v2202
  %2204 = vmatmul.bf16.gmra.mxu0 %v760
  %v2205 = vpop.f32.mrf.mxu0
  %v2206 = vadd.f32 %v2157, %v2205
  %v2207 = vpop.f32.mrf.mxu0
  %v2208 = vadd.f32 %v2159, %v2207
  %2209 = vmatmul.bf16.gmra.mxu0 %v774
  %v2210 = vpop.f32.mrf.mxu0
  %v2211 = vadd.f32 %v2162, %v2210
  %v2212 = vpop.f32.mrf.mxu0
  %v2213 = vadd.f32 %v2164, %v2212
  %2214 = vmatmul.bf16.gmra.mxu0 %v788
  %v2215 = vpop.f32.mrf.mxu0
  %v2216 = vadd.f32 %v2167, %v2215
  %v2217 = vpop.f32.mrf.mxu0
  %v2218 = vadd.f32 %v2169, %v2217
  %2219 = vmatmul.bf16.gmra.mxu0 %v802
  %v2220 = vpop.f32.mrf.mxu0
  %v2221 = vadd.f32 %v2172, %v2220
  %v2222 = vpop.f32.mrf.mxu0
  %v2223 = vadd.f32 %v2174, %v2222
  %2224 = vdwg.mxu0
  %2225 = vmatpush.bf16.msra.mxu0 %v1475
  %2226 = vmatpush.bf16.msra.mxu0 %v1474
  %2227 = vmatpush.bf16.msra.mxu0 %v1473
  %2228 = vmatpush.bf16.msra.mxu0 %v1472
  %2229 = vmatpush.bf16.msra.mxu0 %v1471
  %2230 = vmatpush.bf16.msra.mxu0 %v1470
  %2231 = vmatpush.bf16.msra.mxu0 %v1469
  %2232 = vmatpush.bf16.msra.mxu0 %v1468
  %2233 = vmatmul.bf16.gmra.mxu0 %v705
  %v2234 = vpop.f32.mrf.mxu0
  %v2235 = vadd.f32 %v2186, %v2234
  %v2236 = vpop.f32.mrf.mxu0
  %v2237 = vadd.f32 %v2188, %v2236
  %2238 = vmatmul.bf16.gmra.mxu0 %v719
  %v2239 = vpop.f32.mrf.mxu0
  %v2240 = vadd.f32 %v2191, %v2239
  %v2241 = vpop.f32.mrf.mxu0
  %v2242 = vadd.f32 %v2193, %v2241
  %2243 = vmatmul.bf16.gmra.mxu0 %v733
  %v2244 = vpop.f32.mrf.mxu0
  %v2245 = vadd.f32 %v2196, %v2244
  %v2246 = vpop.f32.mrf.mxu0
  %v2247 = vadd.f32 %v2198, %v2246
  %2248 = vmatmul.bf16.gmra.mxu0 %v747
  %v2249 = vpop.f32.mrf.mxu0
  %v2250 = vadd.f32 %v2201, %v2249
  %v2251 = vpop.f32.mrf.mxu0
  %v2252 = vadd.f32 %v2203, %v2251
  %2253 = vmatmul.bf16.gmra.mxu0 %v761
  %v2254 = vpop.f32.mrf.mxu0
  %v2255 = vadd.f32 %v2206, %v2254
  %v2256 = vpop.f32.mrf.mxu0
  %v2257 = vadd.f32 %v2208, %v2256
  %2258 = vmatmul.bf16.gmra.mxu0 %v775
  %v2259 = vpop.f32.mrf.mxu0
  %v2260 = vadd.f32 %v2211, %v2259
  %v2261 = vpop.f32.mrf.mxu0
  %v2262 = vadd.f32 %v2213, %v2261
  %2263 = vmatmul.bf16.gmra.mxu0 %v789
  %v2264 = vpop.f32.mrf.mxu0
  %v2265 = vadd.f32 %v2216, %v2264
  %v2266 = vpop.f32.mrf.mxu0
  %v2267 = vadd.f32 %v2218, %v2266
  %2268 = vmatmul.bf16.gmra.mxu0 %v803
  %v2269 = vpop.f32.mrf.mxu0
  %v2270 = vadd.f32 %v2221, %v2269
  %v2271 = vpop.f32.mrf.mxu0
  %v2272 = vadd.f32 %v2223, %v2271
  %2273 = vdwg.mxu0
  %v2274 = vld [vmem:[%s2] sm:$0x1]
  %v2276 = vperm.slane %v2274, 0
  %v2278 = vmul.f32 %v2235, %v2276
  %v2279 = vmul.f32 %v2237, %v2276
  %v2280 = vmul.f32 %v2240, %v2276
  %v2281 = vmul.f32 %v2242, %v2276
  %v2282 = vmul.f32 %v2245, %v2276
  %v2283 = vmul.f32 %v2247, %v2276
  %v2284 = vmul.f32 %v2250, %v2276
  %v2285 = vmul.f32 %v2252, %v2276
  %v2286 = vmul.f32 %v2255, %v2276
  %v2287 = vmul.f32 %v2257, %v2276
  %v2288 = vmul.f32 %v2260, %v2276
  %v2289 = vmul.f32 %v2262, %v2276
  %v2290 = vmul.f32 %v2265, %v2276
  %v2291 = vmul.f32 %v2267, %v2276
  %v2292 = vmul.f32 %v2270, %v2276
  %v2293 = vmul.f32 %v2272, %v2276
  %v2294 = vld [vmem:[%s3] sm:$0x1]
  %v2296 = vperm.slane %v2294, 0
  %v2298 = vadd.f32 %v2278, %v2296
  %v2299 = vadd.f32 %v2279, %v2296
  %v2300 = vadd.f32 %v2280, %v2296
  %v2301 = vadd.f32 %v2281, %v2296
  %v2302 = vadd.f32 %v2282, %v2296
  %v2303 = vadd.f32 %v2283, %v2296
  %v2304 = vadd.f32 %v2284, %v2296
  %v2305 = vadd.f32 %v2285, %v2296
  %v2306 = vadd.f32 %v2286, %v2296
  %v2307 = vadd.f32 %v2287, %v2296
  %v2308 = vadd.f32 %v2288, %v2296
  %v2309 = vadd.f32 %v2289, %v2296
  %v2310 = vadd.f32 %v2290, %v2296
  %v2311 = vadd.f32 %v2291, %v2296
  %v2312 = vadd.f32 %v2292, %v2296
  %v2313 = vadd.f32 %v2293, %v2296
  %v2314 = vld [vmem:[%s4] sm:$0xff]
  %v2315 = vld [vmem:[%s4 + $0x8] sm:$0xff]
  %v2316 = vld [vmem:[%s4 + $0x10] sm:$0xff]
  %v2317 = vld [vmem:[%s4 + $0x18] sm:$0xff]
  %v2318 = vld [vmem:[%s4 + $0x20] sm:$0xff]
  %v2319 = vld [vmem:[%s4 + $0x28] sm:$0xff]
  %v2320 = vld [vmem:[%s4 + $0x30] sm:$0xff]
  %v2321 = vld [vmem:[%s4 + $0x38] sm:$0xff]
  %v2322 = vld [vmem:[%s4 + $0x40] sm:$0xff]
  %v2323 = vld [vmem:[%s4 + $0x48] sm:$0xff]
  %v2324 = vld [vmem:[%s4 + $0x50] sm:$0xff]
  %v2325 = vld [vmem:[%s4 + $0x58] sm:$0xff]
  %v2326 = vld [vmem:[%s4 + $0x60] sm:$0xff]
  %v2327 = vld [vmem:[%s4 + $0x68] sm:$0xff]
  %v2328 = vld [vmem:[%s4 + $0x70] sm:$0xff]
  %v2329 = vld [vmem:[%s4 + $0x78] sm:$0xff]
  %v2330 = vadd.f32 %v2298, %v2314
  %v2331 = vadd.f32 %v2299, %v2315
  %v2332 = vadd.f32 %v2300, %v2316
  %v2333 = vadd.f32 %v2301, %v2317
  %v2334 = vadd.f32 %v2302, %v2318
  %v2335 = vadd.f32 %v2303, %v2319
  %v2336 = vadd.f32 %v2304, %v2320
  %v2337 = vadd.f32 %v2305, %v2321
  %v2338 = vadd.f32 %v2306, %v2322
  %v2339 = vadd.f32 %v2307, %v2323
  %v2340 = vadd.f32 %v2308, %v2324
  %v2341 = vadd.f32 %v2309, %v2325
  %v2342 = vadd.f32 %v2310, %v2326
  %v2343 = vadd.f32 %v2311, %v2327
  %v2344 = vadd.f32 %v2312, %v2328
  %v2345 = vadd.f32 %v2313, %v2329
  %v2346 = vmax.f32 %v2330, 0.0
  %v2347 = vmax.f32 %v2331, 0.0
  %v2348 = vmax.f32 %v2332, 0.0
  %v2349 = vmax.f32 %v2333, 0.0
  %v2350 = vmax.f32 %v2334, 0.0
  %v2351 = vmax.f32 %v2335, 0.0
  %v2352 = vmax.f32 %v2336, 0.0
  %v2353 = vmax.f32 %v2337, 0.0
  %v2354 = vmax.f32 %v2338, 0.0
  %v2355 = vmax.f32 %v2339, 0.0
  %v2356 = vmax.f32 %v2340, 0.0
  %v2357 = vmax.f32 %v2341, 0.0
  %v2358 = vmax.f32 %v2342, 0.0
  %v2359 = vmax.f32 %v2343, 0.0
  %v2360 = vmax.f32 %v2344, 0.0
  %v2361 = vmax.f32 %v2345, 0.0
  %vm2362 = vcmask 523264
  %2363 = vst.msk [vmem:[%s5] sm:$0xff] %vm2362, %v2346
  %2364 = vst.msk [vmem:[%s5 + $0x8] sm:$0xff] %vm2362, %v2347
  %2365 = vst.msk [vmem:[%s5 + $0x10] sm:$0xff] %vm2362, %v2348
  %2366 = vst.msk [vmem:[%s5 + $0x18] sm:$0xff] %vm2362, %v2349
  %2367 = vst.msk [vmem:[%s5 + $0x20] sm:$0xff] %vm2362, %v2350
  %2368 = vst.msk [vmem:[%s5 + $0x28] sm:$0xff] %vm2362, %v2351
  %2369 = vst.msk [vmem:[%s5 + $0x30] sm:$0xff] %vm2362, %v2352
  %2370 = vst.msk [vmem:[%s5 + $0x38] sm:$0xff] %vm2362, %v2353
  %2371 = vst.msk [vmem:[%s5 + $0x40] sm:$0xff] %vm2362, %v2354
  %2372 = vst.msk [vmem:[%s5 + $0x48] sm:$0xff] %vm2362, %v2355
  %2373 = vst.msk [vmem:[%s5 + $0x50] sm:$0xff] %vm2362, %v2356
  %2374 = vst.msk [vmem:[%s5 + $0x58] sm:$0xff] %vm2362, %v2357
  %2375 = vst.msk [vmem:[%s5 + $0x60] sm:$0xff] %vm2362, %v2358
  %2376 = vst.msk [vmem:[%s5 + $0x68] sm:$0xff] %vm2362, %v2359
  %2377 = vst.msk [vmem:[%s5 + $0x70] sm:$0xff] %vm2362, %v2360
  %2378 = vst.msk [vmem:[%s5 + $0x78] sm:$0xff] %vm2362, %v2361
  // Predicated region
  $region22: #{ggo_forward.17} parent=0 // pred_check
    _
  $region23: #{ggo_forward.17} parent=0 // pred_check_branch
    %2380 = sbr.rel (0) target = $region25
  $region24: #{ggo_forward.17} parent=0 // pred_region
    _
  $region25: #{ggo_forward.17} parent=0 // pred_fallthru
    _
  // Predicated region
  $region26: #{ggo_forward.17} parent=0 // pred_check
    _
  $region27: #{ggo_forward.17} parent=0 // pred_check_branch
    %2382 = sbr.rel (0) target = $region29
  $region28: #{ggo_forward.17} parent=0 // pred_region
    _
  $region29: #{ggo_forward.17} parent=0 // pred_fallthru
    _

// kernel: ggo_forward.18
$region0: #{ggo_forward.18}
  #allocation0 [shape = 'u32[]', space=smem, size = 0x4, offset = 0x4, fixed_abs, tag = 'smem constant byte address 0x4 - core index']
  #allocation1 [shape = 'u32[72,128]{1,0:T(1,128)}', space=vmem, size = 0x9000, scoped, tag = 'internal scratch']
  %s0 = inlined_call_operand.vmem [shape: bf16[128,1792], index: 0, kind: input, shape index: {}]
  %s1 = inlined_call_operand.vmem [shape: bf16[1792,64], index: 1, kind: input, shape index: {}]
  %s2 = inlined_call_operand.vmem [shape: f32[1,64], index: 2, kind: input, shape index: {}]
  %s3 = inlined_call_operand.vmem [shape: f32[1,64], index: 3, kind: input, shape index: {}]
  %s4 = inlined_call_operand.vmem [shape: f32[128,64], index: 4, kind: output, shape index: {}]
  %s5 = sld [smem:[#allocation0]]
  $region26: #{ggo_forward.18} parent=0
    _
  %s7 = ssub.s32 1, %s5
  %s8 = scalar_select 0, %s7, %s5
  // Predicated region
  $region2: #{ggo_forward.18} parent=0 // pred_check
    _
  $region3: #{ggo_forward.18} parent=0 // pred_check_branch
    %10 = sbr.rel (0) target = $region5
  $region4: #{ggo_forward.18} parent=0 // pred_region
    _
  $region5: #{ggo_forward.18} parent=0 // pred_fallthru
    _
  // Predicated region
  $region6: #{ggo_forward.18} parent=0 // pred_check
    _
  $region7: #{ggo_forward.18} parent=0 // pred_check_branch
    %12 = sbr.rel (0) target = $region9
  $region8: #{ggo_forward.18} parent=0 // pred_region
    _
  $region9: #{ggo_forward.18} parent=0 // pred_fallthru
    _
  // Predicated region
  $region10: #{ggo_forward.18} parent=0 // pred_check
    _
  $region11: #{ggo_forward.18} parent=0 // pred_check_branch
    %14 = sbr.rel (0) target = $region13
  $region12: #{ggo_forward.18} parent=0 // pred_region
    _
  $region13: #{ggo_forward.18} parent=0 // pred_fallthru
    _
  // Predicated region
  $region14: #{ggo_forward.18} parent=0 // pred_check
    _
  $region15: #{ggo_forward.18} parent=0 // pred_check_branch
    %16 = sbr.rel (0) target = $region17
  $region16: #{ggo_forward.18} parent=0 // pred_region
    _
  $region17: #{ggo_forward.18} parent=0 // pred_fallthru
    _
  %v17 = vld [vmem:[%s0] sm:$0xff]
  %v18 = vld [vmem:[%s0 + $0x8] sm:$0xff]
  %v19 = vld [vmem:[%s0 + $0x10] sm:$0xff]
  %v20 = vld [vmem:[%s0 + $0x18] sm:$0xff]
  %v21 = vld [vmem:[%s0 + $0x20] sm:$0xff]
  %v22 = vld [vmem:[%s0 + $0x28] sm:$0xff]
  %v23 = vld [vmem:[%s0 + $0x30] sm:$0xff]
  %v24 = vld [vmem:[%s0 + $0x38] sm:$0xff]
  %v25 = vld [vmem:[%s0 + $0x40] sm:$0xff]
  %v26 = vld [vmem:[%s0 + $0x48] sm:$0xff]
  %v27 = vld [vmem:[%s0 + $0x50] sm:$0xff]
  %v28 = vld [vmem:[%s0 + $0x58] sm:$0xff]
  %v29 = vld [vmem:[%s0 + $0x60] sm:$0xff]
  %v30 = vld [vmem:[%s0 + $0x68] sm:$0xff]
  %v31 = vld [vmem:[%s0 + $0x70] sm:$0xff]
  %v32 = vld [vmem:[%s0 + $0x78] sm:$0xff]
  %v33 = vld [vmem:[%s0 + $0x80] sm:$0xff]
  %v34 = vld [vmem:[%s0 + $0x88] sm:$0xff]
  %v35 = vld [vmem:[%s0 + $0x90] sm:$0xff]
  %v36 = vld [vmem:[%s0 + $0x98] sm:$0xff]
  %v37 = vld [vmem:[%s0 + $0xa0] sm:$0xff]
  %v38 = vld [vmem:[%s0 + $0xa8] sm:$0xff]
  %v39 = vld [vmem:[%s0 + $0xb0] sm:$0xff]
  %v40 = vld [vmem:[%s0 + $0xb8] sm:$0xff]
  %v41 = vld [vmem:[%s0 + $0xc0] sm:$0xff]
  %v42 = vld [vmem:[%s0 + $0xc8] sm:$0xff]
  %v43 = vld [vmem:[%s0 + $0xd0] sm:$0xff]
  %v44 = vld [vmem:[%s0 + $0xd8] sm:$0xff]
  %v45 = vld [vmem:[%s0 + $0xe0] sm:$0xff]
  %v46 = vld [vmem:[%s0 + $0xe8] sm:$0xff]
  %v47 = vld [vmem:[%s0 + $0xf0] sm:$0xff]
  %v48 = vld [vmem:[%s0 + $0xf8] sm:$0xff]
  %v49 = vld [vmem:[%s0 + $0x100] sm:$0xff]
  %v50 = vld [vmem:[%s0 + $0x108] sm:$0xff]
  %v51 = vld [vmem:[%s0 + $0x110] sm:$0xff]
  %v52 = vld [vmem:[%s0 + $0x118] sm:$0xff]
  %v53 = vld [vmem:[%s0 + $0x120] sm:$0xff]
  %v54 = vld [vmem:[%s0 + $0x128] sm:$0xff]
  %v55 = vld [vmem:[%s0 + $0x130] sm:$0xff]
  %v56 = vld [vmem:[%s0 + $0x138] sm:$0xff]
  %v57 = vld [vmem:[%s0 + $0x140] sm:$0xff]
  %v58 = vld [vmem:[%s0 + $0x148] sm:$0xff]
  %v59 = vld [vmem:[%s0 + $0x150] sm:$0xff]
  %v60 = vld [vmem:[%s0 + $0x158] sm:$0xff]
  %v61 = vld [vmem:[%s0 + $0x160] sm:$0xff]
  %v62 = vld [vmem:[%s0 + $0x168] sm:$0xff]
  %v63 = vld [vmem:[%s0 + $0x170] sm:$0xff]
  %v64 = vld [vmem:[%s0 + $0x178] sm:$0xff]
  %v65 = vld [vmem:[%s0 + $0x180] sm:$0xff]
  %v66 = vld [vmem:[%s0 + $0x188] sm:$0xff]
  %v67 = vld [vmem:[%s0 + $0x190] sm:$0xff]
  %v68 = vld [vmem:[%s0 + $0x198] sm:$0xff]
  %v69 = vld [vmem:[%s0 + $0x1a0] sm:$0xff]
  %v70 = vld [vmem:[%s0 + $0x1a8] sm:$0xff]
  %v71 = vld [vmem:[%s0 + $0x1b0] sm:$0xff]
  %v72 = vld [vmem:[%s0 + $0x1b8] sm:$0xff]
  %v73 = vld [vmem:[%s0 + $0x1c0] sm:$0xff]
  %v74 = vld [vmem:[%s0 + $0x1c8] sm:$0xff]
  %v75 = vld [vmem:[%s0 + $0x1d0] sm:$0xff]
  %v76 = vld [vmem:[%s0 + $0x1d8] sm:$0xff]
  %v77 = vld [vmem:[%s0 + $0x1e0] sm:$0xff]
  %v78 = vld [vmem:[%s0 + $0x1e8] sm:$0xff]
  %v79 = vld [vmem:[%s0 + $0x1f0] sm:$0xff]
  %v80 = vld [vmem:[%s0 + $0x1f8] sm:$0xff]
  %v81 = vld [vmem:[%s0 + $0x200] sm:$0xff]
  %v82 = vld [vmem:[%s0 + $0x208] sm:$0xff]
  %v83 = vld [vmem:[%s0 + $0x210] sm:$0xff]
  %v84 = vld [vmem:[%s0 + $0x218] sm:$0xff]
  %v85 = vld [vmem:[%s0 + $0x220] sm:$0xff]
  %v86 = vld [vmem:[%s0 + $0x228] sm:$0xff]
  %v87 = vld [vmem:[%s0 + $0x230] sm:$0xff]
  %v88 = vld [vmem:[%s0 + $0x238] sm:$0xff]
  %v89 = vld [vmem:[%s0 + $0x240] sm:$0xff]
  %v90 = vld [vmem:[%s0 + $0x248] sm:$0xff]
  %v91 = vld [vmem:[%s0 + $0x250] sm:$0xff]
  %v92 = vld [vmem:[%s0 + $0x258] sm:$0xff]
  %v93 = vld [vmem:[%s0 + $0x260] sm:$0xff]
  %v94 = vld [vmem:[%s0 + $0x268] sm:$0xff]
  %v95 = vld [vmem:[%s0 + $0x270] sm:$0xff]
  %v96 = vld [vmem:[%s0 + $0x278] sm:$0xff]
  %v97 = vld [vmem:[%s0 + $0x280] sm:$0xff]
  %v98 = vld [vmem:[%s0 + $0x288] sm:$0xff]
  %v99 = vld [vmem:[%s0 + $0x290] sm:$0xff]
  %v100 = vld [vmem:[%s0 + $0x298] sm:$0xff]
  %v101 = vld [vmem:[%s0 + $0x2a0] sm:$0xff]
  %v102 = vld [vmem:[%s0 + $0x2a8] sm:$0xff]
  %v103 = vld [vmem:[%s0 + $0x2b0] sm:$0xff]
  %v104 = vld [vmem:[%s0 + $0x2b8] sm:$0xff]
  %v105 = vld [vmem:[%s0 + $0x2c0] sm:$0xff]
  %v106 = vld [vmem:[%s0 + $0x2c8] sm:$0xff]
  %v107 = vld [vmem:[%s0 + $0x2d0] sm:$0xff]
  %v108 = vld [vmem:[%s0 + $0x2d8] sm:$0xff]
  %v109 = vld [vmem:[%s0 + $0x2e0] sm:$0xff]
  %v110 = vld [vmem:[%s0 + $0x2e8] sm:$0xff]
  %v111 = vld [vmem:[%s0 + $0x2f0] sm:$0xff]
  %v112 = vld [vmem:[%s0 + $0x2f8] sm:$0xff]
  %v113 = vld [vmem:[%s0 + $0x300] sm:$0xff]
  %v114 = vld [vmem:[%s0 + $0x308] sm:$0xff]
  %v115 = vld [vmem:[%s0 + $0x310] sm:$0xff]
  %v116 = vld [vmem:[%s0 + $0x318] sm:$0xff]
  %v117 = vld [vmem:[%s0 + $0x320] sm:$0xff]
  %v118 = vld [vmem:[%s0 + $0x328] sm:$0xff]
  %v119 = vld [vmem:[%s0 + $0x330] sm:$0xff]
  %v120 = vld [vmem:[%s0 + $0x338] sm:$0xff]
  %v121 = vld [vmem:[%s0 + $0x340] sm:$0xff]
  %v122 = vld [vmem:[%s0 + $0x348] sm:$0xff]
  %v123 = vld [vmem:[%s0 + $0x350] sm:$0xff]
  %v124 = vld [vmem:[%s0 + $0x358] sm:$0xff]
  %v125 = vld [vmem:[%s0 + $0x360] sm:$0xff]
  %v126 = vld [vmem:[%s0 + $0x368] sm:$0xff]
  %v127 = vld [vmem:[%s0 + $0x370] sm:$0xff]
  %v128 = vld [vmem:[%s0 + $0x378] sm:$0xff]
  %v129 = vld [vmem:[%s1] sm:$0xf]
  %v130 = vld [vmem:[%s1 + $0x4] sm:$0xf]
  %v131 = vld [vmem:[%s1 + $0x8] sm:$0xf]
  %v132 = vld [vmem:[%s1 + $0xc] sm:$0xf]
  %v133 = vld [vmem:[%s1 + $0x10] sm:$0xf]
  %v134 = vld [vmem:[%s1 + $0x14] sm:$0xf]
  %v135 = vld [vmem:[%s1 + $0x18] sm:$0xf]
  %v136 = vld [vmem:[%s1 + $0x1c] sm:$0xf]
  %v137 = vld [vmem:[%s1 + $0x20] sm:$0xf]
  %v138 = vld [vmem:[%s1 + $0x24] sm:$0xf]
  %v139 = vld [vmem:[%s1 + $0x28] sm:$0xf]
  %v140 = vld [vmem:[%s1 + $0x2c] sm:$0xf]
  %v141 = vld [vmem:[%s1 + $0x30] sm:$0xf]
  %v142 = vld [vmem:[%s1 + $0x34] sm:$0xf]
  %v143 = vld [vmem:[%s1 + $0x38] sm:$0xf]
  %v144 = vld [vmem:[%s1 + $0x3c] sm:$0xf]
  %v145 = vld [vmem:[%s1 + $0x40] sm:$0xf]
  %v146 = vld [vmem:[%s1 + $0x44] sm:$0xf]
  %v147 = vld [vmem:[%s1 + $0x48] sm:$0xf]
  %v148 = vld [vmem:[%s1 + $0x4c] sm:$0xf]
  %v149 = vld [vmem:[%s1 + $0x50] sm:$0xf]
  %v150 = vld [vmem:[%s1 + $0x54] sm:$0xf]
  %v151 = vld [vmem:[%s1 + $0x58] sm:$0xf]
  %v152 = vld [vmem:[%s1 + $0x5c] sm:$0xf]
  %v153 = vld [vmem:[%s1 + $0x60] sm:$0xf]
  %v154 = vld [vmem:[%s1 + $0x64] sm:$0xf]
  %v155 = vld [vmem:[%s1 + $0x68] sm:$0xf]
  %v156 = vld [vmem:[%s1 + $0x6c] sm:$0xf]
  %v157 = vld [vmem:[%s1 + $0x70] sm:$0xf]
  %v158 = vld [vmem:[%s1 + $0x74] sm:$0xf]
  %v159 = vld [vmem:[%s1 + $0x78] sm:$0xf]
  %v160 = vld [vmem:[%s1 + $0x7c] sm:$0xf]
  %v161 = vld [vmem:[%s1 + $0x80] sm:$0xf]
  %v162 = vld [vmem:[%s1 + $0x84] sm:$0xf]
  %v163 = vld [vmem:[%s1 + $0x88] sm:$0xf]
  %v164 = vld [vmem:[%s1 + $0x8c] sm:$0xf]
  %v165 = vld [vmem:[%s1 + $0x90] sm:$0xf]
  %v166 = vld [vmem:[%s1 + $0x94] sm:$0xf]
  %v167 = vld [vmem:[%s1 + $0x98] sm:$0xf]
  %v168 = vld [vmem:[%s1 + $0x9c] sm:$0xf]
  %v169 = vld [vmem:[%s1 + $0xa0] sm:$0xf]
  %v170 = vld [vmem:[%s1 + $0xa4] sm:$0xf]
  %v171 = vld [vmem:[%s1 + $0xa8] sm:$0xf]
  %v172 = vld [vmem:[%s1 + $0xac] sm:$0xf]
  %v173 = vld [vmem:[%s1 + $0xb0] sm:$0xf]
  %v174 = vld [vmem:[%s1 + $0xb4] sm:$0xf]
  %v175 = vld [vmem:[%s1 + $0xb8] sm:$0xf]
  %v176 = vld [vmem:[%s1 + $0xbc] sm:$0xf]
  %v177 = vld [vmem:[%s1 + $0xc0] sm:$0xf]
  %v178 = vld [vmem:[%s1 + $0xc4] sm:$0xf]
  %v179 = vld [vmem:[%s1 + $0xc8] sm:$0xf]
  %v180 = vld [vmem:[%s1 + $0xcc] sm:$0xf]
  %v181 = vld [vmem:[%s1 + $0xd0] sm:$0xf]
  %v182 = vld [vmem:[%s1 + $0xd4] sm:$0xf]
  %v183 = vld [vmem:[%s1 + $0xd8] sm:$0xf]
  %v184 = vld [vmem:[%s1 + $0xdc] sm:$0xf]
  %v185 = vld [vmem:[%s1 + $0xe0] sm:$0xf]
  %v186 = vld [vmem:[%s1 + $0xe4] sm:$0xf]
  %v187 = vld [vmem:[%s1 + $0xe8] sm:$0xf]
  %v188 = vld [vmem:[%s1 + $0xec] sm:$0xf]
  %v189 = vld [vmem:[%s1 + $0xf0] sm:$0xf]
  %v190 = vld [vmem:[%s1 + $0xf4] sm:$0xf]
  %v191 = vld [vmem:[%s1 + $0xf8] sm:$0xf]
  %v192 = vld [vmem:[%s1 + $0xfc] sm:$0xf]
  %v193 = vld [vmem:[%s1 + $0x100] sm:$0xf]
  %v194 = vld [vmem:[%s1 + $0x104] sm:$0xf]
  %v195 = vld [vmem:[%s1 + $0x108] sm:$0xf]
  %v196 = vld [vmem:[%s1 + $0x10c] sm:$0xf]
  %v197 = vld [vmem:[%s1 + $0x110] sm:$0xf]
  %v198 = vld [vmem:[%s1 + $0x114] sm:$0xf]
  %v199 = vld [vmem:[%s1 + $0x118] sm:$0xf]
  %v200 = vld [vmem:[%s1 + $0x11c] sm:$0xf]
  %v201 = vld [vmem:[%s1 + $0x120] sm:$0xf]
  %v202 = vld [vmem:[%s1 + $0x124] sm:$0xf]
  %v203 = vld [vmem:[%s1 + $0x128] sm:$0xf]
  %v204 = vld [vmem:[%s1 + $0x12c] sm:$0xf]
  %v205 = vld [vmem:[%s1 + $0x130] sm:$0xf]
  %v206 = vld [vmem:[%s1 + $0x134] sm:$0xf]
  %v207 = vld [vmem:[%s1 + $0x138] sm:$0xf]
  %v208 = vld [vmem:[%s1 + $0x13c] sm:$0xf]
  %v209 = vld [vmem:[%s1 + $0x140] sm:$0xf]
  %v210 = vld [vmem:[%s1 + $0x144] sm:$0xf]
  %v211 = vld [vmem:[%s1 + $0x148] sm:$0xf]
  %v212 = vld [vmem:[%s1 + $0x14c] sm:$0xf]
  %v213 = vld [vmem:[%s1 + $0x150] sm:$0xf]
  %v214 = vld [vmem:[%s1 + $0x154] sm:$0xf]
  %v215 = vld [vmem:[%s1 + $0x158] sm:$0xf]
  %v216 = vld [vmem:[%s1 + $0x15c] sm:$0xf]
  %v217 = vld [vmem:[%s1 + $0x160] sm:$0xf]
  %v218 = vld [vmem:[%s1 + $0x164] sm:$0xf]
  %v219 = vld [vmem:[%s1 + $0x168] sm:$0xf]
  %v220 = vld [vmem:[%s1 + $0x16c] sm:$0xf]
  %v221 = vld [vmem:[%s1 + $0x170] sm:$0xf]
  %v222 = vld [vmem:[%s1 + $0x174] sm:$0xf]
  %v223 = vld [vmem:[%s1 + $0x178] sm:$0xf]
  %v224 = vld [vmem:[%s1 + $0x17c] sm:$0xf]
  %v225 = vld [vmem:[%s1 + $0x180] sm:$0xf]
  %v226 = vld [vmem:[%s1 + $0x184] sm:$0xf]
  %v227 = vld [vmem:[%s1 + $0x188] sm:$0xf]
  %v228 = vld [vmem:[%s1 + $0x18c] sm:$0xf]
  %v229 = vld [vmem:[%s1 + $0x190] sm:$0xf]
  %v230 = vld [vmem:[%s1 + $0x194] sm:$0xf]
  %v231 = vld [vmem:[%s1 + $0x198] sm:$0xf]
  %v232 = vld [vmem:[%s1 + $0x19c] sm:$0xf]
  %v233 = vld [vmem:[%s1 + $0x1a0] sm:$0xf]
  %v234 = vld [vmem:[%s1 + $0x1a4] sm:$0xf]
  %v235 = vld [vmem:[%s1 + $0x1a8] sm:$0xf]
  %v236 = vld [vmem:[%s1 + $0x1ac] sm:$0xf]
  %v237 = vld [vmem:[%s1 + $0x1b0] sm:$0xf]
  %v238 = vld [vmem:[%s1 + $0x1b4] sm:$0xf]
  %v239 = vld [vmem:[%s1 + $0x1b8] sm:$0xf]
  %v240 = vld [vmem:[%s1 + $0x1bc] sm:$0xf]
  %v241 = vld [vmem:[%s1 + $0x1c0] sm:$0xf]
  %v242 = vld [vmem:[%s1 + $0x1c4] sm:$0xf]
  %v243 = vld [vmem:[%s1 + $0x1c8] sm:$0xf]
  %v244 = vld [vmem:[%s1 + $0x1cc] sm:$0xf]
  %v245 = vld [vmem:[%s1 + $0x1d0] sm:$0xf]
  %v246 = vld [vmem:[%s1 + $0x1d4] sm:$0xf]
  %v247 = vld [vmem:[%s1 + $0x1d8] sm:$0xf]
  %v248 = vld [vmem:[%s1 + $0x1dc] sm:$0xf]
  %v249 = vld [vmem:[%s1 + $0x1e0] sm:$0xf]
  %v250 = vld [vmem:[%s1 + $0x1e4] sm:$0xf]
  %v251 = vld [vmem:[%s1 + $0x1e8] sm:$0xf]
  %v252 = vld [vmem:[%s1 + $0x1ec] sm:$0xf]
  %v253 = vld [vmem:[%s1 + $0x1f0] sm:$0xf]
  %v254 = vld [vmem:[%s1 + $0x1f4] sm:$0xf]
  %v255 = vld [vmem:[%s1 + $0x1f8] sm:$0xf]
  %v256 = vld [vmem:[%s1 + $0x1fc] sm:$0xf]
  %v257 = vld [vmem:[%s1 + $0x200] sm:$0xf]
  %v258 = vld [vmem:[%s1 + $0x204] sm:$0xf]
  %v259 = vld [vmem:[%s1 + $0x208] sm:$0xf]
  %v260 = vld [vmem:[%s1 + $0x20c] sm:$0xf]
  %v261 = vld [vmem:[%s1 + $0x210] sm:$0xf]
  %v262 = vld [vmem:[%s1 + $0x214] sm:$0xf]
  %v263 = vld [vmem:[%s1 + $0x218] sm:$0xf]
  %v264 = vld [vmem:[%s1 + $0x21c] sm:$0xf]
  %v265 = vld [vmem:[%s1 + $0x220] sm:$0xf]
  %v266 = vld [vmem:[%s1 + $0x224] sm:$0xf]
  %v267 = vld [vmem:[%s1 + $0x228] sm:$0xf]
  %v268 = vld [vmem:[%s1 + $0x22c] sm:$0xf]
  %v269 = vld [vmem:[%s1 + $0x230] sm:$0xf]
  %v270 = vld [vmem:[%s1 + $0x234] sm:$0xf]
  %v271 = vld [vmem:[%s1 + $0x238] sm:$0xf]
  %v272 = vld [vmem:[%s1 + $0x23c] sm:$0xf]
  %v273 = vld [vmem:[%s1 + $0x240] sm:$0xf]
  %v274 = vld [vmem:[%s1 + $0x244] sm:$0xf]
  %v275 = vld [vmem:[%s1 + $0x248] sm:$0xf]
  %v276 = vld [vmem:[%s1 + $0x24c] sm:$0xf]
  %v277 = vld [vmem:[%s1 + $0x250] sm:$0xf]
  %v278 = vld [vmem:[%s1 + $0x254] sm:$0xf]
  %v279 = vld [vmem:[%s1 + $0x258] sm:$0xf]
  %v280 = vld [vmem:[%s1 + $0x25c] sm:$0xf]
  %v281 = vld [vmem:[%s1 + $0x260] sm:$0xf]
  %v282 = vld [vmem:[%s1 + $0x264] sm:$0xf]
  %v283 = vld [vmem:[%s1 + $0x268] sm:$0xf]
  %v284 = vld [vmem:[%s1 + $0x26c] sm:$0xf]
  %v285 = vld [vmem:[%s1 + $0x270] sm:$0xf]
  %v286 = vld [vmem:[%s1 + $0x274] sm:$0xf]
  %v287 = vld [vmem:[%s1 + $0x278] sm:$0xf]
  %v288 = vld [vmem:[%s1 + $0x27c] sm:$0xf]
  %v289 = vld [vmem:[%s1 + $0x280] sm:$0xf]
  %v290 = vld [vmem:[%s1 + $0x284] sm:$0xf]
  %v291 = vld [vmem:[%s1 + $0x288] sm:$0xf]
  %v292 = vld [vmem:[%s1 + $0x28c] sm:$0xf]
  %v293 = vld [vmem:[%s1 + $0x290] sm:$0xf]
  %v294 = vld [vmem:[%s1 + $0x294] sm:$0xf]
  %v295 = vld [vmem:[%s1 + $0x298] sm:$0xf]
  %v296 = vld [vmem:[%s1 + $0x29c] sm:$0xf]
  %v297 = vld [vmem:[%s1 + $0x2a0] sm:$0xf]
  %v298 = vld [vmem:[%s1 + $0x2a4] sm:$0xf]
  %v299 = vld [vmem:[%s1 + $0x2a8] sm:$0xf]
  %v300 = vld [vmem:[%s1 + $0x2ac] sm:$0xf]
  %v301 = vld [vmem:[%s1 + $0x2b0] sm:$0xf]
  %v302 = vld [vmem:[%s1 + $0x2b4] sm:$0xf]
  %v303 = vld [vmem:[%s1 + $0x2b8] sm:$0xf]
  %v304 = vld [vmem:[%s1 + $0x2bc] sm:$0xf]
  %v305 = vld [vmem:[%s1 + $0x2c0] sm:$0xf]
  %v306 = vld [vmem:[%s1 + $0x2c4] sm:$0xf]
  %v307 = vld [vmem:[%s1 + $0x2c8] sm:$0xf]
  %v308 = vld [vmem:[%s1 + $0x2cc] sm:$0xf]
  %v309 = vld [vmem:[%s1 + $0x2d0] sm:$0xf]
  %v310 = vld [vmem:[%s1 + $0x2d4] sm:$0xf]
  %v311 = vld [vmem:[%s1 + $0x2d8] sm:$0xf]
  %v312 = vld [vmem:[%s1 + $0x2dc] sm:$0xf]
  %v313 = vld [vmem:[%s1 + $0x2e0] sm:$0xf]
  %v314 = vld [vmem:[%s1 + $0x2e4] sm:$0xf]
  %v315 = vld [vmem:[%s1 + $0x2e8] sm:$0xf]
  %v316 = vld [vmem:[%s1 + $0x2ec] sm:$0xf]
  %v317 = vld [vmem:[%s1 + $0x2f0] sm:$0xf]
  %v318 = vld [vmem:[%s1 + $0x2f4] sm:$0xf]
  %v319 = vld [vmem:[%s1 + $0x2f8] sm:$0xf]
  %v320 = vld [vmem:[%s1 + $0x2fc] sm:$0xf]
  %v321 = vld [vmem:[%s1 + $0x300] sm:$0xf]
  %v322 = vld [vmem:[%s1 + $0x304] sm:$0xf]
  %v323 = vld [vmem:[%s1 + $0x308] sm:$0xf]
  %v324 = vld [vmem:[%s1 + $0x30c] sm:$0xf]
  %v325 = vld [vmem:[%s1 + $0x310] sm:$0xf]
  %v326 = vld [vmem:[%s1 + $0x314] sm:$0xf]
  %v327 = vld [vmem:[%s1 + $0x318] sm:$0xf]
  %v328 = vld [vmem:[%s1 + $0x31c] sm:$0xf]
  %v329 = vld [vmem:[%s1 + $0x320] sm:$0xf]
  %v330 = vld [vmem:[%s1 + $0x324] sm:$0xf]
  %v331 = vld [vmem:[%s1 + $0x328] sm:$0xf]
  %v332 = vld [vmem:[%s1 + $0x32c] sm:$0xf]
  %v333 = vld [vmem:[%s1 + $0x330] sm:$0xf]
  %v334 = vld [vmem:[%s1 + $0x334] sm:$0xf]
  %v335 = vld [vmem:[%s1 + $0x338] sm:$0xf]
  %v336 = vld [vmem:[%s1 + $0x33c] sm:$0xf]
  %v337 = vld [vmem:[%s1 + $0x340] sm:$0xf]
  %v338 = vld [vmem:[%s1 + $0x344] sm:$0xf]
  %v339 = vld [vmem:[%s1 + $0x348] sm:$0xf]
  %v340 = vld [vmem:[%s1 + $0x34c] sm:$0xf]
  %v341 = vld [vmem:[%s1 + $0x350] sm:$0xf]
  %v342 = vld [vmem:[%s1 + $0x354] sm:$0xf]
  %v343 = vld [vmem:[%s1 + $0x358] sm:$0xf]
  %v344 = vld [vmem:[%s1 + $0x35c] sm:$0xf]
  %v345 = vld [vmem:[%s1 + $0x360] sm:$0xf]
  %v346 = vld [vmem:[%s1 + $0x364] sm:$0xf]
  %v347 = vld [vmem:[%s1 + $0x368] sm:$0xf]
  %v348 = vld [vmem:[%s1 + $0x36c] sm:$0xf]
  %v349 = vld [vmem:[%s1 + $0x370] sm:$0xf]
  %v350 = vld [vmem:[%s1 + $0x374] sm:$0xf]
  %v351 = vld [vmem:[%s1 + $0x378] sm:$0xf]
  %v352 = vld [vmem:[%s1 + $0x37c] sm:$0xf]
  %v465 = vunpack.c.l.b16 %v17
  %v466 = vunpack.c.h.b16 %v17
  %v467 = vunpack.c.l.b16 %v18
  %v468 = vunpack.c.h.b16 %v18
  %v469 = vunpack.c.l.b16 %v19
  %v470 = vunpack.c.h.b16 %v19
  %v471 = vunpack.c.l.b16 %v20
  %v472 = vunpack.c.h.b16 %v20
  %v473 = vunpack.c.l.b16 %v21
  %v474 = vunpack.c.h.b16 %v21
  %v475 = vunpack.c.l.b16 %v22
  %v476 = vunpack.c.h.b16 %v22
  %v477 = vunpack.c.l.b16 %v23
  %v478 = vunpack.c.h.b16 %v23
  %v479 = vunpack.c.l.b16 %v24
  %v480 = vunpack.c.h.b16 %v24
  %v481 = vunpack.c.l.b16 %v25
  %v482 = vunpack.c.h.b16 %v25
  %v483 = vunpack.c.l.b16 %v26
  %v484 = vunpack.c.h.b16 %v26
  %v485 = vunpack.c.l.b16 %v27
  %v486 = vunpack.c.h.b16 %v27
  %v487 = vunpack.c.l.b16 %v28
  %v488 = vunpack.c.h.b16 %v28
  %v489 = vunpack.c.l.b16 %v29
  %v490 = vunpack.c.h.b16 %v29
  %v491 = vunpack.c.l.b16 %v30
  %v492 = vunpack.c.h.b16 %v30
  %v493 = vunpack.c.l.b16 %v31
  %v494 = vunpack.c.h.b16 %v31
  %v495 = vunpack.c.l.b16 %v32
  %v496 = vunpack.c.h.b16 %v32
  %v497 = vunpack.c.l.b16 %v33
  %v498 = vunpack.c.h.b16 %v33
  %v499 = vunpack.c.l.b16 %v34
  %v500 = vunpack.c.h.b16 %v34
  %v501 = vunpack.c.l.b16 %v35
  %v502 = vunpack.c.h.b16 %v35
  %v503 = vunpack.c.l.b16 %v36
  %v504 = vunpack.c.h.b16 %v36
  %v505 = vunpack.c.l.b16 %v37
  %v506 = vunpack.c.h.b16 %v37
  %v507 = vunpack.c.l.b16 %v38
  %v508 = vunpack.c.h.b16 %v38
  %v509 = vunpack.c.l.b16 %v39
  %v510 = vunpack.c.h.b16 %v39
  %v511 = vunpack.c.l.b16 %v40
  %v512 = vunpack.c.h.b16 %v40
  %v513 = vunpack.c.l.b16 %v41
  %v514 = vunpack.c.h.b16 %v41
  %v515 = vunpack.c.l.b16 %v42
  %v516 = vunpack.c.h.b16 %v42
  %v517 = vunpack.c.l.b16 %v43
  %v518 = vunpack.c.h.b16 %v43
  %v519 = vunpack.c.l.b16 %v44
  %v520 = vunpack.c.h.b16 %v44
  %v521 = vunpack.c.l.b16 %v45
  %v522 = vunpack.c.h.b16 %v45
  %v523 = vunpack.c.l.b16 %v46
  %v524 = vunpack.c.h.b16 %v46
  %v525 = vunpack.c.l.b16 %v47
  %v526 = vunpack.c.h.b16 %v47
  %v527 = vunpack.c.l.b16 %v48
  %v528 = vunpack.c.h.b16 %v48
  %v529 = vunpack.c.l.b16 %v49
  %v530 = vunpack.c.h.b16 %v49
  %v531 = vunpack.c.l.b16 %v50
  %v532 = vunpack.c.h.b16 %v50
  %v533 = vunpack.c.l.b16 %v51
  %v534 = vunpack.c.h.b16 %v51
  %v535 = vunpack.c.l.b16 %v52
  %v536 = vunpack.c.h.b16 %v52
  %v537 = vunpack.c.l.b16 %v53
  %v538 = vunpack.c.h.b16 %v53
  %v539 = vunpack.c.l.b16 %v54
  %v540 = vunpack.c.h.b16 %v54
  %v541 = vunpack.c.l.b16 %v55
  %v542 = vunpack.c.h.b16 %v55
  %v543 = vunpack.c.l.b16 %v56
  %v544 = vunpack.c.h.b16 %v56
  %v545 = vunpack.c.l.b16 %v57
  %v546 = vunpack.c.h.b16 %v57
  %v547 = vunpack.c.l.b16 %v58
  %v548 = vunpack.c.h.b16 %v58
  %v549 = vunpack.c.l.b16 %v59
  %v550 = vunpack.c.h.b16 %v59
  %v551 = vunpack.c.l.b16 %v60
  %v552 = vunpack.c.h.b16 %v60
  %v553 = vunpack.c.l.b16 %v61
  %v554 = vunpack.c.h.b16 %v61
  %v555 = vunpack.c.l.b16 %v62
  %v556 = vunpack.c.h.b16 %v62
  %v557 = vunpack.c.l.b16 %v63
  %v558 = vunpack.c.h.b16 %v63
  %v559 = vunpack.c.l.b16 %v64
  %v560 = vunpack.c.h.b16 %v64
  %v561 = vunpack.c.l.b16 %v65
  %v562 = vunpack.c.h.b16 %v65
  %v563 = vunpack.c.l.b16 %v66
  %v564 = vunpack.c.h.b16 %v66
  %v565 = vunpack.c.l.b16 %v67
  %v566 = vunpack.c.h.b16 %v67
  %v567 = vunpack.c.l.b16 %v68
  %v568 = vunpack.c.h.b16 %v68
  %v569 = vunpack.c.l.b16 %v69
  %v570 = vunpack.c.h.b16 %v69
  %v571 = vunpack.c.l.b16 %v70
  %v572 = vunpack.c.h.b16 %v70
  %v573 = vunpack.c.l.b16 %v71
  %v574 = vunpack.c.h.b16 %v71
  %v575 = vunpack.c.l.b16 %v72
  %v576 = vunpack.c.h.b16 %v72
  %v577 = vunpack.c.l.b16 %v73
  %v578 = vunpack.c.h.b16 %v73
  %v579 = vunpack.c.l.b16 %v74
  %v580 = vunpack.c.h.b16 %v74
  %v581 = vunpack.c.l.b16 %v75
  %v582 = vunpack.c.h.b16 %v75
  %v583 = vunpack.c.l.b16 %v76
  %v584 = vunpack.c.h.b16 %v76
  %v585 = vunpack.c.l.b16 %v77
  %v586 = vunpack.c.h.b16 %v77
  %v587 = vunpack.c.l.b16 %v78
  %v588 = vunpack.c.h.b16 %v78
  %v589 = vunpack.c.l.b16 %v79
  %v590 = vunpack.c.h.b16 %v79
  %v591 = vunpack.c.l.b16 %v80
  %v592 = vunpack.c.h.b16 %v80
  %v593 = vunpack.c.l.b16 %v81
  %v594 = vunpack.c.h.b16 %v81
  %v595 = vunpack.c.l.b16 %v82
  %v596 = vunpack.c.h.b16 %v82
  %v597 = vunpack.c.l.b16 %v83
  %v598 = vunpack.c.h.b16 %v83
  %v599 = vunpack.c.l.b16 %v84
  %v600 = vunpack.c.h.b16 %v84
  %v601 = vunpack.c.l.b16 %v85
  %v602 = vunpack.c.h.b16 %v85
  %v603 = vunpack.c.l.b16 %v86
  %v604 = vunpack.c.h.b16 %v86
  %v605 = vunpack.c.l.b16 %v87
  %v606 = vunpack.c.h.b16 %v87
  %v607 = vunpack.c.l.b16 %v88
  %v608 = vunpack.c.h.b16 %v88
  %v609 = vunpack.c.l.b16 %v89
  %v610 = vunpack.c.h.b16 %v89
  %v611 = vunpack.c.l.b16 %v90
  %v612 = vunpack.c.h.b16 %v90
  %v613 = vunpack.c.l.b16 %v91
  %v614 = vunpack.c.h.b16 %v91
  %v615 = vunpack.c.l.b16 %v92
  %v616 = vunpack.c.h.b16 %v92
  %v617 = vunpack.c.l.b16 %v93
  %v618 = vunpack.c.h.b16 %v93
  %v619 = vunpack.c.l.b16 %v94
  %v620 = vunpack.c.h.b16 %v94
  %v621 = vunpack.c.l.b16 %v95
  %v622 = vunpack.c.h.b16 %v95
  %v623 = vunpack.c.l.b16 %v96
  %v624 = vunpack.c.h.b16 %v96
  %v625 = vunpack.c.l.b16 %v97
  %v626 = vunpack.c.h.b16 %v97
  %v627 = vunpack.c.l.b16 %v98
  %v628 = vunpack.c.h.b16 %v98
  %v629 = vunpack.c.l.b16 %v99
  %v630 = vunpack.c.h.b16 %v99
  %v631 = vunpack.c.l.b16 %v100
  %v632 = vunpack.c.h.b16 %v100
  %v633 = vunpack.c.l.b16 %v101
  %v634 = vunpack.c.h.b16 %v101
  %v635 = vunpack.c.l.b16 %v102
  %v636 = vunpack.c.h.b16 %v102
  %v637 = vunpack.c.l.b16 %v103
  %v638 = vunpack.c.h.b16 %v103
  %v639 = vunpack.c.l.b16 %v104
  %v640 = vunpack.c.h.b16 %v104
  %v641 = vunpack.c.l.b16 %v105
  %v642 = vunpack.c.h.b16 %v105
  %v643 = vunpack.c.l.b16 %v106
  %v644 = vunpack.c.h.b16 %v106
  %v645 = vunpack.c.l.b16 %v107
  %v646 = vunpack.c.h.b16 %v107
  %v647 = vunpack.c.l.b16 %v108
  %v648 = vunpack.c.h.b16 %v108
  %v649 = vunpack.c.l.b16 %v109
  %v650 = vunpack.c.h.b16 %v109
  %v651 = vunpack.c.l.b16 %v110
  %v652 = vunpack.c.h.b16 %v110
  %v653 = vunpack.c.l.b16 %v111
  %v654 = vunpack.c.h.b16 %v111
  %v655 = vunpack.c.l.b16 %v112
  %v656 = vunpack.c.h.b16 %v112
  %v657 = vunpack.c.l.b16 %v113
  %v658 = vunpack.c.h.b16 %v113
  %v659 = vunpack.c.l.b16 %v114
  %v660 = vunpack.c.h.b16 %v114
  %v661 = vunpack.c.l.b16 %v115
  %v662 = vunpack.c.h.b16 %v115
  %v663 = vunpack.c.l.b16 %v116
  %v664 = vunpack.c.h.b16 %v116
  %v665 = vunpack.c.l.b16 %v117
  %v666 = vunpack.c.h.b16 %v117
  %v667 = vunpack.c.l.b16 %v118
  %v668 = vunpack.c.h.b16 %v118
  %v669 = vunpack.c.l.b16 %v119
  %v670 = vunpack.c.h.b16 %v119
  %v671 = vunpack.c.l.b16 %v120
  %v672 = vunpack.c.h.b16 %v120
  %v673 = vunpack.c.l.b16 %v121
  %v674 = vunpack.c.h.b16 %v121
  %v675 = vunpack.c.l.b16 %v122
  %v676 = vunpack.c.h.b16 %v122
  %v677 = vunpack.c.l.b16 %v123
  %v678 = vunpack.c.h.b16 %v123
  %v679 = vunpack.c.l.b16 %v124
  %v680 = vunpack.c.h.b16 %v124
  %v681 = vunpack.c.l.b16 %v125
  %v682 = vunpack.c.h.b16 %v125
  %v683 = vunpack.c.l.b16 %v126
  %v684 = vunpack.c.h.b16 %v126
  %v685 = vunpack.c.l.b16 %v127
  %v686 = vunpack.c.h.b16 %v127
  %v687 = vunpack.c.l.b16 %v128
  %v688 = vunpack.c.h.b16 %v128
  %v689 = vpack.c.b16 %v479, %v465
  %v690 = vpack.c.b16 %v480, %v466
  %v691 = vpack.c.b16 %v481, %v467
  %v692 = vpack.c.b16 %v482, %v468
  %v693 = vpack.c.b16 %v483, %v469
  %v694 = vpack.c.b16 %v484, %v470
  %v695 = vpack.c.b16 %v485, %v471
  %v696 = vpack.c.b16 %v486, %v472
  %v697 = vpack.c.b16 %v487, %v473
  %v698 = vpack.c.b16 %v488, %v474
  %v699 = vpack.c.b16 %v489, %v475
  %v700 = vpack.c.b16 %v490, %v476
  %v701 = vpack.c.b16 %v491, %v477
  %v702 = vpack.c.b16 %v492, %v478
  %v703 = vpack.c.b16 %v507, %v493
  %v704 = vpack.c.b16 %v508, %v494
  %v705 = vpack.c.b16 %v509, %v495
  %v706 = vpack.c.b16 %v510, %v496
  %v707 = vpack.c.b16 %v511, %v497
  %v708 = vpack.c.b16 %v512, %v498
  %v709 = vpack.c.b16 %v513, %v499
  %v710 = vpack.c.b16 %v514, %v500
  %v711 = vpack.c.b16 %v515, %v501
  %v712 = vpack.c.b16 %v516, %v502
  %v713 = vpack.c.b16 %v517, %v503
  %v714 = vpack.c.b16 %v518, %v504
  %v715 = vpack.c.b16 %v519, %v505
  %v716 = vpack.c.b16 %v520, %v506
  %v717 = vpack.c.b16 %v535, %v521
  %v718 = vpack.c.b16 %v536, %v522
  %v719 = vpack.c.b16 %v537, %v523
  %v720 = vpack.c.b16 %v538, %v524
  %v721 = vpack.c.b16 %v539, %v525
  %v722 = vpack.c.b16 %v540, %v526
  %v723 = vpack.c.b16 %v541, %v527
  %v724 = vpack.c.b16 %v542, %v528
  %v725 = vpack.c.b16 %v543, %v529
  %v726 = vpack.c.b16 %v544, %v530
  %v727 = vpack.c.b16 %v545, %v531
  %v728 = vpack.c.b16 %v546, %v532
  %v729 = vpack.c.b16 %v547, %v533
  %v730 = vpack.c.b16 %v548, %v534
  %v731 = vpack.c.b16 %v563, %v549
  %v732 = vpack.c.b16 %v564, %v550
  %v733 = vpack.c.b16 %v565, %v551
  %v734 = vpack.c.b16 %v566, %v552
  %v735 = vpack.c.b16 %v567, %v553
  %v736 = vpack.c.b16 %v568, %v554
  %v737 = vpack.c.b16 %v569, %v555
  %v738 = vpack.c.b16 %v570, %v556
  %v739 = vpack.c.b16 %v571, %v557
  %v740 = vpack.c.b16 %v572, %v558
  %v741 = vpack.c.b16 %v573, %v559
  %v742 = vpack.c.b16 %v574, %v560
  %v743 = vpack.c.b16 %v575, %v561
  %v744 = vpack.c.b16 %v576, %v562
  %v745 = vpack.c.b16 %v591, %v577
  %v746 = vpack.c.b16 %v592, %v578
  %v747 = vpack.c.b16 %v593, %v579
  %v748 = vpack.c.b16 %v594, %v580
  %v749 = vpack.c.b16 %v595, %v581
  %v750 = vpack.c.b16 %v596, %v582
  %v751 = vpack.c.b16 %v597, %v583
  %v752 = vpack.c.b16 %v598, %v584
  %v753 = vpack.c.b16 %v599, %v585
  %v754 = vpack.c.b16 %v600, %v586
  %v755 = vpack.c.b16 %v601, %v587
  %v756 = vpack.c.b16 %v602, %v588
  %v757 = vpack.c.b16 %v603, %v589
  %v758 = vpack.c.b16 %v604, %v590
  %v759 = vpack.c.b16 %v619, %v605
  %v760 = vpack.c.b16 %v620, %v606
  %v761 = vpack.c.b16 %v621, %v607
  %v762 = vpack.c.b16 %v622, %v608
  %v763 = vpack.c.b16 %v623, %v609
  %v764 = vpack.c.b16 %v624, %v610
  %v765 = vpack.c.b16 %v625, %v611
  %v766 = vpack.c.b16 %v626, %v612
  %v767 = vpack.c.b16 %v627, %v613
  %v768 = vpack.c.b16 %v628, %v614
  %v769 = vpack.c.b16 %v629, %v615
  %v770 = vpack.c.b16 %v630, %v616
  %v771 = vpack.c.b16 %v631, %v617
  %v772 = vpack.c.b16 %v632, %v618
  %v773 = vpack.c.b16 %v647, %v633
  %v774 = vpack.c.b16 %v648, %v634
  %v775 = vpack.c.b16 %v649, %v635
  %v776 = vpack.c.b16 %v650, %v636
  %v777 = vpack.c.b16 %v651, %v637
  %v778 = vpack.c.b16 %v652, %v638
  %v779 = vpack.c.b16 %v653, %v639
  %v780 = vpack.c.b16 %v654, %v640
  %v781 = vpack.c.b16 %v655, %v641
  %v782 = vpack.c.b16 %v656, %v642
  %v783 = vpack.c.b16 %v657, %v643
  %v784 = vpack.c.b16 %v658, %v644
  %v785 = vpack.c.b16 %v659, %v645
  %v786 = vpack.c.b16 %v660, %v646
  %v787 = vpack.c.b16 %v675, %v661
  %v788 = vpack.c.b16 %v676, %v662
  %v789 = vpack.c.b16 %v677, %v663
  %v790 = vpack.c.b16 %v678, %v664
  %v791 = vpack.c.b16 %v679, %v665
  %v792 = vpack.c.b16 %v680, %v666
  %v793 = vpack.c.b16 %v681, %v667
  %v794 = vpack.c.b16 %v682, %v668
  %v795 = vpack.c.b16 %v683, %v669
  %v796 = vpack.c.b16 %v684, %v670
  %v797 = vpack.c.b16 %v685, %v671
  %v798 = vpack.c.b16 %v686, %v672
  %v799 = vpack.c.b16 %v687, %v673
  %v800 = vpack.c.b16 %v688, %v674
  %v1137 = vunpack.c.l.b16 %v129
  %v1138 = vunpack.c.l.b16 %v130
  %v1139 = vunpack.c.l.b16 %v131
  %v1140 = vunpack.c.l.b16 %v132
  %v1141 = vunpack.c.l.b16 %v133
  %v1142 = vunpack.c.l.b16 %v134
  %v1143 = vunpack.c.l.b16 %v135
  %v1144 = vunpack.c.l.b16 %v136
  %v1145 = vunpack.c.l.b16 %v137
  %v1146 = vunpack.c.l.b16 %v138
  %v1147 = vunpack.c.l.b16 %v139
  %v1148 = vunpack.c.l.b16 %v140
  %v1149 = vunpack.c.l.b16 %v141
  %v1150 = vunpack.c.l.b16 %v142
  %v1151 = vunpack.c.l.b16 %v143
  %v1152 = vunpack.c.l.b16 %v144
  %v1153 = vunpack.c.l.b16 %v145
  %v1154 = vunpack.c.l.b16 %v146
  %v1155 = vunpack.c.l.b16 %v147
  %v1156 = vunpack.c.l.b16 %v148
  %v1157 = vunpack.c.l.b16 %v149
  %v1158 = vunpack.c.l.b16 %v150
  %v1159 = vunpack.c.l.b16 %v151
  %v1160 = vunpack.c.l.b16 %v152
  %v1161 = vunpack.c.l.b16 %v153
  %v1162 = vunpack.c.l.b16 %v154
  %v1163 = vunpack.c.l.b16 %v155
  %v1164 = vunpack.c.l.b16 %v156
  %v1165 = vunpack.c.l.b16 %v157
  %v1166 = vunpack.c.l.b16 %v158
  %v1167 = vunpack.c.l.b16 %v159
  %v1168 = vunpack.c.l.b16 %v160
  %v1169 = vunpack.c.l.b16 %v161
  %v1170 = vunpack.c.l.b16 %v162
  %v1171 = vunpack.c.l.b16 %v163
  %v1172 = vunpack.c.l.b16 %v164
  %v1173 = vunpack.c.l.b16 %v165
  %v1174 = vunpack.c.l.b16 %v166
  %v1175 = vunpack.c.l.b16 %v167
  %v1176 = vunpack.c.l.b16 %v168
  %v1177 = vunpack.c.l.b16 %v169
  %v1178 = vunpack.c.l.b16 %v170
  %v1179 = vunpack.c.l.b16 %v171
  %v1180 = vunpack.c.l.b16 %v172
  %v1181 = vunpack.c.l.b16 %v173
  %v1182 = vunpack.c.l.b16 %v174
  %v1183 = vunpack.c.l.b16 %v175
  %v1184 = vunpack.c.l.b16 %v176
  %v1185 = vunpack.c.l.b16 %v177
  %v1186 = vunpack.c.l.b16 %v178
  %v1187 = vunpack.c.l.b16 %v179
  %v1188 = vunpack.c.l.b16 %v180
  %v1189 = vunpack.c.l.b16 %v181
  %v1190 = vunpack.c.l.b16 %v182
  %v1191 = vunpack.c.l.b16 %v183
  %v1192 = vunpack.c.l.b16 %v184
  %v1193 = vunpack.c.l.b16 %v185
  %v1194 = vunpack.c.l.b16 %v186
  %v1195 = vunpack.c.l.b16 %v187
  %v1196 = vunpack.c.l.b16 %v188
  %v1197 = vunpack.c.l.b16 %v189
  %v1198 = vunpack.c.l.b16 %v190
  %v1199 = vunpack.c.l.b16 %v191
  %v1200 = vunpack.c.l.b16 %v192
  %v1201 = vunpack.c.l.b16 %v193
  %v1202 = vunpack.c.l.b16 %v194
  %v1203 = vunpack.c.l.b16 %v195
  %v1204 = vunpack.c.l.b16 %v196
  %v1205 = vunpack.c.l.b16 %v197
  %v1206 = vunpack.c.l.b16 %v198
  %v1207 = vunpack.c.l.b16 %v199
  %v1208 = vunpack.c.l.b16 %v200
  %v1209 = vunpack.c.l.b16 %v201
  %v1210 = vunpack.c.l.b16 %v202
  %v1211 = vunpack.c.l.b16 %v203
  %v1212 = vunpack.c.l.b16 %v204
  %v1213 = vunpack.c.l.b16 %v205
  %v1214 = vunpack.c.l.b16 %v206
  %v1215 = vunpack.c.l.b16 %v207
  %v1216 = vunpack.c.l.b16 %v208
  %v1217 = vunpack.c.l.b16 %v209
  %v1218 = vunpack.c.l.b16 %v210
  %v1219 = vunpack.c.l.b16 %v211
  %v1220 = vunpack.c.l.b16 %v212
  %v1221 = vunpack.c.l.b16 %v213
  %v1222 = vunpack.c.l.b16 %v214
  %v1223 = vunpack.c.l.b16 %v215
  %v1224 = vunpack.c.l.b16 %v216
  %v1225 = vunpack.c.l.b16 %v217
  %v1226 = vunpack.c.l.b16 %v218
  %v1227 = vunpack.c.l.b16 %v219
  %v1228 = vunpack.c.l.b16 %v220
  %v1229 = vunpack.c.l.b16 %v221
  %v1230 = vunpack.c.l.b16 %v222
  %v1231 = vunpack.c.l.b16 %v223
  %v1232 = vunpack.c.l.b16 %v224
  %v1233 = vunpack.c.l.b16 %v225
  %v1234 = vunpack.c.l.b16 %v226
  %v1235 = vunpack.c.l.b16 %v227
  %v1236 = vunpack.c.l.b16 %v228
  %v1237 = vunpack.c.l.b16 %v229
  %v1238 = vunpack.c.l.b16 %v230
  %v1239 = vunpack.c.l.b16 %v231
  %v1240 = vunpack.c.l.b16 %v232
  %v1241 = vunpack.c.l.b16 %v233
  %v1242 = vunpack.c.l.b16 %v234
  %v1243 = vunpack.c.l.b16 %v235
  %v1244 = vunpack.c.l.b16 %v236
  %v1245 = vunpack.c.l.b16 %v237
  %v1246 = vunpack.c.l.b16 %v238
  %v1247 = vunpack.c.l.b16 %v239
  %v1248 = vunpack.c.l.b16 %v240
  %v1249 = vunpack.c.l.b16 %v241
  %v1250 = vunpack.c.l.b16 %v242
  %v1251 = vunpack.c.l.b16 %v243
  %v1252 = vunpack.c.l.b16 %v244
  %v1253 = vunpack.c.l.b16 %v245
  %v1254 = vunpack.c.l.b16 %v246
  %v1255 = vunpack.c.l.b16 %v247
  %v1256 = vunpack.c.l.b16 %v248
  %v1257 = vunpack.c.l.b16 %v249
  %v1258 = vunpack.c.l.b16 %v250
  %v1259 = vunpack.c.l.b16 %v251
  %v1260 = vunpack.c.l.b16 %v252
  %v1261 = vunpack.c.l.b16 %v253
  %v1262 = vunpack.c.l.b16 %v254
  %v1263 = vunpack.c.l.b16 %v255
  %v1264 = vunpack.c.l.b16 %v256
  %v1265 = vunpack.c.l.b16 %v257
  %v1266 = vunpack.c.l.b16 %v258
  %v1267 = vunpack.c.l.b16 %v259
  %v1268 = vunpack.c.l.b16 %v260
  %v1269 = vunpack.c.l.b16 %v261
  %v1270 = vunpack.c.l.b16 %v262
  %v1271 = vunpack.c.l.b16 %v263
  %v1272 = vunpack.c.l.b16 %v264
  %v1273 = vunpack.c.l.b16 %v265
  %v1274 = vunpack.c.l.b16 %v266
  %v1275 = vunpack.c.l.b16 %v267
  %v1276 = vunpack.c.l.b16 %v268
  %v1277 = vunpack.c.l.b16 %v269
  %v1278 = vunpack.c.l.b16 %v270
  %v1279 = vunpack.c.l.b16 %v271
  %v1280 = vunpack.c.l.b16 %v272
  %v1281 = vunpack.c.l.b16 %v273
  %v1282 = vunpack.c.l.b16 %v274
  %v1283 = vunpack.c.l.b16 %v275
  %v1284 = vunpack.c.l.b16 %v276
  %v1285 = vunpack.c.l.b16 %v277
  %v1286 = vunpack.c.l.b16 %v278
  %v1287 = vunpack.c.l.b16 %v279
  %v1288 = vunpack.c.l.b16 %v280
  %v1289 = vunpack.c.l.b16 %v281
  %v1290 = vunpack.c.l.b16 %v282
  %v1291 = vunpack.c.l.b16 %v283
  %v1292 = vunpack.c.l.b16 %v284
  %v1293 = vunpack.c.l.b16 %v285
  %v1294 = vunpack.c.l.b16 %v286
  %v1295 = vunpack.c.l.b16 %v287
  %v1296 = vunpack.c.l.b16 %v288
  %v1297 = vunpack.c.l.b16 %v289
  %v1298 = vunpack.c.l.b16 %v290
  %v1299 = vunpack.c.l.b16 %v291
  %v1300 = vunpack.c.l.b16 %v292
  %v1301 = vunpack.c.l.b16 %v293
  %v1302 = vunpack.c.l.b16 %v294
  %v1303 = vunpack.c.l.b16 %v295
  %v1304 = vunpack.c.l.b16 %v296
  %v1305 = vunpack.c.l.b16 %v297
  %v1306 = vunpack.c.l.b16 %v298
  %v1307 = vunpack.c.l.b16 %v299
  %v1308 = vunpack.c.l.b16 %v300
  %v1309 = vunpack.c.l.b16 %v301
  %v1310 = vunpack.c.l.b16 %v302
  %v1311 = vunpack.c.l.b16 %v303
  %v1312 = vunpack.c.l.b16 %v304
  %v1313 = vunpack.c.l.b16 %v305
  %v1314 = vunpack.c.l.b16 %v306
  %v1315 = vunpack.c.l.b16 %v307
  %v1316 = vunpack.c.l.b16 %v308
  %v1317 = vunpack.c.l.b16 %v309
  %v1318 = vunpack.c.l.b16 %v310
  %v1319 = vunpack.c.l.b16 %v311
  %v1320 = vunpack.c.l.b16 %v312
  %v1321 = vunpack.c.l.b16 %v313
  %v1322 = vunpack.c.l.b16 %v314
  %v1323 = vunpack.c.l.b16 %v315
  %v1324 = vunpack.c.l.b16 %v316
  %v1325 = vunpack.c.l.b16 %v317
  %v1326 = vunpack.c.l.b16 %v318
  %v1327 = vunpack.c.l.b16 %v319
  %v1328 = vunpack.c.l.b16 %v320
  %v1329 = vunpack.c.l.b16 %v321
  %v1330 = vunpack.c.l.b16 %v322
  %v1331 = vunpack.c.l.b16 %v323
  %v1332 = vunpack.c.l.b16 %v324
  %v1333 = vunpack.c.l.b16 %v325
  %v1334 = vunpack.c.l.b16 %v326
  %v1335 = vunpack.c.l.b16 %v327
  %v1336 = vunpack.c.l.b16 %v328
  %v1337 = vunpack.c.l.b16 %v329
  %v1338 = vunpack.c.l.b16 %v330
  %v1339 = vunpack.c.l.b16 %v331
  %v1340 = vunpack.c.l.b16 %v332
  %v1341 = vunpack.c.l.b16 %v333
  %v1342 = vunpack.c.l.b16 %v334
  %v1343 = vunpack.c.l.b16 %v335
  %v1344 = vunpack.c.l.b16 %v336
  %v1345 = vunpack.c.l.b16 %v337
  %v1346 = vunpack.c.l.b16 %v338
  %v1347 = vunpack.c.l.b16 %v339
  %v1348 = vunpack.c.l.b16 %v340
  %v1349 = vunpack.c.l.b16 %v341
  %v1350 = vunpack.c.l.b16 %v342
  %v1351 = vunpack.c.l.b16 %v343
  %v1352 = vunpack.c.l.b16 %v344
  %v1353 = vunpack.c.l.b16 %v345
  %v1354 = vunpack.c.l.b16 %v346
  %v1355 = vunpack.c.l.b16 %v347
  %v1356 = vunpack.c.l.b16 %v348
  %v1357 = vunpack.c.l.b16 %v349
  %v1358 = vunpack.c.l.b16 %v350
  %v1359 = vunpack.c.l.b16 %v351
  %v1360 = vunpack.c.l.b16 %v352
  %v1361 = vpack.c.b16 %v1138, %v1137
  %v1362 = vpack.c.b16 %v1140, %v1139
  %v1363 = vpack.c.b16 %v1142, %v1141
  %v1364 = vpack.c.b16 %v1144, %v1143
  %v1365 = vpack.c.b16 %v1146, %v1145
  %v1366 = vpack.c.b16 %v1148, %v1147
  %v1367 = vpack.c.b16 %v1150, %v1149
  %v1368 = vpack.c.b16 %v1152, %v1151
  %v1369 = vpack.c.b16 %v1154, %v1153
  %v1370 = vpack.c.b16 %v1156, %v1155
  %v1371 = vpack.c.b16 %v1158, %v1157
  %v1372 = vpack.c.b16 %v1160, %v1159
  %v1373 = vpack.c.b16 %v1162, %v1161
  %v1374 = vpack.c.b16 %v1164, %v1163
  %v1375 = vpack.c.b16 %v1166, %v1165
  %v1376 = vpack.c.b16 %v1168, %v1167
  %v1377 = vpack.c.b16 %v1170, %v1169
  %v1378 = vpack.c.b16 %v1172, %v1171
  %v1379 = vpack.c.b16 %v1174, %v1173
  %v1380 = vpack.c.b16 %v1176, %v1175
  %v1381 = vpack.c.b16 %v1178, %v1177
  %v1382 = vpack.c.b16 %v1180, %v1179
  %v1383 = vpack.c.b16 %v1182, %v1181
  %v1384 = vpack.c.b16 %v1184, %v1183
  %v1385 = vpack.c.b16 %v1186, %v1185
  %v1386 = vpack.c.b16 %v1188, %v1187
  %v1387 = vpack.c.b16 %v1190, %v1189
  %v1388 = vpack.c.b16 %v1192, %v1191
  %v1389 = vpack.c.b16 %v1194, %v1193
  %v1390 = vpack.c.b16 %v1196, %v1195
  %v1391 = vpack.c.b16 %v1198, %v1197
  %v1392 = vpack.c.b16 %v1200, %v1199
  %v1393 = vpack.c.b16 %v1202, %v1201
  %v1394 = vpack.c.b16 %v1204, %v1203
  %v1395 = vpack.c.b16 %v1206, %v1205
  %v1396 = vpack.c.b16 %v1208, %v1207
  %v1397 = vpack.c.b16 %v1210, %v1209
  %v1398 = vpack.c.b16 %v1212, %v1211
  %v1399 = vpack.c.b16 %v1214, %v1213
  %v1400 = vpack.c.b16 %v1216, %v1215
  %v1401 = vpack.c.b16 %v1218, %v1217
  %v1402 = vpack.c.b16 %v1220, %v1219
  %v1403 = vpack.c.b16 %v1222, %v1221
  %v1404 = vpack.c.b16 %v1224, %v1223
  %v1405 = vpack.c.b16 %v1226, %v1225
  %v1406 = vpack.c.b16 %v1228, %v1227
  %v1407 = vpack.c.b16 %v1230, %v1229
  %v1408 = vpack.c.b16 %v1232, %v1231
  %v1409 = vpack.c.b16 %v1234, %v1233
  %v1410 = vpack.c.b16 %v1236, %v1235
  %v1411 = vpack.c.b16 %v1238, %v1237
  %v1412 = vpack.c.b16 %v1240, %v1239
  %v1413 = vpack.c.b16 %v1242, %v1241
  %v1414 = vpack.c.b16 %v1244, %v1243
  %v1415 = vpack.c.b16 %v1246, %v1245
  %v1416 = vpack.c.b16 %v1248, %v1247
  %v1417 = vpack.c.b16 %v1250, %v1249
  %v1418 = vpack.c.b16 %v1252, %v1251
  %v1419 = vpack.c.b16 %v1254, %v1253
  %v1420 = vpack.c.b16 %v1256, %v1255
  %v1421 = vpack.c.b16 %v1258, %v1257
  %v1422 = vpack.c.b16 %v1260, %v1259
  %v1423 = vpack.c.b16 %v1262, %v1261
  %v1424 = vpack.c.b16 %v1264, %v1263
  %v1425 = vpack.c.b16 %v1266, %v1265
  %v1426 = vpack.c.b16 %v1268, %v1267
  %v1427 = vpack.c.b16 %v1270, %v1269
  %v1428 = vpack.c.b16 %v1272, %v1271
  %v1429 = vpack.c.b16 %v1274, %v1273
  %v1430 = vpack.c.b16 %v1276, %v1275
  %v1431 = vpack.c.b16 %v1278, %v1277
  %v1432 = vpack.c.b16 %v1280, %v1279
  %v1433 = vpack.c.b16 %v1282, %v1281
  %v1434 = vpack.c.b16 %v1284, %v1283
  %v1435 = vpack.c.b16 %v1286, %v1285
  %v1436 = vpack.c.b16 %v1288, %v1287
  %v1437 = vpack.c.b16 %v1290, %v1289
  %v1438 = vpack.c.b16 %v1292, %v1291
  %v1439 = vpack.c.b16 %v1294, %v1293
  %v1440 = vpack.c.b16 %v1296, %v1295
  %v1441 = vpack.c.b16 %v1298, %v1297
  %v1442 = vpack.c.b16 %v1300, %v1299
  %v1443 = vpack.c.b16 %v1302, %v1301
  %v1444 = vpack.c.b16 %v1304, %v1303
  %v1445 = vpack.c.b16 %v1306, %v1305
  %v1446 = vpack.c.b16 %v1308, %v1307
  %v1447 = vpack.c.b16 %v1310, %v1309
  %v1448 = vpack.c.b16 %v1312, %v1311
  %v1449 = vpack.c.b16 %v1314, %v1313
  %v1450 = vpack.c.b16 %v1316, %v1315
  %v1451 = vpack.c.b16 %v1318, %v1317
  %v1452 = vpack.c.b16 %v1320, %v1319
  %v1453 = vpack.c.b16 %v1322, %v1321
  %v1454 = vpack.c.b16 %v1324, %v1323
  %v1455 = vpack.c.b16 %v1326, %v1325
  %v1456 = vpack.c.b16 %v1328, %v1327
  %v1457 = vpack.c.b16 %v1330, %v1329
  %v1458 = vpack.c.b16 %v1332, %v1331
  %v1459 = vpack.c.b16 %v1334, %v1333
  %v1460 = vpack.c.b16 %v1336, %v1335
  %v1461 = vpack.c.b16 %v1338, %v1337
  %v1462 = vpack.c.b16 %v1340, %v1339
  %v1463 = vpack.c.b16 %v1342, %v1341
  %v1464 = vpack.c.b16 %v1344, %v1343
  %v1465 = vpack.c.b16 %v1346, %v1345
  %v1466 = vpack.c.b16 %v1348, %v1347
  %v1467 = vpack.c.b16 %v1350, %v1349
  %v1468 = vpack.c.b16 %v1352, %v1351
  %v1469 = vpack.c.b16 %v1354, %v1353
  %v1470 = vpack.c.b16 %v1356, %v1355
  %v1471 = vpack.c.b16 %v1358, %v1357
  %v1472 = vpack.c.b16 %v1360, %v1359
  %1585 = vmatpush.bf16.msra.mxu0 %v1368
  %1586 = vmatpush.bf16.msra.mxu0 %v1367
  %1587 = vmatpush.bf16.msra.mxu0 %v1366
  %1588 = vmatpush.bf16.msra.mxu0 %v1365
  %1589 = vmatpush.bf16.msra.mxu0 %v1364
  %1590 = vmatpush.bf16.msra.mxu0 %v1363
  %1591 = vmatpush.bf16.msra.mxu0 %v1362
  %1592 = vmatpush.bf16.msra.mxu0 %v1361
  %1593 = vmatmul.bf16.gmra.mxu0 %v689
  %v1594 = vpop.f32.mrf.mxu0
  %v1595 = vadd.f32 0.0, %v1594
  %v1596 = vpop.f32.mrf.mxu0
  %v1597 = vadd.f32 0.0, %v1596
  %1598 = vmatmul.bf16.gmra.mxu0 %v703
  %v1599 = vpop.f32.mrf.mxu0
  %v1600 = vadd.f32 0.0, %v1599
  %v1601 = vpop.f32.mrf.mxu0
  %v1602 = vadd.f32 0.0, %v1601
  %1603 = vmatmul.bf16.gmra.mxu0 %v717
  %v1604 = vpop.f32.mrf.mxu0
  %v1605 = vadd.f32 0.0, %v1604
  %v1606 = vpop.f32.mrf.mxu0
  %v1607 = vadd.f32 0.0, %v1606
  %1608 = vmatmul.bf16.gmra.mxu0 %v731
  %v1609 = vpop.f32.mrf.mxu0
  %v1610 = vadd.f32 0.0, %v1609
  %v1611 = vpop.f32.mrf.mxu0
  %v1612 = vadd.f32 0.0, %v1611
  %1613 = vmatmul.bf16.gmra.mxu0 %v745
  %v1614 = vpop.f32.mrf.mxu0
  %v1615 = vadd.f32 0.0, %v1614
  %v1616 = vpop.f32.mrf.mxu0
  %v1617 = vadd.f32 0.0, %v1616
  %1618 = vmatmul.bf16.gmra.mxu0 %v759
  %v1619 = vpop.f32.mrf.mxu0
  %v1620 = vadd.f32 0.0, %v1619
  %v1621 = vpop.f32.mrf.mxu0
  %v1622 = vadd.f32 0.0, %v1621
  %1623 = vmatmul.bf16.gmra.mxu0 %v773
  %v1624 = vpop.f32.mrf.mxu0
  %v1625 = vadd.f32 0.0, %v1624
  %v1626 = vpop.f32.mrf.mxu0
  %v1627 = vadd.f32 0.0, %v1626
  %1628 = vmatmul.bf16.gmra.mxu0 %v787
  %v1629 = vpop.f32.mrf.mxu0
  %v1630 = vadd.f32 0.0, %v1629
  %v1631 = vpop.f32.mrf.mxu0
  %v1632 = vadd.f32 0.0, %v1631
  %1633 = vdwg.mxu0
  %1634 = vmatpush.bf16.msra.mxu0 %v1376
  %1635 = vmatpush.bf16.msra.mxu0 %v1375
  %1636 = vmatpush.bf16.msra.mxu0 %v1374
  %1637 = vmatpush.bf16.msra.mxu0 %v1373
  %1638 = vmatpush.bf16.msra.mxu0 %v1372
  %1639 = vmatpush.bf16.msra.mxu0 %v1371
  %1640 = vmatpush.bf16.msra.mxu0 %v1370
  %1641 = vmatpush.bf16.msra.mxu0 %v1369
  %1642 = vmatmul.bf16.gmra.mxu0 %v690
  %v1643 = vpop.f32.mrf.mxu0
  %v1644 = vadd.f32 %v1595, %v1643
  %v1645 = vpop.f32.mrf.mxu0
  %v1646 = vadd.f32 %v1597, %v1645
  %1647 = vmatmul.bf16.gmra.mxu0 %v704
  %v1648 = vpop.f32.mrf.mxu0
  %v1649 = vadd.f32 %v1600, %v1648
  %v1650 = vpop.f32.mrf.mxu0
  %v1651 = vadd.f32 %v1602, %v1650
  %1652 = vmatmul.bf16.gmra.mxu0 %v718
  %v1653 = vpop.f32.mrf.mxu0
  %v1654 = vadd.f32 %v1605, %v1653
  %v1655 = vpop.f32.mrf.mxu0
  %v1656 = vadd.f32 %v1607, %v1655
  %1657 = vmatmul.bf16.gmra.mxu0 %v732
  %v1658 = vpop.f32.mrf.mxu0
  %v1659 = vadd.f32 %v1610, %v1658
  %v1660 = vpop.f32.mrf.mxu0
  %v1661 = vadd.f32 %v1612, %v1660
  %1662 = vmatmul.bf16.gmra.mxu0 %v746
  %v1663 = vpop.f32.mrf.mxu0
  %v1664 = vadd.f32 %v1615, %v1663
  %v1665 = vpop.f32.mrf.mxu0
  %v1666 = vadd.f32 %v1617, %v1665
  %1667 = vmatmul.bf16.gmra.mxu0 %v760
  %v1668 = vpop.f32.mrf.mxu0
  %v1669 = vadd.f32 %v1620, %v1668
  %v1670 = vpop.f32.mrf.mxu0
  %v1671 = vadd.f32 %v1622, %v1670
  %1672 = vmatmul.bf16.gmra.mxu0 %v774
  %v1673 = vpop.f32.mrf.mxu0
  %v1674 = vadd.f32 %v1625, %v1673
  %v1675 = vpop.f32.mrf.mxu0
  %v1676 = vadd.f32 %v1627, %v1675
  %1677 = vmatmul.bf16.gmra.mxu0 %v788
  %v1678 = vpop.f32.mrf.mxu0
  %v1679 = vadd.f32 %v1630, %v1678
  %v1680 = vpop.f32.mrf.mxu0
  %v1681 = vadd.f32 %v1632, %v1680
  %1682 = vdwg.mxu0
  %1683 = vmatpush.bf16.msra.mxu0 %v1384
  %1684 = vmatpush.bf16.msra.mxu0 %v1383
  %1685 = vmatpush.bf16.msra.mxu0 %v1382
  %1686 = vmatpush.bf16.msra.mxu0 %v1381
  %1687 = vmatpush.bf16.msra.mxu0 %v1380
  %1688 = vmatpush.bf16.msra.mxu0 %v1379
  %1689 = vmatpush.bf16.msra.mxu0 %v1378
  %1690 = vmatpush.bf16.msra.mxu0 %v1377
  %1691 = vmatmul.bf16.gmra.mxu0 %v691
  %v1692 = vpop.f32.mrf.mxu0
  %v1693 = vadd.f32 %v1644, %v1692
  %v1694 = vpop.f32.mrf.mxu0
  %v1695 = vadd.f32 %v1646, %v1694
  %1696 = vmatmul.bf16.gmra.mxu0 %v705
  %v1697 = vpop.f32.mrf.mxu0
  %v1698 = vadd.f32 %v1649, %v1697
  %v1699 = vpop.f32.mrf.mxu0
  %v1700 = vadd.f32 %v1651, %v1699
  %1701 = vmatmul.bf16.gmra.mxu0 %v719
  %v1702 = vpop.f32.mrf.mxu0
  %v1703 = vadd.f32 %v1654, %v1702
  %v1704 = vpop.f32.mrf.mxu0
  %v1705 = vadd.f32 %v1656, %v1704
  %1706 = vmatmul.bf16.gmra.mxu0 %v733
  %v1707 = vpop.f32.mrf.mxu0
  %v1708 = vadd.f32 %v1659, %v1707
  %v1709 = vpop.f32.mrf.mxu0
  %v1710 = vadd.f32 %v1661, %v1709
  %1711 = vmatmul.bf16.gmra.mxu0 %v747
  %v1712 = vpop.f32.mrf.mxu0
  %v1713 = vadd.f32 %v1664, %v1712
  %v1714 = vpop.f32.mrf.mxu0
  %v1715 = vadd.f32 %v1666, %v1714
  %1716 = vmatmul.bf16.gmra.mxu0 %v761
  %v1717 = vpop.f32.mrf.mxu0
  %v1718 = vadd.f32 %v1669, %v1717
  %v1719 = vpop.f32.mrf.mxu0
  %v1720 = vadd.f32 %v1671, %v1719
  %1721 = vmatmul.bf16.gmra.mxu0 %v775
  %v1722 = vpop.f32.mrf.mxu0
  %v1723 = vadd.f32 %v1674, %v1722
  %v1724 = vpop.f32.mrf.mxu0
  %v1725 = vadd.f32 %v1676, %v1724
  %1726 = vmatmul.bf16.gmra.mxu0 %v789
  %v1727 = vpop.f32.mrf.mxu0
  %v1728 = vadd.f32 %v1679, %v1727
  %v1729 = vpop.f32.mrf.mxu0
  %v1730 = vadd.f32 %v1681, %v1729
  %1731 = vdwg.mxu0
  %1732 = vmatpush.bf16.msra.mxu0 %v1392
  %1733 = vmatpush.bf16.msra.mxu0 %v1391
  %1734 = vmatpush.bf16.msra.mxu0 %v1390
  %1735 = vmatpush.bf16.msra.mxu0 %v1389
  %1736 = vmatpush.bf16.msra.mxu0 %v1388
  %1737 = vmatpush.bf16.msra.mxu0 %v1387
  %1738 = vmatpush.bf16.msra.mxu0 %v1386
  %1739 = vmatpush.bf16.msra.mxu0 %v1385
  %1740 = vmatmul.bf16.gmra.mxu0 %v692
  %v1741 = vpop.f32.mrf.mxu0
  %v1742 = vadd.f32 %v1693, %v1741
  %v1743 = vpop.f32.mrf.mxu0
  %v1744 = vadd.f32 %v1695, %v1743
  %1745 = vmatmul.bf16.gmra.mxu0 %v706
  %v1746 = vpop.f32.mrf.mxu0
  %v1747 = vadd.f32 %v1698, %v1746
  %v1748 = vpop.f32.mrf.mxu0
  %v1749 = vadd.f32 %v1700, %v1748
  %1750 = vmatmul.bf16.gmra.mxu0 %v720
  %v1751 = vpop.f32.mrf.mxu0
  %v1752 = vadd.f32 %v1703, %v1751
  %v1753 = vpop.f32.mrf.mxu0
  %v1754 = vadd.f32 %v1705, %v1753
  %1755 = vmatmul.bf16.gmra.mxu0 %v734
  %v1756 = vpop.f32.mrf.mxu0
  %v1757 = vadd.f32 %v1708, %v1756
  %v1758 = vpop.f32.mrf.mxu0
  %v1759 = vadd.f32 %v1710, %v1758
  %1760 = vmatmul.bf16.gmra.mxu0 %v748
  %v1761 = vpop.f32.mrf.mxu0
  %v1762 = vadd.f32 %v1713, %v1761
  %v1763 = vpop.f32.mrf.mxu0
  %v1764 = vadd.f32 %v1715, %v1763
  %1765 = vmatmul.bf16.gmra.mxu0 %v762
  %v1766 = vpop.f32.mrf.mxu0
  %v1767 = vadd.f32 %v1718, %v1766
  %v1768 = vpop.f32.mrf.mxu0
  %v1769 = vadd.f32 %v1720, %v1768
  %1770 = vmatmul.bf16.gmra.mxu0 %v776
  %v1771 = vpop.f32.mrf.mxu0
  %v1772 = vadd.f32 %v1723, %v1771
  %v1773 = vpop.f32.mrf.mxu0
  %v1774 = vadd.f32 %v1725, %v1773
  %1775 = vmatmul.bf16.gmra.mxu0 %v790
  %v1776 = vpop.f32.mrf.mxu0
  %v1777 = vadd.f32 %v1728, %v1776
  %v1778 = vpop.f32.mrf.mxu0
  %v1779 = vadd.f32 %v1730, %v1778
  %1780 = vdwg.mxu0
  %1781 = vmatpush.bf16.msra.mxu0 %v1400
  %1782 = vmatpush.bf16.msra.mxu0 %v1399
  %1783 = vmatpush.bf16.msra.mxu0 %v1398
  %1784 = vmatpush.bf16.msra.mxu0 %v1397
  %1785 = vmatpush.bf16.msra.mxu0 %v1396
  %1786 = vmatpush.bf16.msra.mxu0 %v1395
  %1787 = vmatpush.bf16.msra.mxu0 %v1394
  %1788 = vmatpush.bf16.msra.mxu0 %v1393
  %1789 = vmatmul.bf16.gmra.mxu0 %v693
  %v1790 = vpop.f32.mrf.mxu0
  %v1791 = vadd.f32 %v1742, %v1790
  %v1792 = vpop.f32.mrf.mxu0
  %v1793 = vadd.f32 %v1744, %v1792
  %1794 = vmatmul.bf16.gmra.mxu0 %v707
  %v1795 = vpop.f32.mrf.mxu0
  %v1796 = vadd.f32 %v1747, %v1795
  %v1797 = vpop.f32.mrf.mxu0
  %v1798 = vadd.f32 %v1749, %v1797
  %1799 = vmatmul.bf16.gmra.mxu0 %v721
  %v1800 = vpop.f32.mrf.mxu0
  %v1801 = vadd.f32 %v1752, %v1800
  %v1802 = vpop.f32.mrf.mxu0
  %v1803 = vadd.f32 %v1754, %v1802
  %1804 = vmatmul.bf16.gmra.mxu0 %v735
  %v1805 = vpop.f32.mrf.mxu0
  %v1806 = vadd.f32 %v1757, %v1805
  %v1807 = vpop.f32.mrf.mxu0
  %v1808 = vadd.f32 %v1759, %v1807
  %1809 = vmatmul.bf16.gmra.mxu0 %v749
  %v1810 = vpop.f32.mrf.mxu0
  %v1811 = vadd.f32 %v1762, %v1810
  %v1812 = vpop.f32.mrf.mxu0
  %v1813 = vadd.f32 %v1764, %v1812
  %1814 = vmatmul.bf16.gmra.mxu0 %v763
  %v1815 = vpop.f32.mrf.mxu0
  %v1816 = vadd.f32 %v1767, %v1815
  %v1817 = vpop.f32.mrf.mxu0
  %v1818 = vadd.f32 %v1769, %v1817
  %1819 = vmatmul.bf16.gmra.mxu0 %v777
  %v1820 = vpop.f32.mrf.mxu0
  %v1821 = vadd.f32 %v1772, %v1820
  %v1822 = vpop.f32.mrf.mxu0
  %v1823 = vadd.f32 %v1774, %v1822
  %1824 = vmatmul.bf16.gmra.mxu0 %v791
  %v1825 = vpop.f32.mrf.mxu0
  %v1826 = vadd.f32 %v1777, %v1825
  %v1827 = vpop.f32.mrf.mxu0
  %v1828 = vadd.f32 %v1779, %v1827
  %1829 = vdwg.mxu0
  %1830 = vmatpush.bf16.msra.mxu0 %v1408
  %1831 = vmatpush.bf16.msra.mxu0 %v1407
  %1832 = vmatpush.bf16.msra.mxu0 %v1406
  %1833 = vmatpush.bf16.msra.mxu0 %v1405
  %1834 = vmatpush.bf16.msra.mxu0 %v1404
  %1835 = vmatpush.bf16.msra.mxu0 %v1403
  %1836 = vmatpush.bf16.msra.mxu0 %v1402
  %1837 = vmatpush.bf16.msra.mxu0 %v1401
  %1838 = vmatmul.bf16.gmra.mxu0 %v694
  %v1839 = vpop.f32.mrf.mxu0
  %v1840 = vadd.f32 %v1791, %v1839
  %v1841 = vpop.f32.mrf.mxu0
  %v1842 = vadd.f32 %v1793, %v1841
  %1843 = vmatmul.bf16.gmra.mxu0 %v708
  %v1844 = vpop.f32.mrf.mxu0
  %v1845 = vadd.f32 %v1796, %v1844
  %v1846 = vpop.f32.mrf.mxu0
  %v1847 = vadd.f32 %v1798, %v1846
  %1848 = vmatmul.bf16.gmra.mxu0 %v722
  %v1849 = vpop.f32.mrf.mxu0
  %v1850 = vadd.f32 %v1801, %v1849
  %v1851 = vpop.f32.mrf.mxu0
  %v1852 = vadd.f32 %v1803, %v1851
  %1853 = vmatmul.bf16.gmra.mxu0 %v736
  %v1854 = vpop.f32.mrf.mxu0
  %v1855 = vadd.f32 %v1806, %v1854
  %v1856 = vpop.f32.mrf.mxu0
  %v1857 = vadd.f32 %v1808, %v1856
  %1858 = vmatmul.bf16.gmra.mxu0 %v750
  %v1859 = vpop.f32.mrf.mxu0
  %v1860 = vadd.f32 %v1811, %v1859
  %v1861 = vpop.f32.mrf.mxu0
  %v1862 = vadd.f32 %v1813, %v1861
  %1863 = vmatmul.bf16.gmra.mxu0 %v764
  %v1864 = vpop.f32.mrf.mxu0
  %v1865 = vadd.f32 %v1816, %v1864
  %v1866 = vpop.f32.mrf.mxu0
  %v1867 = vadd.f32 %v1818, %v1866
  %1868 = vmatmul.bf16.gmra.mxu0 %v778
  %v1869 = vpop.f32.mrf.mxu0
  %v1870 = vadd.f32 %v1821, %v1869
  %v1871 = vpop.f32.mrf.mxu0
  %v1872 = vadd.f32 %v1823, %v1871
  %1873 = vmatmul.bf16.gmra.mxu0 %v792
  %v1874 = vpop.f32.mrf.mxu0
  %v1875 = vadd.f32 %v1826, %v1874
  %v1876 = vpop.f32.mrf.mxu0
  %v1877 = vadd.f32 %v1828, %v1876
  %1878 = vdwg.mxu0
  %1879 = vmatpush.bf16.msra.mxu0 %v1416
  %1880 = vmatpush.bf16.msra.mxu0 %v1415
  %1881 = vmatpush.bf16.msra.mxu0 %v1414
  %1882 = vmatpush.bf16.msra.mxu0 %v1413
  %1883 = vmatpush.bf16.msra.mxu0 %v1412
  %1884 = vmatpush.bf16.msra.mxu0 %v1411
  %1885 = vmatpush.bf16.msra.mxu0 %v1410
  %1886 = vmatpush.bf16.msra.mxu0 %v1409
  %1887 = vmatmul.bf16.gmra.mxu0 %v695
  %v1888 = vpop.f32.mrf.mxu0
  %v1889 = vadd.f32 %v1840, %v1888
  %v1890 = vpop.f32.mrf.mxu0
  %v1891 = vadd.f32 %v1842, %v1890
  %1892 = vmatmul.bf16.gmra.mxu0 %v709
  %v1893 = vpop.f32.mrf.mxu0
  %v1894 = vadd.f32 %v1845, %v1893
  %v1895 = vpop.f32.mrf.mxu0
  %v1896 = vadd.f32 %v1847, %v1895
  %1897 = vmatmul.bf16.gmra.mxu0 %v723
  %v1898 = vpop.f32.mrf.mxu0
  %v1899 = vadd.f32 %v1850, %v1898
  %v1900 = vpop.f32.mrf.mxu0
  %v1901 = vadd.f32 %v1852, %v1900
  %1902 = vmatmul.bf16.gmra.mxu0 %v737
  %v1903 = vpop.f32.mrf.mxu0
  %v1904 = vadd.f32 %v1855, %v1903
  %v1905 = vpop.f32.mrf.mxu0
  %v1906 = vadd.f32 %v1857, %v1905
  %1907 = vmatmul.bf16.gmra.mxu0 %v751
  %v1908 = vpop.f32.mrf.mxu0
  %v1909 = vadd.f32 %v1860, %v1908
  %v1910 = vpop.f32.mrf.mxu0
  %v1911 = vadd.f32 %v1862, %v1910
  %1912 = vmatmul.bf16.gmra.mxu0 %v765
  %v1913 = vpop.f32.mrf.mxu0
  %v1914 = vadd.f32 %v1865, %v1913
  %v1915 = vpop.f32.mrf.mxu0
  %v1916 = vadd.f32 %v1867, %v1915
  %1917 = vmatmul.bf16.gmra.mxu0 %v779
  %v1918 = vpop.f32.mrf.mxu0
  %v1919 = vadd.f32 %v1870, %v1918
  %v1920 = vpop.f32.mrf.mxu0
  %v1921 = vadd.f32 %v1872, %v1920
  %1922 = vmatmul.bf16.gmra.mxu0 %v793
  %v1923 = vpop.f32.mrf.mxu0
  %v1924 = vadd.f32 %v1875, %v1923
  %v1925 = vpop.f32.mrf.mxu0
  %v1926 = vadd.f32 %v1877, %v1925
  %1927 = vdwg.mxu0
  %1928 = vmatpush.bf16.msra.mxu0 %v1424
  %1929 = vmatpush.bf16.msra.mxu0 %v1423
  %1930 = vmatpush.bf16.msra.mxu0 %v1422
  %1931 = vmatpush.bf16.msra.mxu0 %v1421
  %1932 = vmatpush.bf16.msra.mxu0 %v1420
  %1933 = vmatpush.bf16.msra.mxu0 %v1419
  %1934 = vmatpush.bf16.msra.mxu0 %v1418
  %1935 = vmatpush.bf16.msra.mxu0 %v1417
  %1936 = vmatmul.bf16.gmra.mxu0 %v696
  %v1937 = vpop.f32.mrf.mxu0
  %v1938 = vadd.f32 %v1889, %v1937
  %v1939 = vpop.f32.mrf.mxu0
  %v1940 = vadd.f32 %v1891, %v1939
  %1941 = vmatmul.bf16.gmra.mxu0 %v710
  %v1942 = vpop.f32.mrf.mxu0
  %v1943 = vadd.f32 %v1894, %v1942
  %v1944 = vpop.f32.mrf.mxu0
  %v1945 = vadd.f32 %v1896, %v1944
  %1946 = vmatmul.bf16.gmra.mxu0 %v724
  %v1947 = vpop.f32.mrf.mxu0
  %v1948 = vadd.f32 %v1899, %v1947
  %v1949 = vpop.f32.mrf.mxu0
  %v1950 = vadd.f32 %v1901, %v1949
  %1951 = vmatmul.bf16.gmra.mxu0 %v738
  %v1952 = vpop.f32.mrf.mxu0
  %v1953 = vadd.f32 %v1904, %v1952
  %v1954 = vpop.f32.mrf.mxu0
  %v1955 = vadd.f32 %v1906, %v1954
  %1956 = vmatmul.bf16.gmra.mxu0 %v752
  %v1957 = vpop.f32.mrf.mxu0
  %v1958 = vadd.f32 %v1909, %v1957
  %v1959 = vpop.f32.mrf.mxu0
  %v1960 = vadd.f32 %v1911, %v1959
  %1961 = vmatmul.bf16.gmra.mxu0 %v766
  %v1962 = vpop.f32.mrf.mxu0
  %v1963 = vadd.f32 %v1914, %v1962
  %v1964 = vpop.f32.mrf.mxu0
  %v1965 = vadd.f32 %v1916, %v1964
  %1966 = vmatmul.bf16.gmra.mxu0 %v780
  %v1967 = vpop.f32.mrf.mxu0
  %v1968 = vadd.f32 %v1919, %v1967
  %v1969 = vpop.f32.mrf.mxu0
  %v1970 = vadd.f32 %v1921, %v1969
  %1971 = vmatmul.bf16.gmra.mxu0 %v794
  %v1972 = vpop.f32.mrf.mxu0
  %v1973 = vadd.f32 %v1924, %v1972
  %v1974 = vpop.f32.mrf.mxu0
  %v1975 = vadd.f32 %v1926, %v1974
  %1976 = vdwg.mxu0
  %1977 = vmatpush.bf16.msra.mxu0 %v1432
  %1978 = vmatpush.bf16.msra.mxu0 %v1431
  %1979 = vmatpush.bf16.msra.mxu0 %v1430
  %1980 = vmatpush.bf16.msra.mxu0 %v1429
  %1981 = vmatpush.bf16.msra.mxu0 %v1428
  %1982 = vmatpush.bf16.msra.mxu0 %v1427
  %1983 = vmatpush.bf16.msra.mxu0 %v1426
  %1984 = vmatpush.bf16.msra.mxu0 %v1425
  %1985 = vmatmul.bf16.gmra.mxu0 %v697
  %v1986 = vpop.f32.mrf.mxu0
  %v1987 = vadd.f32 %v1938, %v1986
  %v1988 = vpop.f32.mrf.mxu0
  %v1989 = vadd.f32 %v1940, %v1988
  %1990 = vmatmul.bf16.gmra.mxu0 %v711
  %v1991 = vpop.f32.mrf.mxu0
  %v1992 = vadd.f32 %v1943, %v1991
  %v1993 = vpop.f32.mrf.mxu0
  %v1994 = vadd.f32 %v1945, %v1993
  %1995 = vmatmul.bf16.gmra.mxu0 %v725
  %v1996 = vpop.f32.mrf.mxu0
  %v1997 = vadd.f32 %v1948, %v1996
  %v1998 = vpop.f32.mrf.mxu0
  %v1999 = vadd.f32 %v1950, %v1998
  %2000 = vmatmul.bf16.gmra.mxu0 %v739
  %v2001 = vpop.f32.mrf.mxu0
  %v2002 = vadd.f32 %v1953, %v2001
  %v2003 = vpop.f32.mrf.mxu0
  %v2004 = vadd.f32 %v1955, %v2003
  %2005 = vmatmul.bf16.gmra.mxu0 %v753
  %v2006 = vpop.f32.mrf.mxu0
  %v2007 = vadd.f32 %v1958, %v2006
  %v2008 = vpop.f32.mrf.mxu0
  %v2009 = vadd.f32 %v1960, %v2008
  %2010 = vmatmul.bf16.gmra.mxu0 %v767
  %v2011 = vpop.f32.mrf.mxu0
  %v2012 = vadd.f32 %v1963, %v2011
  %v2013 = vpop.f32.mrf.mxu0
  %v2014 = vadd.f32 %v1965, %v2013
  %2015 = vmatmul.bf16.gmra.mxu0 %v781
  %v2016 = vpop.f32.mrf.mxu0
  %v2017 = vadd.f32 %v1968, %v2016
  %v2018 = vpop.f32.mrf.mxu0
  %v2019 = vadd.f32 %v1970, %v2018
  %2020 = vmatmul.bf16.gmra.mxu0 %v795
  %v2021 = vpop.f32.mrf.mxu0
  %v2022 = vadd.f32 %v1973, %v2021
  %v2023 = vpop.f32.mrf.mxu0
  %v2024 = vadd.f32 %v1975, %v2023
  %2025 = vdwg.mxu0
  %2026 = vmatpush.bf16.msra.mxu0 %v1440
  %2027 = vmatpush.bf16.msra.mxu0 %v1439
  %2028 = vmatpush.bf16.msra.mxu0 %v1438
  %2029 = vmatpush.bf16.msra.mxu0 %v1437
  %2030 = vmatpush.bf16.msra.mxu0 %v1436
  %2031 = vmatpush.bf16.msra.mxu0 %v1435
  %2032 = vmatpush.bf16.msra.mxu0 %v1434
  %2033 = vmatpush.bf16.msra.mxu0 %v1433
  %2034 = vmatmul.bf16.gmra.mxu0 %v698
  %v2035 = vpop.f32.mrf.mxu0
  %v2036 = vadd.f32 %v1987, %v2035
  %v2037 = vpop.f32.mrf.mxu0
  %v2038 = vadd.f32 %v1989, %v2037
  %2039 = vmatmul.bf16.gmra.mxu0 %v712
  %v2040 = vpop.f32.mrf.mxu0
  %v2041 = vadd.f32 %v1992, %v2040
  %v2042 = vpop.f32.mrf.mxu0
  %v2043 = vadd.f32 %v1994, %v2042
  %2044 = vmatmul.bf16.gmra.mxu0 %v726
  %v2045 = vpop.f32.mrf.mxu0
  %v2046 = vadd.f32 %v1997, %v2045
  %v2047 = vpop.f32.mrf.mxu0
  %v2048 = vadd.f32 %v1999, %v2047
  %2049 = vmatmul.bf16.gmra.mxu0 %v740
  %v2050 = vpop.f32.mrf.mxu0
  %v2051 = vadd.f32 %v2002, %v2050
  %v2052 = vpop.f32.mrf.mxu0
  %v2053 = vadd.f32 %v2004, %v2052
  %2054 = vmatmul.bf16.gmra.mxu0 %v754
  %v2055 = vpop.f32.mrf.mxu0
  %v2056 = vadd.f32 %v2007, %v2055
  %v2057 = vpop.f32.mrf.mxu0
  %v2058 = vadd.f32 %v2009, %v2057
  %2059 = vmatmul.bf16.gmra.mxu0 %v768
  %v2060 = vpop.f32.mrf.mxu0
  %v2061 = vadd.f32 %v2012, %v2060
  %v2062 = vpop.f32.mrf.mxu0
  %v2063 = vadd.f32 %v2014, %v2062
  %2064 = vmatmul.bf16.gmra.mxu0 %v782
  %v2065 = vpop.f32.mrf.mxu0
  %v2066 = vadd.f32 %v2017, %v2065
  %v2067 = vpop.f32.mrf.mxu0
  %v2068 = vadd.f32 %v2019, %v2067
  %2069 = vmatmul.bf16.gmra.mxu0 %v796
  %v2070 = vpop.f32.mrf.mxu0
  %v2071 = vadd.f32 %v2022, %v2070
  %v2072 = vpop.f32.mrf.mxu0
  %v2073 = vadd.f32 %v2024, %v2072
  %2074 = vdwg.mxu0
  %2075 = vmatpush.bf16.msra.mxu0 %v1448
  %2076 = vmatpush.bf16.msra.mxu0 %v1447
  %2077 = vmatpush.bf16.msra.mxu0 %v1446
  %2078 = vmatpush.bf16.msra.mxu0 %v1445
  %2079 = vmatpush.bf16.msra.mxu0 %v1444
  %2080 = vmatpush.bf16.msra.mxu0 %v1443
  %2081 = vmatpush.bf16.msra.mxu0 %v1442
  %2082 = vmatpush.bf16.msra.mxu0 %v1441
  %2083 = vmatmul.bf16.gmra.mxu0 %v699
  %v2084 = vpop.f32.mrf.mxu0
  %v2085 = vadd.f32 %v2036, %v2084
  %v2086 = vpop.f32.mrf.mxu0
  %v2087 = vadd.f32 %v2038, %v2086
  %2088 = vmatmul.bf16.gmra.mxu0 %v713
  %v2089 = vpop.f32.mrf.mxu0
  %v2090 = vadd.f32 %v2041, %v2089
  %v2091 = vpop.f32.mrf.mxu0
  %v2092 = vadd.f32 %v2043, %v2091
  %2093 = vmatmul.bf16.gmra.mxu0 %v727
  %v2094 = vpop.f32.mrf.mxu0
  %v2095 = vadd.f32 %v2046, %v2094
  %v2096 = vpop.f32.mrf.mxu0
  %v2097 = vadd.f32 %v2048, %v2096
  %2098 = vmatmul.bf16.gmra.mxu0 %v741
  %v2099 = vpop.f32.mrf.mxu0
  %v2100 = vadd.f32 %v2051, %v2099
  %v2101 = vpop.f32.mrf.mxu0
  %v2102 = vadd.f32 %v2053, %v2101
  %2103 = vmatmul.bf16.gmra.mxu0 %v755
  %v2104 = vpop.f32.mrf.mxu0
  %v2105 = vadd.f32 %v2056, %v2104
  %v2106 = vpop.f32.mrf.mxu0
  %v2107 = vadd.f32 %v2058, %v2106
  %2108 = vmatmul.bf16.gmra.mxu0 %v769
  %v2109 = vpop.f32.mrf.mxu0
  %v2110 = vadd.f32 %v2061, %v2109
  %v2111 = vpop.f32.mrf.mxu0
  %v2112 = vadd.f32 %v2063, %v2111
  %2113 = vmatmul.bf16.gmra.mxu0 %v783
  %v2114 = vpop.f32.mrf.mxu0
  %v2115 = vadd.f32 %v2066, %v2114
  %v2116 = vpop.f32.mrf.mxu0
  %v2117 = vadd.f32 %v2068, %v2116
  %2118 = vmatmul.bf16.gmra.mxu0 %v797
  %v2119 = vpop.f32.mrf.mxu0
  %v2120 = vadd.f32 %v2071, %v2119
  %v2121 = vpop.f32.mrf.mxu0
  %v2122 = vadd.f32 %v2073, %v2121
  %2123 = vdwg.mxu0
  %2124 = vmatpush.bf16.msra.mxu0 %v1456
  %2125 = vmatpush.bf16.msra.mxu0 %v1455
  %2126 = vmatpush.bf16.msra.mxu0 %v1454
  %2127 = vmatpush.bf16.msra.mxu0 %v1453
  %2128 = vmatpush.bf16.msra.mxu0 %v1452
  %2129 = vmatpush.bf16.msra.mxu0 %v1451
  %2130 = vmatpush.bf16.msra.mxu0 %v1450
  %2131 = vmatpush.bf16.msra.mxu0 %v1449
  %2132 = vmatmul.bf16.gmra.mxu0 %v700
  %v2133 = vpop.f32.mrf.mxu0
  %v2134 = vadd.f32 %v2085, %v2133
  %v2135 = vpop.f32.mrf.mxu0
  %v2136 = vadd.f32 %v2087, %v2135
  %2137 = vmatmul.bf16.gmra.mxu0 %v714
  %v2138 = vpop.f32.mrf.mxu0
  %v2139 = vadd.f32 %v2090, %v2138
  %v2140 = vpop.f32.mrf.mxu0
  %v2141 = vadd.f32 %v2092, %v2140
  %2142 = vmatmul.bf16.gmra.mxu0 %v728
  %v2143 = vpop.f32.mrf.mxu0
  %v2144 = vadd.f32 %v2095, %v2143
  %v2145 = vpop.f32.mrf.mxu0
  %v2146 = vadd.f32 %v2097, %v2145
  %2147 = vmatmul.bf16.gmra.mxu0 %v742
  %v2148 = vpop.f32.mrf.mxu0
  %v2149 = vadd.f32 %v2100, %v2148
  %v2150 = vpop.f32.mrf.mxu0
  %v2151 = vadd.f32 %v2102, %v2150
  %2152 = vmatmul.bf16.gmra.mxu0 %v756
  %v2153 = vpop.f32.mrf.mxu0
  %v2154 = vadd.f32 %v2105, %v2153
  %v2155 = vpop.f32.mrf.mxu0
  %v2156 = vadd.f32 %v2107, %v2155
  %2157 = vmatmul.bf16.gmra.mxu0 %v770
  %v2158 = vpop.f32.mrf.mxu0
  %v2159 = vadd.f32 %v2110, %v2158
  %v2160 = vpop.f32.mrf.mxu0
  %v2161 = vadd.f32 %v2112, %v2160
  %2162 = vmatmul.bf16.gmra.mxu0 %v784
  %v2163 = vpop.f32.mrf.mxu0
  %v2164 = vadd.f32 %v2115, %v2163
  %v2165 = vpop.f32.mrf.mxu0
  %v2166 = vadd.f32 %v2117, %v2165
  %2167 = vmatmul.bf16.gmra.mxu0 %v798
  %v2168 = vpop.f32.mrf.mxu0
  %v2169 = vadd.f32 %v2120, %v2168
  %v2170 = vpop.f32.mrf.mxu0
  %v2171 = vadd.f32 %v2122, %v2170
  %2172 = vdwg.mxu0
  %2173 = vmatpush.bf16.msra.mxu0 %v1464
  %2174 = vmatpush.bf16.msra.mxu0 %v1463
  %2175 = vmatpush.bf16.msra.mxu0 %v1462
  %2176 = vmatpush.bf16.msra.mxu0 %v1461
  %2177 = vmatpush.bf16.msra.mxu0 %v1460
  %2178 = vmatpush.bf16.msra.mxu0 %v1459
  %2179 = vmatpush.bf16.msra.mxu0 %v1458
  %2180 = vmatpush.bf16.msra.mxu0 %v1457
  %2181 = vmatmul.bf16.gmra.mxu0 %v701
  %v2182 = vpop.f32.mrf.mxu0
  %v2183 = vadd.f32 %v2134, %v2182
  %v2184 = vpop.f32.mrf.mxu0
  %v2185 = vadd.f32 %v2136, %v2184
  %2186 = vmatmul.bf16.gmra.mxu0 %v715
  %v2187 = vpop.f32.mrf.mxu0
  %v2188 = vadd.f32 %v2139, %v2187
  %v2189 = vpop.f32.mrf.mxu0
  %v2190 = vadd.f32 %v2141, %v2189
  %2191 = vmatmul.bf16.gmra.mxu0 %v729
  %v2192 = vpop.f32.mrf.mxu0
  %v2193 = vadd.f32 %v2144, %v2192
  %v2194 = vpop.f32.mrf.mxu0
  %v2195 = vadd.f32 %v2146, %v2194
  %2196 = vmatmul.bf16.gmra.mxu0 %v743
  %v2197 = vpop.f32.mrf.mxu0
  %v2198 = vadd.f32 %v2149, %v2197
  %v2199 = vpop.f32.mrf.mxu0
  %v2200 = vadd.f32 %v2151, %v2199
  %2201 = vmatmul.bf16.gmra.mxu0 %v757
  %v2202 = vpop.f32.mrf.mxu0
  %v2203 = vadd.f32 %v2154, %v2202
  %v2204 = vpop.f32.mrf.mxu0
  %v2205 = vadd.f32 %v2156, %v2204
  %2206 = vmatmul.bf16.gmra.mxu0 %v771
  %v2207 = vpop.f32.mrf.mxu0
  %v2208 = vadd.f32 %v2159, %v2207
  %v2209 = vpop.f32.mrf.mxu0
  %v2210 = vadd.f32 %v2161, %v2209
  %2211 = vmatmul.bf16.gmra.mxu0 %v785
  %v2212 = vpop.f32.mrf.mxu0
  %v2213 = vadd.f32 %v2164, %v2212
  %v2214 = vpop.f32.mrf.mxu0
  %v2215 = vadd.f32 %v2166, %v2214
  %2216 = vmatmul.bf16.gmra.mxu0 %v799
  %v2217 = vpop.f32.mrf.mxu0
  %v2218 = vadd.f32 %v2169, %v2217
  %v2219 = vpop.f32.mrf.mxu0
  %v2220 = vadd.f32 %v2171, %v2219
  %2221 = vdwg.mxu0
  %2222 = vmatpush.bf16.msra.mxu0 %v1472
  %2223 = vmatpush.bf16.msra.mxu0 %v1471
  %2224 = vmatpush.bf16.msra.mxu0 %v1470
  %2225 = vmatpush.bf16.msra.mxu0 %v1469
  %2226 = vmatpush.bf16.msra.mxu0 %v1468
  %2227 = vmatpush.bf16.msra.mxu0 %v1467
  %2228 = vmatpush.bf16.msra.mxu0 %v1466
  %2229 = vmatpush.bf16.msra.mxu0 %v1465
  %2230 = vmatmul.bf16.gmra.mxu0 %v702
  %v2231 = vpop.f32.mrf.mxu0
  %v2232 = vadd.f32 %v2183, %v2231
  %v2233 = vpop.f32.mrf.mxu0
  %v2234 = vadd.f32 %v2185, %v2233
  %2235 = vmatmul.bf16.gmra.mxu0 %v716
  %v2236 = vpop.f32.mrf.mxu0
  %v2237 = vadd.f32 %v2188, %v2236
  %v2238 = vpop.f32.mrf.mxu0
  %v2239 = vadd.f32 %v2190, %v2238
  %2240 = vmatmul.bf16.gmra.mxu0 %v730
  %v2241 = vpop.f32.mrf.mxu0
  %v2242 = vadd.f32 %v2193, %v2241
  %v2243 = vpop.f32.mrf.mxu0
  %v2244 = vadd.f32 %v2195, %v2243
  %2245 = vmatmul.bf16.gmra.mxu0 %v744
  %v2246 = vpop.f32.mrf.mxu0
  %v2247 = vadd.f32 %v2198, %v2246
  %v2248 = vpop.f32.mrf.mxu0
  %v2249 = vadd.f32 %v2200, %v2248
  %2250 = vmatmul.bf16.gmra.mxu0 %v758
  %v2251 = vpop.f32.mrf.mxu0
  %v2252 = vadd.f32 %v2203, %v2251
  %v2253 = vpop.f32.mrf.mxu0
  %v2254 = vadd.f32 %v2205, %v2253
  %2255 = vmatmul.bf16.gmra.mxu0 %v772
  %v2256 = vpop.f32.mrf.mxu0
  %v2257 = vadd.f32 %v2208, %v2256
  %v2258 = vpop.f32.mrf.mxu0
  %v2259 = vadd.f32 %v2210, %v2258
  %2260 = vmatmul.bf16.gmra.mxu0 %v786
  %v2261 = vpop.f32.mrf.mxu0
  %v2262 = vadd.f32 %v2213, %v2261
  %v2263 = vpop.f32.mrf.mxu0
  %v2264 = vadd.f32 %v2215, %v2263
  %2265 = vmatmul.bf16.gmra.mxu0 %v800
  %v2266 = vpop.f32.mrf.mxu0
  %v2267 = vadd.f32 %v2218, %v2266
  %v2268 = vpop.f32.mrf.mxu0
  %v2269 = vadd.f32 %v2220, %v2268
  %2270 = vdwg.mxu0
  %v2271 = vld [vmem:[%s2] sm:$0x1]
  %v2273 = vperm.slane %v2271, 0
  %v2275 = vmul.f32 %v2232, %v2273
  %v2276 = vmul.f32 %v2234, %v2273
  %v2277 = vmul.f32 %v2237, %v2273
  %v2278 = vmul.f32 %v2239, %v2273
  %v2279 = vmul.f32 %v2242, %v2273
  %v2280 = vmul.f32 %v2244, %v2273
  %v2281 = vmul.f32 %v2247, %v2273
  %v2282 = vmul.f32 %v2249, %v2273
  %v2283 = vmul.f32 %v2252, %v2273
  %v2284 = vmul.f32 %v2254, %v2273
  %v2285 = vmul.f32 %v2257, %v2273
  %v2286 = vmul.f32 %v2259, %v2273
  %v2287 = vmul.f32 %v2262, %v2273
  %v2288 = vmul.f32 %v2264, %v2273
  %v2289 = vmul.f32 %v2267, %v2273
  %v2290 = vmul.f32 %v2269, %v2273
  %v2291 = vld [vmem:[%s3] sm:$0x1]
  %v2293 = vperm.slane %v2291, 0
  %v2295 = vadd.f32 %v2275, %v2293
  %v2296 = vadd.f32 %v2276, %v2293
  %v2297 = vadd.f32 %v2277, %v2293
  %v2298 = vadd.f32 %v2278, %v2293
  %v2299 = vadd.f32 %v2279, %v2293
  %v2300 = vadd.f32 %v2280, %v2293
  %v2301 = vadd.f32 %v2281, %v2293
  %v2302 = vadd.f32 %v2282, %v2293
  %v2303 = vadd.f32 %v2283, %v2293
  %v2304 = vadd.f32 %v2284, %v2293
  %v2305 = vadd.f32 %v2285, %v2293
  %v2306 = vadd.f32 %v2286, %v2293
  %v2307 = vadd.f32 %v2287, %v2293
  %v2308 = vadd.f32 %v2288, %v2293
  %v2309 = vadd.f32 %v2289, %v2293
  %v2310 = vadd.f32 %v2290, %v2293
  %v2311 = vmax.f32 %v2295, 0.0
  %v2312 = vmax.f32 %v2296, 0.0
  %v2313 = vmax.f32 %v2297, 0.0
  %v2314 = vmax.f32 %v2298, 0.0
  %v2315 = vmax.f32 %v2299, 0.0
  %v2316 = vmax.f32 %v2300, 0.0
  %v2317 = vmax.f32 %v2301, 0.0
  %v2318 = vmax.f32 %v2302, 0.0
  %v2319 = vmax.f32 %v2303, 0.0
  %v2320 = vmax.f32 %v2304, 0.0
  %v2321 = vmax.f32 %v2305, 0.0
  %v2322 = vmax.f32 %v2306, 0.0
  %v2323 = vmax.f32 %v2307, 0.0
  %v2324 = vmax.f32 %v2308, 0.0
  %v2325 = vmax.f32 %v2309, 0.0
  %v2326 = vmax.f32 %v2310, 0.0
  %vm2327 = vcmask 523264
  %2328 = vst.msk [vmem:[%s4] sm:$0xff] %vm2327, %v2311
  %2329 = vst.msk [vmem:[%s4 + $0x8] sm:$0xff] %vm2327, %v2312
  %2330 = vst.msk [vmem:[%s4 + $0x10] sm:$0xff] %vm2327, %v2313
  %2331 = vst.msk [vmem:[%s4 + $0x18] sm:$0xff] %vm2327, %v2314
  %2332 = vst.msk [vmem:[%s4 + $0x20] sm:$0xff] %vm2327, %v2315
  %2333 = vst.msk [vmem:[%s4 + $0x28] sm:$0xff] %vm2327, %v2316
  %2334 = vst.msk [vmem:[%s4 + $0x30] sm:$0xff] %vm2327, %v2317
  %2335 = vst.msk [vmem:[%s4 + $0x38] sm:$0xff] %vm2327, %v2318
  %2336 = vst.msk [vmem:[%s4 + $0x40] sm:$0xff] %vm2327, %v2319
  %2337 = vst.msk [vmem:[%s4 + $0x48] sm:$0xff] %vm2327, %v2320
  %2338 = vst.msk [vmem:[%s4 + $0x50] sm:$0xff] %vm2327, %v2321
  %2339 = vst.msk [vmem:[%s4 + $0x58] sm:$0xff] %vm2327, %v2322
  %2340 = vst.msk [vmem:[%s4 + $0x60] sm:$0xff] %vm2327, %v2323
  %2341 = vst.msk [vmem:[%s4 + $0x68] sm:$0xff] %vm2327, %v2324
  %2342 = vst.msk [vmem:[%s4 + $0x70] sm:$0xff] %vm2327, %v2325
  %2343 = vst.msk [vmem:[%s4 + $0x78] sm:$0xff] %vm2327, %v2326
  // Predicated region
  $region18: #{ggo_forward.18} parent=0 // pred_check
    _
  $region19: #{ggo_forward.18} parent=0 // pred_check_branch
    %2345 = sbr.rel (0) target = $region21
  $region20: #{ggo_forward.18} parent=0 // pred_region
    _
  $region21: #{ggo_forward.18} parent=0 // pred_fallthru
    _
  // Predicated region
  $region22: #{ggo_forward.18} parent=0 // pred_check
    _
  $region23: #{ggo_forward.18} parent=0 // pred_check_branch
    %2347 = sbr.rel (0) target = $region25
  $region24: #{ggo_forward.18} parent=0 // pred_region
    _
  $region25: #{ggo_forward.18} parent=0 // pred_fallthru
    _

</llo_original>
